<compile_context>
chip_gen: v7x
topology: tpu7x:2x2x1
jax: 0.10.0
libtpu: 0.0.40
codegen_flags: <defaults>
</compile_context>

<pallas_src>
import functools

import jax
import jax.numpy as jnp
import numpy as np
from jax import lax
from jax.experimental import pallas as pl
from jax.experimental.pallas import tpu as pltpu


# --------------------------------------------------------------------------
# Fused kernel: 1x1 projections + polyphase ConvTranspose + 1x1 expansion
#               + folded BN + ReLU + MaxUnpool2d + add + ReLU
# --------------------------------------------------------------------------
def _fused_bottleneck_kernel(
    x_ref, idx_ref,
    w_main_ref, w_ext1_ref, w_tconv_ref, w_ext3_ref,
    sm_ref, fm_ref, s1_ref, f1_ref, s2_ref, f2_ref, s3_ref, f3_ref,
    o_ref,
    *, H, W, Cin, Cint, Cout,
):
    # ---- shared read of x; both 1x1 projections from the same VMEM tile ----
    x2d = x_ref[0].reshape(H * W, Cin)                               # (HW, Cin)

    main = jnp.dot(x2d, w_main_ref[...], preferred_element_type=jnp.float32)
    main = main * sm_ref[...] + fm_ref[...]                          # BN, no act
    main3 = main.reshape(H, W, Cout)

    e1 = jnp.dot(x2d, w_ext1_ref[...], preferred_element_type=jnp.float32)
    e1 = jnp.maximum(e1 * s1_ref[...] + f1_ref[...], 0.0)            # BN + ReLU
    e1_3 = e1.reshape(H, W, Cint)

    # ---- polyphase shifted views of ext1 (zeros past the image edge) ----
    zcol = jnp.zeros((H, 1, Cint), jnp.float32)
    zrow = jnp.zeros((1, W, Cint), jnp.float32)
    e1_l3 = jnp.concatenate([e1_3[:, 1:, :], zcol], axis=1)          # e1[r, c+1]
    e1_u3 = jnp.concatenate([e1_3[1:, :, :], zrow], axis=0)          # e1[r+1, c]
    e1_ul3 = jnp.concatenate([e1_l3[1:, :, :], zrow], axis=0)        # e1[r+1, c+1]
    e1_l = e1_l3.reshape(H * W, Cint)
    e1_u = e1_u3.reshape(H * W, Cint)
    e1_ul = e1_ul3.reshape(H * W, Cint)

    def tap(a2d, kh, kw):
        # w_tconv_ref[kh, kw] is the (Cint_in, Cint_out) matrix of that tap.
        return jnp.dot(a2d, w_tconv_ref[kh, kw],
                       preferred_element_type=jnp.float32)

    # ConvTranspose2d(3x3, stride=2, padding=1, output_padding=1) polyphase:
    #   y[2r  , 2c  ] = e1[r,c]   @ W11
    #   y[2r  , 2c+1] = e1[r,c]   @ W12 + e1[r,c+1] @ W10
    #   y[2r+1, 2c  ] = e1[r,c]   @ W21 + e1[r+1,c] @ W01
    #   y[2r+1, 2c+1] = e1[r,c]@W22 + e1[r,c+1]@W20 + e1[r+1,c]@W02 + e1[r+1,c+1]@W00
    p_ee = tap(e1, 1, 1)
    p_eo = tap(e1, 1, 2) + tap(e1_l, 1, 0)
    p_oe = tap(e1, 2, 1) + tap(e1_u, 0, 1)
    p_oo = tap(e1, 2, 2) + tap(e1_l, 2, 0) + tap(e1_u, 0, 2) + tap(e1_ul, 0, 0)

    # ---- MaxUnpool positions (flat row-major index into the 2H x 2W map) ----
    idx3 = idx_ref[0]                                                # (H, W, Cout) i32
    rr = lax.broadcasted_iota(jnp.int32, (H, W, Cout), 0)
    cc = lax.broadcasted_iota(jnp.int32, (H, W, Cout), 1)

    def finish(p, dr, dc):
        # ext2: BN + ReLU of the transposed-conv phase
        e2 = jnp.maximum(p * s2_ref[...] + f2_ref[...], 0.0)         # (HW, Cint)
        # ext3: 1x1 expansion + BN + ReLU (dropout p=0 -> identity)
        e3 = jnp.dot(e2, w_ext3_ref[...], preferred_element_type=jnp.float32)
        e3 = jnp.maximum(e3 * s3_ref[...] + f3_ref[...], 0.0)        # (HW, Cout)
        e3 = e3.reshape(H, W, Cout)
        # MaxUnpool2d(2): main[r,c] lands at flat index idx3[r,c]; this output
        # pixel is (2r+dr, 2c+dc).
        pos = (2 * rr + dr) * (2 * W) + (2 * cc + dc)
        unp = jnp.where(idx3 == pos, main3, 0.0)
        return jnp.maximum(unp + e3, 0.0)                            # add + ReLU

    lane = 2 * W * Cout
    # even output rows: [c, dc, co] packed along the lane axis
    out_even = jnp.concatenate([finish(p_ee, 0, 0), finish(p_eo, 0, 1)],
                               axis=-1).reshape(H, lane)
    # odd output rows
    out_odd = jnp.concatenate([finish(p_oe, 1, 0), finish(p_oo, 1, 1)],
                              axis=-1).reshape(H, lane)
    o_ref[0, 0] = out_even
    o_ref[0, 1] = out_odd


def upsampling_bottleneck_forward(x_nchw, max_indices, p):
    """Forward of _UpsamplingBottleneck (inference, relu=True, dropout=0)."""
    N, Cin, H, W = x_nchw.shape
    Cout = p["w_main"].shape[1]
    Cint = p["w_ext1"].shape[1]
    lane = 2 * W * Cout

    x_nhwc = jnp.transpose(x_nchw, (0, 2, 3, 1))                     # (N,H,W,Cin)
    idx_nhwc = jnp.transpose(max_indices, (0, 2, 3, 1)).astype(jnp.int32)
    # torch ConvTranspose2d weight (Cin, Cout, kh, kw) -> (kh, kw, Cin, Cout)
    w_tconv = jnp.transpose(p["w_ext2_t"], (2, 3, 0, 1))

    kernel = functools.partial(_fused_bottleneck_kernel,
                               H=H, W=W, Cin=Cin, Cint=Cint, Cout=Cout)

    def full2(n):
        return (0, 0)

    def full4(n):
        return (0, 0, 0, 0)

    ker_out = pl.pallas_call(
        kernel,
        out_shape=jax.ShapeDtypeStruct((N, 2, H, lane), jnp.float32),
        grid_spec=pltpu.PrefetchScalarGridSpec(
            num_scalar_prefetch=0,
            grid=(N,),
            in_specs=[
                pl.BlockSpec((1, H, W, Cin), lambda n: (n, 0, 0, 0)),
                pl.BlockSpec((1, H, W, Cout), lambda n: (n, 0, 0, 0)),
                pl.BlockSpec((Cin, Cout), full2),
                pl.BlockSpec((Cin, Cint), full2),
                pl.BlockSpec((3, 3, Cint, Cint), full4),
                pl.BlockSpec((Cint, Cout), full2),
                pl.BlockSpec((1, Cout), full2),
                pl.BlockSpec((1, Cout), full2),
                pl.BlockSpec((1, Cint), full2),
                pl.BlockSpec((1, Cint), full2),
                pl.BlockSpec((1, Cint), full2),
                pl.BlockSpec((1, Cint), full2),
                pl.BlockSpec((1, Cout), full2),
                pl.BlockSpec((1, Cout), full2),
            ],
            out_specs=pl.BlockSpec((1, 2, H, lane), lambda n: (n, 0, 0, 0)),
        ),
        compiler_params=pltpu.CompilerParams(
            dimension_semantics=("parallel",),
            vmem_limit_bytes=64 * 1024 * 1024,
        ),
    )(x_nhwc, idx_nhwc,
      p["w_main"], p["w_ext1"], w_tconv, p["w_ext3"],
      p["main_scale"], p["main_shift"], p["ext1_scale"], p["ext1_shift"],
      p["ext2_scale"], p["ext2_shift"], p["ext3_scale"], p["ext3_shift"])

    # (N, 2, H, 2*W*Cout) -> (N, 2H, 2W, Cout) -> NCHW (single fused XLA copy)
    out = jnp.transpose(ker_out, (0, 2, 1, 3)).reshape(N, 2 * H, 2 * W, Cout)
    return jnp.transpose(out, (0, 3, 1, 2))


# --------------------------------------------------------------------------
# Pure-JAX reference (NCHW, scatter-based unpool, lax conv for the transpose)
# --------------------------------------------------------------------------
def reference_forward(x, max_indices, p):
    N, Cin, H, W = x.shape
    Cout = p["w_main"].shape[1]

    def bn(y, scale, shift):
        return y * scale[0][None, :, None, None] + shift[0][None, :, None, None]

    main = jnp.einsum("nchw,cd->ndhw", x, p["w_main"])
    main = bn(main, p["main_scale"], p["main_shift"])

    flat = jnp.zeros((N, Cout, 4 * H * W), jnp.float32)
    flat = flat.at[jnp.arange(N)[:, None, None],
                   jnp.arange(Cout)[None, :, None],
                   max_indices.reshape(N, Cout, H * W)].set(main.reshape(N, Cout, H * W))
    main_up = flat.reshape(N, Cout, 2 * H, 2 * W)

    ext = jnp.einsum("nchw,cd->ndhw", x, p["w_ext1"])
    ext = jnp.maximum(bn(ext, p["ext1_scale"], p["ext1_shift"]), 0.0)
    ext_nhwc = jnp.transpose(ext, (0, 2, 3, 1))
    w_conv = jnp.transpose(p["w_ext2_t"][:, :, ::-1, ::-1], (2, 3, 0, 1))
    ext2 = jax.lax.conv_general_dilated(
        ext_nhwc, w_conv, window_strides=(1, 1),
        padding=((1, 2), (1, 2)), lhs_dilation=(2, 2),
        dimension_numbers=("NHWC", "HWIO", "NHWC"))
    ext2 = jnp.transpose(ext2, (0, 3, 1, 2))
    ext2 = jnp.maximum(bn(ext2, p["ext2_scale"], p["ext2_shift"]), 0.0)
    ext3 = jnp.einsum("nchw,cd->ndhw", ext2, p["w_ext3"])
    ext3 = jnp.maximum(bn(ext3, p["ext3_scale"], p["ext3_shift"]), 0.0)
    return jnp.maximum(main_up + ext3, 0.0)


# --------------------------------------------------------------------------
# Deterministic parameter init (BN folded to scale/shift, inference mode)
# --------------------------------------------------------------------------
def init_params(key, Cin, Cout, Cint, K):
    ks = jax.random.split(key, 8)

    def conv_w(k, ci, co):
        return jax.random.normal(k, (ci, co), jnp.float32) / jnp.sqrt(float(ci))

    def bn(k, c):
        k1, k2, k3, k4 = jax.random.split(k, 4)
        gamma = 1.0 + 0.1 * jax.random.normal(k1, (c,), jnp.float32)
        beta = 0.1 * jax.random.normal(k2, (c,), jnp.float32)
        mean = 0.1 * jax.random.normal(k3, (c,), jnp.float32)
        var = 1.0 + 0.1 * jax.random.uniform(k4, (c,), jnp.float32)
        scale = gamma / jnp.sqrt(var + 1e-5)
        shift = beta - mean * scale
        return scale.reshape(1, c), shift.reshape(1, c)

    p = {}
    p["w_main"] = conv_w(ks[0], Cin, Cout)
    p["main_scale"], p["main_shift"] = bn(ks[1], Cout)
    p["w_ext1"] = conv_w(ks[2], Cin, Cint)
    p["ext1_scale"], p["ext1_shift"] = bn(ks[3], Cint)
    p["w_ext2_t"] = jax.random.normal(ks[4], (Cint, Cint, K, K), jnp.float32) / jnp.sqrt(float(Cint * K * K))
    p["ext2_scale"], p["ext2_shift"] = bn(ks[5], Cint)
    p["w_ext3"] = conv_w(ks[6], Cint, Cout)
    p["ext3_scale"], p["ext3_shift"] = bn(ks[7], Cout)
    return p


if __name__ == "__main__":
    N, Cin, H, W = 2, 16, 16, 16
    internal_ratio = 4
    Cout = 8
    Cint = Cin // internal_ratio
    K = 3

    key = jax.random.PRNGKey(0)
    kx, ki1, ki2, kp = jax.random.split(key, 4)

    x = jax.random.normal(kx, (N, Cin, H, W), jnp.float32)

    # Valid MaxPool2d(2) indices: each (n,c,h,w) picks one element of its 2x2
    # window in the (2H, 2W) pre-pool feature map (flat row-major index).
    rows = jnp.arange(H)[None, None, :, None]
    cols = jnp.arange(W)[None, None, None, :]
    dh = jax.random.randint(ki1, (N, Cout, H, W), 0, 2)
    dw = jax.random.randint(ki2, (N, Cout, H, W), 0, 2)
    max_indices = ((2 * rows + dh) * (2 * W) + (2 * cols + dw)).astype(jnp.int32)

    params = init_params(kp, Cin, Cout, Cint, K)

    fwd = jax.jit(upsampling_bottleneck_forward)
    out = jax.block_until_ready(fwd(x, max_indices, params))

    ref = reference_forward(x, max_indices, params)
    np.testing.assert_allclose(np.asarray(out), np.asarray(ref), atol=1e-3, rtol=1e-3)
    assert out.shape == (N, Cout, 2 * H, 2 * W)
    print("KERNEL_OK")
</pallas_src>

<mosaic_0001>
module attributes {stable_mosaic.version = 11 : i64} {
  func.func @_fused_bottleneck_kernel(%arg0: i32, %arg1: memref<1x16x16x16xf32, #tpu.memory_space<vmem>>, %arg2: memref<1x16x16x8xi32, #tpu.memory_space<vmem>>, %arg3: memref<16x8xf32, #tpu.memory_space<vmem>>, %arg4: memref<16x4xf32, #tpu.memory_space<vmem>>, %arg5: memref<3x3x4x4xf32, #tpu.memory_space<vmem>>, %arg6: memref<4x8xf32, #tpu.memory_space<vmem>>, %arg7: memref<1x8xf32, #tpu.memory_space<vmem>>, %arg8: memref<1x8xf32, #tpu.memory_space<vmem>>, %arg9: memref<1x4xf32, #tpu.memory_space<vmem>>, %arg10: memref<1x4xf32, #tpu.memory_space<vmem>>, %arg11: memref<1x4xf32, #tpu.memory_space<vmem>>, %arg12: memref<1x4xf32, #tpu.memory_space<vmem>>, %arg13: memref<1x8xf32, #tpu.memory_space<vmem>>, %arg14: memref<1x8xf32, #tpu.memory_space<vmem>>, %arg15: memref<1x2x16x256xf32, #tpu.memory_space<vmem>>) attributes {dimension_semantics = [#tpu.dimension_semantics<parallel>], iteration_bounds = array<i64: 2>, scalar_prefetch = 0 : i64, scratch_operands = 0 : i64, tpu.core_type = #tpu.core_type<tc>, window_params = [{transform_indices = @transform_0, window_bounds = array<i64: 1, 16, 16, 16>}, {transform_indices = @transform_1, window_bounds = array<i64: 1, 16, 16, 8>}, {pipeline_mode = #tpu.pipeline_mode<synchronous>, transform_indices = @transform_2, window_bounds = array<i64: 16, 8>}, {pipeline_mode = #tpu.pipeline_mode<synchronous>, transform_indices = @transform_3, window_bounds = array<i64: 16, 4>}, {pipeline_mode = #tpu.pipeline_mode<synchronous>, transform_indices = @transform_4, window_bounds = array<i64: 3, 3, 4, 4>}, {pipeline_mode = #tpu.pipeline_mode<synchronous>, transform_indices = @transform_5, window_bounds = array<i64: 4, 8>}, {pipeline_mode = #tpu.pipeline_mode<synchronous>, transform_indices = @transform_6, window_bounds = array<i64: 1, 8>}, {pipeline_mode = #tpu.pipeline_mode<synchronous>, transform_indices = @transform_7, window_bounds = array<i64: 1, 8>}, {pipeline_mode = #tpu.pipeline_mode<synchronous>, transform_indices = @transform_8, window_bounds = array<i64: 1, 4>}, {pipeline_mode = #tpu.pipeline_mode<synchronous>, transform_indices = @transform_9, window_bounds = array<i64: 1, 4>}, {pipeline_mode = #tpu.pipeline_mode<synchronous>, transform_indices = @transform_10, window_bounds = array<i64: 1, 4>}, {pipeline_mode = #tpu.pipeline_mode<synchronous>, transform_indices = @transform_11, window_bounds = array<i64: 1, 4>}, {pipeline_mode = #tpu.pipeline_mode<synchronous>, transform_indices = @transform_12, window_bounds = array<i64: 1, 8>}, {pipeline_mode = #tpu.pipeline_mode<synchronous>, transform_indices = @transform_13, window_bounds = array<i64: 1, 8>}, {transform_indices = @transform_14, window_bounds = array<i64: 1, 2, 16, 256>}]} {
    %c0 = arith.constant 0 : index
    %c0_0 = arith.constant 0 : index
    %c0_1 = arith.constant 0 : index
    %c0_2 = arith.constant 0 : index
    %0 = vector.load %arg1[%c0, %c0_0, %c0_1, %c0_2] : memref<1x16x16x16xf32, #tpu.memory_space<vmem>>, vector<1x16x16x16xf32>
    %1 = vector.shape_cast %0 : vector<1x16x16x16xf32> to vector<16x16x16xf32>
    %2 = vector.shape_cast %1 : vector<16x16x16xf32> to vector<256x16xf32>
    %c0_3 = arith.constant 0 : index
    %c0_4 = arith.constant 0 : index
    %3 = vector.load %arg3[%c0_3, %c0_4] : memref<16x8xf32, #tpu.memory_space<vmem>>, vector<16x8xf32>
    %cst = arith.constant dense<0.000000e+00> : vector<256x8xf32>
    %4 = tpu.matmul %2, %3, %cst {dimension_numbers = #tpu.dot_dimension_numbers<[1], [0], [0], [1], [0, 0, 1, 1], [], []>} : vector<256x16xf32>, vector<16x8xf32>, vector<256x8xf32> -> vector<256x8xf32>
    %c0_5 = arith.constant 0 : index
    %c0_6 = arith.constant 0 : index
    %5 = vector.load %arg7[%c0_5, %c0_6] : memref<1x8xf32, #tpu.memory_space<vmem>>, vector<1x8xf32>
    %6 = vector.broadcast %5 : vector<1x8xf32> to vector<256x8xf32>
    %7 = arith.mulf %4, %6 : vector<256x8xf32>
    %c0_7 = arith.constant 0 : index
    %c0_8 = arith.constant 0 : index
    %8 = vector.load %arg8[%c0_7, %c0_8] : memref<1x8xf32, #tpu.memory_space<vmem>>, vector<1x8xf32>
    %9 = vector.broadcast %8 : vector<1x8xf32> to vector<256x8xf32>
    %10 = arith.addf %7, %9 : vector<256x8xf32>
    %11 = vector.shape_cast %10 : vector<256x8xf32> to vector<16x16x8xf32>
    %c0_9 = arith.constant 0 : index
    %c0_10 = arith.constant 0 : index
    %12 = vector.load %arg4[%c0_9, %c0_10] : memref<16x4xf32, #tpu.memory_space<vmem>>, vector<16x4xf32>
    %cst_11 = arith.constant dense<0.000000e+00> : vector<256x4xf32>
    %13 = tpu.matmul %2, %12, %cst_11 {dimension_numbers = #tpu.dot_dimension_numbers<[1], [0], [0], [1], [0, 0, 1, 1], [], []>} : vector<256x16xf32>, vector<16x4xf32>, vector<256x4xf32> -> vector<256x4xf32>
    %c0_12 = arith.constant 0 : index
    %c0_13 = arith.constant 0 : index
    %14 = vector.load %arg9[%c0_12, %c0_13] : memref<1x4xf32, #tpu.memory_space<vmem>>, vector<1x4xf32>
    %15 = vector.broadcast %14 : vector<1x4xf32> to vector<256x4xf32>
    %16 = arith.mulf %13, %15 : vector<256x4xf32>
    %c0_14 = arith.constant 0 : index
    %c0_15 = arith.constant 0 : index
    %17 = vector.load %arg10[%c0_14, %c0_15] : memref<1x4xf32, #tpu.memory_space<vmem>>, vector<1x4xf32>
    %18 = vector.broadcast %17 : vector<1x4xf32> to vector<256x4xf32>
    %19 = arith.addf %16, %18 : vector<256x4xf32>
    %cst_16 = arith.constant 0.000000e+00 : f32
    %20 = vector.broadcast %cst_16 : f32 to vector<256x4xf32>
    %21 = arith.maximumf %19, %20 : vector<256x4xf32>
    %22 = vector.shape_cast %21 : vector<256x4xf32> to vector<16x16x4xf32>
    %cst_17 = arith.constant 0.000000e+00 : f32
    %23 = vector.broadcast %cst_17 : f32 to vector<16x1x4xf32>
    %cst_18 = arith.constant 0.000000e+00 : f32
    %24 = vector.broadcast %cst_18 : f32 to vector<1x16x4xf32>
    %25 = vector.extract_strided_slice %22 {offsets = [0, 1, 0], sizes = [16, 15, 4], strides = [1, 1, 1]} : vector<16x16x4xf32> to vector<16x15x4xf32>
    %26 = tpu.concatenate %25, %23 in 1 : vector<16x15x4xf32>, vector<16x1x4xf32> -> vector<16x16x4xf32>
    %27 = vector.extract_strided_slice %22 {offsets = [1, 0, 0], sizes = [15, 16, 4], strides = [1, 1, 1]} : vector<16x16x4xf32> to vector<15x16x4xf32>
    %28 = tpu.concatenate %27, %24 in 0 : vector<15x16x4xf32>, vector<1x16x4xf32> -> vector<16x16x4xf32>
    %29 = vector.extract_strided_slice %26 {offsets = [1, 0, 0], sizes = [15, 16, 4], strides = [1, 1, 1]} : vector<16x16x4xf32> to vector<15x16x4xf32>
    %30 = tpu.concatenate %29, %24 in 0 : vector<15x16x4xf32>, vector<1x16x4xf32> -> vector<16x16x4xf32>
    %31 = vector.shape_cast %26 : vector<16x16x4xf32> to vector<256x4xf32>
    %32 = vector.shape_cast %28 : vector<16x16x4xf32> to vector<256x4xf32>
    %33 = vector.shape_cast %30 : vector<16x16x4xf32> to vector<256x4xf32>
    %c1 = arith.constant 1 : index
    %c1_19 = arith.constant 1 : index
    %c0_20 = arith.constant 0 : index
    %c0_21 = arith.constant 0 : index
    %34 = vector.load %arg5[%c1, %c1_19, %c0_20, %c0_21] : memref<3x3x4x4xf32, #tpu.memory_space<vmem>>, vector<1x1x4x4xf32>
    %35 = vector.shape_cast %34 : vector<1x1x4x4xf32> to vector<4x4xf32>
    %cst_22 = arith.constant dense<0.000000e+00> : vector<256x4xf32>
    %36 = tpu.matmul %21, %35, %cst_22 {dimension_numbers = #tpu.dot_dimension_numbers<[1], [0], [0], [1], [0, 0, 1, 1], [], []>} : vector<256x4xf32>, vector<4x4xf32>, vector<256x4xf32> -> vector<256x4xf32>
    %c1_23 = arith.constant 1 : index
    %c2 = arith.constant 2 : index
    %c0_24 = arith.constant 0 : index
    %c0_25 = arith.constant 0 : index
    %37 = vector.load %arg5[%c1_23, %c2, %c0_24, %c0_25] : memref<3x3x4x4xf32, #tpu.memory_space<vmem>>, vector<1x1x4x4xf32>
    %38 = vector.shape_cast %37 : vector<1x1x4x4xf32> to vector<4x4xf32>
    %cst_26 = arith.constant dense<0.000000e+00> : vector<256x4xf32>
    %39 = tpu.matmul %21, %38, %cst_26 {dimension_numbers = #tpu.dot_dimension_numbers<[1], [0], [0], [1], [0, 0, 1, 1], [], []>} : vector<256x4xf32>, vector<4x4xf32>, vector<256x4xf32> -> vector<256x4xf32>
    %c1_27 = arith.constant 1 : index
    %c0_28 = arith.constant 0 : index
    %c0_29 = arith.constant 0 : index
    %c0_30 = arith.constant 0 : index
    %40 = vector.load %arg5[%c1_27, %c0_28, %c0_29, %c0_30] : memref<3x3x4x4xf32, #tpu.memory_space<vmem>>, vector<1x1x4x4xf32>
    %41 = vector.shape_cast %40 : vector<1x1x4x4xf32> to vector<4x4xf32>
    %cst_31 = arith.constant dense<0.000000e+00> : vector<256x4xf32>
    %42 = tpu.matmul %31, %41, %cst_31 {dimension_numbers = #tpu.dot_dimension_numbers<[1], [0], [0], [1], [0, 0, 1, 1], [], []>} : vector<256x4xf32>, vector<4x4xf32>, vector<256x4xf32> -> vector<256x4xf32>
    %43 = arith.addf %39, %42 : vector<256x4xf32>
    %c2_32 = arith.constant 2 : index
    %c1_33 = arith.constant 1 : index
    %c0_34 = arith.constant 0 : index
    %c0_35 = arith.constant 0 : index
    %44 = vector.load %arg5[%c2_32, %c1_33, %c0_34, %c0_35] : memref<3x3x4x4xf32, #tpu.memory_space<vmem>>, vector<1x1x4x4xf32>
    %45 = vector.shape_cast %44 : vector<1x1x4x4xf32> to vector<4x4xf32>
    %cst_36 = arith.constant dense<0.000000e+00> : vector<256x4xf32>
    %46 = tpu.matmul %21, %45, %cst_36 {dimension_numbers = #tpu.dot_dimension_numbers<[1], [0], [0], [1], [0, 0, 1, 1], [], []>} : vector<256x4xf32>, vector<4x4xf32>, vector<256x4xf32> -> vector<256x4xf32>
    %c0_37 = arith.constant 0 : index
    %c1_38 = arith.constant 1 : index
    %c0_39 = arith.constant 0 : index
    %c0_40 = arith.constant 0 : index
    %47 = vector.load %arg5[%c0_37, %c1_38, %c0_39, %c0_40] : memref<3x3x4x4xf32, #tpu.memory_space<vmem>>, vector<1x1x4x4xf32>
    %48 = vector.shape_cast %47 : vector<1x1x4x4xf32> to vector<4x4xf32>
    %cst_41 = arith.constant dense<0.000000e+00> : vector<256x4xf32>
    %49 = tpu.matmul %32, %48, %cst_41 {dimension_numbers = #tpu.dot_dimension_numbers<[1], [0], [0], [1], [0, 0, 1, 1], [], []>} : vector<256x4xf32>, vector<4x4xf32>, vector<256x4xf32> -> vector<256x4xf32>
    %50 = arith.addf %46, %49 : vector<256x4xf32>
    %c2_42 = arith.constant 2 : index
    %c2_43 = arith.constant 2 : index
    %c0_44 = arith.constant 0 : index
    %c0_45 = arith.constant 0 : index
    %51 = vector.load %arg5[%c2_42, %c2_43, %c0_44, %c0_45] : memref<3x3x4x4xf32, #tpu.memory_space<vmem>>, vector<1x1x4x4xf32>
    %52 = vector.shape_cast %51 : vector<1x1x4x4xf32> to vector<4x4xf32>
    %cst_46 = arith.constant dense<0.000000e+00> : vector<256x4xf32>
    %53 = tpu.matmul %21, %52, %cst_46 {dimension_numbers = #tpu.dot_dimension_numbers<[1], [0], [0], [1], [0, 0, 1, 1], [], []>} : vector<256x4xf32>, vector<4x4xf32>, vector<256x4xf32> -> vector<256x4xf32>
    %c2_47 = arith.constant 2 : index
    %c0_48 = arith.constant 0 : index
    %c0_49 = arith.constant 0 : index
    %c0_50 = arith.constant 0 : index
    %54 = vector.load %arg5[%c2_47, %c0_48, %c0_49, %c0_50] : memref<3x3x4x4xf32, #tpu.memory_space<vmem>>, vector<1x1x4x4xf32>
    %55 = vector.shape_cast %54 : vector<1x1x4x4xf32> to vector<4x4xf32>
    %cst_51 = arith.constant dense<0.000000e+00> : vector<256x4xf32>
    %56 = tpu.matmul %31, %55, %cst_51 {dimension_numbers = #tpu.dot_dimension_numbers<[1], [0], [0], [1], [0, 0, 1, 1], [], []>} : vector<256x4xf32>, vector<4x4xf32>, vector<256x4xf32> -> vector<256x4xf32>
    %57 = arith.addf %53, %56 : vector<256x4xf32>
    %c0_52 = arith.constant 0 : index
    %c2_53 = arith.constant 2 : index
    %c0_54 = arith.constant 0 : index
    %c0_55 = arith.constant 0 : index
    %58 = vector.load %arg5[%c0_52, %c2_53, %c0_54, %c0_55] : memref<3x3x4x4xf32, #tpu.memory_space<vmem>>, vector<1x1x4x4xf32>
    %59 = vector.shape_cast %58 : vector<1x1x4x4xf32> to vector<4x4xf32>
    %cst_56 = arith.constant dense<0.000000e+00> : vector<256x4xf32>
    %60 = tpu.matmul %32, %59, %cst_56 {dimension_numbers = #tpu.dot_dimension_numbers<[1], [0], [0], [1], [0, 0, 1, 1], [], []>} : vector<256x4xf32>, vector<4x4xf32>, vector<256x4xf32> -> vector<256x4xf32>
    %61 = arith.addf %57, %60 : vector<256x4xf32>
    %c0_57 = arith.constant 0 : index
    %c0_58 = arith.constant 0 : index
    %c0_59 = arith.constant 0 : index
    %c0_60 = arith.constant 0 : index
    %62 = vector.load %arg5[%c0_57, %c0_58, %c0_59, %c0_60] : memref<3x3x4x4xf32, #tpu.memory_space<vmem>>, vector<1x1x4x4xf32>
    %63 = vector.shape_cast %62 : vector<1x1x4x4xf32> to vector<4x4xf32>
    %cst_61 = arith.constant dense<0.000000e+00> : vector<256x4xf32>
    %64 = tpu.matmul %33, %63, %cst_61 {dimension_numbers = #tpu.dot_dimension_numbers<[1], [0], [0], [1], [0, 0, 1, 1], [], []>} : vector<256x4xf32>, vector<4x4xf32>, vector<256x4xf32> -> vector<256x4xf32>
    %65 = arith.addf %61, %64 : vector<256x4xf32>
    %c0_62 = arith.constant 0 : index
    %c0_63 = arith.constant 0 : index
    %c0_64 = arith.constant 0 : index
    %c0_65 = arith.constant 0 : index
    %66 = vector.load %arg2[%c0_62, %c0_63, %c0_64, %c0_65] : memref<1x16x16x8xi32, #tpu.memory_space<vmem>>, vector<1x16x16x8xi32>
    %67 = vector.shape_cast %66 : vector<1x16x16x8xi32> to vector<16x16x8xi32>
    %68 = tpu.iota {dimensions = array<i32: 0>} : vector<16x16x8xi32>
    %69 = tpu.iota {dimensions = array<i32: 1>} : vector<16x16x8xi32>
    %c0_66 = arith.constant 0 : index
    %c0_67 = arith.constant 0 : index
    %70 = vector.load %arg11[%c0_66, %c0_67] : memref<1x4xf32, #tpu.memory_space<vmem>>, vector<1x4xf32>
    %71 = vector.broadcast %70 : vector<1x4xf32> to vector<256x4xf32>
    %72 = arith.mulf %36, %71 : vector<256x4xf32>
    %c0_68 = arith.constant 0 : index
    %c0_69 = arith.constant 0 : index
    %73 = vector.load %arg12[%c0_68, %c0_69] : memref<1x4xf32, #tpu.memory_space<vmem>>, vector<1x4xf32>
    %74 = vector.broadcast %73 : vector<1x4xf32> to vector<256x4xf32>
    %75 = arith.addf %72, %74 : vector<256x4xf32>
    %cst_70 = arith.constant 0.000000e+00 : f32
    %76 = vector.broadcast %cst_70 : f32 to vector<256x4xf32>
    %77 = arith.maximumf %75, %76 : vector<256x4xf32>
    %c0_71 = arith.constant 0 : index
    %c0_72 = arith.constant 0 : index
    %78 = vector.load %arg6[%c0_71, %c0_72] : memref<4x8xf32, #tpu.memory_space<vmem>>, vector<4x8xf32>
    %cst_73 = arith.constant dense<0.000000e+00> : vector<256x8xf32>
    %79 = tpu.matmul %77, %78, %cst_73 {dimension_numbers = #tpu.dot_dimension_numbers<[1], [0], [0], [1], [0, 0, 1, 1], [], []>} : vector<256x4xf32>, vector<4x8xf32>, vector<256x8xf32> -> vector<256x8xf32>
    %c0_74 = arith.constant 0 : index
    %c0_75 = arith.constant 0 : index
    %80 = vector.load %arg13[%c0_74, %c0_75] : memref<1x8xf32, #tpu.memory_space<vmem>>, vector<1x8xf32>
    %81 = vector.broadcast %80 : vector<1x8xf32> to vector<256x8xf32>
    %82 = arith.mulf %79, %81 : vector<256x8xf32>
    %c0_76 = arith.constant 0 : index
    %c0_77 = arith.constant 0 : index
    %83 = vector.load %arg14[%c0_76, %c0_77] : memref<1x8xf32, #tpu.memory_space<vmem>>, vector<1x8xf32>
    %84 = vector.broadcast %83 : vector<1x8xf32> to vector<256x8xf32>
    %85 = arith.addf %82, %84 : vector<256x8xf32>
    %cst_78 = arith.constant 0.000000e+00 : f32
    %86 = vector.broadcast %cst_78 : f32 to vector<256x8xf32>
    %87 = arith.maximumf %85, %86 : vector<256x8xf32>
    %88 = vector.shape_cast %87 : vector<256x8xf32> to vector<16x16x8xf32>
    %c2_i32 = arith.constant 2 : i32
    %89 = vector.broadcast %c2_i32 : i32 to vector<16x16x8xi32>
    %90 = arith.muli %89, %68 : vector<16x16x8xi32>
    %c0_i32 = arith.constant 0 : i32
    %91 = vector.broadcast %c0_i32 : i32 to vector<16x16x8xi32>
    %92 = arith.addi %90, %91 : vector<16x16x8xi32>
    %c32_i32 = arith.constant 32 : i32
    %93 = vector.broadcast %c32_i32 : i32 to vector<16x16x8xi32>
    %94 = arith.muli %92, %93 : vector<16x16x8xi32>
    %c2_i32_79 = arith.constant 2 : i32
    %95 = vector.broadcast %c2_i32_79 : i32 to vector<16x16x8xi32>
    %96 = arith.muli %95, %69 : vector<16x16x8xi32>
    %c0_i32_80 = arith.constant 0 : i32
    %97 = vector.broadcast %c0_i32_80 : i32 to vector<16x16x8xi32>
    %98 = arith.addi %96, %97 : vector<16x16x8xi32>
    %99 = arith.addi %94, %98 : vector<16x16x8xi32>
    %100 = arith.cmpi eq, %67, %99 : vector<16x16x8xi32>
    %cst_81 = arith.constant 0.000000e+00 : f32
    %101 = vector.broadcast %cst_81 : f32 to vector<16x16x8xf32>
    %102 = arith.select %100, %11, %101 : vector<16x16x8xi1>, vector<16x16x8xf32>
    %103 = arith.addf %102, %88 : vector<16x16x8xf32>
    %cst_82 = arith.constant 0.000000e+00 : f32
    %104 = vector.broadcast %cst_82 : f32 to vector<16x16x8xf32>
    %105 = arith.maximumf %103, %104 : vector<16x16x8xf32>
    %c0_83 = arith.constant 0 : index
    %c0_84 = arith.constant 0 : index
    %106 = vector.load %arg11[%c0_83, %c0_84] : memref<1x4xf32, #tpu.memory_space<vmem>>, vector<1x4xf32>
    %107 = vector.broadcast %106 : vector<1x4xf32> to vector<256x4xf32>
    %108 = arith.mulf %43, %107 : vector<256x4xf32>
    %c0_85 = arith.constant 0 : index
    %c0_86 = arith.constant 0 : index
    %109 = vector.load %arg12[%c0_85, %c0_86] : memref<1x4xf32, #tpu.memory_space<vmem>>, vector<1x4xf32>
    %110 = vector.broadcast %109 : vector<1x4xf32> to vector<256x4xf32>
    %111 = arith.addf %108, %110 : vector<256x4xf32>
    %cst_87 = arith.constant 0.000000e+00 : f32
    %112 = vector.broadcast %cst_87 : f32 to vector<256x4xf32>
    %113 = arith.maximumf %111, %112 : vector<256x4xf32>
    %c0_88 = arith.constant 0 : index
    %c0_89 = arith.constant 0 : index
    %114 = vector.load %arg6[%c0_88, %c0_89] : memref<4x8xf32, #tpu.memory_space<vmem>>, vector<4x8xf32>
    %cst_90 = arith.constant dense<0.000000e+00> : vector<256x8xf32>
    %115 = tpu.matmul %113, %114, %cst_90 {dimension_numbers = #tpu.dot_dimension_numbers<[1], [0], [0], [1], [0, 0, 1, 1], [], []>} : vector<256x4xf32>, vector<4x8xf32>, vector<256x8xf32> -> vector<256x8xf32>
    %c0_91 = arith.constant 0 : index
    %c0_92 = arith.constant 0 : index
    %116 = vector.load %arg13[%c0_91, %c0_92] : memref<1x8xf32, #tpu.memory_space<vmem>>, vector<1x8xf32>
    %117 = vector.broadcast %116 : vector<1x8xf32> to vector<256x8xf32>
    %118 = arith.mulf %115, %117 : vector<256x8xf32>
    %c0_93 = arith.constant 0 : index
    %c0_94 = arith.constant 0 : index
    %119 = vector.load %arg14[%c0_93, %c0_94] : memref<1x8xf32, #tpu.memory_space<vmem>>, vector<1x8xf32>
    %120 = vector.broadcast %119 : vector<1x8xf32> to vector<256x8xf32>
    %121 = arith.addf %118, %120 : vector<256x8xf32>
    %cst_95 = arith.constant 0.000000e+00 : f32
    %122 = vector.broadcast %cst_95 : f32 to vector<256x8xf32>
    %123 = arith.maximumf %121, %122 : vector<256x8xf32>
    %124 = vector.shape_cast %123 : vector<256x8xf32> to vector<16x16x8xf32>
    %c2_i32_96 = arith.constant 2 : i32
    %125 = vector.broadcast %c2_i32_96 : i32 to vector<16x16x8xi32>
    %126 = arith.muli %125, %68 : vector<16x16x8xi32>
    %c0_i32_97 = arith.constant 0 : i32
    %127 = vector.broadcast %c0_i32_97 : i32 to vector<16x16x8xi32>
    %128 = arith.addi %126, %127 : vector<16x16x8xi32>
    %c32_i32_98 = arith.constant 32 : i32
    %129 = vector.broadcast %c32_i32_98 : i32 to vector<16x16x8xi32>
    %130 = arith.muli %128, %129 : vector<16x16x8xi32>
    %c2_i32_99 = arith.constant 2 : i32
    %131 = vector.broadcast %c2_i32_99 : i32 to vector<16x16x8xi32>
    %132 = arith.muli %131, %69 : vector<16x16x8xi32>
    %c1_i32 = arith.constant 1 : i32
    %133 = vector.broadcast %c1_i32 : i32 to vector<16x16x8xi32>
    %134 = arith.addi %132, %133 : vector<16x16x8xi32>
    %135 = arith.addi %130, %134 : vector<16x16x8xi32>
    %136 = arith.cmpi eq, %67, %135 : vector<16x16x8xi32>
    %cst_100 = arith.constant 0.000000e+00 : f32
    %137 = vector.broadcast %cst_100 : f32 to vector<16x16x8xf32>
    %138 = arith.select %136, %11, %137 : vector<16x16x8xi1>, vector<16x16x8xf32>
    %139 = arith.addf %138, %124 : vector<16x16x8xf32>
    %cst_101 = arith.constant 0.000000e+00 : f32
    %140 = vector.broadcast %cst_101 : f32 to vector<16x16x8xf32>
    %141 = arith.maximumf %139, %140 : vector<16x16x8xf32>
    %142 = tpu.concatenate %105, %141 in 2 : vector<16x16x8xf32>, vector<16x16x8xf32> -> vector<16x16x16xf32>
    %143 = vector.shape_cast %142 : vector<16x16x16xf32> to vector<16x256xf32>
    %c0_102 = arith.constant 0 : index
    %c0_103 = arith.constant 0 : index
    %144 = vector.load %arg11[%c0_102, %c0_103] : memref<1x4xf32, #tpu.memory_space<vmem>>, vector<1x4xf32>
    %145 = vector.broadcast %144 : vector<1x4xf32> to vector<256x4xf32>
    %146 = arith.mulf %50, %145 : vector<256x4xf32>
    %c0_104 = arith.constant 0 : index
    %c0_105 = arith.constant 0 : index
    %147 = vector.load %arg12[%c0_104, %c0_105] : memref<1x4xf32, #tpu.memory_space<vmem>>, vector<1x4xf32>
    %148 = vector.broadcast %147 : vector<1x4xf32> to vector<256x4xf32>
    %149 = arith.addf %146, %148 : vector<256x4xf32>
    %cst_106 = arith.constant 0.000000e+00 : f32
    %150 = vector.broadcast %cst_106 : f32 to vector<256x4xf32>
    %151 = arith.maximumf %149, %150 : vector<256x4xf32>
    %c0_107 = arith.constant 0 : index
    %c0_108 = arith.constant 0 : index
    %152 = vector.load %arg6[%c0_107, %c0_108] : memref<4x8xf32, #tpu.memory_space<vmem>>, vector<4x8xf32>
    %cst_109 = arith.constant dense<0.000000e+00> : vector<256x8xf32>
    %153 = tpu.matmul %151, %152, %cst_109 {dimension_numbers = #tpu.dot_dimension_numbers<[1], [0], [0], [1], [0, 0, 1, 1], [], []>} : vector<256x4xf32>, vector<4x8xf32>, vector<256x8xf32> -> vector<256x8xf32>
    %c0_110 = arith.constant 0 : index
    %c0_111 = arith.constant 0 : index
    %154 = vector.load %arg13[%c0_110, %c0_111] : memref<1x8xf32, #tpu.memory_space<vmem>>, vector<1x8xf32>
    %155 = vector.broadcast %154 : vector<1x8xf32> to vector<256x8xf32>
    %156 = arith.mulf %153, %155 : vector<256x8xf32>
    %c0_112 = arith.constant 0 : index
    %c0_113 = arith.constant 0 : index
    %157 = vector.load %arg14[%c0_112, %c0_113] : memref<1x8xf32, #tpu.memory_space<vmem>>, vector<1x8xf32>
    %158 = vector.broadcast %157 : vector<1x8xf32> to vector<256x8xf32>
    %159 = arith.addf %156, %158 : vector<256x8xf32>
    %cst_114 = arith.constant 0.000000e+00 : f32
    %160 = vector.broadcast %cst_114 : f32 to vector<256x8xf32>
    %161 = arith.maximumf %159, %160 : vector<256x8xf32>
    %162 = vector.shape_cast %161 : vector<256x8xf32> to vector<16x16x8xf32>
    %c2_i32_115 = arith.constant 2 : i32
    %163 = vector.broadcast %c2_i32_115 : i32 to vector<16x16x8xi32>
    %164 = arith.muli %163, %68 : vector<16x16x8xi32>
    %c1_i32_116 = arith.constant 1 : i32
    %165 = vector.broadcast %c1_i32_116 : i32 to vector<16x16x8xi32>
    %166 = arith.addi %164, %165 : vector<16x16x8xi32>
    %c32_i32_117 = arith.constant 32 : i32
    %167 = vector.broadcast %c32_i32_117 : i32 to vector<16x16x8xi32>
    %168 = arith.muli %166, %167 : vector<16x16x8xi32>
    %c2_i32_118 = arith.constant 2 : i32
    %169 = vector.broadcast %c2_i32_118 : i32 to vector<16x16x8xi32>
    %170 = arith.muli %169, %69 : vector<16x16x8xi32>
    %c0_i32_119 = arith.constant 0 : i32
    %171 = vector.broadcast %c0_i32_119 : i32 to vector<16x16x8xi32>
    %172 = arith.addi %170, %171 : vector<16x16x8xi32>
    %173 = arith.addi %168, %172 : vector<16x16x8xi32>
    %174 = arith.cmpi eq, %67, %173 : vector<16x16x8xi32>
    %cst_120 = arith.constant 0.000000e+00 : f32
    %175 = vector.broadcast %cst_120 : f32 to vector<16x16x8xf32>
    %176 = arith.select %174, %11, %175 : vector<16x16x8xi1>, vector<16x16x8xf32>
    %177 = arith.addf %176, %162 : vector<16x16x8xf32>
    %cst_121 = arith.constant 0.000000e+00 : f32
    %178 = vector.broadcast %cst_121 : f32 to vector<16x16x8xf32>
    %179 = arith.maximumf %177, %178 : vector<16x16x8xf32>
    %c0_122 = arith.constant 0 : index
    %c0_123 = arith.constant 0 : index
    %180 = vector.load %arg11[%c0_122, %c0_123] : memref<1x4xf32, #tpu.memory_space<vmem>>, vector<1x4xf32>
    %181 = vector.broadcast %180 : vector<1x4xf32> to vector<256x4xf32>
    %182 = arith.mulf %65, %181 : vector<256x4xf32>
    %c0_124 = arith.constant 0 : index
    %c0_125 = arith.constant 0 : index
    %183 = vector.load %arg12[%c0_124, %c0_125] : memref<1x4xf32, #tpu.memory_space<vmem>>, vector<1x4xf32>
    %184 = vector.broadcast %183 : vector<1x4xf32> to vector<256x4xf32>
    %185 = arith.addf %182, %184 : vector<256x4xf32>
    %cst_126 = arith.constant 0.000000e+00 : f32
    %186 = vector.broadcast %cst_126 : f32 to vector<256x4xf32>
    %187 = arith.maximumf %185, %186 : vector<256x4xf32>
    %c0_127 = arith.constant 0 : index
    %c0_128 = arith.constant 0 : index
    %188 = vector.load %arg6[%c0_127, %c0_128] : memref<4x8xf32, #tpu.memory_space<vmem>>, vector<4x8xf32>
    %cst_129 = arith.constant dense<0.000000e+00> : vector<256x8xf32>
    %189 = tpu.matmul %187, %188, %cst_129 {dimension_numbers = #tpu.dot_dimension_numbers<[1], [0], [0], [1], [0, 0, 1, 1], [], []>} : vector<256x4xf32>, vector<4x8xf32>, vector<256x8xf32> -> vector<256x8xf32>
    %c0_130 = arith.constant 0 : index
    %c0_131 = arith.constant 0 : index
    %190 = vector.load %arg13[%c0_130, %c0_131] : memref<1x8xf32, #tpu.memory_space<vmem>>, vector<1x8xf32>
    %191 = vector.broadcast %190 : vector<1x8xf32> to vector<256x8xf32>
    %192 = arith.mulf %189, %191 : vector<256x8xf32>
    %c0_132 = arith.constant 0 : index
    %c0_133 = arith.constant 0 : index
    %193 = vector.load %arg14[%c0_132, %c0_133] : memref<1x8xf32, #tpu.memory_space<vmem>>, vector<1x8xf32>
    %194 = vector.broadcast %193 : vector<1x8xf32> to vector<256x8xf32>
    %195 = arith.addf %192, %194 : vector<256x8xf32>
    %cst_134 = arith.constant 0.000000e+00 : f32
    %196 = vector.broadcast %cst_134 : f32 to vector<256x8xf32>
    %197 = arith.maximumf %195, %196 : vector<256x8xf32>
    %198 = vector.shape_cast %197 : vector<256x8xf32> to vector<16x16x8xf32>
    %c2_i32_135 = arith.constant 2 : i32
    %199 = vector.broadcast %c2_i32_135 : i32 to vector<16x16x8xi32>
    %200 = arith.muli %199, %68 : vector<16x16x8xi32>
    %c1_i32_136 = arith.constant 1 : i32
    %201 = vector.broadcast %c1_i32_136 : i32 to vector<16x16x8xi32>
    %202 = arith.addi %200, %201 : vector<16x16x8xi32>
    %c32_i32_137 = arith.constant 32 : i32
    %203 = vector.broadcast %c32_i32_137 : i32 to vector<16x16x8xi32>
    %204 = arith.muli %202, %203 : vector<16x16x8xi32>
    %c2_i32_138 = arith.constant 2 : i32
    %205 = vector.broadcast %c2_i32_138 : i32 to vector<16x16x8xi32>
    %206 = arith.muli %205, %69 : vector<16x16x8xi32>
    %c1_i32_139 = arith.constant 1 : i32
    %207 = vector.broadcast %c1_i32_139 : i32 to vector<16x16x8xi32>
    %208 = arith.addi %206, %207 : vector<16x16x8xi32>
    %209 = arith.addi %204, %208 : vector<16x16x8xi32>
    %210 = arith.cmpi eq, %67, %209 : vector<16x16x8xi32>
    %cst_140 = arith.constant 0.000000e+00 : f32
    %211 = vector.broadcast %cst_140 : f32 to vector<16x16x8xf32>
    %212 = arith.select %210, %11, %211 : vector<16x16x8xi1>, vector<16x16x8xf32>
    %213 = arith.addf %212, %198 : vector<16x16x8xf32>
    %cst_141 = arith.constant 0.000000e+00 : f32
    %214 = vector.broadcast %cst_141 : f32 to vector<16x16x8xf32>
    %215 = arith.maximumf %213, %214 : vector<16x16x8xf32>
    %216 = tpu.concatenate %179, %215 in 2 : vector<16x16x8xf32>, vector<16x16x8xf32> -> vector<16x16x16xf32>
    %217 = vector.shape_cast %216 : vector<16x16x16xf32> to vector<16x256xf32>
    %c0_142 = arith.constant 0 : index
    %c0_143 = arith.constant 0 : index
    %c0_144 = arith.constant 0 : index
    %c0_145 = arith.constant 0 : index
    %218 = vector.load %arg15[%c0_142, %c0_143, %c0_144, %c0_145] : memref<1x2x16x256xf32, #tpu.memory_space<vmem>>, vector<1x1x16x256xf32>
    %219 = vector.shape_cast %218 : vector<1x1x16x256xf32> to vector<16x256xf32>
    %220 = vector.shape_cast %143 : vector<16x256xf32> to vector<1x1x16x256xf32>
    tpu.vector_store %arg15[%c0_142, %c0_143, %c0_144, %c0_145], %220 {strides = array<i32>} : memref<1x2x16x256xf32, #tpu.memory_space<vmem>>, vector<1x1x16x256xf32>,
    %c0_146 = arith.constant 0 : index
    %c1_147 = arith.constant 1 : index
    %c0_148 = arith.constant 0 : index
    %c0_149 = arith.constant 0 : index
    %221 = vector.load %arg15[%c0_146, %c1_147, %c0_148, %c0_149] : memref<1x2x16x256xf32, #tpu.memory_space<vmem>>, vector<1x1x16x256xf32>
    %222 = vector.shape_cast %221 : vector<1x1x16x256xf32> to vector<16x256xf32>
    %223 = vector.shape_cast %217 : vector<16x256xf32> to vector<1x1x16x256xf32>
    tpu.vector_store %arg15[%c0_146, %c1_147, %c0_148, %c0_149], %223 {strides = array<i32>} : memref<1x2x16x256xf32, #tpu.memory_space<vmem>>, vector<1x1x16x256xf32>,
    return
  }
  func.func @transform_0(%arg0: i32) -> (i32, i32, i32, i32) {
    %c0_i32 = arith.constant 0 : i32
    %c0_i32_0 = arith.constant 0 : i32
    %c0_i32_1 = arith.constant 0 : i32
    %c0_i32_2 = arith.constant 0 : i32
    return %arg0, %c0_i32, %c0_i32_0, %c0_i32_1 : i32, i32, i32, i32
  }
  func.func @transform_1(%arg0: i32) -> (i32, i32, i32, i32) {
    %c0_i32 = arith.constant 0 : i32
    %c0_i32_0 = arith.constant 0 : i32
    %c0_i32_1 = arith.constant 0 : i32
    %c0_i32_2 = arith.constant 0 : i32
    return %arg0, %c0_i32, %c0_i32_0, %c0_i32_1 : i32, i32, i32, i32
  }
  func.func @transform_2(%arg0: i32) -> (i32, i32) {
    %c0_i32 = arith.constant 0 : i32
    %c0_i32_0 = arith.constant 0 : i32
    %c0_i32_1 = arith.constant 0 : i32
    return %c0_i32, %c0_i32_0 : i32, i32
  }
  func.func @transform_3(%arg0: i32) -> (i32, i32) {
    %c0_i32 = arith.constant 0 : i32
    %c0_i32_0 = arith.constant 0 : i32
    %c0_i32_1 = arith.constant 0 : i32
    return %c0_i32, %c0_i32_0 : i32, i32
  }
  func.func @transform_4(%arg0: i32) -> (i32, i32, i32, i32) {
    %c0_i32 = arith.constant 0 : i32
    %c0_i32_0 = arith.constant 0 : i32
    %c0_i32_1 = arith.constant 0 : i32
    %c0_i32_2 = arith.constant 0 : i32
    %c0_i32_3 = arith.constant 0 : i32
    return %c0_i32, %c0_i32_0, %c0_i32_1, %c0_i32_2 : i32, i32, i32, i32
  }
  func.func @transform_5(%arg0: i32) -> (i32, i32) {
    %c0_i32 = arith.constant 0 : i32
    %c0_i32_0 = arith.constant 0 : i32
    %c0_i32_1 = arith.constant 0 : i32
    return %c0_i32, %c0_i32_0 : i32, i32
  }
  func.func @transform_6(%arg0: i32) -> (i32, i32) {
    %c0_i32 = arith.constant 0 : i32
    %c0_i32_0 = arith.constant 0 : i32
    %c0_i32_1 = arith.constant 0 : i32
    return %c0_i32, %c0_i32_0 : i32, i32
  }
  func.func @transform_7(%arg0: i32) -> (i32, i32) {
    %c0_i32 = arith.constant 0 : i32
    %c0_i32_0 = arith.constant 0 : i32
    %c0_i32_1 = arith.constant 0 : i32
    return %c0_i32, %c0_i32_0 : i32, i32
  }
  func.func @transform_8(%arg0: i32) -> (i32, i32) {
    %c0_i32 = arith.constant 0 : i32
    %c0_i32_0 = arith.constant 0 : i32
    %c0_i32_1 = arith.constant 0 : i32
    return %c0_i32, %c0_i32_0 : i32, i32
  }
  func.func @transform_9(%arg0: i32) -> (i32, i32) {
    %c0_i32 = arith.constant 0 : i32
    %c0_i32_0 = arith.constant 0 : i32
    %c0_i32_1 = arith.constant 0 : i32
    return %c0_i32, %c0_i32_0 : i32, i32
  }
  func.func @transform_10(%arg0: i32) -> (i32, i32) {
    %c0_i32 = arith.constant 0 : i32
    %c0_i32_0 = arith.constant 0 : i32
    %c0_i32_1 = arith.constant 0 : i32
    return %c0_i32, %c0_i32_0 : i32, i32
  }
  func.func @transform_11(%arg0: i32) -> (i32, i32) {
    %c0_i32 = arith.constant 0 : i32
    %c0_i32_0 = arith.constant 0 : i32
    %c0_i32_1 = arith.constant 0 : i32
    return %c0_i32, %c0_i32_0 : i32, i32
  }
  func.func @transform_12(%arg0: i32) -> (i32, i32) {
    %c0_i32 = arith.constant 0 : i32
    %c0_i32_0 = arith.constant 0 : i32
    %c0_i32_1 = arith.constant 0 : i32
    return %c0_i32, %c0_i32_0 : i32, i32
  }
  func.func @transform_13(%arg0: i32) -> (i32, i32) {
    %c0_i32 = arith.constant 0 : i32
    %c0_i32_0 = arith.constant 0 : i32
    %c0_i32_1 = arith.constant 0 : i32
    return %c0_i32, %c0_i32_0 : i32, i32
  }
  func.func @transform_14(%arg0: i32) -> (i32, i32, i32, i32) {
    %c0_i32 = arith.constant 0 : i32
    %c0_i32_0 = arith.constant 0 : i32
    %c0_i32_1 = arith.constant 0 : i32
    %c0_i32_2 = arith.constant 0 : i32
    return %arg0, %c0_i32, %c0_i32_0, %c0_i32_1 : i32, i32, i32, i32
  }
}

</mosaic_0001>

<llo_original>
// kernel: upsampling_bottleneck_forward.1
$region0: #{upsampling_bottleneck_forward.1}
  #allocation0 [shape = 'u32[]', space=smem, size = 0x4, offset = 0x4, fixed_abs, tag = 'smem constant byte address 0x4 - core index']
  #allocation1 [shape = 'u32[144,128]{1,0:T(1,128)}', space=vmem, size = 0x12000, scoped, tag = 'internal scratch']
  %s0 = inlined_call_operand.hbm [shape: f32[2,16,16,16], index: 0, kind: input, shape index: {}]
  %s1 = inlined_call_operand.hbm [shape: s32[2,16,16,8], index: 1, kind: input, shape index: {}]
  %s2 = inlined_call_operand.hbm [shape: f32[16,8], index: 2, kind: input, shape index: {}]
  %s3 = inlined_call_operand.hbm [shape: f32[16,4], index: 3, kind: input, shape index: {}]
  %s4 = inlined_call_operand.hbm [shape: f32[3,3,4,4], index: 4, kind: input, shape index: {}]
  %s5 = inlined_call_operand.hbm [shape: f32[4,8], index: 5, kind: input, shape index: {}]
  %s6 = inlined_call_operand.hbm [shape: f32[1,8], index: 6, kind: input, shape index: {}]
  %s7 = inlined_call_operand.hbm [shape: f32[1,8], index: 7, kind: input, shape index: {}]
  %s8 = inlined_call_operand.hbm [shape: f32[1,4], index: 8, kind: input, shape index: {}]
  %s9 = inlined_call_operand.hbm [shape: f32[1,4], index: 9, kind: input, shape index: {}]
  %s10 = inlined_call_operand.hbm [shape: f32[1,4], index: 10, kind: input, shape index: {}]
  %s11 = inlined_call_operand.hbm [shape: f32[1,4], index: 11, kind: input, shape index: {}]
  %s12 = inlined_call_operand.hbm [shape: f32[1,8], index: 12, kind: input, shape index: {}]
  %s13 = inlined_call_operand.hbm [shape: f32[1,8], index: 13, kind: input, shape index: {}]
  %s14 = inlined_call_operand.hbm [shape: f32[2,2,16,256], index: 14, kind: output, shape index: {}]
  %s15 = sld [smem:[#allocation0]]
  $region145: #{upsampling_bottleneck_forward.1} parent=0
    _
  %s17 = ssub.s32 1, %s15
  %s18 = scalar_select 0, %s17, %s15
  $region1: #{upsampling_bottleneck_forward.1} parent=0
    #allocation2 [shape = 'u8[262144]{0}', space=vmem, size = 0x40000, scoped, tag = 'input window, operand 0']
    #allocation3 [shape = 's32[2]{0}', space=sflag, size = 0x8, scoped, tag = 'scoped memory for upsampling_bottleneck_forward.1']
    #allocation4 [shape = 's32[2]{0}', space=sflag, size = 0x8, scoped, tag = 'scoped memory for upsampling_bottleneck_forward.1']
    #allocation5 [shape = 'u8[262144]{0}', space=vmem, size = 0x40000, scoped, tag = 'input window, operand 1']
    #allocation6 [shape = 's32[2]{0}', space=sflag, size = 0x8, scoped, tag = 'scoped memory for upsampling_bottleneck_forward.1']
    #allocation7 [shape = 'u8[8192]{0}', space=vmem, size = 0x2000, scoped, tag = 'input window, operand 2, single buffered']
    #allocation8 [shape = 'u8[8192]{0}', space=vmem, size = 0x2000, scoped, tag = 'input window, operand 3, single buffered']
    #allocation9 [shape = 's32[1]{0}', space=sflag, size = 0x4, scoped, tag = 'scoped memory for upsampling_bottleneck_forward.1']
    #allocation10 [shape = 'u8[18432]{0}', space=vmem, size = 0x4800, scoped, tag = 'input window, operand 4, single buffered']
    #allocation11 [shape = 'u8[2048]{0}', space=vmem, size = 0x800, scoped, tag = 'input window, operand 5, single buffered']
    #allocation12 [shape = 's32[1]{0}', space=sflag, size = 0x4, scoped, tag = 'scoped memory for upsampling_bottleneck_forward.1']
    #allocation13 [shape = 'u8[512]{0}', space=vmem, size = 0x400, scoped, tag = 'input window, operand 6, single buffered']
    #allocation14 [shape = 'u8[512]{0}', space=vmem, size = 0x400, scoped, tag = 'input window, operand 7, single buffered']
    #allocation15 [shape = 's32[1]{0}', space=sflag, size = 0x4, scoped, tag = 'scoped memory for upsampling_bottleneck_forward.1']
    #allocation16 [shape = 'u8[512]{0}', space=vmem, size = 0x400, scoped, tag = 'input window, operand 8, single buffered']
    #allocation17 [shape = 'u8[512]{0}', space=vmem, size = 0x400, scoped, tag = 'input window, operand 9, single buffered']
    #allocation18 [shape = 's32[1]{0}', space=sflag, size = 0x4, scoped, tag = 'scoped memory for upsampling_bottleneck_forward.1']
    #allocation19 [shape = 'u8[512]{0}', space=vmem, size = 0x400, scoped, tag = 'input window, operand 10, single buffered']
    #allocation20 [shape = 'u8[512]{0}', space=vmem, size = 0x400, scoped, tag = 'input window, operand 11, single buffered']
    #allocation21 [shape = 's32[1]{0}', space=sflag, size = 0x4, scoped, tag = 'scoped memory for upsampling_bottleneck_forward.1']
    #allocation22 [shape = 'u8[512]{0}', space=vmem, size = 0x400, scoped, tag = 'input window, operand 12, single buffered']
    #allocation23 [shape = 'u8[512]{0}', space=vmem, size = 0x400, scoped, tag = 'input window, operand 13, single buffered']
    #allocation24 [shape = 's32[1]{0}', space=sflag, size = 0x4, scoped, tag = 'scoped memory for upsampling_bottleneck_forward.1']
    #allocation25 [shape = 'u8[65536]{0}', space=vmem, size = 0x10000, scoped, tag = 'output window, operand 0']
    %19 = vsyncpa [#allocation3], 0
    %s20 = scalar_lea.sflag [#allocation3], 1
    %21 = vsyncpa %s20, 0
    %22 = vsyncpa [#allocation6], 0
    %s23 = scalar_lea.sflag [#allocation6], 1
    %24 = vsyncpa %s23, 0
    %25 = vsyncpa [#allocation9], 0
    %26 = vsyncpa [#allocation12], 0
    %27 = vsyncpa [#allocation15], 0
    %28 = vsyncpa [#allocation18], 0
    %29 = vsyncpa [#allocation21], 0
    %30 = vsyncpa [#allocation24], 0
    %31 = vsyncpa [#allocation4], 0
    %s32 = scalar_lea.sflag [#allocation4], 1
    %33 = vsyncpa %s32, 0
    loop: start=0, step=1, limit=4
    $region2: #{upsampling_bottleneck_forward.1} parent=1 // loop_pre_header
      _
    $region3: #{upsampling_bottleneck_forward.1} parent=1 // loop_header
      %s35 = sphi 0, %s39
      %p36 = scmp.ge.s32.totalorder %s35, 4
      %s45 = sphi 0, %s47
      %s48 = sphi 0, %s45
      %s49 = sphi 0, %s48
      %s65 = sphi 0, %s49
      %s71 = sphi 0, %s73
      %s74 = sphi 0, %s71
      %s75 = sphi 0, %s74
      %s91 = sphi 0, %s75
      %s95 = sphi 0, %s95
      %s97 = sphi 0, %s95
      %s98 = sphi 0, %s97
      %s112 = sphi 0, %s98
      %s116 = sphi 0, %s116
      %s118 = sphi 0, %s116
      %s119 = sphi 0, %s118
      %s133 = sphi 0, %s119
      %s137 = sphi 0, %s137
      %s139 = sphi 0, %s137
      %s140 = sphi 0, %s139
      %s154 = sphi 0, %s140
      %s158 = sphi 0, %s158
      %s160 = sphi 0, %s158
      %s161 = sphi 0, %s160
      %s175 = sphi 0, %s161
      %s179 = sphi 0, %s179
      %s181 = sphi 0, %s179
      %s182 = sphi 0, %s181
      %s196 = sphi 0, %s182
      %s200 = sphi 0, %s200
      %s202 = sphi 0, %s200
      %s203 = sphi 0, %s202
      %s217 = sphi 0, %s203
      %s221 = sphi 0, %s221
      %s223 = sphi 0, %s221
      %s224 = sphi 0, %s223
      %s238 = sphi 0, %s224
      %s242 = sphi 0, %s242
      %s244 = sphi 0, %s242
      %s245 = sphi 0, %s244
      %s259 = sphi 0, %s245
      %s263 = sphi 0, %s263
      %s265 = sphi 0, %s263
      %s266 = sphi 0, %s265
      %s280 = sphi 0, %s266
      %s284 = sphi 0, %s284
      %s286 = sphi 0, %s284
      %s287 = sphi 0, %s286
      %s301 = sphi 0, %s287
      %s305 = sphi 0, %s305
      %s307 = sphi 0, %s305
      %s308 = sphi 0, %s307
      %s322 = sphi 0, %s308
      %s326 = sphi 0, %s326
      %s328 = sphi 0, %s326
      %s329 = sphi 0, %s328
      %s343 = sphi 0, %s329
      %s349 = sphi 0, %s351
      %s352 = sphi 0, %s349
      %s353 = sphi 0, %s352
      %s369 = sphi 0, %s353
    $region4: #{upsampling_bottleneck_forward.1} parent=1 // loop_header_branch
      %38 = sbr.rel (%p36) target = $region8
    $region5: #{upsampling_bottleneck_forward.1} parent=1 // loop_body
      %s40 = ssub.s32 %s35, 1
      %s41 = ssub.s32 %s35, 2
      %s42 = sadd.s32 %s35, 1
      %s43 = ssub.s32 %s35, %s42
      %p44 = scmp.eq.s32.totalorder %s43, 0
      %s46 = sadd.s32 %s45, 1
      %s47 = scalar_select %p44, %s45, %s46
      %p50 = pneg %p44
      %p51 = scmp.eq.s32.totalorder %s35, 1
      %p52 = por %p50, %p51
      %p53 = scmp.ne.s32.totalorder %s45, %s48
      %p54 = scmp.eq.s32.totalorder %s35, 0
      %p55 = por %p53, %p54
      %p56 = scmp.ne.s32.totalorder %s45, %s48
      %p57 = scmp.eq.s32.totalorder %s40, 1
      %p58 = por %p56, %p57
      %p59 = scmp.ne.s32.totalorder %s48, %s49
      %p60 = scmp.eq.s32.totalorder %s40, 0
      %p61 = por %p59, %p60
      %p62 = scmp.ne.s32.totalorder %s48, %s49
      %p63 = scmp.eq.s32.totalorder %s41, 1
      %p64 = por %p62, %p63
      %p66 = scmp.ne.s32.totalorder %s49, %s65
      %p67 = scmp.eq.s32.totalorder %s41, 0
      %p68 = por %p66, %p67
      %s69 = ssub.s32 %s35, %s42
      %p70 = scmp.eq.s32.totalorder %s69, 0
      %s72 = sadd.s32 %s71, 1
      %s73 = scalar_select %p70, %s71, %s72
      %p76 = pneg %p70
      %p77 = scmp.eq.s32.totalorder %s35, 1
      %p78 = por %p76, %p77
      %p79 = scmp.ne.s32.totalorder %s71, %s74
      %p80 = scmp.eq.s32.totalorder %s35, 0
      %p81 = por %p79, %p80
      %p82 = scmp.ne.s32.totalorder %s71, %s74
      %p83 = scmp.eq.s32.totalorder %s40, 1
      %p84 = por %p82, %p83
      %p85 = scmp.ne.s32.totalorder %s74, %s75
      %p86 = scmp.eq.s32.totalorder %s40, 0
      %p87 = por %p85, %p86
      %p88 = scmp.ne.s32.totalorder %s74, %s75
      %p89 = scmp.eq.s32.totalorder %s41, 1
      %p90 = por %p88, %p89
      %p92 = scmp.ne.s32.totalorder %s75, %s91
      %p93 = scmp.eq.s32.totalorder %s41, 0
      %p94 = por %p92, %p93
      %s96 = sadd.s32 %s95, 1
      %p99 = scmp.eq.s32.totalorder %s35, 1
      %p100 = scmp.ne.s32.totalorder %s95, %s97
      %p101 = scmp.eq.s32.totalorder %s35, 0
      %p102 = por %p100, %p101
      %p103 = scmp.ne.s32.totalorder %s95, %s97
      %p104 = scmp.eq.s32.totalorder %s40, 1
      %p105 = por %p103, %p104
      %p106 = scmp.ne.s32.totalorder %s97, %s98
      %p107 = scmp.eq.s32.totalorder %s40, 0
      %p108 = por %p106, %p107
      %p109 = scmp.ne.s32.totalorder %s97, %s98
      %p110 = scmp.eq.s32.totalorder %s41, 1
      %p111 = por %p109, %p110
      %p113 = scmp.ne.s32.totalorder %s98, %s112
      %p114 = scmp.eq.s32.totalorder %s41, 0
      %p115 = por %p113, %p114
      %s117 = sadd.s32 %s116, 1
      %p120 = scmp.eq.s32.totalorder %s35, 1
      %p121 = scmp.ne.s32.totalorder %s116, %s118
      %p122 = scmp.eq.s32.totalorder %s35, 0
      %p123 = por %p121, %p122
      %p124 = scmp.ne.s32.totalorder %s116, %s118
      %p125 = scmp.eq.s32.totalorder %s40, 1
      %p126 = por %p124, %p125
      %p127 = scmp.ne.s32.totalorder %s118, %s119
      %p128 = scmp.eq.s32.totalorder %s40, 0
      %p129 = por %p127, %p128
      %p130 = scmp.ne.s32.totalorder %s118, %s119
      %p131 = scmp.eq.s32.totalorder %s41, 1
      %p132 = por %p130, %p131
      %p134 = scmp.ne.s32.totalorder %s119, %s133
      %p135 = scmp.eq.s32.totalorder %s41, 0
      %p136 = por %p134, %p135
      %s138 = sadd.s32 %s137, 1
      %p141 = scmp.eq.s32.totalorder %s35, 1
      %p142 = scmp.ne.s32.totalorder %s137, %s139
      %p143 = scmp.eq.s32.totalorder %s35, 0
      %p144 = por %p142, %p143
      %p145 = scmp.ne.s32.totalorder %s137, %s139
      %p146 = scmp.eq.s32.totalorder %s40, 1
      %p147 = por %p145, %p146
      %p148 = scmp.ne.s32.totalorder %s139, %s140
      %p149 = scmp.eq.s32.totalorder %s40, 0
      %p150 = por %p148, %p149
      %p151 = scmp.ne.s32.totalorder %s139, %s140
      %p152 = scmp.eq.s32.totalorder %s41, 1
      %p153 = por %p151, %p152
      %p155 = scmp.ne.s32.totalorder %s140, %s154
      %p156 = scmp.eq.s32.totalorder %s41, 0
      %p157 = por %p155, %p156
      %s159 = sadd.s32 %s158, 1
      %p162 = scmp.eq.s32.totalorder %s35, 1
      %p163 = scmp.ne.s32.totalorder %s158, %s160
      %p164 = scmp.eq.s32.totalorder %s35, 0
      %p165 = por %p163, %p164
      %p166 = scmp.ne.s32.totalorder %s158, %s160
      %p167 = scmp.eq.s32.totalorder %s40, 1
      %p168 = por %p166, %p167
      %p169 = scmp.ne.s32.totalorder %s160, %s161
      %p170 = scmp.eq.s32.totalorder %s40, 0
      %p171 = por %p169, %p170
      %p172 = scmp.ne.s32.totalorder %s160, %s161
      %p173 = scmp.eq.s32.totalorder %s41, 1
      %p174 = por %p172, %p173
      %p176 = scmp.ne.s32.totalorder %s161, %s175
      %p177 = scmp.eq.s32.totalorder %s41, 0
      %p178 = por %p176, %p177
      %s180 = sadd.s32 %s179, 1
      %p183 = scmp.eq.s32.totalorder %s35, 1
      %p184 = scmp.ne.s32.totalorder %s179, %s181
      %p185 = scmp.eq.s32.totalorder %s35, 0
      %p186 = por %p184, %p185
      %p187 = scmp.ne.s32.totalorder %s179, %s181
      %p188 = scmp.eq.s32.totalorder %s40, 1
      %p189 = por %p187, %p188
      %p190 = scmp.ne.s32.totalorder %s181, %s182
      %p191 = scmp.eq.s32.totalorder %s40, 0
      %p192 = por %p190, %p191
      %p193 = scmp.ne.s32.totalorder %s181, %s182
      %p194 = scmp.eq.s32.totalorder %s41, 1
      %p195 = por %p193, %p194
      %p197 = scmp.ne.s32.totalorder %s182, %s196
      %p198 = scmp.eq.s32.totalorder %s41, 0
      %p199 = por %p197, %p198
      %s201 = sadd.s32 %s200, 1
      %p204 = scmp.eq.s32.totalorder %s35, 1
      %p205 = scmp.ne.s32.totalorder %s200, %s202
      %p206 = scmp.eq.s32.totalorder %s35, 0
      %p207 = por %p205, %p206
      %p208 = scmp.ne.s32.totalorder %s200, %s202
      %p209 = scmp.eq.s32.totalorder %s40, 1
      %p210 = por %p208, %p209
      %p211 = scmp.ne.s32.totalorder %s202, %s203
      %p212 = scmp.eq.s32.totalorder %s40, 0
      %p213 = por %p211, %p212
      %p214 = scmp.ne.s32.totalorder %s202, %s203
      %p215 = scmp.eq.s32.totalorder %s41, 1
      %p216 = por %p214, %p215
      %p218 = scmp.ne.s32.totalorder %s203, %s217
      %p219 = scmp.eq.s32.totalorder %s41, 0
      %p220 = por %p218, %p219
      %s222 = sadd.s32 %s221, 1
      %p225 = scmp.eq.s32.totalorder %s35, 1
      %p226 = scmp.ne.s32.totalorder %s221, %s223
      %p227 = scmp.eq.s32.totalorder %s35, 0
      %p228 = por %p226, %p227
      %p229 = scmp.ne.s32.totalorder %s221, %s223
      %p230 = scmp.eq.s32.totalorder %s40, 1
      %p231 = por %p229, %p230
      %p232 = scmp.ne.s32.totalorder %s223, %s224
      %p233 = scmp.eq.s32.totalorder %s40, 0
      %p234 = por %p232, %p233
      %p235 = scmp.ne.s32.totalorder %s223, %s224
      %p236 = scmp.eq.s32.totalorder %s41, 1
      %p237 = por %p235, %p236
      %p239 = scmp.ne.s32.totalorder %s224, %s238
      %p240 = scmp.eq.s32.totalorder %s41, 0
      %p241 = por %p239, %p240
      %s243 = sadd.s32 %s242, 1
      %p246 = scmp.eq.s32.totalorder %s35, 1
      %p247 = scmp.ne.s32.totalorder %s242, %s244
      %p248 = scmp.eq.s32.totalorder %s35, 0
      %p249 = por %p247, %p248
      %p250 = scmp.ne.s32.totalorder %s242, %s244
      %p251 = scmp.eq.s32.totalorder %s40, 1
      %p252 = por %p250, %p251
      %p253 = scmp.ne.s32.totalorder %s244, %s245
      %p254 = scmp.eq.s32.totalorder %s40, 0
      %p255 = por %p253, %p254
      %p256 = scmp.ne.s32.totalorder %s244, %s245
      %p257 = scmp.eq.s32.totalorder %s41, 1
      %p258 = por %p256, %p257
      %p260 = scmp.ne.s32.totalorder %s245, %s259
      %p261 = scmp.eq.s32.totalorder %s41, 0
      %p262 = por %p260, %p261
      %s264 = sadd.s32 %s263, 1
      %p267 = scmp.eq.s32.totalorder %s35, 1
      %p268 = scmp.ne.s32.totalorder %s263, %s265
      %p269 = scmp.eq.s32.totalorder %s35, 0
      %p270 = por %p268, %p269
      %p271 = scmp.ne.s32.totalorder %s263, %s265
      %p272 = scmp.eq.s32.totalorder %s40, 1
      %p273 = por %p271, %p272
      %p274 = scmp.ne.s32.totalorder %s265, %s266
      %p275 = scmp.eq.s32.totalorder %s40, 0
      %p276 = por %p274, %p275
      %p277 = scmp.ne.s32.totalorder %s265, %s266
      %p278 = scmp.eq.s32.totalorder %s41, 1
      %p279 = por %p277, %p278
      %p281 = scmp.ne.s32.totalorder %s266, %s280
      %p282 = scmp.eq.s32.totalorder %s41, 0
      %p283 = por %p281, %p282
      %s285 = sadd.s32 %s284, 1
      %p288 = scmp.eq.s32.totalorder %s35, 1
      %p289 = scmp.ne.s32.totalorder %s284, %s286
      %p290 = scmp.eq.s32.totalorder %s35, 0
      %p291 = por %p289, %p290
      %p292 = scmp.ne.s32.totalorder %s284, %s286
      %p293 = scmp.eq.s32.totalorder %s40, 1
      %p294 = por %p292, %p293
      %p295 = scmp.ne.s32.totalorder %s286, %s287
      %p296 = scmp.eq.s32.totalorder %s40, 0
      %p297 = por %p295, %p296
      %p298 = scmp.ne.s32.totalorder %s286, %s287
      %p299 = scmp.eq.s32.totalorder %s41, 1
      %p300 = por %p298, %p299
      %p302 = scmp.ne.s32.totalorder %s287, %s301
      %p303 = scmp.eq.s32.totalorder %s41, 0
      %p304 = por %p302, %p303
      %s306 = sadd.s32 %s305, 1
      %p309 = scmp.eq.s32.totalorder %s35, 1
      %p310 = scmp.ne.s32.totalorder %s305, %s307
      %p311 = scmp.eq.s32.totalorder %s35, 0
      %p312 = por %p310, %p311
      %p313 = scmp.ne.s32.totalorder %s305, %s307
      %p314 = scmp.eq.s32.totalorder %s40, 1
      %p315 = por %p313, %p314
      %p316 = scmp.ne.s32.totalorder %s307, %s308
      %p317 = scmp.eq.s32.totalorder %s40, 0
      %p318 = por %p316, %p317
      %p319 = scmp.ne.s32.totalorder %s307, %s308
      %p320 = scmp.eq.s32.totalorder %s41, 1
      %p321 = por %p319, %p320
      %p323 = scmp.ne.s32.totalorder %s308, %s322
      %p324 = scmp.eq.s32.totalorder %s41, 0
      %p325 = por %p323, %p324
      %s327 = sadd.s32 %s326, 1
      %p330 = scmp.eq.s32.totalorder %s35, 1
      %p331 = scmp.ne.s32.totalorder %s326, %s328
      %p332 = scmp.eq.s32.totalorder %s35, 0
      %p333 = por %p331, %p332
      %p334 = scmp.ne.s32.totalorder %s326, %s328
      %p335 = scmp.eq.s32.totalorder %s40, 1
      %p336 = por %p334, %p335
      %p337 = scmp.ne.s32.totalorder %s328, %s329
      %p338 = scmp.eq.s32.totalorder %s40, 0
      %p339 = por %p337, %p338
      %p340 = scmp.ne.s32.totalorder %s328, %s329
      %p341 = scmp.eq.s32.totalorder %s41, 1
      %p342 = por %p340, %p341
      %p344 = scmp.ne.s32.totalorder %s329, %s343
      %p345 = scmp.eq.s32.totalorder %s41, 0
      %p346 = por %p344, %p345
      %s347 = ssub.s32 %s35, %s42
      %p348 = scmp.eq.s32.totalorder %s347, 0
      %s350 = sadd.s32 %s349, 1
      %s351 = scalar_select %p348, %s349, %s350
      %p354 = pneg %p348
      %p355 = scmp.eq.s32.totalorder %s35, 1
      %p356 = por %p354, %p355
      %p357 = scmp.ne.s32.totalorder %s349, %s352
      %p358 = scmp.eq.s32.totalorder %s35, 0
      %p359 = por %p357, %p358
      %p360 = scmp.ne.s32.totalorder %s349, %s352
      %p361 = scmp.eq.s32.totalorder %s40, 1
      %p362 = por %p360, %p361
      %p363 = scmp.ne.s32.totalorder %s352, %s353
      %p364 = scmp.eq.s32.totalorder %s40, 0
      %p365 = por %p363, %p364
      %p366 = scmp.ne.s32.totalorder %s352, %s353
      %p367 = scmp.eq.s32.totalorder %s41, 1
      %p368 = por %p366, %p367
      %p370 = scmp.ne.s32.totalorder %s353, %s369
      %p371 = scmp.eq.s32.totalorder %s41, 0
      %p372 = por %p370, %p371
      %p373 = scmp.le.s32.totalorder 1, %s35
      %p374 = scmp.lt.s32.totalorder %s35, 3
      %p375 = pnand %p373, %p374
      %p376 = pneg %p375
      // Predicated region
      $region9: #{upsampling_bottleneck_forward.1} parent=5 // pred_check
        _
      $region10: #{upsampling_bottleneck_forward.1} parent=5 // pred_check_branch
        %378 = sbr.rel (%p375) target = $region12
      $region11: #{upsampling_bottleneck_forward.1} parent=5 // pred_region
        %s379 = ssub.s32 %s35, 1
        // Predicated region
        $region13: #{upsampling_bottleneck_forward.1} parent=11 // pred_check
          %p380 = pneg %p108
        $region14: #{upsampling_bottleneck_forward.1} parent=11 // pred_check_branch
          %382 = sbr.rel (%p380) target = $region16
        $region15: #{upsampling_bottleneck_forward.1} parent=11 // pred_region
          %s384 = ssub.s32 256, 256
          %385 = vsyncadd [#allocation6], %s384
          %s386 = sshll.u32 [#allocation7], 4
          %s387 = int_to_ptr.vmem [resolvable:$true] %s386
          %392 = dma.hbm_to_vmem [thread:$0]  %s2, 256, %s387, [#allocation6], 128, 128, 8
        $region16: #{upsampling_bottleneck_forward.1} parent=11 // pred_fallthru
          _
        // Predicated region
        $region17: #{upsampling_bottleneck_forward.1} parent=11 // pred_check
          %p393 = pneg %p129
        $region18: #{upsampling_bottleneck_forward.1} parent=11 // pred_check_branch
          %395 = sbr.rel (%p393) target = $region20
        $region19: #{upsampling_bottleneck_forward.1} parent=11 // pred_region
          %s397 = ssub.s32 256, 256
          %398 = vsyncadd [#allocation9], %s397
          %s399 = sshll.u32 [#allocation8], 4
          %s400 = int_to_ptr.vmem [resolvable:$true] %s399
          %405 = dma.hbm_to_vmem [thread:$0]  %s3, 256, %s400, [#allocation9], 128, 128, 8
        $region20: #{upsampling_bottleneck_forward.1} parent=11 // pred_fallthru
          _
        // Predicated region
        $region21: #{upsampling_bottleneck_forward.1} parent=11 // pred_check
          %p406 = pneg %p150
        $region22: #{upsampling_bottleneck_forward.1} parent=11 // pred_check_branch
          %408 = sbr.rel (%p406) target = $region24
        $region23: #{upsampling_bottleneck_forward.1} parent=11 // pred_region
          %s410 = ssub.s32 576, 576
          %411 = vsyncadd [#allocation9], %s410
          %s412 = sshll.u32 [#allocation10], 4
          %s413 = int_to_ptr.vmem [resolvable:$true] %s412
          %418 = dma.hbm_to_vmem [thread:$0]  %s4, 576, %s413, [#allocation9], 64, 64, 4
        $region24: #{upsampling_bottleneck_forward.1} parent=11 // pred_fallthru
          _
        // Predicated region
        $region25: #{upsampling_bottleneck_forward.1} parent=11 // pred_check
          %p419 = pneg %p171
        $region26: #{upsampling_bottleneck_forward.1} parent=11 // pred_check_branch
          %421 = sbr.rel (%p419) target = $region28
        $region27: #{upsampling_bottleneck_forward.1} parent=11 // pred_region
          %s423 = ssub.s32 64, 64
          %424 = vsyncadd [#allocation12], %s423
          %s426 = sshll.u32 [#allocation11], 4
          %s427 = int_to_ptr.vmem [resolvable:$true] %s426
          %429 = dma.hbm_to_vmem [thread:$0]  %s5, 64, %s427, [#allocation12]
        $region28: #{upsampling_bottleneck_forward.1} parent=11 // pred_fallthru
          _
        // Predicated region
        $region29: #{upsampling_bottleneck_forward.1} parent=11 // pred_check
          %p430 = pneg %p192
        $region30: #{upsampling_bottleneck_forward.1} parent=11 // pred_check_branch
          %432 = sbr.rel (%p430) target = $region32
        $region31: #{upsampling_bottleneck_forward.1} parent=11 // pred_region
          %s434 = ssub.s32 16, 16
          %435 = vsyncadd [#allocation12], %s434
          %s437 = sshll.u32 [#allocation13], 4
          %s438 = int_to_ptr.vmem [resolvable:$true] %s437
          %440 = dma.hbm_to_vmem [thread:$0]  %s6, 16, %s438, [#allocation12]
        $region32: #{upsampling_bottleneck_forward.1} parent=11 // pred_fallthru
          _
        // Predicated region
        $region33: #{upsampling_bottleneck_forward.1} parent=11 // pred_check
          %p441 = pneg %p213
        $region34: #{upsampling_bottleneck_forward.1} parent=11 // pred_check_branch
          %443 = sbr.rel (%p441) target = $region36
        $region35: #{upsampling_bottleneck_forward.1} parent=11 // pred_region
          %s445 = ssub.s32 16, 16
          %446 = vsyncadd [#allocation15], %s445
          %s448 = sshll.u32 [#allocation14], 4
          %s449 = int_to_ptr.vmem [resolvable:$true] %s448
          %451 = dma.hbm_to_vmem [thread:$0]  %s7, 16, %s449, [#allocation15]
        $region36: #{upsampling_bottleneck_forward.1} parent=11 // pred_fallthru
          _
        // Predicated region
        $region37: #{upsampling_bottleneck_forward.1} parent=11 // pred_check
          %p452 = pneg %p234
        $region38: #{upsampling_bottleneck_forward.1} parent=11 // pred_check_branch
          %454 = sbr.rel (%p452) target = $region40
        $region39: #{upsampling_bottleneck_forward.1} parent=11 // pred_region
          %s456 = ssub.s32 16, 16
          %457 = vsyncadd [#allocation15], %s456
          %s459 = sshll.u32 [#allocation16], 4
          %s460 = int_to_ptr.vmem [resolvable:$true] %s459
          %462 = dma.hbm_to_vmem [thread:$0]  %s8, 16, %s460, [#allocation15]
        $region40: #{upsampling_bottleneck_forward.1} parent=11 // pred_fallthru
          _
        // Predicated region
        $region41: #{upsampling_bottleneck_forward.1} parent=11 // pred_check
          %p463 = pneg %p255
        $region42: #{upsampling_bottleneck_forward.1} parent=11 // pred_check_branch
          %465 = sbr.rel (%p463) target = $region44
        $region43: #{upsampling_bottleneck_forward.1} parent=11 // pred_region
          %s467 = ssub.s32 16, 16
          %468 = vsyncadd [#allocation18], %s467
          %s470 = sshll.u32 [#allocation17], 4
          %s471 = int_to_ptr.vmem [resolvable:$true] %s470
          %473 = dma.hbm_to_vmem [thread:$0]  %s9, 16, %s471, [#allocation18]
        $region44: #{upsampling_bottleneck_forward.1} parent=11 // pred_fallthru
          _
        // Predicated region
        $region45: #{upsampling_bottleneck_forward.1} parent=11 // pred_check
          %p474 = pneg %p276
        $region46: #{upsampling_bottleneck_forward.1} parent=11 // pred_check_branch
          %476 = sbr.rel (%p474) target = $region48
        $region47: #{upsampling_bottleneck_forward.1} parent=11 // pred_region
          %s478 = ssub.s32 16, 16
          %479 = vsyncadd [#allocation18], %s478
          %s481 = sshll.u32 [#allocation19], 4
          %s482 = int_to_ptr.vmem [resolvable:$true] %s481
          %484 = dma.hbm_to_vmem [thread:$0]  %s10, 16, %s482, [#allocation18]
        $region48: #{upsampling_bottleneck_forward.1} parent=11 // pred_fallthru
          _
        // Predicated region
        $region49: #{upsampling_bottleneck_forward.1} parent=11 // pred_check
          %p485 = pneg %p297
        $region50: #{upsampling_bottleneck_forward.1} parent=11 // pred_check_branch
          %487 = sbr.rel (%p485) target = $region52
        $region51: #{upsampling_bottleneck_forward.1} parent=11 // pred_region
          %s489 = ssub.s32 16, 16
          %490 = vsyncadd [#allocation21], %s489
          %s492 = sshll.u32 [#allocation20], 4
          %s493 = int_to_ptr.vmem [resolvable:$true] %s492
          %495 = dma.hbm_to_vmem [thread:$0]  %s11, 16, %s493, [#allocation21]
        $region52: #{upsampling_bottleneck_forward.1} parent=11 // pred_fallthru
          _
        // Predicated region
        $region53: #{upsampling_bottleneck_forward.1} parent=11 // pred_check
          %p496 = pneg %p318
        $region54: #{upsampling_bottleneck_forward.1} parent=11 // pred_check_branch
          %498 = sbr.rel (%p496) target = $region56
        $region55: #{upsampling_bottleneck_forward.1} parent=11 // pred_region
          %s500 = ssub.s32 16, 16
          %501 = vsyncadd [#allocation21], %s500
          %s503 = sshll.u32 [#allocation22], 4
          %s504 = int_to_ptr.vmem [resolvable:$true] %s503
          %506 = dma.hbm_to_vmem [thread:$0]  %s12, 16, %s504, [#allocation21]
        $region56: #{upsampling_bottleneck_forward.1} parent=11 // pred_fallthru
          _
        // Predicated region
        $region57: #{upsampling_bottleneck_forward.1} parent=11 // pred_check
          %p507 = pneg %p339
        $region58: #{upsampling_bottleneck_forward.1} parent=11 // pred_check_branch
          %509 = sbr.rel (%p507) target = $region60
        $region59: #{upsampling_bottleneck_forward.1} parent=11 // pred_region
          %s511 = ssub.s32 16, 16
          %512 = vsyncadd [#allocation24], %s511
          %s514 = sshll.u32 [#allocation23], 4
          %s515 = int_to_ptr.vmem [resolvable:$true] %s514
          %517 = dma.hbm_to_vmem [thread:$0]  %s13, 16, %s515, [#allocation24]
        $region60: #{upsampling_bottleneck_forward.1} parent=11 // pred_fallthru
          _
      $region12: #{upsampling_bottleneck_forward.1} parent=5 // pred_fallthru
        _
      %p518 = scmp.lt.s32.totalorder %s35, 2
      // Predicated region
      $region61: #{upsampling_bottleneck_forward.1} parent=5 // pred_check
        %p519 = pneg %p518
      $region62: #{upsampling_bottleneck_forward.1} parent=5 // pred_check_branch
        %521 = sbr.rel (%p519) target = $region64
      $region63: #{upsampling_bottleneck_forward.1} parent=5 // pred_region
        // Predicated region
        $region65: #{upsampling_bottleneck_forward.1} parent=63 // pred_check
          %p522 = pneg %p55
        $region66: #{upsampling_bottleneck_forward.1} parent=63 // pred_check_branch
          %524 = sbr.rel (%p522) target = $region68
        $region67: #{upsampling_bottleneck_forward.1} parent=63 // pred_region
          %s525 = sand.u32 %s45, 1
          %s526 = scalar_lea.sflag [#allocation3], %s525
          %s527 = sand.u32 %s45, 1
          %s528 = smul.addr %s527, 256
          %s529 = scalar_lea.vmem [#allocation2], %s528
          %s531 = ssub.s32 4096, 4096
          %532 = vsyncadd %s526, %s531
          %s533 = smul.addr %s35, 32
          %s534 = smul.addr %s533, 128
          %s535 = scalar_lea.hbm %s0, %s534
          %s536 = sshll.u32 %s529, 4
          %s537 = int_to_ptr.vmem [resolvable:$true] %s536
          %542 = dma.hbm_to_vmem [thread:$0]  %s535, 4096, %s537, %s526, 128, 128, 8
        $region68: #{upsampling_bottleneck_forward.1} parent=63 // pred_fallthru
          _
        // Predicated region
        $region69: #{upsampling_bottleneck_forward.1} parent=63 // pred_check
          %p543 = pneg %p81
        $region70: #{upsampling_bottleneck_forward.1} parent=63 // pred_check_branch
          %545 = sbr.rel (%p543) target = $region72
        $region71: #{upsampling_bottleneck_forward.1} parent=63 // pred_region
          %s546 = sand.u32 %s35, 1
          %s547 = scalar_lea.sflag [#allocation6], %s546
          %s548 = sand.u32 %s71, 1
          %s549 = smul.addr %s548, 256
          %s550 = scalar_lea.vmem [#allocation5], %s549
          %s552 = ssub.s32 4096, 4096
          %553 = vsyncadd %s547, %s552
          %s554 = smul.addr %s35, 32
          %s555 = smul.addr %s554, 128
          %s556 = scalar_lea.hbm %s1, %s555
          %s557 = sshll.u32 %s550, 4
          %s558 = int_to_ptr.vmem [resolvable:$true] %s557
          %563 = dma.hbm_to_vmem [thread:$0]  %s556, 4096, %s558, %s547, 128, 128, 8
        $region72: #{upsampling_bottleneck_forward.1} parent=63 // pred_fallthru
          _
      $region64: #{upsampling_bottleneck_forward.1} parent=5 // pred_fallthru
        _
      %p564 = scmp.le.s32.totalorder 1, %s35
      %p565 = scmp.lt.s32.totalorder %s35, 3
      %p566 = pnand %p564, %p565
      %p567 = pneg %p566
      // Predicated region
      $region73: #{upsampling_bottleneck_forward.1} parent=5 // pred_check
        _
      $region74: #{upsampling_bottleneck_forward.1} parent=5 // pred_check_branch
        %569 = sbr.rel (%p566) target = $region76
      $region75: #{upsampling_bottleneck_forward.1} parent=5 // pred_region
        %s570 = ssub.s32 %s35, 1
        %s571 = sand.u32 %s48, 1
        %s572 = scalar_lea.sflag [#allocation3], %s571
        %s573 = sand.u32 %s48, 1
        %s574 = smul.addr %s573, 256
        %s575 = scalar_lea.vmem [#allocation2], %s574
        // Predicated region
        $region77: #{upsampling_bottleneck_forward.1} parent=75 // pred_check
          %p576 = pneg %p61
        $region78: #{upsampling_bottleneck_forward.1} parent=75 // pred_check_branch
          %578 = sbr.rel (%p576) target = $region80
        $region79: #{upsampling_bottleneck_forward.1} parent=75 // pred_region
          %579 = dma.done %s572, 4096
        $region80: #{upsampling_bottleneck_forward.1} parent=75 // pred_fallthru
          _
        %s580 = sand.u32 %s40, 1
        %s581 = scalar_lea.sflag [#allocation6], %s580
        %s582 = sand.u32 %s74, 1
        %s583 = smul.addr %s582, 256
        %s584 = scalar_lea.vmem [#allocation5], %s583
        // Predicated region
        $region81: #{upsampling_bottleneck_forward.1} parent=75 // pred_check
          %p585 = pneg %p87
        $region82: #{upsampling_bottleneck_forward.1} parent=75 // pred_check_branch
          %587 = sbr.rel (%p585) target = $region84
        $region83: #{upsampling_bottleneck_forward.1} parent=75 // pred_region
          %588 = dma.done %s581, 4096
        $region84: #{upsampling_bottleneck_forward.1} parent=75 // pred_fallthru
          _
        // Predicated region
        $region85: #{upsampling_bottleneck_forward.1} parent=75 // pred_check
          %p589 = pneg %p108
        $region86: #{upsampling_bottleneck_forward.1} parent=75 // pred_check_branch
          %591 = sbr.rel (%p589) target = $region88
        $region87: #{upsampling_bottleneck_forward.1} parent=75 // pred_region
          %592 = dma.done [#allocation6], 256
        $region88: #{upsampling_bottleneck_forward.1} parent=75 // pred_fallthru
          _
        // Predicated region
        $region89: #{upsampling_bottleneck_forward.1} parent=75 // pred_check
          %p593 = pneg %p129
        $region90: #{upsampling_bottleneck_forward.1} parent=75 // pred_check_branch
          %595 = sbr.rel (%p593) target = $region92
        $region91: #{upsampling_bottleneck_forward.1} parent=75 // pred_region
          %596 = dma.done [#allocation9], 256
        $region92: #{upsampling_bottleneck_forward.1} parent=75 // pred_fallthru
          _
        // Predicated region
        $region93: #{upsampling_bottleneck_forward.1} parent=75 // pred_check
          %p597 = pneg %p150
        $region94: #{upsampling_bottleneck_forward.1} parent=75 // pred_check_branch
          %599 = sbr.rel (%p597) target = $region96
        $region95: #{upsampling_bottleneck_forward.1} parent=75 // pred_region
          %600 = dma.done [#allocation9], 576
        $region96: #{upsampling_bottleneck_forward.1} parent=75 // pred_fallthru
          _
        // Predicated region
        $region97: #{upsampling_bottleneck_forward.1} parent=75 // pred_check
          %p601 = pneg %p171
        $region98: #{upsampling_bottleneck_forward.1} parent=75 // pred_check_branch
          %603 = sbr.rel (%p601) target = $region100
        $region99: #{upsampling_bottleneck_forward.1} parent=75 // pred_region
          %604 = dma.done [#allocation12], 64
        $region100: #{upsampling_bottleneck_forward.1} parent=75 // pred_fallthru
          _
        // Predicated region
        $region101: #{upsampling_bottleneck_forward.1} parent=75 // pred_check
          %p605 = pneg %p192
        $region102: #{upsampling_bottleneck_forward.1} parent=75 // pred_check_branch
          %607 = sbr.rel (%p605) target = $region104
        $region103: #{upsampling_bottleneck_forward.1} parent=75 // pred_region
          %608 = dma.done [#allocation12], 16
        $region104: #{upsampling_bottleneck_forward.1} parent=75 // pred_fallthru
          _
        // Predicated region
        $region105: #{upsampling_bottleneck_forward.1} parent=75 // pred_check
          %p609 = pneg %p213
        $region106: #{upsampling_bottleneck_forward.1} parent=75 // pred_check_branch
          %611 = sbr.rel (%p609) target = $region108
        $region107: #{upsampling_bottleneck_forward.1} parent=75 // pred_region
          %612 = dma.done [#allocation15], 16
        $region108: #{upsampling_bottleneck_forward.1} parent=75 // pred_fallthru
          _
        // Predicated region
        $region109: #{upsampling_bottleneck_forward.1} parent=75 // pred_check
          %p613 = pneg %p234
        $region110: #{upsampling_bottleneck_forward.1} parent=75 // pred_check_branch
          %615 = sbr.rel (%p613) target = $region112
        $region111: #{upsampling_bottleneck_forward.1} parent=75 // pred_region
          %616 = dma.done [#allocation15], 16
        $region112: #{upsampling_bottleneck_forward.1} parent=75 // pred_fallthru
          _
        // Predicated region
        $region113: #{upsampling_bottleneck_forward.1} parent=75 // pred_check
          %p617 = pneg %p255
        $region114: #{upsampling_bottleneck_forward.1} parent=75 // pred_check_branch
          %619 = sbr.rel (%p617) target = $region116
        $region115: #{upsampling_bottleneck_forward.1} parent=75 // pred_region
          %620 = dma.done [#allocation18], 16
        $region116: #{upsampling_bottleneck_forward.1} parent=75 // pred_fallthru
          _
        // Predicated region
        $region117: #{upsampling_bottleneck_forward.1} parent=75 // pred_check
          %p621 = pneg %p276
        $region118: #{upsampling_bottleneck_forward.1} parent=75 // pred_check_branch
          %623 = sbr.rel (%p621) target = $region120
        $region119: #{upsampling_bottleneck_forward.1} parent=75 // pred_region
          %624 = dma.done [#allocation18], 16
        $region120: #{upsampling_bottleneck_forward.1} parent=75 // pred_fallthru
          _
        // Predicated region
        $region121: #{upsampling_bottleneck_forward.1} parent=75 // pred_check
          %p625 = pneg %p297
        $region122: #{upsampling_bottleneck_forward.1} parent=75 // pred_check_branch
          %627 = sbr.rel (%p625) target = $region124
        $region123: #{upsampling_bottleneck_forward.1} parent=75 // pred_region
          %628 = dma.done [#allocation21], 16
        $region124: #{upsampling_bottleneck_forward.1} parent=75 // pred_fallthru
          _
        // Predicated region
        $region125: #{upsampling_bottleneck_forward.1} parent=75 // pred_check
          %p629 = pneg %p318
        $region126: #{upsampling_bottleneck_forward.1} parent=75 // pred_check_branch
          %631 = sbr.rel (%p629) target = $region128
        $region127: #{upsampling_bottleneck_forward.1} parent=75 // pred_region
          %632 = dma.done [#allocation21], 16
        $region128: #{upsampling_bottleneck_forward.1} parent=75 // pred_fallthru
          _
        // Predicated region
        $region129: #{upsampling_bottleneck_forward.1} parent=75 // pred_check
          %p633 = pneg %p339
        $region130: #{upsampling_bottleneck_forward.1} parent=75 // pred_check_branch
          %635 = sbr.rel (%p633) target = $region132
        $region131: #{upsampling_bottleneck_forward.1} parent=75 // pred_region
          %636 = dma.done [#allocation24], 16
        $region132: #{upsampling_bottleneck_forward.1} parent=75 // pred_fallthru
          _
        %s637 = sand.u32 %s48, 1
        %s638 = scalar_lea.sflag [#allocation3], %s637
        %s639 = sand.u32 %s48, 1
        %s640 = smul.addr %s639, 256
        %s641 = scalar_lea.vmem [#allocation2], %s640
        %p642 = pneg %p61
        %p643 = pneg %p58
        %s644 = sand.u32 %s40, 1
        %s645 = scalar_lea.sflag [#allocation6], %s644
        %s646 = sand.u32 %s74, 1
        %s647 = smul.addr %s646, 256
        %s648 = scalar_lea.vmem [#allocation5], %s647
        %p649 = pneg %p87
        %p650 = pneg %p84
        %p651 = pneg %p108
        %p652 = pneg %p105
        %p653 = pneg %p129
        %p654 = pneg %p126
        %p655 = pneg %p150
        %p656 = pneg %p147
        %p657 = pneg %p171
        %p658 = pneg %p168
        %p659 = pneg %p192
        %p660 = pneg %p189
        %p661 = pneg %p213
        %p662 = pneg %p210
        %p663 = pneg %p234
        %p664 = pneg %p231
        %p665 = pneg %p255
        %p666 = pneg %p252
        %p667 = pneg %p276
        %p668 = pneg %p273
        %p669 = pneg %p297
        %p670 = pneg %p294
        %p671 = pneg %p318
        %p672 = pneg %p315
        %p673 = pneg %p339
        %p674 = pneg %p336
        %p675 = pneg %p365
        %p676 = pneg %p362
        %s677 = sand.u32 %s352, 1
        %s678 = scalar_lea.sflag [#allocation4], %s677
        %s679 = sand.u32 %s352, 1
        %s680 = smul.addr %s679, 64
        %s681 = scalar_lea.vmem [#allocation25], %s680
        %v682 = vld [vmem:[%s575] sm:$0xff]
        %v683 = vld [vmem:[%s575 + $0x8] sm:$0xff]
        %v684 = vld [vmem:[%s575 + $0x10] sm:$0xff]
        %v685 = vld [vmem:[%s575 + $0x18] sm:$0xff]
        %v686 = vld [vmem:[%s575 + $0x20] sm:$0xff]
        %v687 = vld [vmem:[%s575 + $0x28] sm:$0xff]
        %v688 = vld [vmem:[%s575 + $0x30] sm:$0xff]
        %v689 = vld [vmem:[%s575 + $0x38] sm:$0xff]
        %v690 = vld [vmem:[%s575 + $0x40] sm:$0xff]
        %v691 = vld [vmem:[%s575 + $0x48] sm:$0xff]
        %v692 = vld [vmem:[%s575 + $0x50] sm:$0xff]
        %v693 = vld [vmem:[%s575 + $0x58] sm:$0xff]
        %v694 = vld [vmem:[%s575 + $0x60] sm:$0xff]
        %v695 = vld [vmem:[%s575 + $0x68] sm:$0xff]
        %v696 = vld [vmem:[%s575 + $0x70] sm:$0xff]
        %v697 = vld [vmem:[%s575 + $0x78] sm:$0xff]
        %v698 = vld [vmem:[%s575 + $0x80] sm:$0xff]
        %v699 = vld [vmem:[%s575 + $0x88] sm:$0xff]
        %v700 = vld [vmem:[%s575 + $0x90] sm:$0xff]
        %v701 = vld [vmem:[%s575 + $0x98] sm:$0xff]
        %v702 = vld [vmem:[%s575 + $0xa0] sm:$0xff]
        %v703 = vld [vmem:[%s575 + $0xa8] sm:$0xff]
        %v704 = vld [vmem:[%s575 + $0xb0] sm:$0xff]
        %v705 = vld [vmem:[%s575 + $0xb8] sm:$0xff]
        %v706 = vld [vmem:[%s575 + $0xc0] sm:$0xff]
        %v707 = vld [vmem:[%s575 + $0xc8] sm:$0xff]
        %v708 = vld [vmem:[%s575 + $0xd0] sm:$0xff]
        %v709 = vld [vmem:[%s575 + $0xd8] sm:$0xff]
        %v710 = vld [vmem:[%s575 + $0xe0] sm:$0xff]
        %v711 = vld [vmem:[%s575 + $0xe8] sm:$0xff]
        %v712 = vld [vmem:[%s575 + $0xf0] sm:$0xff]
        %v713 = vld [vmem:[%s575 + $0xf8] sm:$0xff]
        %v714 = vld [vmem:[#allocation7] sm:$0xff]
        %v715 = vld [vmem:[#allocation7 + $0x8] sm:$0xff]
        %vm716 = vcmask 130048
        %v718 = vsel %vm716, %v682, 0
        %v721 = vsel %vm716, %v683, 0
        %v724 = vsel %vm716, %v684, 0
        %v727 = vsel %vm716, %v685, 0
        %v730 = vsel %vm716, %v686, 0
        %v733 = vsel %vm716, %v687, 0
        %v736 = vsel %vm716, %v688, 0
        %v739 = vsel %vm716, %v689, 0
        %v742 = vsel %vm716, %v690, 0
        %v745 = vsel %vm716, %v691, 0
        %v748 = vsel %vm716, %v692, 0
        %v751 = vsel %vm716, %v693, 0
        %v754 = vsel %vm716, %v694, 0
        %v757 = vsel %vm716, %v695, 0
        %v760 = vsel %vm716, %v696, 0
        %v763 = vsel %vm716, %v697, 0
        %v766 = vsel %vm716, %v698, 0
        %v769 = vsel %vm716, %v699, 0
        %v772 = vsel %vm716, %v700, 0
        %v775 = vsel %vm716, %v701, 0
        %v778 = vsel %vm716, %v702, 0
        %v781 = vsel %vm716, %v703, 0
        %v784 = vsel %vm716, %v704, 0
        %v787 = vsel %vm716, %v705, 0
        %v790 = vsel %vm716, %v706, 0
        %v793 = vsel %vm716, %v707, 0
        %v796 = vsel %vm716, %v708, 0
        %v799 = vsel %vm716, %v709, 0
        %v802 = vsel %vm716, %v710, 0
        %v805 = vsel %vm716, %v711, 0
        %v808 = vsel %vm716, %v712, 0
        %v811 = vsel %vm716, %v713, 0
        %813 = vmatprep.subr.mxu0 0.0
        %814 = vmatpush1.msra.mxu0 %v714
        %815 = vmatprep.subr.mxu0 0.0
        %816 = vmatpush1.msra.mxu0 %v715
        %817 = vmatprep.subr.mxu0 0.0
        %818 = vmatpush1.msra.mxu0 0.0
        %819 = vmatprep.subr.mxu0 0.0
        %820 = vmatpush1.msra.mxu0 0.0
        %821 = vmatprep.subr.mxu0 0.0
        %822 = vmatpush1.msra.mxu0 0.0
        %823 = vmatprep.subr.mxu0 0.0
        %824 = vmatpush1.msra.mxu0 0.0
        %825 = vmatprep.subr.mxu0 0.0
        %826 = vmatpush1.msra.mxu0 0.0
        %827 = vmatprep.subr.mxu0 0.0
        %828 = vmatpush1.msra.mxu0 0.0
        %829 = vmatprep.subr.mxu0 0.0
        %830 = vmatpush1.msra.mxu0 0.0
        %831 = vmatprep.subr.mxu0 0.0
        %832 = vmatpush1.msra.mxu0 0.0
        %833 = vmatprep.subr.mxu0 0.0
        %834 = vmatpush1.msra.mxu0 0.0
        %835 = vmatprep.subr.mxu0 0.0
        %836 = vmatpush1.msra.mxu0 0.0
        %837 = vmatprep.subr.mxu0 0.0
        %838 = vmatpush1.msra.mxu0 0.0
        %839 = vmatprep.subr.mxu0 0.0
        %840 = vmatpush1.msra.mxu0 0.0
        %841 = vmatprep.subr.mxu0 0.0
        %842 = vmatpush1.msra.mxu0 0.0
        %843 = vmatprep.subr.mxu0 0.0
        %844 = vmatpush1.msra.mxu0 0.0
        %845 = vmatprep.subr.mxu0 0.0
        %846 = vmatpush1.msra.mxu0 0.0
        %847 = vmatprep.subr.mxu0 0.0
        %848 = vmatpush1.msra.mxu0 0.0
        %849 = vmatprep.subr.mxu0 0.0
        %850 = vmatpush1.msra.mxu0 0.0
        %851 = vmatprep.subr.mxu0 0.0
        %852 = vmatpush1.msra.mxu0 0.0
        %853 = vmatprep.subr.mxu0 0.0
        %854 = vmatpush1.msra.mxu0 0.0
        %855 = vmatprep.subr.mxu0 0.0
        %856 = vmatpush1.msra.mxu0 0.0
        %857 = vmatprep.subr.mxu0 0.0
        %858 = vmatpush1.msra.mxu0 0.0
        %859 = vmatprep.subr.mxu0 0.0
        %860 = vmatpush1.msra.mxu0 0.0
        %861 = vmatprep.subr.mxu0 0.0
        %862 = vmatpush1.msra.mxu0 0.0
        %863 = vmatprep.subr.mxu0 0.0
        %864 = vmatpush1.msra.mxu0 0.0
        %865 = vmatprep.subr.mxu0 0.0
        %866 = vmatpush1.msra.mxu0 0.0
        %867 = vmatprep.subr.mxu0 0.0
        %868 = vmatpush1.msra.mxu0 0.0
        %869 = vmatprep.subr.mxu0 0.0
        %870 = vmatpush1.msra.mxu0 0.0
        %871 = vmatprep.subr.mxu0 0.0
        %872 = vmatpush1.msra.mxu0 0.0
        %873 = vmatprep.subr.mxu0 0.0
        %874 = vmatpush1.msra.mxu0 0.0
        %875 = vmatprep.subr.mxu0 0.0
        %876 = vmatpush1.msra.mxu0 0.0
        %877 = vmatprep.mubr.f32.mxu0 0.0
        %878 = vmatmul.mubr.f32.gmra.mrb[0].mxu0 %v718
        %v879 = vpop.f32.mrb[0].mxu0
        %v880 = vadd.f32 0.0, %v879
        %v881 = vpop.f32.mrb[0].mxu0
        %882 = vmatprep.mubr.f32.mxu0 0.0
        %883 = vmatmul.mubr.f32.gmra.mrb[0].mxu0 %v721
        %v884 = vpop.f32.mrb[0].mxu0
        %v885 = vadd.f32 0.0, %v884
        %v886 = vpop.f32.mrb[0].mxu0
        %887 = vmatprep.mubr.f32.mxu0 0.0
        %888 = vmatmul.mubr.f32.gmra.mrb[0].mxu0 %v724
        %v889 = vpop.f32.mrb[0].mxu0
        %v890 = vadd.f32 0.0, %v889
        %v891 = vpop.f32.mrb[0].mxu0
        %892 = vmatprep.mubr.f32.mxu0 0.0
        %893 = vmatmul.mubr.f32.gmra.mrb[0].mxu0 %v727
        %v894 = vpop.f32.mrb[0].mxu0
        %v895 = vadd.f32 0.0, %v894
        %v896 = vpop.f32.mrb[0].mxu0
        %897 = vmatprep.mubr.f32.mxu0 0.0
        %898 = vmatmul.mubr.f32.gmra.mrb[0].mxu0 %v730
        %v899 = vpop.f32.mrb[0].mxu0
        %v900 = vadd.f32 0.0, %v899
        %v901 = vpop.f32.mrb[0].mxu0
        %902 = vmatprep.mubr.f32.mxu0 0.0
        %903 = vmatmul.mubr.f32.gmra.mrb[0].mxu0 %v733
        %v904 = vpop.f32.mrb[0].mxu0
        %v905 = vadd.f32 0.0, %v904
        %v906 = vpop.f32.mrb[0].mxu0
        %907 = vmatprep.mubr.f32.mxu0 0.0
        %908 = vmatmul.mubr.f32.gmra.mrb[0].mxu0 %v736
        %v909 = vpop.f32.mrb[0].mxu0
        %v910 = vadd.f32 0.0, %v909
        %v911 = vpop.f32.mrb[0].mxu0
        %912 = vmatprep.mubr.f32.mxu0 0.0
        %913 = vmatmul.mubr.f32.gmra.mrb[0].mxu0 %v739
        %v914 = vpop.f32.mrb[0].mxu0
        %v915 = vadd.f32 0.0, %v914
        %v916 = vpop.f32.mrb[0].mxu0
        %917 = vmatprep.mubr.f32.mxu0 0.0
        %918 = vmatmul.mubr.f32.gmra.mrb[0].mxu0 %v742
        %v919 = vpop.f32.mrb[0].mxu0
        %v920 = vadd.f32 0.0, %v919
        %v921 = vpop.f32.mrb[0].mxu0
        %922 = vmatprep.mubr.f32.mxu0 0.0
        %923 = vmatmul.mubr.f32.gmra.mrb[0].mxu0 %v745
        %v924 = vpop.f32.mrb[0].mxu0
        %v925 = vadd.f32 0.0, %v924
        %v926 = vpop.f32.mrb[0].mxu0
        %927 = vmatprep.mubr.f32.mxu0 0.0
        %928 = vmatmul.mubr.f32.gmra.mrb[0].mxu0 %v748
        %v929 = vpop.f32.mrb[0].mxu0
        %v930 = vadd.f32 0.0, %v929
        %v931 = vpop.f32.mrb[0].mxu0
        %932 = vmatprep.mubr.f32.mxu0 0.0
        %933 = vmatmul.mubr.f32.gmra.mrb[0].mxu0 %v751
        %v934 = vpop.f32.mrb[0].mxu0
        %v935 = vadd.f32 0.0, %v934
        %v936 = vpop.f32.mrb[0].mxu0
        %937 = vmatprep.mubr.f32.mxu0 0.0
        %938 = vmatmul.mubr.f32.gmra.mrb[0].mxu0 %v754
        %v939 = vpop.f32.mrb[0].mxu0
        %v940 = vadd.f32 0.0, %v939
        %v941 = vpop.f32.mrb[0].mxu0
        %942 = vmatprep.mubr.f32.mxu0 0.0
        %943 = vmatmul.mubr.f32.gmra.mrb[0].mxu0 %v757
        %v944 = vpop.f32.mrb[0].mxu0
        %v945 = vadd.f32 0.0, %v944
        %v946 = vpop.f32.mrb[0].mxu0
        %947 = vmatprep.mubr.f32.mxu0 0.0
        %948 = vmatmul.mubr.f32.gmra.mrb[0].mxu0 %v760
        %v949 = vpop.f32.mrb[0].mxu0
        %v950 = vadd.f32 0.0, %v949
        %v951 = vpop.f32.mrb[0].mxu0
        %952 = vmatprep.mubr.f32.mxu0 0.0
        %953 = vmatmul.mubr.f32.gmra.mrb[0].mxu0 %v763
        %v954 = vpop.f32.mrb[0].mxu0
        %v955 = vadd.f32 0.0, %v954
        %v956 = vpop.f32.mrb[0].mxu0
        %957 = vmatprep.mubr.f32.mxu0 0.0
        %958 = vmatmul.mubr.f32.gmra.mrb[0].mxu0 %v766
        %v959 = vpop.f32.mrb[0].mxu0
        %v960 = vadd.f32 0.0, %v959
        %v961 = vpop.f32.mrb[0].mxu0
        %962 = vmatprep.mubr.f32.mxu0 0.0
        %963 = vmatmul.mubr.f32.gmra.mrb[0].mxu0 %v769
        %v964 = vpop.f32.mrb[0].mxu0
        %v965 = vadd.f32 0.0, %v964
        %v966 = vpop.f32.mrb[0].mxu0
        %967 = vmatprep.mubr.f32.mxu0 0.0
        %968 = vmatmul.mubr.f32.gmra.mrb[0].mxu0 %v772
        %v969 = vpop.f32.mrb[0].mxu0
        %v970 = vadd.f32 0.0, %v969
        %v971 = vpop.f32.mrb[0].mxu0
        %972 = vmatprep.mubr.f32.mxu0 0.0
        %973 = vmatmul.mubr.f32.gmra.mrb[0].mxu0 %v775
        %v974 = vpop.f32.mrb[0].mxu0
        %v975 = vadd.f32 0.0, %v974
        %v976 = vpop.f32.mrb[0].mxu0
        %977 = vmatprep.mubr.f32.mxu0 0.0
        %978 = vmatmul.mubr.f32.gmra.mrb[0].mxu0 %v778
        %v979 = vpop.f32.mrb[0].mxu0
        %v980 = vadd.f32 0.0, %v979
        %v981 = vpop.f32.mrb[0].mxu0
        %982 = vmatprep.mubr.f32.mxu0 0.0
        %983 = vmatmul.mubr.f32.gmra.mrb[0].mxu0 %v781
        %v984 = vpop.f32.mrb[0].mxu0
        %v985 = vadd.f32 0.0, %v984
        %v986 = vpop.f32.mrb[0].mxu0
        %987 = vmatprep.mubr.f32.mxu0 0.0
        %988 = vmatmul.mubr.f32.gmra.mrb[0].mxu0 %v784
        %v989 = vpop.f32.mrb[0].mxu0
        %v990 = vadd.f32 0.0, %v989
        %v991 = vpop.f32.mrb[0].mxu0
        %992 = vmatprep.mubr.f32.mxu0 0.0
        %993 = vmatmul.mubr.f32.gmra.mrb[0].mxu0 %v787
        %v994 = vpop.f32.mrb[0].mxu0
        %v995 = vadd.f32 0.0, %v994
        %v996 = vpop.f32.mrb[0].mxu0
        %997 = vmatprep.mubr.f32.mxu0 0.0
        %998 = vmatmul.mubr.f32.gmra.mrb[0].mxu0 %v790
        %v999 = vpop.f32.mrb[0].mxu0
        %v1000 = vadd.f32 0.0, %v999
        %v1001 = vpop.f32.mrb[0].mxu0
        %1002 = vmatprep.mubr.f32.mxu0 0.0
        %1003 = vmatmul.mubr.f32.gmra.mrb[0].mxu0 %v793
        %v1004 = vpop.f32.mrb[0].mxu0
        %v1005 = vadd.f32 0.0, %v1004
        %v1006 = vpop.f32.mrb[0].mxu0
        %1007 = vmatprep.mubr.f32.mxu0 0.0
        %1008 = vmatmul.mubr.f32.gmra.mrb[0].mxu0 %v796
        %v1009 = vpop.f32.mrb[0].mxu0
        %v1010 = vadd.f32 0.0, %v1009
        %v1011 = vpop.f32.mrb[0].mxu0
        %1012 = vmatprep.mubr.f32.mxu0 0.0
        %1013 = vmatmul.mubr.f32.gmra.mrb[0].mxu0 %v799
        %v1014 = vpop.f32.mrb[0].mxu0
        %v1015 = vadd.f32 0.0, %v1014
        %v1016 = vpop.f32.mrb[0].mxu0
        %1017 = vmatprep.mubr.f32.mxu0 0.0
        %1018 = vmatmul.mubr.f32.gmra.mrb[0].mxu0 %v802
        %v1019 = vpop.f32.mrb[0].mxu0
        %v1020 = vadd.f32 0.0, %v1019
        %v1021 = vpop.f32.mrb[0].mxu0
        %1022 = vmatprep.mubr.f32.mxu0 0.0
        %1023 = vmatmul.mubr.f32.gmra.mrb[0].mxu0 %v805
        %v1024 = vpop.f32.mrb[0].mxu0
        %v1025 = vadd.f32 0.0, %v1024
        %v1026 = vpop.f32.mrb[0].mxu0
        %1027 = vmatprep.mubr.f32.mxu0 0.0
        %1028 = vmatmul.mubr.f32.gmra.mrb[0].mxu0 %v808
        %v1029 = vpop.f32.mrb[0].mxu0
        %v1030 = vadd.f32 0.0, %v1029
        %v1031 = vpop.f32.mrb[0].mxu0
        %1032 = vmatprep.mubr.f32.mxu0 0.0
        %1033 = vmatmul.mubr.f32.gmra.mrb[0].mxu0 %v811
        %v1034 = vpop.f32.mrb[0].mxu0
        %v1035 = vadd.f32 0.0, %v1034
        %v1036 = vpop.f32.mrb[0].mxu0
        %1037 = vdwg.mxu0
        %v1038 = vld [vmem:[#allocation13] sm:$0x1]
        %v1040 = vlaneseq
        %v1041 = vshrl.u32 %v1040, 7
        %v1042 = vsub.s32 0, %v1041
        %v1043 = vrot.slane %v1038, %v1042
        %v1045 = vmul.f32 %v880, %v1043
        %v1046 = vmul.f32 %v885, %v1043
        %v1047 = vmul.f32 %v890, %v1043
        %v1048 = vmul.f32 %v895, %v1043
        %v1049 = vmul.f32 %v900, %v1043
        %v1050 = vmul.f32 %v905, %v1043
        %v1051 = vmul.f32 %v910, %v1043
        %v1052 = vmul.f32 %v915, %v1043
        %v1053 = vmul.f32 %v920, %v1043
        %v1054 = vmul.f32 %v925, %v1043
        %v1055 = vmul.f32 %v930, %v1043
        %v1056 = vmul.f32 %v935, %v1043
        %v1057 = vmul.f32 %v940, %v1043
        %v1058 = vmul.f32 %v945, %v1043
        %v1059 = vmul.f32 %v950, %v1043
        %v1060 = vmul.f32 %v955, %v1043
        %v1061 = vmul.f32 %v960, %v1043
        %v1062 = vmul.f32 %v965, %v1043
        %v1063 = vmul.f32 %v970, %v1043
        %v1064 = vmul.f32 %v975, %v1043
        %v1065 = vmul.f32 %v980, %v1043
        %v1066 = vmul.f32 %v985, %v1043
        %v1067 = vmul.f32 %v990, %v1043
        %v1068 = vmul.f32 %v995, %v1043
        %v1069 = vmul.f32 %v1000, %v1043
        %v1070 = vmul.f32 %v1005, %v1043
        %v1071 = vmul.f32 %v1010, %v1043
        %v1072 = vmul.f32 %v1015, %v1043
        %v1073 = vmul.f32 %v1020, %v1043
        %v1074 = vmul.f32 %v1025, %v1043
        %v1075 = vmul.f32 %v1030, %v1043
        %v1076 = vmul.f32 %v1035, %v1043
        %v1077 = vld [vmem:[#allocation14] sm:$0x1]
        %v1079 = vlaneseq
        %v1080 = vshrl.u32 %v1079, 7
        %v1081 = vsub.s32 0, %v1080
        %v1082 = vrot.slane %v1077, %v1081
        %v1084 = vadd.f32 %v1045, %v1082
        %v1085 = vadd.f32 %v1046, %v1082
        %v1086 = vadd.f32 %v1047, %v1082
        %v1087 = vadd.f32 %v1048, %v1082
        %v1088 = vadd.f32 %v1049, %v1082
        %v1089 = vadd.f32 %v1050, %v1082
        %v1090 = vadd.f32 %v1051, %v1082
        %v1091 = vadd.f32 %v1052, %v1082
        %v1092 = vadd.f32 %v1053, %v1082
        %v1093 = vadd.f32 %v1054, %v1082
        %v1094 = vadd.f32 %v1055, %v1082
        %v1095 = vadd.f32 %v1056, %v1082
        %v1096 = vadd.f32 %v1057, %v1082
        %v1097 = vadd.f32 %v1058, %v1082
        %v1098 = vadd.f32 %v1059, %v1082
        %v1099 = vadd.f32 %v1060, %v1082
        %v1100 = vadd.f32 %v1061, %v1082
        %v1101 = vadd.f32 %v1062, %v1082
        %v1102 = vadd.f32 %v1063, %v1082
        %v1103 = vadd.f32 %v1064, %v1082
        %v1104 = vadd.f32 %v1065, %v1082
        %v1105 = vadd.f32 %v1066, %v1082
        %v1106 = vadd.f32 %v1067, %v1082
        %v1107 = vadd.f32 %v1068, %v1082
        %v1108 = vadd.f32 %v1069, %v1082
        %v1109 = vadd.f32 %v1070, %v1082
        %v1110 = vadd.f32 %v1071, %v1082
        %v1111 = vadd.f32 %v1072, %v1082
        %v1112 = vadd.f32 %v1073, %v1082
        %v1113 = vadd.f32 %v1074, %v1082
        %v1114 = vadd.f32 %v1075, %v1082
        %v1115 = vadd.f32 %v1076, %v1082
        %v1116 = vld [vmem:[#allocation8] sm:$0xff]
        %v1117 = vld [vmem:[#allocation8 + $0x8] sm:$0xff]
        %1118 = vmatprep.subr.mxu0 0.0
        %1119 = vmatpush1.msra.mxu0 %v1116
        %1120 = vmatprep.subr.mxu0 0.0
        %1121 = vmatpush1.msra.mxu0 %v1117
        %1122 = vmatprep.subr.mxu0 0.0
        %1123 = vmatpush1.msra.mxu0 0.0
        %1124 = vmatprep.subr.mxu0 0.0
        %1125 = vmatpush1.msra.mxu0 0.0
        %1126 = vmatprep.subr.mxu0 0.0
        %1127 = vmatpush1.msra.mxu0 0.0
        %1128 = vmatprep.subr.mxu0 0.0
        %1129 = vmatpush1.msra.mxu0 0.0
        %1130 = vmatprep.subr.mxu0 0.0
        %1131 = vmatpush1.msra.mxu0 0.0
        %1132 = vmatprep.subr.mxu0 0.0
        %1133 = vmatpush1.msra.mxu0 0.0
        %1134 = vmatprep.subr.mxu0 0.0
        %1135 = vmatpush1.msra.mxu0 0.0
        %1136 = vmatprep.subr.mxu0 0.0
        %1137 = vmatpush1.msra.mxu0 0.0
        %1138 = vmatprep.subr.mxu0 0.0
        %1139 = vmatpush1.msra.mxu0 0.0
        %1140 = vmatprep.subr.mxu0 0.0
        %1141 = vmatpush1.msra.mxu0 0.0
        %1142 = vmatprep.subr.mxu0 0.0
        %1143 = vmatpush1.msra.mxu0 0.0
        %1144 = vmatprep.subr.mxu0 0.0
        %1145 = vmatpush1.msra.mxu0 0.0
        %1146 = vmatprep.subr.mxu0 0.0
        %1147 = vmatpush1.msra.mxu0 0.0
        %1148 = vmatprep.subr.mxu0 0.0
        %1149 = vmatpush1.msra.mxu0 0.0
        %1150 = vmatprep.subr.mxu0 0.0
        %1151 = vmatpush1.msra.mxu0 0.0
        %1152 = vmatprep.subr.mxu0 0.0
        %1153 = vmatpush1.msra.mxu0 0.0
        %1154 = vmatprep.subr.mxu0 0.0
        %1155 = vmatpush1.msra.mxu0 0.0
        %1156 = vmatprep.subr.mxu0 0.0
        %1157 = vmatpush1.msra.mxu0 0.0
        %1158 = vmatprep.subr.mxu0 0.0
        %1159 = vmatpush1.msra.mxu0 0.0
        %1160 = vmatprep.subr.mxu0 0.0
        %1161 = vmatpush1.msra.mxu0 0.0
        %1162 = vmatprep.subr.mxu0 0.0
        %1163 = vmatpush1.msra.mxu0 0.0
        %1164 = vmatprep.subr.mxu0 0.0
        %1165 = vmatpush1.msra.mxu0 0.0
        %1166 = vmatprep.subr.mxu0 0.0
        %1167 = vmatpush1.msra.mxu0 0.0
        %1168 = vmatprep.subr.mxu0 0.0
        %1169 = vmatpush1.msra.mxu0 0.0
        %1170 = vmatprep.subr.mxu0 0.0
        %1171 = vmatpush1.msra.mxu0 0.0
        %1172 = vmatprep.subr.mxu0 0.0
        %1173 = vmatpush1.msra.mxu0 0.0
        %1174 = vmatprep.subr.mxu0 0.0
        %1175 = vmatpush1.msra.mxu0 0.0
        %1176 = vmatprep.subr.mxu0 0.0
        %1177 = vmatpush1.msra.mxu0 0.0
        %1178 = vmatprep.subr.mxu0 0.0
        %1179 = vmatpush1.msra.mxu0 0.0
        %1180 = vmatprep.subr.mxu0 0.0
        %1181 = vmatpush1.msra.mxu0 0.0
        %1182 = vmatprep.mubr.f32.mxu0 0.0
        %1183 = vmatmul.mubr.f32.gmra.mrb[0].mxu0 %v718
        %v1184 = vpop.f32.mrb[0].mxu0
        %v1185 = vadd.f32 0.0, %v1184
        %v1186 = vpop.f32.mrb[0].mxu0
        %1187 = vmatprep.mubr.f32.mxu0 0.0
        %1188 = vmatmul.mubr.f32.gmra.mrb[0].mxu0 %v721
        %v1189 = vpop.f32.mrb[0].mxu0
        %v1190 = vadd.f32 0.0, %v1189
        %v1191 = vpop.f32.mrb[0].mxu0
        %1192 = vmatprep.mubr.f32.mxu0 0.0
        %1193 = vmatmul.mubr.f32.gmra.mrb[0].mxu0 %v724
        %v1194 = vpop.f32.mrb[0].mxu0
        %v1195 = vadd.f32 0.0, %v1194
        %v1196 = vpop.f32.mrb[0].mxu0
        %1197 = vmatprep.mubr.f32.mxu0 0.0
        %1198 = vmatmul.mubr.f32.gmra.mrb[0].mxu0 %v727
        %v1199 = vpop.f32.mrb[0].mxu0
        %v1200 = vadd.f32 0.0, %v1199
        %v1201 = vpop.f32.mrb[0].mxu0
        %1202 = vmatprep.mubr.f32.mxu0 0.0
        %1203 = vmatmul.mubr.f32.gmra.mrb[0].mxu0 %v730
        %v1204 = vpop.f32.mrb[0].mxu0
        %v1205 = vadd.f32 0.0, %v1204
        %v1206 = vpop.f32.mrb[0].mxu0
        %1207 = vmatprep.mubr.f32.mxu0 0.0
        %1208 = vmatmul.mubr.f32.gmra.mrb[0].mxu0 %v733
        %v1209 = vpop.f32.mrb[0].mxu0
        %v1210 = vadd.f32 0.0, %v1209
        %v1211 = vpop.f32.mrb[0].mxu0
        %1212 = vmatprep.mubr.f32.mxu0 0.0
        %1213 = vmatmul.mubr.f32.gmra.mrb[0].mxu0 %v736
        %v1214 = vpop.f32.mrb[0].mxu0
        %v1215 = vadd.f32 0.0, %v1214
        %v1216 = vpop.f32.mrb[0].mxu0
        %1217 = vmatprep.mubr.f32.mxu0 0.0
        %1218 = vmatmul.mubr.f32.gmra.mrb[0].mxu0 %v739
        %v1219 = vpop.f32.mrb[0].mxu0
        %v1220 = vadd.f32 0.0, %v1219
        %v1221 = vpop.f32.mrb[0].mxu0
        %1222 = vmatprep.mubr.f32.mxu0 0.0
        %1223 = vmatmul.mubr.f32.gmra.mrb[0].mxu0 %v742
        %v1224 = vpop.f32.mrb[0].mxu0
        %v1225 = vadd.f32 0.0, %v1224
        %v1226 = vpop.f32.mrb[0].mxu0
        %1227 = vmatprep.mubr.f32.mxu0 0.0
        %1228 = vmatmul.mubr.f32.gmra.mrb[0].mxu0 %v745
        %v1229 = vpop.f32.mrb[0].mxu0
        %v1230 = vadd.f32 0.0, %v1229
        %v1231 = vpop.f32.mrb[0].mxu0
        %1232 = vmatprep.mubr.f32.mxu0 0.0
        %1233 = vmatmul.mubr.f32.gmra.mrb[0].mxu0 %v748
        %v1234 = vpop.f32.mrb[0].mxu0
        %v1235 = vadd.f32 0.0, %v1234
        %v1236 = vpop.f32.mrb[0].mxu0
        %1237 = vmatprep.mubr.f32.mxu0 0.0
        %1238 = vmatmul.mubr.f32.gmra.mrb[0].mxu0 %v751
        %v1239 = vpop.f32.mrb[0].mxu0
        %v1240 = vadd.f32 0.0, %v1239
        %v1241 = vpop.f32.mrb[0].mxu0
        %1242 = vmatprep.mubr.f32.mxu0 0.0
        %1243 = vmatmul.mubr.f32.gmra.mrb[0].mxu0 %v754
        %v1244 = vpop.f32.mrb[0].mxu0
        %v1245 = vadd.f32 0.0, %v1244
        %v1246 = vpop.f32.mrb[0].mxu0
        %1247 = vmatprep.mubr.f32.mxu0 0.0
        %1248 = vmatmul.mubr.f32.gmra.mrb[0].mxu0 %v757
        %v1249 = vpop.f32.mrb[0].mxu0
        %v1250 = vadd.f32 0.0, %v1249
        %v1251 = vpop.f32.mrb[0].mxu0
        %1252 = vmatprep.mubr.f32.mxu0 0.0
        %1253 = vmatmul.mubr.f32.gmra.mrb[0].mxu0 %v760
        %v1254 = vpop.f32.mrb[0].mxu0
        %v1255 = vadd.f32 0.0, %v1254
        %v1256 = vpop.f32.mrb[0].mxu0
        %1257 = vmatprep.mubr.f32.mxu0 0.0
        %1258 = vmatmul.mubr.f32.gmra.mrb[0].mxu0 %v763
        %v1259 = vpop.f32.mrb[0].mxu0
        %v1260 = vadd.f32 0.0, %v1259
        %v1261 = vpop.f32.mrb[0].mxu0
        %1262 = vmatprep.mubr.f32.mxu0 0.0
        %1263 = vmatmul.mubr.f32.gmra.mrb[0].mxu0 %v766
        %v1264 = vpop.f32.mrb[0].mxu0
        %v1265 = vadd.f32 0.0, %v1264
        %v1266 = vpop.f32.mrb[0].mxu0
        %1267 = vmatprep.mubr.f32.mxu0 0.0
        %1268 = vmatmul.mubr.f32.gmra.mrb[0].mxu0 %v769
        %v1269 = vpop.f32.mrb[0].mxu0
        %v1270 = vadd.f32 0.0, %v1269
        %v1271 = vpop.f32.mrb[0].mxu0
        %1272 = vmatprep.mubr.f32.mxu0 0.0
        %1273 = vmatmul.mubr.f32.gmra.mrb[0].mxu0 %v772
        %v1274 = vpop.f32.mrb[0].mxu0
        %v1275 = vadd.f32 0.0, %v1274
        %v1276 = vpop.f32.mrb[0].mxu0
        %1277 = vmatprep.mubr.f32.mxu0 0.0
        %1278 = vmatmul.mubr.f32.gmra.mrb[0].mxu0 %v775
        %v1279 = vpop.f32.mrb[0].mxu0
        %v1280 = vadd.f32 0.0, %v1279
        %v1281 = vpop.f32.mrb[0].mxu0
        %1282 = vmatprep.mubr.f32.mxu0 0.0
        %1283 = vmatmul.mubr.f32.gmra.mrb[0].mxu0 %v778
        %v1284 = vpop.f32.mrb[0].mxu0
        %v1285 = vadd.f32 0.0, %v1284
        %v1286 = vpop.f32.mrb[0].mxu0
        %1287 = vmatprep.mubr.f32.mxu0 0.0
        %1288 = vmatmul.mubr.f32.gmra.mrb[0].mxu0 %v781
        %v1289 = vpop.f32.mrb[0].mxu0
        %v1290 = vadd.f32 0.0, %v1289
        %v1291 = vpop.f32.mrb[0].mxu0
        %1292 = vmatprep.mubr.f32.mxu0 0.0
        %1293 = vmatmul.mubr.f32.gmra.mrb[0].mxu0 %v784
        %v1294 = vpop.f32.mrb[0].mxu0
        %v1295 = vadd.f32 0.0, %v1294
        %v1296 = vpop.f32.mrb[0].mxu0
        %1297 = vmatprep.mubr.f32.mxu0 0.0
        %1298 = vmatmul.mubr.f32.gmra.mrb[0].mxu0 %v787
        %v1299 = vpop.f32.mrb[0].mxu0
        %v1300 = vadd.f32 0.0, %v1299
        %v1301 = vpop.f32.mrb[0].mxu0
        %1302 = vmatprep.mubr.f32.mxu0 0.0
        %1303 = vmatmul.mubr.f32.gmra.mrb[0].mxu0 %v790
        %v1304 = vpop.f32.mrb[0].mxu0
        %v1305 = vadd.f32 0.0, %v1304
        %v1306 = vpop.f32.mrb[0].mxu0
        %1307 = vmatprep.mubr.f32.mxu0 0.0
        %1308 = vmatmul.mubr.f32.gmra.mrb[0].mxu0 %v793
        %v1309 = vpop.f32.mrb[0].mxu0
        %v1310 = vadd.f32 0.0, %v1309
        %v1311 = vpop.f32.mrb[0].mxu0
        %1312 = vmatprep.mubr.f32.mxu0 0.0
        %1313 = vmatmul.mubr.f32.gmra.mrb[0].mxu0 %v796
        %v1314 = vpop.f32.mrb[0].mxu0
        %v1315 = vadd.f32 0.0, %v1314
        %v1316 = vpop.f32.mrb[0].mxu0
        %1317 = vmatprep.mubr.f32.mxu0 0.0
        %1318 = vmatmul.mubr.f32.gmra.mrb[0].mxu0 %v799
        %v1319 = vpop.f32.mrb[0].mxu0
        %v1320 = vadd.f32 0.0, %v1319
        %v1321 = vpop.f32.mrb[0].mxu0
        %1322 = vmatprep.mubr.f32.mxu0 0.0
        %1323 = vmatmul.mubr.f32.gmra.mrb[0].mxu0 %v802
        %v1324 = vpop.f32.mrb[0].mxu0
        %v1325 = vadd.f32 0.0, %v1324
        %v1326 = vpop.f32.mrb[0].mxu0
        %1327 = vmatprep.mubr.f32.mxu0 0.0
        %1328 = vmatmul.mubr.f32.gmra.mrb[0].mxu0 %v805
        %v1329 = vpop.f32.mrb[0].mxu0
        %v1330 = vadd.f32 0.0, %v1329
        %v1331 = vpop.f32.mrb[0].mxu0
        %1332 = vmatprep.mubr.f32.mxu0 0.0
        %1333 = vmatmul.mubr.f32.gmra.mrb[0].mxu0 %v808
        %v1334 = vpop.f32.mrb[0].mxu0
        %v1335 = vadd.f32 0.0, %v1334
        %v1336 = vpop.f32.mrb[0].mxu0
        %1337 = vmatprep.mubr.f32.mxu0 0.0
        %1338 = vmatmul.mubr.f32.gmra.mrb[0].mxu0 %v811
        %v1339 = vpop.f32.mrb[0].mxu0
        %v1340 = vadd.f32 0.0, %v1339
        %v1341 = vpop.f32.mrb[0].mxu0
        %1342 = vdwg.mxu0
        %v1343 = vld [vmem:[#allocation16] sm:$0x1]
        %v1345 = vlaneseq
        %v1346 = vshrl.u32 %v1345, 7
        %v1347 = vsub.s32 0, %v1346
        %v1348 = vrot.slane %v1343, %v1347
        %v1350 = vmul.f32 %v1185, %v1348
        %v1351 = vmul.f32 %v1190, %v1348
        %v1352 = vmul.f32 %v1195, %v1348
        %v1353 = vmul.f32 %v1200, %v1348
        %v1354 = vmul.f32 %v1205, %v1348
        %v1355 = vmul.f32 %v1210, %v1348
        %v1356 = vmul.f32 %v1215, %v1348
        %v1357 = vmul.f32 %v1220, %v1348
        %v1358 = vmul.f32 %v1225, %v1348
        %v1359 = vmul.f32 %v1230, %v1348
        %v1360 = vmul.f32 %v1235, %v1348
        %v1361 = vmul.f32 %v1240, %v1348
        %v1362 = vmul.f32 %v1245, %v1348
        %v1363 = vmul.f32 %v1250, %v1348
        %v1364 = vmul.f32 %v1255, %v1348
        %v1365 = vmul.f32 %v1260, %v1348
        %v1366 = vmul.f32 %v1265, %v1348
        %v1367 = vmul.f32 %v1270, %v1348
        %v1368 = vmul.f32 %v1275, %v1348
        %v1369 = vmul.f32 %v1280, %v1348
        %v1370 = vmul.f32 %v1285, %v1348
        %v1371 = vmul.f32 %v1290, %v1348
        %v1372 = vmul.f32 %v1295, %v1348
        %v1373 = vmul.f32 %v1300, %v1348
        %v1374 = vmul.f32 %v1305, %v1348
        %v1375 = vmul.f32 %v1310, %v1348
        %v1376 = vmul.f32 %v1315, %v1348
        %v1377 = vmul.f32 %v1320, %v1348
        %v1378 = vmul.f32 %v1325, %v1348
        %v1379 = vmul.f32 %v1330, %v1348
        %v1380 = vmul.f32 %v1335, %v1348
        %v1381 = vmul.f32 %v1340, %v1348
        %v1382 = vld [vmem:[#allocation17] sm:$0x1]
        %v1384 = vlaneseq
        %v1385 = vshrl.u32 %v1384, 7
        %v1386 = vsub.s32 0, %v1385
        %v1387 = vrot.slane %v1382, %v1386
        %v1389 = vadd.f32 %v1350, %v1387
        %v1390 = vadd.f32 %v1351, %v1387
        %v1391 = vadd.f32 %v1352, %v1387
        %v1392 = vadd.f32 %v1353, %v1387
        %v1393 = vadd.f32 %v1354, %v1387
        %v1394 = vadd.f32 %v1355, %v1387
        %v1395 = vadd.f32 %v1356, %v1387
        %v1396 = vadd.f32 %v1357, %v1387
        %v1397 = vadd.f32 %v1358, %v1387
        %v1398 = vadd.f32 %v1359, %v1387
        %v1399 = vadd.f32 %v1360, %v1387
        %v1400 = vadd.f32 %v1361, %v1387
        %v1401 = vadd.f32 %v1362, %v1387
        %v1402 = vadd.f32 %v1363, %v1387
        %v1403 = vadd.f32 %v1364, %v1387
        %v1404 = vadd.f32 %v1365, %v1387
        %v1405 = vadd.f32 %v1366, %v1387
        %v1406 = vadd.f32 %v1367, %v1387
        %v1407 = vadd.f32 %v1368, %v1387
        %v1408 = vadd.f32 %v1369, %v1387
        %v1409 = vadd.f32 %v1370, %v1387
        %v1410 = vadd.f32 %v1371, %v1387
        %v1411 = vadd.f32 %v1372, %v1387
        %v1412 = vadd.f32 %v1373, %v1387
        %v1413 = vadd.f32 %v1374, %v1387
        %v1414 = vadd.f32 %v1375, %v1387
        %v1415 = vadd.f32 %v1376, %v1387
        %v1416 = vadd.f32 %v1377, %v1387
        %v1417 = vadd.f32 %v1378, %v1387
        %v1418 = vadd.f32 %v1379, %v1387
        %v1419 = vadd.f32 %v1380, %v1387
        %v1420 = vadd.f32 %v1381, %v1387
        %v1421 = vmax.f32 %v1389, 0.0
        %v1422 = vmax.f32 %v1390, 0.0
        %v1423 = vmax.f32 %v1391, 0.0
        %v1424 = vmax.f32 %v1392, 0.0
        %v1425 = vmax.f32 %v1393, 0.0
        %v1426 = vmax.f32 %v1394, 0.0
        %v1427 = vmax.f32 %v1395, 0.0
        %v1428 = vmax.f32 %v1396, 0.0
        %v1429 = vmax.f32 %v1397, 0.0
        %v1430 = vmax.f32 %v1398, 0.0
        %v1431 = vmax.f32 %v1399, 0.0
        %v1432 = vmax.f32 %v1400, 0.0
        %v1433 = vmax.f32 %v1401, 0.0
        %v1434 = vmax.f32 %v1402, 0.0
        %v1435 = vmax.f32 %v1403, 0.0
        %v1436 = vmax.f32 %v1404, 0.0
        %v1437 = vmax.f32 %v1405, 0.0
        %v1438 = vmax.f32 %v1406, 0.0
        %v1439 = vmax.f32 %v1407, 0.0
        %v1440 = vmax.f32 %v1408, 0.0
        %v1441 = vmax.f32 %v1409, 0.0
        %v1442 = vmax.f32 %v1410, 0.0
        %v1443 = vmax.f32 %v1411, 0.0
        %v1444 = vmax.f32 %v1412, 0.0
        %v1445 = vmax.f32 %v1413, 0.0
        %v1446 = vmax.f32 %v1414, 0.0
        %v1447 = vmax.f32 %v1415, 0.0
        %v1448 = vmax.f32 %v1416, 0.0
        %v1449 = vmax.f32 %v1417, 0.0
        %v1450 = vmax.f32 %v1418, 0.0
        %v1451 = vmax.f32 %v1419, 0.0
        %v1452 = vmax.f32 %v1420, 0.0
        %vm1485 = vcmask 1046528
        %v1486 = vrot.slane %v1421, 1
        %v1487 = vrot.slane %v1422, 1
        %v1488 = vsel %vm1485, %v1486, %v1487
        %v1489 = vrot.slane %v1423, 1
        %v1490 = vrot.slane %v1424, 1
        %v1491 = vsel %vm1485, %v1489, %v1490
        %v1492 = vrot.slane %v1425, 1
        %v1493 = vrot.slane %v1426, 1
        %v1494 = vsel %vm1485, %v1492, %v1493
        %v1495 = vrot.slane %v1427, 1
        %v1496 = vrot.slane %v1428, 1
        %v1497 = vsel %vm1485, %v1495, %v1496
        %v1498 = vrot.slane %v1429, 1
        %v1499 = vrot.slane %v1430, 1
        %v1500 = vsel %vm1485, %v1498, %v1499
        %v1501 = vrot.slane %v1431, 1
        %v1502 = vrot.slane %v1432, 1
        %v1503 = vsel %vm1485, %v1501, %v1502
        %v1504 = vrot.slane %v1433, 1
        %v1505 = vrot.slane %v1434, 1
        %v1506 = vsel %vm1485, %v1504, %v1505
        %v1507 = vrot.slane %v1435, 1
        %v1508 = vrot.slane %v1436, 1
        %v1509 = vsel %vm1485, %v1507, %v1508
        %v1510 = vrot.slane %v1437, 1
        %v1511 = vrot.slane %v1438, 1
        %v1512 = vsel %vm1485, %v1510, %v1511
        %v1513 = vrot.slane %v1439, 1
        %v1514 = vrot.slane %v1440, 1
        %v1515 = vsel %vm1485, %v1513, %v1514
        %v1516 = vrot.slane %v1441, 1
        %v1517 = vrot.slane %v1442, 1
        %v1518 = vsel %vm1485, %v1516, %v1517
        %v1519 = vrot.slane %v1443, 1
        %v1520 = vrot.slane %v1444, 1
        %v1521 = vsel %vm1485, %v1519, %v1520
        %v1522 = vrot.slane %v1445, 1
        %v1523 = vrot.slane %v1446, 1
        %v1524 = vsel %vm1485, %v1522, %v1523
        %v1525 = vrot.slane %v1447, 1
        %v1526 = vrot.slane %v1448, 1
        %v1527 = vsel %vm1485, %v1525, %v1526
        %v1528 = vrot.slane %v1449, 1
        %v1529 = vrot.slane %v1450, 1
        %v1530 = vsel %vm1485, %v1528, %v1529
        %v1531 = vrot.slane %v1451, 1
        %v1532 = vrot.slane %v1452, 1
        %v1533 = vsel %vm1485, %v1531, %v1532
        %v1550 = vsel %vm1485, %v1487, 0.0
        %v1551 = vsel %vm1485, %v1490, 0.0
        %v1552 = vsel %vm1485, %v1493, 0.0
        %v1553 = vsel %vm1485, %v1496, 0.0
        %v1554 = vsel %vm1485, %v1499, 0.0
        %v1555 = vsel %vm1485, %v1502, 0.0
        %v1556 = vsel %vm1485, %v1505, 0.0
        %v1557 = vsel %vm1485, %v1508, 0.0
        %v1558 = vsel %vm1485, %v1511, 0.0
        %v1559 = vsel %vm1485, %v1514, 0.0
        %v1560 = vsel %vm1485, %v1517, 0.0
        %v1561 = vsel %vm1485, %v1520, 0.0
        %v1562 = vsel %vm1485, %v1523, 0.0
        %v1563 = vsel %vm1485, %v1526, 0.0
        %v1564 = vsel %vm1485, %v1529, 0.0
        %v1565 = vsel %vm1485, %v1532, 0.0
        %s1566 = scalar_lea.vmem [#allocation10], 16
        %v1567 = vld [vmem:[%s1566] sm:$0xf]
        %vm1568 = vcmask 31744
        %v1569 = vsel %vm1568, %v1421, 0
        %v1571 = vsel %vm1568, %v1422, 0
        %v1573 = vsel %vm1568, %v1423, 0
        %v1575 = vsel %vm1568, %v1424, 0
        %v1577 = vsel %vm1568, %v1425, 0
        %v1579 = vsel %vm1568, %v1426, 0
        %v1581 = vsel %vm1568, %v1427, 0
        %v1583 = vsel %vm1568, %v1428, 0
        %v1585 = vsel %vm1568, %v1429, 0
        %v1587 = vsel %vm1568, %v1430, 0
        %v1589 = vsel %vm1568, %v1431, 0
        %v1591 = vsel %vm1568, %v1432, 0
        %v1593 = vsel %vm1568, %v1433, 0
        %v1595 = vsel %vm1568, %v1434, 0
        %v1597 = vsel %vm1568, %v1435, 0
        %v1599 = vsel %vm1568, %v1436, 0
        %v1601 = vsel %vm1568, %v1437, 0
        %v1603 = vsel %vm1568, %v1438, 0
        %v1605 = vsel %vm1568, %v1439, 0
        %v1607 = vsel %vm1568, %v1440, 0
        %v1609 = vsel %vm1568, %v1441, 0
        %v1611 = vsel %vm1568, %v1442, 0
        %v1613 = vsel %vm1568, %v1443, 0
        %v1615 = vsel %vm1568, %v1444, 0
        %v1617 = vsel %vm1568, %v1445, 0
        %v1619 = vsel %vm1568, %v1446, 0
        %v1621 = vsel %vm1568, %v1447, 0
        %v1623 = vsel %vm1568, %v1448, 0
        %v1625 = vsel %vm1568, %v1449, 0
        %v1627 = vsel %vm1568, %v1450, 0
        %v1629 = vsel %vm1568, %v1451, 0
        %v1631 = vsel %vm1568, %v1452, 0
        %vm1633 = vcmask 1043456
        %v1635 = vsel %vm1633, %v1567, 0
        %1637 = vmatprep.subr.mxu0 0.0
        %1638 = vmatpush1.msra.mxu0 %v1635
        %1639 = vmatprep.subr.mxu0 0.0
        %1640 = vmatpush1.msra.mxu0 0.0
        %1641 = vmatprep.subr.mxu0 0.0
        %1642 = vmatpush1.msra.mxu0 0.0
        %1643 = vmatprep.subr.mxu0 0.0
        %1644 = vmatpush1.msra.mxu0 0.0
        %1645 = vmatprep.subr.mxu0 0.0
        %1646 = vmatpush1.msra.mxu0 0.0
        %1647 = vmatprep.subr.mxu0 0.0
        %1648 = vmatpush1.msra.mxu0 0.0
        %1649 = vmatprep.subr.mxu0 0.0
        %1650 = vmatpush1.msra.mxu0 0.0
        %1651 = vmatprep.subr.mxu0 0.0
        %1652 = vmatpush1.msra.mxu0 0.0
        %1653 = vmatprep.subr.mxu0 0.0
        %1654 = vmatpush1.msra.mxu0 0.0
        %1655 = vmatprep.subr.mxu0 0.0
        %1656 = vmatpush1.msra.mxu0 0.0
        %1657 = vmatprep.subr.mxu0 0.0
        %1658 = vmatpush1.msra.mxu0 0.0
        %1659 = vmatprep.subr.mxu0 0.0
        %1660 = vmatpush1.msra.mxu0 0.0
        %1661 = vmatprep.subr.mxu0 0.0
        %1662 = vmatpush1.msra.mxu0 0.0
        %1663 = vmatprep.subr.mxu0 0.0
        %1664 = vmatpush1.msra.mxu0 0.0
        %1665 = vmatprep.subr.mxu0 0.0
        %1666 = vmatpush1.msra.mxu0 0.0
        %1667 = vmatprep.subr.mxu0 0.0
        %1668 = vmatpush1.msra.mxu0 0.0
        %1669 = vmatprep.subr.mxu0 0.0
        %1670 = vmatpush1.msra.mxu0 0.0
        %1671 = vmatprep.subr.mxu0 0.0
        %1672 = vmatpush1.msra.mxu0 0.0
        %1673 = vmatprep.subr.mxu0 0.0
        %1674 = vmatpush1.msra.mxu0 0.0
        %1675 = vmatprep.subr.mxu0 0.0
        %1676 = vmatpush1.msra.mxu0 0.0
        %1677 = vmatprep.subr.mxu0 0.0
        %1678 = vmatpush1.msra.mxu0 0.0
        %1679 = vmatprep.subr.mxu0 0.0
        %1680 = vmatpush1.msra.mxu0 0.0
        %1681 = vmatprep.subr.mxu0 0.0
        %1682 = vmatpush1.msra.mxu0 0.0
        %1683 = vmatprep.subr.mxu0 0.0
        %1684 = vmatpush1.msra.mxu0 0.0
        %1685 = vmatprep.subr.mxu0 0.0
        %1686 = vmatpush1.msra.mxu0 0.0
        %1687 = vmatprep.subr.mxu0 0.0
        %1688 = vmatpush1.msra.mxu0 0.0
        %1689 = vmatprep.subr.mxu0 0.0
        %1690 = vmatpush1.msra.mxu0 0.0
        %1691 = vmatprep.subr.mxu0 0.0
        %1692 = vmatpush1.msra.mxu0 0.0
        %1693 = vmatprep.subr.mxu0 0.0
        %1694 = vmatpush1.msra.mxu0 0.0
        %1695 = vmatprep.subr.mxu0 0.0
        %1696 = vmatpush1.msra.mxu0 0.0
        %1697 = vmatprep.subr.mxu0 0.0
        %1698 = vmatpush1.msra.mxu0 0.0
        %1699 = vmatprep.subr.mxu0 0.0
        %1700 = vmatpush1.msra.mxu0 0.0
        %1701 = vmatprep.mubr.f32.mxu0 0.0
        %1702 = vmatmul.mubr.f32.gmra.mrb[0].mxu0 %v1569
        %v1703 = vpop.f32.mrb[0].mxu0
        %v1704 = vadd.f32 0.0, %v1703
        %v1705 = vpop.f32.mrb[0].mxu0
        %1706 = vmatprep.mubr.f32.mxu0 0.0
        %1707 = vmatmul.mubr.f32.gmra.mrb[0].mxu0 %v1571
        %v1708 = vpop.f32.mrb[0].mxu0
        %v1709 = vadd.f32 0.0, %v1708
        %v1710 = vpop.f32.mrb[0].mxu0
        %1711 = vmatprep.mubr.f32.mxu0 0.0
        %1712 = vmatmul.mubr.f32.gmra.mrb[0].mxu0 %v1573
        %v1713 = vpop.f32.mrb[0].mxu0
        %v1714 = vadd.f32 0.0, %v1713
        %v1715 = vpop.f32.mrb[0].mxu0
        %1716 = vmatprep.mubr.f32.mxu0 0.0
        %1717 = vmatmul.mubr.f32.gmra.mrb[0].mxu0 %v1575
        %v1718 = vpop.f32.mrb[0].mxu0
        %v1719 = vadd.f32 0.0, %v1718
        %v1720 = vpop.f32.mrb[0].mxu0
        %1721 = vmatprep.mubr.f32.mxu0 0.0
        %1722 = vmatmul.mubr.f32.gmra.mrb[0].mxu0 %v1577
        %v1723 = vpop.f32.mrb[0].mxu0
        %v1724 = vadd.f32 0.0, %v1723
        %v1725 = vpop.f32.mrb[0].mxu0
        %1726 = vmatprep.mubr.f32.mxu0 0.0
        %1727 = vmatmul.mubr.f32.gmra.mrb[0].mxu0 %v1579
        %v1728 = vpop.f32.mrb[0].mxu0
        %v1729 = vadd.f32 0.0, %v1728
        %v1730 = vpop.f32.mrb[0].mxu0
        %1731 = vmatprep.mubr.f32.mxu0 0.0
        %1732 = vmatmul.mubr.f32.gmra.mrb[0].mxu0 %v1581
        %v1733 = vpop.f32.mrb[0].mxu0
        %v1734 = vadd.f32 0.0, %v1733
        %v1735 = vpop.f32.mrb[0].mxu0
        %1736 = vmatprep.mubr.f32.mxu0 0.0
        %1737 = vmatmul.mubr.f32.gmra.mrb[0].mxu0 %v1583
        %v1738 = vpop.f32.mrb[0].mxu0
        %v1739 = vadd.f32 0.0, %v1738
        %v1740 = vpop.f32.mrb[0].mxu0
        %1741 = vmatprep.mubr.f32.mxu0 0.0
        %1742 = vmatmul.mubr.f32.gmra.mrb[0].mxu0 %v1585
        %v1743 = vpop.f32.mrb[0].mxu0
        %v1744 = vadd.f32 0.0, %v1743
        %v1745 = vpop.f32.mrb[0].mxu0
        %1746 = vmatprep.mubr.f32.mxu0 0.0
        %1747 = vmatmul.mubr.f32.gmra.mrb[0].mxu0 %v1587
        %v1748 = vpop.f32.mrb[0].mxu0
        %v1749 = vadd.f32 0.0, %v1748
        %v1750 = vpop.f32.mrb[0].mxu0
        %1751 = vmatprep.mubr.f32.mxu0 0.0
        %1752 = vmatmul.mubr.f32.gmra.mrb[0].mxu0 %v1589
        %v1753 = vpop.f32.mrb[0].mxu0
        %v1754 = vadd.f32 0.0, %v1753
        %v1755 = vpop.f32.mrb[0].mxu0
        %1756 = vmatprep.mubr.f32.mxu0 0.0
        %1757 = vmatmul.mubr.f32.gmra.mrb[0].mxu0 %v1591
        %v1758 = vpop.f32.mrb[0].mxu0
        %v1759 = vadd.f32 0.0, %v1758
        %v1760 = vpop.f32.mrb[0].mxu0
        %1761 = vmatprep.mubr.f32.mxu0 0.0
        %1762 = vmatmul.mubr.f32.gmra.mrb[0].mxu0 %v1593
        %v1763 = vpop.f32.mrb[0].mxu0
        %v1764 = vadd.f32 0.0, %v1763
        %v1765 = vpop.f32.mrb[0].mxu0
        %1766 = vmatprep.mubr.f32.mxu0 0.0
        %1767 = vmatmul.mubr.f32.gmra.mrb[0].mxu0 %v1595
        %v1768 = vpop.f32.mrb[0].mxu0
        %v1769 = vadd.f32 0.0, %v1768
        %v1770 = vpop.f32.mrb[0].mxu0
        %1771 = vmatprep.mubr.f32.mxu0 0.0
        %1772 = vmatmul.mubr.f32.gmra.mrb[0].mxu0 %v1597
        %v1773 = vpop.f32.mrb[0].mxu0
        %v1774 = vadd.f32 0.0, %v1773
        %v1775 = vpop.f32.mrb[0].mxu0
        %1776 = vmatprep.mubr.f32.mxu0 0.0
        %1777 = vmatmul.mubr.f32.gmra.mrb[0].mxu0 %v1599
        %v1778 = vpop.f32.mrb[0].mxu0
        %v1779 = vadd.f32 0.0, %v1778
        %v1780 = vpop.f32.mrb[0].mxu0
        %1781 = vmatprep.mubr.f32.mxu0 0.0
        %1782 = vmatmul.mubr.f32.gmra.mrb[0].mxu0 %v1601
        %v1783 = vpop.f32.mrb[0].mxu0
        %v1784 = vadd.f32 0.0, %v1783
        %v1785 = vpop.f32.mrb[0].mxu0
        %1786 = vmatprep.mubr.f32.mxu0 0.0
        %1787 = vmatmul.mubr.f32.gmra.mrb[0].mxu0 %v1603
        %v1788 = vpop.f32.mrb[0].mxu0
        %v1789 = vadd.f32 0.0, %v1788
        %v1790 = vpop.f32.mrb[0].mxu0
        %1791 = vmatprep.mubr.f32.mxu0 0.0
        %1792 = vmatmul.mubr.f32.gmra.mrb[0].mxu0 %v1605
        %v1793 = vpop.f32.mrb[0].mxu0
        %v1794 = vadd.f32 0.0, %v1793
        %v1795 = vpop.f32.mrb[0].mxu0
        %1796 = vmatprep.mubr.f32.mxu0 0.0
        %1797 = vmatmul.mubr.f32.gmra.mrb[0].mxu0 %v1607
        %v1798 = vpop.f32.mrb[0].mxu0
        %v1799 = vadd.f32 0.0, %v1798
        %v1800 = vpop.f32.mrb[0].mxu0
        %1801 = vmatprep.mubr.f32.mxu0 0.0
        %1802 = vmatmul.mubr.f32.gmra.mrb[0].mxu0 %v1609
        %v1803 = vpop.f32.mrb[0].mxu0
        %v1804 = vadd.f32 0.0, %v1803
        %v1805 = vpop.f32.mrb[0].mxu0
        %1806 = vmatprep.mubr.f32.mxu0 0.0
        %1807 = vmatmul.mubr.f32.gmra.mrb[0].mxu0 %v1611
        %v1808 = vpop.f32.mrb[0].mxu0
        %v1809 = vadd.f32 0.0, %v1808
        %v1810 = vpop.f32.mrb[0].mxu0
        %1811 = vmatprep.mubr.f32.mxu0 0.0
        %1812 = vmatmul.mubr.f32.gmra.mrb[0].mxu0 %v1613
        %v1813 = vpop.f32.mrb[0].mxu0
        %v1814 = vadd.f32 0.0, %v1813
        %v1815 = vpop.f32.mrb[0].mxu0
        %1816 = vmatprep.mubr.f32.mxu0 0.0
        %1817 = vmatmul.mubr.f32.gmra.mrb[0].mxu0 %v1615
        %v1818 = vpop.f32.mrb[0].mxu0
        %v1819 = vadd.f32 0.0, %v1818
        %v1820 = vpop.f32.mrb[0].mxu0
        %1821 = vmatprep.mubr.f32.mxu0 0.0
        %1822 = vmatmul.mubr.f32.gmra.mrb[0].mxu0 %v1617
        %v1823 = vpop.f32.mrb[0].mxu0
        %v1824 = vadd.f32 0.0, %v1823
        %v1825 = vpop.f32.mrb[0].mxu0
        %1826 = vmatprep.mubr.f32.mxu0 0.0
        %1827 = vmatmul.mubr.f32.gmra.mrb[0].mxu0 %v1619
        %v1828 = vpop.f32.mrb[0].mxu0
        %v1829 = vadd.f32 0.0, %v1828
        %v1830 = vpop.f32.mrb[0].mxu0
        %1831 = vmatprep.mubr.f32.mxu0 0.0
        %1832 = vmatmul.mubr.f32.gmra.mrb[0].mxu0 %v1621
        %v1833 = vpop.f32.mrb[0].mxu0
        %v1834 = vadd.f32 0.0, %v1833
        %v1835 = vpop.f32.mrb[0].mxu0
        %1836 = vmatprep.mubr.f32.mxu0 0.0
        %1837 = vmatmul.mubr.f32.gmra.mrb[0].mxu0 %v1623
        %v1838 = vpop.f32.mrb[0].mxu0
        %v1839 = vadd.f32 0.0, %v1838
        %v1840 = vpop.f32.mrb[0].mxu0
        %1841 = vmatprep.mubr.f32.mxu0 0.0
        %1842 = vmatmul.mubr.f32.gmra.mrb[0].mxu0 %v1625
        %v1843 = vpop.f32.mrb[0].mxu0
        %v1844 = vadd.f32 0.0, %v1843
        %v1845 = vpop.f32.mrb[0].mxu0
        %1846 = vmatprep.mubr.f32.mxu0 0.0
        %1847 = vmatmul.mubr.f32.gmra.mrb[0].mxu0 %v1627
        %v1848 = vpop.f32.mrb[0].mxu0
        %v1849 = vadd.f32 0.0, %v1848
        %v1850 = vpop.f32.mrb[0].mxu0
        %1851 = vmatprep.mubr.f32.mxu0 0.0
        %1852 = vmatmul.mubr.f32.gmra.mrb[0].mxu0 %v1629
        %v1853 = vpop.f32.mrb[0].mxu0
        %v1854 = vadd.f32 0.0, %v1853
        %v1855 = vpop.f32.mrb[0].mxu0
        %1856 = vmatprep.mubr.f32.mxu0 0.0
        %1857 = vmatmul.mubr.f32.gmra.mrb[0].mxu0 %v1631
        %v1858 = vpop.f32.mrb[0].mxu0
        %v1859 = vadd.f32 0.0, %v1858
        %v1860 = vpop.f32.mrb[0].mxu0
        %1861 = vdwg.mxu0
        %s1862 = scalar_lea.vmem [#allocation10], 20
        %v1863 = vld [vmem:[%s1862] sm:$0xf]
        %s1864 = scalar_lea.vmem [#allocation10], 12
        %v1865 = vld [vmem:[%s1864] sm:$0xf]
        %v1866 = vsel %vm1568, %v1488, 0
        %v1869 = vsel %vm1568, %v1550, 0
        %v1871 = vsel %vm1568, %v1491, 0
        %v1874 = vsel %vm1568, %v1551, 0
        %v1876 = vsel %vm1568, %v1494, 0
        %v1879 = vsel %vm1568, %v1552, 0
        %v1881 = vsel %vm1568, %v1497, 0
        %v1884 = vsel %vm1568, %v1553, 0
        %v1886 = vsel %vm1568, %v1500, 0
        %v1889 = vsel %vm1568, %v1554, 0
        %v1891 = vsel %vm1568, %v1503, 0
        %v1894 = vsel %vm1568, %v1555, 0
        %v1896 = vsel %vm1568, %v1506, 0
        %v1899 = vsel %vm1568, %v1556, 0
        %v1901 = vsel %vm1568, %v1509, 0
        %v1904 = vsel %vm1568, %v1557, 0
        %v1906 = vsel %vm1568, %v1512, 0
        %v1909 = vsel %vm1568, %v1558, 0
        %v1911 = vsel %vm1568, %v1515, 0
        %v1914 = vsel %vm1568, %v1559, 0
        %v1916 = vsel %vm1568, %v1518, 0
        %v1919 = vsel %vm1568, %v1560, 0
        %v1921 = vsel %vm1568, %v1521, 0
        %v1924 = vsel %vm1568, %v1561, 0
        %v1926 = vsel %vm1568, %v1524, 0
        %v1929 = vsel %vm1568, %v1562, 0
        %v1931 = vsel %vm1568, %v1527, 0
        %v1934 = vsel %vm1568, %v1563, 0
        %v1936 = vsel %vm1568, %v1530, 0
        %v1939 = vsel %vm1568, %v1564, 0
        %v1941 = vsel %vm1568, %v1533, 0
        %v1944 = vsel %vm1568, %v1565, 0
        %v1947 = vsel %vm1633, %v1865, 0
        %1949 = vmatprep.subr.mxu0 0.0
        %1950 = vmatpush1.msra.mxu0 %v1947
        %1951 = vmatprep.subr.mxu0 0.0
        %1952 = vmatpush1.msra.mxu0 0.0
        %1953 = vmatprep.subr.mxu0 0.0
        %1954 = vmatpush1.msra.mxu0 0.0
        %1955 = vmatprep.subr.mxu0 0.0
        %1956 = vmatpush1.msra.mxu0 0.0
        %1957 = vmatprep.subr.mxu0 0.0
        %1958 = vmatpush1.msra.mxu0 0.0
        %1959 = vmatprep.subr.mxu0 0.0
        %1960 = vmatpush1.msra.mxu0 0.0
        %1961 = vmatprep.subr.mxu0 0.0
        %1962 = vmatpush1.msra.mxu0 0.0
        %1963 = vmatprep.subr.mxu0 0.0
        %1964 = vmatpush1.msra.mxu0 0.0
        %1965 = vmatprep.subr.mxu0 0.0
        %1966 = vmatpush1.msra.mxu0 0.0
        %1967 = vmatprep.subr.mxu0 0.0
        %1968 = vmatpush1.msra.mxu0 0.0
        %1969 = vmatprep.subr.mxu0 0.0
        %1970 = vmatpush1.msra.mxu0 0.0
        %1971 = vmatprep.subr.mxu0 0.0
        %1972 = vmatpush1.msra.mxu0 0.0
        %1973 = vmatprep.subr.mxu0 0.0
        %1974 = vmatpush1.msra.mxu0 0.0
        %1975 = vmatprep.subr.mxu0 0.0
        %1976 = vmatpush1.msra.mxu0 0.0
        %1977 = vmatprep.subr.mxu0 0.0
        %1978 = vmatpush1.msra.mxu0 0.0
        %1979 = vmatprep.subr.mxu0 0.0
        %1980 = vmatpush1.msra.mxu0 0.0
        %1981 = vmatprep.subr.mxu0 0.0
        %1982 = vmatpush1.msra.mxu0 0.0
        %1983 = vmatprep.subr.mxu0 0.0
        %1984 = vmatpush1.msra.mxu0 0.0
        %1985 = vmatprep.subr.mxu0 0.0
        %1986 = vmatpush1.msra.mxu0 0.0
        %1987 = vmatprep.subr.mxu0 0.0
        %1988 = vmatpush1.msra.mxu0 0.0
        %1989 = vmatprep.subr.mxu0 0.0
        %1990 = vmatpush1.msra.mxu0 0.0
        %1991 = vmatprep.subr.mxu0 0.0
        %1992 = vmatpush1.msra.mxu0 0.0
        %1993 = vmatprep.subr.mxu0 0.0
        %1994 = vmatpush1.msra.mxu0 0.0
        %1995 = vmatprep.subr.mxu0 0.0
        %1996 = vmatpush1.msra.mxu0 0.0
        %1997 = vmatprep.subr.mxu0 0.0
        %1998 = vmatpush1.msra.mxu0 0.0
        %1999 = vmatprep.subr.mxu0 0.0
        %2000 = vmatpush1.msra.mxu0 0.0
        %2001 = vmatprep.subr.mxu0 0.0
        %2002 = vmatpush1.msra.mxu0 0.0
        %2003 = vmatprep.subr.mxu0 0.0
        %2004 = vmatpush1.msra.mxu0 0.0
        %2005 = vmatprep.subr.mxu0 0.0
        %2006 = vmatpush1.msra.mxu0 0.0
        %2007 = vmatprep.subr.mxu0 0.0
        %2008 = vmatpush1.msra.mxu0 0.0
        %2009 = vmatprep.subr.mxu0 0.0
        %2010 = vmatpush1.msra.mxu0 0.0
        %2011 = vmatprep.subr.mxu0 0.0
        %2012 = vmatpush1.msra.mxu0 0.0
        %2013 = vmatprep.mubr.f32.mxu0 0.0
        %2014 = vmatmul.mubr.f32.gmra.mrb[0].mxu0 %v1866
        %v2015 = vpop.f32.mrb[0].mxu0
        %v2016 = vadd.f32 0.0, %v2015
        %v2017 = vpop.f32.mrb[0].mxu0
        %2018 = vmatprep.mubr.f32.mxu0 0.0
        %2019 = vmatmul.mubr.f32.gmra.mrb[0].mxu0 %v1869
        %v2020 = vpop.f32.mrb[0].mxu0
        %v2021 = vadd.f32 0.0, %v2020
        %v2022 = vpop.f32.mrb[0].mxu0
        %2023 = vmatprep.mubr.f32.mxu0 0.0
        %2024 = vmatmul.mubr.f32.gmra.mrb[0].mxu0 %v1871
        %v2025 = vpop.f32.mrb[0].mxu0
        %v2026 = vadd.f32 0.0, %v2025
        %v2027 = vpop.f32.mrb[0].mxu0
        %2028 = vmatprep.mubr.f32.mxu0 0.0
        %2029 = vmatmul.mubr.f32.gmra.mrb[0].mxu0 %v1874
        %v2030 = vpop.f32.mrb[0].mxu0
        %v2031 = vadd.f32 0.0, %v2030
        %v2032 = vpop.f32.mrb[0].mxu0
        %2033 = vmatprep.mubr.f32.mxu0 0.0
        %2034 = vmatmul.mubr.f32.gmra.mrb[0].mxu0 %v1876
        %v2035 = vpop.f32.mrb[0].mxu0
        %v2036 = vadd.f32 0.0, %v2035
        %v2037 = vpop.f32.mrb[0].mxu0
        %2038 = vmatprep.mubr.f32.mxu0 0.0
        %2039 = vmatmul.mubr.f32.gmra.mrb[0].mxu0 %v1879
        %v2040 = vpop.f32.mrb[0].mxu0
        %v2041 = vadd.f32 0.0, %v2040
        %v2042 = vpop.f32.mrb[0].mxu0
        %2043 = vmatprep.mubr.f32.mxu0 0.0
        %2044 = vmatmul.mubr.f32.gmra.mrb[0].mxu0 %v1881
        %v2045 = vpop.f32.mrb[0].mxu0
        %v2046 = vadd.f32 0.0, %v2045
        %v2047 = vpop.f32.mrb[0].mxu0
        %2048 = vmatprep.mubr.f32.mxu0 0.0
        %2049 = vmatmul.mubr.f32.gmra.mrb[0].mxu0 %v1884
        %v2050 = vpop.f32.mrb[0].mxu0
        %v2051 = vadd.f32 0.0, %v2050
        %v2052 = vpop.f32.mrb[0].mxu0
        %2053 = vmatprep.mubr.f32.mxu0 0.0
        %2054 = vmatmul.mubr.f32.gmra.mrb[0].mxu0 %v1886
        %v2055 = vpop.f32.mrb[0].mxu0
        %v2056 = vadd.f32 0.0, %v2055
        %v2057 = vpop.f32.mrb[0].mxu0
        %2058 = vmatprep.mubr.f32.mxu0 0.0
        %2059 = vmatmul.mubr.f32.gmra.mrb[0].mxu0 %v1889
        %v2060 = vpop.f32.mrb[0].mxu0
        %v2061 = vadd.f32 0.0, %v2060
        %v2062 = vpop.f32.mrb[0].mxu0
        %2063 = vmatprep.mubr.f32.mxu0 0.0
        %2064 = vmatmul.mubr.f32.gmra.mrb[0].mxu0 %v1891
        %v2065 = vpop.f32.mrb[0].mxu0
        %v2066 = vadd.f32 0.0, %v2065
        %v2067 = vpop.f32.mrb[0].mxu0
        %2068 = vmatprep.mubr.f32.mxu0 0.0
        %2069 = vmatmul.mubr.f32.gmra.mrb[0].mxu0 %v1894
        %v2070 = vpop.f32.mrb[0].mxu0
        %v2071 = vadd.f32 0.0, %v2070
        %v2072 = vpop.f32.mrb[0].mxu0
        %2073 = vmatprep.mubr.f32.mxu0 0.0
        %2074 = vmatmul.mubr.f32.gmra.mrb[0].mxu0 %v1896
        %v2075 = vpop.f32.mrb[0].mxu0
        %v2076 = vadd.f32 0.0, %v2075
        %v2077 = vpop.f32.mrb[0].mxu0
        %2078 = vmatprep.mubr.f32.mxu0 0.0
        %2079 = vmatmul.mubr.f32.gmra.mrb[0].mxu0 %v1899
        %v2080 = vpop.f32.mrb[0].mxu0
        %v2081 = vadd.f32 0.0, %v2080
        %v2082 = vpop.f32.mrb[0].mxu0
        %2083 = vmatprep.mubr.f32.mxu0 0.0
        %2084 = vmatmul.mubr.f32.gmra.mrb[0].mxu0 %v1901
        %v2085 = vpop.f32.mrb[0].mxu0
        %v2086 = vadd.f32 0.0, %v2085
        %v2087 = vpop.f32.mrb[0].mxu0
        %2088 = vmatprep.mubr.f32.mxu0 0.0
        %2089 = vmatmul.mubr.f32.gmra.mrb[0].mxu0 %v1904
        %v2090 = vpop.f32.mrb[0].mxu0
        %v2091 = vadd.f32 0.0, %v2090
        %v2092 = vpop.f32.mrb[0].mxu0
        %2093 = vmatprep.mubr.f32.mxu0 0.0
        %2094 = vmatmul.mubr.f32.gmra.mrb[0].mxu0 %v1906
        %v2095 = vpop.f32.mrb[0].mxu0
        %v2096 = vadd.f32 0.0, %v2095
        %v2097 = vpop.f32.mrb[0].mxu0
        %2098 = vmatprep.mubr.f32.mxu0 0.0
        %2099 = vmatmul.mubr.f32.gmra.mrb[0].mxu0 %v1909
        %v2100 = vpop.f32.mrb[0].mxu0
        %v2101 = vadd.f32 0.0, %v2100
        %v2102 = vpop.f32.mrb[0].mxu0
        %2103 = vmatprep.mubr.f32.mxu0 0.0
        %2104 = vmatmul.mubr.f32.gmra.mrb[0].mxu0 %v1911
        %v2105 = vpop.f32.mrb[0].mxu0
        %v2106 = vadd.f32 0.0, %v2105
        %v2107 = vpop.f32.mrb[0].mxu0
        %2108 = vmatprep.mubr.f32.mxu0 0.0
        %2109 = vmatmul.mubr.f32.gmra.mrb[0].mxu0 %v1914
        %v2110 = vpop.f32.mrb[0].mxu0
        %v2111 = vadd.f32 0.0, %v2110
        %v2112 = vpop.f32.mrb[0].mxu0
        %2113 = vmatprep.mubr.f32.mxu0 0.0
        %2114 = vmatmul.mubr.f32.gmra.mrb[0].mxu0 %v1916
        %v2115 = vpop.f32.mrb[0].mxu0
        %v2116 = vadd.f32 0.0, %v2115
        %v2117 = vpop.f32.mrb[0].mxu0
        %2118 = vmatprep.mubr.f32.mxu0 0.0
        %2119 = vmatmul.mubr.f32.gmra.mrb[0].mxu0 %v1919
        %v2120 = vpop.f32.mrb[0].mxu0
        %v2121 = vadd.f32 0.0, %v2120
        %v2122 = vpop.f32.mrb[0].mxu0
        %2123 = vmatprep.mubr.f32.mxu0 0.0
        %2124 = vmatmul.mubr.f32.gmra.mrb[0].mxu0 %v1921
        %v2125 = vpop.f32.mrb[0].mxu0
        %v2126 = vadd.f32 0.0, %v2125
        %v2127 = vpop.f32.mrb[0].mxu0
        %2128 = vmatprep.mubr.f32.mxu0 0.0
        %2129 = vmatmul.mubr.f32.gmra.mrb[0].mxu0 %v1924
        %v2130 = vpop.f32.mrb[0].mxu0
        %v2131 = vadd.f32 0.0, %v2130
        %v2132 = vpop.f32.mrb[0].mxu0
        %2133 = vmatprep.mubr.f32.mxu0 0.0
        %2134 = vmatmul.mubr.f32.gmra.mrb[0].mxu0 %v1926
        %v2135 = vpop.f32.mrb[0].mxu0
        %v2136 = vadd.f32 0.0, %v2135
        %v2137 = vpop.f32.mrb[0].mxu0
        %2138 = vmatprep.mubr.f32.mxu0 0.0
        %2139 = vmatmul.mubr.f32.gmra.mrb[0].mxu0 %v1929
        %v2140 = vpop.f32.mrb[0].mxu0
        %v2141 = vadd.f32 0.0, %v2140
        %v2142 = vpop.f32.mrb[0].mxu0
        %2143 = vmatprep.mubr.f32.mxu0 0.0
        %2144 = vmatmul.mubr.f32.gmra.mrb[0].mxu0 %v1931
        %v2145 = vpop.f32.mrb[0].mxu0
        %v2146 = vadd.f32 0.0, %v2145
        %v2147 = vpop.f32.mrb[0].mxu0
        %2148 = vmatprep.mubr.f32.mxu0 0.0
        %2149 = vmatmul.mubr.f32.gmra.mrb[0].mxu0 %v1934
        %v2150 = vpop.f32.mrb[0].mxu0
        %v2151 = vadd.f32 0.0, %v2150
        %v2152 = vpop.f32.mrb[0].mxu0
        %2153 = vmatprep.mubr.f32.mxu0 0.0
        %2154 = vmatmul.mubr.f32.gmra.mrb[0].mxu0 %v1936
        %v2155 = vpop.f32.mrb[0].mxu0
        %v2156 = vadd.f32 0.0, %v2155
        %v2157 = vpop.f32.mrb[0].mxu0
        %2158 = vmatprep.mubr.f32.mxu0 0.0
        %2159 = vmatmul.mubr.f32.gmra.mrb[0].mxu0 %v1939
        %v2160 = vpop.f32.mrb[0].mxu0
        %v2161 = vadd.f32 0.0, %v2160
        %v2162 = vpop.f32.mrb[0].mxu0
        %2163 = vmatprep.mubr.f32.mxu0 0.0
        %2164 = vmatmul.mubr.f32.gmra.mrb[0].mxu0 %v1941
        %v2165 = vpop.f32.mrb[0].mxu0
        %v2166 = vadd.f32 0.0, %v2165
        %v2167 = vpop.f32.mrb[0].mxu0
        %2168 = vmatprep.mubr.f32.mxu0 0.0
        %2169 = vmatmul.mubr.f32.gmra.mrb[0].mxu0 %v1944
        %v2170 = vpop.f32.mrb[0].mxu0
        %v2171 = vadd.f32 0.0, %v2170
        %v2172 = vpop.f32.mrb[0].mxu0
        %2173 = vdwg.mxu0
        %v2175 = vsel %vm1633, %v1863, 0
        %2177 = vmatprep.subr.mxu0 0.0
        %2178 = vmatpush1.msra.mxu0 %v2175
        %2179 = vmatprep.subr.mxu0 0.0
        %2180 = vmatpush1.msra.mxu0 0.0
        %2181 = vmatprep.subr.mxu0 0.0
        %2182 = vmatpush1.msra.mxu0 0.0
        %2183 = vmatprep.subr.mxu0 0.0
        %2184 = vmatpush1.msra.mxu0 0.0
        %2185 = vmatprep.subr.mxu0 0.0
        %2186 = vmatpush1.msra.mxu0 0.0
        %2187 = vmatprep.subr.mxu0 0.0
        %2188 = vmatpush1.msra.mxu0 0.0
        %2189 = vmatprep.subr.mxu0 0.0
        %2190 = vmatpush1.msra.mxu0 0.0
        %2191 = vmatprep.subr.mxu0 0.0
        %2192 = vmatpush1.msra.mxu0 0.0
        %2193 = vmatprep.subr.mxu0 0.0
        %2194 = vmatpush1.msra.mxu0 0.0
        %2195 = vmatprep.subr.mxu0 0.0
        %2196 = vmatpush1.msra.mxu0 0.0
        %2197 = vmatprep.subr.mxu0 0.0
        %2198 = vmatpush1.msra.mxu0 0.0
        %2199 = vmatprep.subr.mxu0 0.0
        %2200 = vmatpush1.msra.mxu0 0.0
        %2201 = vmatprep.subr.mxu0 0.0
        %2202 = vmatpush1.msra.mxu0 0.0
        %2203 = vmatprep.subr.mxu0 0.0
        %2204 = vmatpush1.msra.mxu0 0.0
        %2205 = vmatprep.subr.mxu0 0.0
        %2206 = vmatpush1.msra.mxu0 0.0
        %2207 = vmatprep.subr.mxu0 0.0
        %2208 = vmatpush1.msra.mxu0 0.0
        %2209 = vmatprep.subr.mxu0 0.0
        %2210 = vmatpush1.msra.mxu0 0.0
        %2211 = vmatprep.subr.mxu0 0.0
        %2212 = vmatpush1.msra.mxu0 0.0
        %2213 = vmatprep.subr.mxu0 0.0
        %2214 = vmatpush1.msra.mxu0 0.0
        %2215 = vmatprep.subr.mxu0 0.0
        %2216 = vmatpush1.msra.mxu0 0.0
        %2217 = vmatprep.subr.mxu0 0.0
        %2218 = vmatpush1.msra.mxu0 0.0
        %2219 = vmatprep.subr.mxu0 0.0
        %2220 = vmatpush1.msra.mxu0 0.0
        %2221 = vmatprep.subr.mxu0 0.0
        %2222 = vmatpush1.msra.mxu0 0.0
        %2223 = vmatprep.subr.mxu0 0.0
        %2224 = vmatpush1.msra.mxu0 0.0
        %2225 = vmatprep.subr.mxu0 0.0
        %2226 = vmatpush1.msra.mxu0 0.0
        %2227 = vmatprep.subr.mxu0 0.0
        %2228 = vmatpush1.msra.mxu0 0.0
        %2229 = vmatprep.subr.mxu0 0.0
        %2230 = vmatpush1.msra.mxu0 0.0
        %2231 = vmatprep.subr.mxu0 0.0
        %2232 = vmatpush1.msra.mxu0 0.0
        %2233 = vmatprep.subr.mxu0 0.0
        %2234 = vmatpush1.msra.mxu0 0.0
        %2235 = vmatprep.subr.mxu0 0.0
        %2236 = vmatpush1.msra.mxu0 0.0
        %2237 = vmatprep.subr.mxu0 0.0
        %2238 = vmatpush1.msra.mxu0 0.0
        %2239 = vmatprep.subr.mxu0 0.0
        %2240 = vmatpush1.msra.mxu0 0.0
        %2241 = vmatprep.mubr.f32.mxu0 0.0
        %2242 = vmatmul.mubr.f32.gmra.mrb[0].mxu0 %v1569
        %v2243 = vpop.f32.mrb[0].mxu0
        %v2244 = vadd.f32 %v2016, %v2243
        %v2245 = vpop.f32.mrb[0].mxu0
        %2246 = vmatprep.mubr.f32.mxu0 0.0
        %2247 = vmatmul.mubr.f32.gmra.mrb[0].mxu0 %v1571
        %v2248 = vpop.f32.mrb[0].mxu0
        %v2249 = vadd.f32 %v2021, %v2248
        %v2250 = vpop.f32.mrb[0].mxu0
        %2251 = vmatprep.mubr.f32.mxu0 0.0
        %2252 = vmatmul.mubr.f32.gmra.mrb[0].mxu0 %v1573
        %v2253 = vpop.f32.mrb[0].mxu0
        %v2254 = vadd.f32 %v2026, %v2253
        %v2255 = vpop.f32.mrb[0].mxu0
        %2256 = vmatprep.mubr.f32.mxu0 0.0
        %2257 = vmatmul.mubr.f32.gmra.mrb[0].mxu0 %v1575
        %v2258 = vpop.f32.mrb[0].mxu0
        %v2259 = vadd.f32 %v2031, %v2258
        %v2260 = vpop.f32.mrb[0].mxu0
        %2261 = vmatprep.mubr.f32.mxu0 0.0
        %2262 = vmatmul.mubr.f32.gmra.mrb[0].mxu0 %v1577
        %v2263 = vpop.f32.mrb[0].mxu0
        %v2264 = vadd.f32 %v2036, %v2263
        %v2265 = vpop.f32.mrb[0].mxu0
        %2266 = vmatprep.mubr.f32.mxu0 0.0
        %2267 = vmatmul.mubr.f32.gmra.mrb[0].mxu0 %v1579
        %v2268 = vpop.f32.mrb[0].mxu0
        %v2269 = vadd.f32 %v2041, %v2268
        %v2270 = vpop.f32.mrb[0].mxu0
        %2271 = vmatprep.mubr.f32.mxu0 0.0
        %2272 = vmatmul.mubr.f32.gmra.mrb[0].mxu0 %v1581
        %v2273 = vpop.f32.mrb[0].mxu0
        %v2274 = vadd.f32 %v2046, %v2273
        %v2275 = vpop.f32.mrb[0].mxu0
        %2276 = vmatprep.mubr.f32.mxu0 0.0
        %2277 = vmatmul.mubr.f32.gmra.mrb[0].mxu0 %v1583
        %v2278 = vpop.f32.mrb[0].mxu0
        %v2279 = vadd.f32 %v2051, %v2278
        %v2280 = vpop.f32.mrb[0].mxu0
        %2281 = vmatprep.mubr.f32.mxu0 0.0
        %2282 = vmatmul.mubr.f32.gmra.mrb[0].mxu0 %v1585
        %v2283 = vpop.f32.mrb[0].mxu0
        %v2284 = vadd.f32 %v2056, %v2283
        %v2285 = vpop.f32.mrb[0].mxu0
        %2286 = vmatprep.mubr.f32.mxu0 0.0
        %2287 = vmatmul.mubr.f32.gmra.mrb[0].mxu0 %v1587
        %v2288 = vpop.f32.mrb[0].mxu0
        %v2289 = vadd.f32 %v2061, %v2288
        %v2290 = vpop.f32.mrb[0].mxu0
        %2291 = vmatprep.mubr.f32.mxu0 0.0
        %2292 = vmatmul.mubr.f32.gmra.mrb[0].mxu0 %v1589
        %v2293 = vpop.f32.mrb[0].mxu0
        %v2294 = vadd.f32 %v2066, %v2293
        %v2295 = vpop.f32.mrb[0].mxu0
        %2296 = vmatprep.mubr.f32.mxu0 0.0
        %2297 = vmatmul.mubr.f32.gmra.mrb[0].mxu0 %v1591
        %v2298 = vpop.f32.mrb[0].mxu0
        %v2299 = vadd.f32 %v2071, %v2298
        %v2300 = vpop.f32.mrb[0].mxu0
        %2301 = vmatprep.mubr.f32.mxu0 0.0
        %2302 = vmatmul.mubr.f32.gmra.mrb[0].mxu0 %v1593
        %v2303 = vpop.f32.mrb[0].mxu0
        %v2304 = vadd.f32 %v2076, %v2303
        %v2305 = vpop.f32.mrb[0].mxu0
        %2306 = vmatprep.mubr.f32.mxu0 0.0
        %2307 = vmatmul.mubr.f32.gmra.mrb[0].mxu0 %v1595
        %v2308 = vpop.f32.mrb[0].mxu0
        %v2309 = vadd.f32 %v2081, %v2308
        %v2310 = vpop.f32.mrb[0].mxu0
        %2311 = vmatprep.mubr.f32.mxu0 0.0
        %2312 = vmatmul.mubr.f32.gmra.mrb[0].mxu0 %v1597
        %v2313 = vpop.f32.mrb[0].mxu0
        %v2314 = vadd.f32 %v2086, %v2313
        %v2315 = vpop.f32.mrb[0].mxu0
        %2316 = vmatprep.mubr.f32.mxu0 0.0
        %2317 = vmatmul.mubr.f32.gmra.mrb[0].mxu0 %v1599
        %v2318 = vpop.f32.mrb[0].mxu0
        %v2319 = vadd.f32 %v2091, %v2318
        %v2320 = vpop.f32.mrb[0].mxu0
        %2321 = vmatprep.mubr.f32.mxu0 0.0
        %2322 = vmatmul.mubr.f32.gmra.mrb[0].mxu0 %v1601
        %v2323 = vpop.f32.mrb[0].mxu0
        %v2324 = vadd.f32 %v2096, %v2323
        %v2325 = vpop.f32.mrb[0].mxu0
        %2326 = vmatprep.mubr.f32.mxu0 0.0
        %2327 = vmatmul.mubr.f32.gmra.mrb[0].mxu0 %v1603
        %v2328 = vpop.f32.mrb[0].mxu0
        %v2329 = vadd.f32 %v2101, %v2328
        %v2330 = vpop.f32.mrb[0].mxu0
        %2331 = vmatprep.mubr.f32.mxu0 0.0
        %2332 = vmatmul.mubr.f32.gmra.mrb[0].mxu0 %v1605
        %v2333 = vpop.f32.mrb[0].mxu0
        %v2334 = vadd.f32 %v2106, %v2333
        %v2335 = vpop.f32.mrb[0].mxu0
        %2336 = vmatprep.mubr.f32.mxu0 0.0
        %2337 = vmatmul.mubr.f32.gmra.mrb[0].mxu0 %v1607
        %v2338 = vpop.f32.mrb[0].mxu0
        %v2339 = vadd.f32 %v2111, %v2338
        %v2340 = vpop.f32.mrb[0].mxu0
        %2341 = vmatprep.mubr.f32.mxu0 0.0
        %2342 = vmatmul.mubr.f32.gmra.mrb[0].mxu0 %v1609
        %v2343 = vpop.f32.mrb[0].mxu0
        %v2344 = vadd.f32 %v2116, %v2343
        %v2345 = vpop.f32.mrb[0].mxu0
        %2346 = vmatprep.mubr.f32.mxu0 0.0
        %2347 = vmatmul.mubr.f32.gmra.mrb[0].mxu0 %v1611
        %v2348 = vpop.f32.mrb[0].mxu0
        %v2349 = vadd.f32 %v2121, %v2348
        %v2350 = vpop.f32.mrb[0].mxu0
        %2351 = vmatprep.mubr.f32.mxu0 0.0
        %2352 = vmatmul.mubr.f32.gmra.mrb[0].mxu0 %v1613
        %v2353 = vpop.f32.mrb[0].mxu0
        %v2354 = vadd.f32 %v2126, %v2353
        %v2355 = vpop.f32.mrb[0].mxu0
        %2356 = vmatprep.mubr.f32.mxu0 0.0
        %2357 = vmatmul.mubr.f32.gmra.mrb[0].mxu0 %v1615
        %v2358 = vpop.f32.mrb[0].mxu0
        %v2359 = vadd.f32 %v2131, %v2358
        %v2360 = vpop.f32.mrb[0].mxu0
        %2361 = vmatprep.mubr.f32.mxu0 0.0
        %2362 = vmatmul.mubr.f32.gmra.mrb[0].mxu0 %v1617
        %v2363 = vpop.f32.mrb[0].mxu0
        %v2364 = vadd.f32 %v2136, %v2363
        %v2365 = vpop.f32.mrb[0].mxu0
        %2366 = vmatprep.mubr.f32.mxu0 0.0
        %2367 = vmatmul.mubr.f32.gmra.mrb[0].mxu0 %v1619
        %v2368 = vpop.f32.mrb[0].mxu0
        %v2369 = vadd.f32 %v2141, %v2368
        %v2370 = vpop.f32.mrb[0].mxu0
        %2371 = vmatprep.mubr.f32.mxu0 0.0
        %2372 = vmatmul.mubr.f32.gmra.mrb[0].mxu0 %v1621
        %v2373 = vpop.f32.mrb[0].mxu0
        %v2374 = vadd.f32 %v2146, %v2373
        %v2375 = vpop.f32.mrb[0].mxu0
        %2376 = vmatprep.mubr.f32.mxu0 0.0
        %2377 = vmatmul.mubr.f32.gmra.mrb[0].mxu0 %v1623
        %v2378 = vpop.f32.mrb[0].mxu0
        %v2379 = vadd.f32 %v2151, %v2378
        %v2380 = vpop.f32.mrb[0].mxu0
        %2381 = vmatprep.mubr.f32.mxu0 0.0
        %2382 = vmatmul.mubr.f32.gmra.mrb[0].mxu0 %v1625
        %v2383 = vpop.f32.mrb[0].mxu0
        %v2384 = vadd.f32 %v2156, %v2383
        %v2385 = vpop.f32.mrb[0].mxu0
        %2386 = vmatprep.mubr.f32.mxu0 0.0
        %2387 = vmatmul.mubr.f32.gmra.mrb[0].mxu0 %v1627
        %v2388 = vpop.f32.mrb[0].mxu0
        %v2389 = vadd.f32 %v2161, %v2388
        %v2390 = vpop.f32.mrb[0].mxu0
        %2391 = vmatprep.mubr.f32.mxu0 0.0
        %2392 = vmatmul.mubr.f32.gmra.mrb[0].mxu0 %v1629
        %v2393 = vpop.f32.mrb[0].mxu0
        %v2394 = vadd.f32 %v2166, %v2393
        %v2395 = vpop.f32.mrb[0].mxu0
        %2396 = vmatprep.mubr.f32.mxu0 0.0
        %2397 = vmatmul.mubr.f32.gmra.mrb[0].mxu0 %v1631
        %v2398 = vpop.f32.mrb[0].mxu0
        %v2399 = vadd.f32 %v2171, %v2398
        %v2400 = vpop.f32.mrb[0].mxu0
        %2401 = vdwg.mxu0
        %s2402 = scalar_lea.vmem [#allocation10], 28
        %v2403 = vld [vmem:[%s2402] sm:$0xf]
        %s2404 = scalar_lea.vmem [#allocation10], 4
        %v2405 = vld [vmem:[%s2404] sm:$0xf]
        %v2407 = vsel %vm1568, 0.0, 0
        %v2410 = vsel %vm1633, %v2405, 0
        %2412 = vmatprep.subr.mxu0 0.0
        %2413 = vmatpush1.msra.mxu0 %v2410
        %2414 = vmatprep.subr.mxu0 0.0
        %2415 = vmatpush1.msra.mxu0 0.0
        %2416 = vmatprep.subr.mxu0 0.0
        %2417 = vmatpush1.msra.mxu0 0.0
        %2418 = vmatprep.subr.mxu0 0.0
        %2419 = vmatpush1.msra.mxu0 0.0
        %2420 = vmatprep.subr.mxu0 0.0
        %2421 = vmatpush1.msra.mxu0 0.0
        %2422 = vmatprep.subr.mxu0 0.0
        %2423 = vmatpush1.msra.mxu0 0.0
        %2424 = vmatprep.subr.mxu0 0.0
        %2425 = vmatpush1.msra.mxu0 0.0
        %2426 = vmatprep.subr.mxu0 0.0
        %2427 = vmatpush1.msra.mxu0 0.0
        %2428 = vmatprep.subr.mxu0 0.0
        %2429 = vmatpush1.msra.mxu0 0.0
        %2430 = vmatprep.subr.mxu0 0.0
        %2431 = vmatpush1.msra.mxu0 0.0
        %2432 = vmatprep.subr.mxu0 0.0
        %2433 = vmatpush1.msra.mxu0 0.0
        %2434 = vmatprep.subr.mxu0 0.0
        %2435 = vmatpush1.msra.mxu0 0.0
        %2436 = vmatprep.subr.mxu0 0.0
        %2437 = vmatpush1.msra.mxu0 0.0
        %2438 = vmatprep.subr.mxu0 0.0
        %2439 = vmatpush1.msra.mxu0 0.0
        %2440 = vmatprep.subr.mxu0 0.0
        %2441 = vmatpush1.msra.mxu0 0.0
        %2442 = vmatprep.subr.mxu0 0.0
        %2443 = vmatpush1.msra.mxu0 0.0
        %2444 = vmatprep.subr.mxu0 0.0
        %2445 = vmatpush1.msra.mxu0 0.0
        %2446 = vmatprep.subr.mxu0 0.0
        %2447 = vmatpush1.msra.mxu0 0.0
        %2448 = vmatprep.subr.mxu0 0.0
        %2449 = vmatpush1.msra.mxu0 0.0
        %2450 = vmatprep.subr.mxu0 0.0
        %2451 = vmatpush1.msra.mxu0 0.0
        %2452 = vmatprep.subr.mxu0 0.0
        %2453 = vmatpush1.msra.mxu0 0.0
        %2454 = vmatprep.subr.mxu0 0.0
        %2455 = vmatpush1.msra.mxu0 0.0
        %2456 = vmatprep.subr.mxu0 0.0
        %2457 = vmatpush1.msra.mxu0 0.0
        %2458 = vmatprep.subr.mxu0 0.0
        %2459 = vmatpush1.msra.mxu0 0.0
        %2460 = vmatprep.subr.mxu0 0.0
        %2461 = vmatpush1.msra.mxu0 0.0
        %2462 = vmatprep.subr.mxu0 0.0
        %2463 = vmatpush1.msra.mxu0 0.0
        %2464 = vmatprep.subr.mxu0 0.0
        %2465 = vmatpush1.msra.mxu0 0.0
        %2466 = vmatprep.subr.mxu0 0.0
        %2467 = vmatpush1.msra.mxu0 0.0
        %2468 = vmatprep.subr.mxu0 0.0
        %2469 = vmatpush1.msra.mxu0 0.0
        %2470 = vmatprep.subr.mxu0 0.0
        %2471 = vmatpush1.msra.mxu0 0.0
        %2472 = vmatprep.subr.mxu0 0.0
        %2473 = vmatpush1.msra.mxu0 0.0
        %2474 = vmatprep.subr.mxu0 0.0
        %2475 = vmatpush1.msra.mxu0 0.0
        %2476 = vmatprep.mubr.f32.mxu0 0.0
        %2477 = vmatmul.mubr.f32.gmra.mrb[0].mxu0 %v1573
        %v2478 = vpop.f32.mrb[0].mxu0
        %v2479 = vadd.f32 0.0, %v2478
        %v2480 = vpop.f32.mrb[0].mxu0
        %2481 = vmatprep.mubr.f32.mxu0 0.0
        %2482 = vmatmul.mubr.f32.gmra.mrb[0].mxu0 %v1575
        %v2483 = vpop.f32.mrb[0].mxu0
        %v2484 = vadd.f32 0.0, %v2483
        %v2485 = vpop.f32.mrb[0].mxu0
        %2486 = vmatprep.mubr.f32.mxu0 0.0
        %2487 = vmatmul.mubr.f32.gmra.mrb[0].mxu0 %v1577
        %v2488 = vpop.f32.mrb[0].mxu0
        %v2489 = vadd.f32 0.0, %v2488
        %v2490 = vpop.f32.mrb[0].mxu0
        %2491 = vmatprep.mubr.f32.mxu0 0.0
        %2492 = vmatmul.mubr.f32.gmra.mrb[0].mxu0 %v1579
        %v2493 = vpop.f32.mrb[0].mxu0
        %v2494 = vadd.f32 0.0, %v2493
        %v2495 = vpop.f32.mrb[0].mxu0
        %2496 = vmatprep.mubr.f32.mxu0 0.0
        %2497 = vmatmul.mubr.f32.gmra.mrb[0].mxu0 %v1581
        %v2498 = vpop.f32.mrb[0].mxu0
        %v2499 = vadd.f32 0.0, %v2498
        %v2500 = vpop.f32.mrb[0].mxu0
        %2501 = vmatprep.mubr.f32.mxu0 0.0
        %2502 = vmatmul.mubr.f32.gmra.mrb[0].mxu0 %v1583
        %v2503 = vpop.f32.mrb[0].mxu0
        %v2504 = vadd.f32 0.0, %v2503
        %v2505 = vpop.f32.mrb[0].mxu0
        %2506 = vmatprep.mubr.f32.mxu0 0.0
        %2507 = vmatmul.mubr.f32.gmra.mrb[0].mxu0 %v1585
        %v2508 = vpop.f32.mrb[0].mxu0
        %v2509 = vadd.f32 0.0, %v2508
        %v2510 = vpop.f32.mrb[0].mxu0
        %2511 = vmatprep.mubr.f32.mxu0 0.0
        %2512 = vmatmul.mubr.f32.gmra.mrb[0].mxu0 %v1587
        %v2513 = vpop.f32.mrb[0].mxu0
        %v2514 = vadd.f32 0.0, %v2513
        %v2515 = vpop.f32.mrb[0].mxu0
        %2516 = vmatprep.mubr.f32.mxu0 0.0
        %2517 = vmatmul.mubr.f32.gmra.mrb[0].mxu0 %v1589
        %v2518 = vpop.f32.mrb[0].mxu0
        %v2519 = vadd.f32 0.0, %v2518
        %v2520 = vpop.f32.mrb[0].mxu0
        %2521 = vmatprep.mubr.f32.mxu0 0.0
        %2522 = vmatmul.mubr.f32.gmra.mrb[0].mxu0 %v1591
        %v2523 = vpop.f32.mrb[0].mxu0
        %v2524 = vadd.f32 0.0, %v2523
        %v2525 = vpop.f32.mrb[0].mxu0
        %2526 = vmatprep.mubr.f32.mxu0 0.0
        %2527 = vmatmul.mubr.f32.gmra.mrb[0].mxu0 %v1593
        %v2528 = vpop.f32.mrb[0].mxu0
        %v2529 = vadd.f32 0.0, %v2528
        %v2530 = vpop.f32.mrb[0].mxu0
        %2531 = vmatprep.mubr.f32.mxu0 0.0
        %2532 = vmatmul.mubr.f32.gmra.mrb[0].mxu0 %v1595
        %v2533 = vpop.f32.mrb[0].mxu0
        %v2534 = vadd.f32 0.0, %v2533
        %v2535 = vpop.f32.mrb[0].mxu0
        %2536 = vmatprep.mubr.f32.mxu0 0.0
        %2537 = vmatmul.mubr.f32.gmra.mrb[0].mxu0 %v1597
        %v2538 = vpop.f32.mrb[0].mxu0
        %v2539 = vadd.f32 0.0, %v2538
        %v2540 = vpop.f32.mrb[0].mxu0
        %2541 = vmatprep.mubr.f32.mxu0 0.0
        %2542 = vmatmul.mubr.f32.gmra.mrb[0].mxu0 %v1599
        %v2543 = vpop.f32.mrb[0].mxu0
        %v2544 = vadd.f32 0.0, %v2543
        %v2545 = vpop.f32.mrb[0].mxu0
        %2546 = vmatprep.mubr.f32.mxu0 0.0
        %2547 = vmatmul.mubr.f32.gmra.mrb[0].mxu0 %v1601
        %v2548 = vpop.f32.mrb[0].mxu0
        %v2549 = vadd.f32 0.0, %v2548
        %v2550 = vpop.f32.mrb[0].mxu0
        %2551 = vmatprep.mubr.f32.mxu0 0.0
        %2552 = vmatmul.mubr.f32.gmra.mrb[0].mxu0 %v1603
        %v2553 = vpop.f32.mrb[0].mxu0
        %v2554 = vadd.f32 0.0, %v2553
        %v2555 = vpop.f32.mrb[0].mxu0
        %2556 = vmatprep.mubr.f32.mxu0 0.0
        %2557 = vmatmul.mubr.f32.gmra.mrb[0].mxu0 %v1605
        %v2558 = vpop.f32.mrb[0].mxu0
        %v2559 = vadd.f32 0.0, %v2558
        %v2560 = vpop.f32.mrb[0].mxu0
        %2561 = vmatprep.mubr.f32.mxu0 0.0
        %2562 = vmatmul.mubr.f32.gmra.mrb[0].mxu0 %v1607
        %v2563 = vpop.f32.mrb[0].mxu0
        %v2564 = vadd.f32 0.0, %v2563
        %v2565 = vpop.f32.mrb[0].mxu0
        %2566 = vmatprep.mubr.f32.mxu0 0.0
        %2567 = vmatmul.mubr.f32.gmra.mrb[0].mxu0 %v1609
        %v2568 = vpop.f32.mrb[0].mxu0
        %v2569 = vadd.f32 0.0, %v2568
        %v2570 = vpop.f32.mrb[0].mxu0
        %2571 = vmatprep.mubr.f32.mxu0 0.0
        %2572 = vmatmul.mubr.f32.gmra.mrb[0].mxu0 %v1611
        %v2573 = vpop.f32.mrb[0].mxu0
        %v2574 = vadd.f32 0.0, %v2573
        %v2575 = vpop.f32.mrb[0].mxu0
        %2576 = vmatprep.mubr.f32.mxu0 0.0
        %2577 = vmatmul.mubr.f32.gmra.mrb[0].mxu0 %v1613
        %v2578 = vpop.f32.mrb[0].mxu0
        %v2579 = vadd.f32 0.0, %v2578
        %v2580 = vpop.f32.mrb[0].mxu0
        %2581 = vmatprep.mubr.f32.mxu0 0.0
        %2582 = vmatmul.mubr.f32.gmra.mrb[0].mxu0 %v1615
        %v2583 = vpop.f32.mrb[0].mxu0
        %v2584 = vadd.f32 0.0, %v2583
        %v2585 = vpop.f32.mrb[0].mxu0
        %2586 = vmatprep.mubr.f32.mxu0 0.0
        %2587 = vmatmul.mubr.f32.gmra.mrb[0].mxu0 %v1617
        %v2588 = vpop.f32.mrb[0].mxu0
        %v2589 = vadd.f32 0.0, %v2588
        %v2590 = vpop.f32.mrb[0].mxu0
        %2591 = vmatprep.mubr.f32.mxu0 0.0
        %2592 = vmatmul.mubr.f32.gmra.mrb[0].mxu0 %v1619
        %v2593 = vpop.f32.mrb[0].mxu0
        %v2594 = vadd.f32 0.0, %v2593
        %v2595 = vpop.f32.mrb[0].mxu0
        %2596 = vmatprep.mubr.f32.mxu0 0.0
        %2597 = vmatmul.mubr.f32.gmra.mrb[0].mxu0 %v1621
        %v2598 = vpop.f32.mrb[0].mxu0
        %v2599 = vadd.f32 0.0, %v2598
        %v2600 = vpop.f32.mrb[0].mxu0
        %2601 = vmatprep.mubr.f32.mxu0 0.0
        %2602 = vmatmul.mubr.f32.gmra.mrb[0].mxu0 %v1623
        %v2603 = vpop.f32.mrb[0].mxu0
        %v2604 = vadd.f32 0.0, %v2603
        %v2605 = vpop.f32.mrb[0].mxu0
        %2606 = vmatprep.mubr.f32.mxu0 0.0
        %2607 = vmatmul.mubr.f32.gmra.mrb[0].mxu0 %v1625
        %v2608 = vpop.f32.mrb[0].mxu0
        %v2609 = vadd.f32 0.0, %v2608
        %v2610 = vpop.f32.mrb[0].mxu0
        %2611 = vmatprep.mubr.f32.mxu0 0.0
        %2612 = vmatmul.mubr.f32.gmra.mrb[0].mxu0 %v1627
        %v2613 = vpop.f32.mrb[0].mxu0
        %v2614 = vadd.f32 0.0, %v2613
        %v2615 = vpop.f32.mrb[0].mxu0
        %2616 = vmatprep.mubr.f32.mxu0 0.0
        %2617 = vmatmul.mubr.f32.gmra.mrb[0].mxu0 %v1629
        %v2618 = vpop.f32.mrb[0].mxu0
        %v2619 = vadd.f32 0.0, %v2618
        %v2620 = vpop.f32.mrb[0].mxu0
        %2621 = vmatprep.mubr.f32.mxu0 0.0
        %2622 = vmatmul.mubr.f32.gmra.mrb[0].mxu0 %v1631
        %v2623 = vpop.f32.mrb[0].mxu0
        %v2624 = vadd.f32 0.0, %v2623
        %v2625 = vpop.f32.mrb[0].mxu0
        %2626 = vmatprep.mubr.f32.mxu0 0.0
        %2627 = vmatmul.mubr.f32.gmra.mrb[0].mxu0 %v2407
        %v2628 = vpop.f32.mrb[0].mxu0
        %v2629 = vadd.f32 0.0, %v2628
        %v2630 = vpop.f32.mrb[0].mxu0
        %2631 = vmatprep.mubr.f32.mxu0 0.0
        %2632 = vmatmul.mubr.f32.gmra.mrb[0].mxu0 %v2407
        %v2633 = vpop.f32.mrb[0].mxu0
        %v2634 = vadd.f32 0.0, %v2633
        %v2635 = vpop.f32.mrb[0].mxu0
        %2636 = vdwg.mxu0
        %v2638 = vsel %vm1633, %v2403, 0
        %2640 = vmatprep.subr.mxu0 0.0
        %2641 = vmatpush1.msra.mxu0 %v2638
        %2642 = vmatprep.subr.mxu0 0.0
        %2643 = vmatpush1.msra.mxu0 0.0
        %2644 = vmatprep.subr.mxu0 0.0
        %2645 = vmatpush1.msra.mxu0 0.0
        %2646 = vmatprep.subr.mxu0 0.0
        %2647 = vmatpush1.msra.mxu0 0.0
        %2648 = vmatprep.subr.mxu0 0.0
        %2649 = vmatpush1.msra.mxu0 0.0
        %2650 = vmatprep.subr.mxu0 0.0
        %2651 = vmatpush1.msra.mxu0 0.0
        %2652 = vmatprep.subr.mxu0 0.0
        %2653 = vmatpush1.msra.mxu0 0.0
        %2654 = vmatprep.subr.mxu0 0.0
        %2655 = vmatpush1.msra.mxu0 0.0
        %2656 = vmatprep.subr.mxu0 0.0
        %2657 = vmatpush1.msra.mxu0 0.0
        %2658 = vmatprep.subr.mxu0 0.0
        %2659 = vmatpush1.msra.mxu0 0.0
        %2660 = vmatprep.subr.mxu0 0.0
        %2661 = vmatpush1.msra.mxu0 0.0
        %2662 = vmatprep.subr.mxu0 0.0
        %2663 = vmatpush1.msra.mxu0 0.0
        %2664 = vmatprep.subr.mxu0 0.0
        %2665 = vmatpush1.msra.mxu0 0.0
        %2666 = vmatprep.subr.mxu0 0.0
        %2667 = vmatpush1.msra.mxu0 0.0
        %2668 = vmatprep.subr.mxu0 0.0
        %2669 = vmatpush1.msra.mxu0 0.0
        %2670 = vmatprep.subr.mxu0 0.0
        %2671 = vmatpush1.msra.mxu0 0.0
        %2672 = vmatprep.subr.mxu0 0.0
        %2673 = vmatpush1.msra.mxu0 0.0
        %2674 = vmatprep.subr.mxu0 0.0
        %2675 = vmatpush1.msra.mxu0 0.0
        %2676 = vmatprep.subr.mxu0 0.0
        %2677 = vmatpush1.msra.mxu0 0.0
        %2678 = vmatprep.subr.mxu0 0.0
        %2679 = vmatpush1.msra.mxu0 0.0
        %2680 = vmatprep.subr.mxu0 0.0
        %2681 = vmatpush1.msra.mxu0 0.0
        %2682 = vmatprep.subr.mxu0 0.0
        %2683 = vmatpush1.msra.mxu0 0.0
        %2684 = vmatprep.subr.mxu0 0.0
        %2685 = vmatpush1.msra.mxu0 0.0
        %2686 = vmatprep.subr.mxu0 0.0
        %2687 = vmatpush1.msra.mxu0 0.0
        %2688 = vmatprep.subr.mxu0 0.0
        %2689 = vmatpush1.msra.mxu0 0.0
        %2690 = vmatprep.subr.mxu0 0.0
        %2691 = vmatpush1.msra.mxu0 0.0
        %2692 = vmatprep.subr.mxu0 0.0
        %2693 = vmatpush1.msra.mxu0 0.0
        %2694 = vmatprep.subr.mxu0 0.0
        %2695 = vmatpush1.msra.mxu0 0.0
        %2696 = vmatprep.subr.mxu0 0.0
        %2697 = vmatpush1.msra.mxu0 0.0
        %2698 = vmatprep.subr.mxu0 0.0
        %2699 = vmatpush1.msra.mxu0 0.0
        %2700 = vmatprep.subr.mxu0 0.0
        %2701 = vmatpush1.msra.mxu0 0.0
        %2702 = vmatprep.subr.mxu0 0.0
        %2703 = vmatpush1.msra.mxu0 0.0
        %2704 = vmatprep.mubr.f32.mxu0 0.0
        %2705 = vmatmul.mubr.f32.gmra.mrb[0].mxu0 %v1569
        %v2706 = vpop.f32.mrb[0].mxu0
        %v2707 = vadd.f32 %v2479, %v2706
        %v2708 = vpop.f32.mrb[0].mxu0
        %2709 = vmatprep.mubr.f32.mxu0 0.0
        %2710 = vmatmul.mubr.f32.gmra.mrb[0].mxu0 %v1571
        %v2711 = vpop.f32.mrb[0].mxu0
        %v2712 = vadd.f32 %v2484, %v2711
        %v2713 = vpop.f32.mrb[0].mxu0
        %2714 = vmatprep.mubr.f32.mxu0 0.0
        %2715 = vmatmul.mubr.f32.gmra.mrb[0].mxu0 %v1573
        %v2716 = vpop.f32.mrb[0].mxu0
        %v2717 = vadd.f32 %v2489, %v2716
        %v2718 = vpop.f32.mrb[0].mxu0
        %2719 = vmatprep.mubr.f32.mxu0 0.0
        %2720 = vmatmul.mubr.f32.gmra.mrb[0].mxu0 %v1575
        %v2721 = vpop.f32.mrb[0].mxu0
        %v2722 = vadd.f32 %v2494, %v2721
        %v2723 = vpop.f32.mrb[0].mxu0
        %2724 = vmatprep.mubr.f32.mxu0 0.0
        %2725 = vmatmul.mubr.f32.gmra.mrb[0].mxu0 %v1577
        %v2726 = vpop.f32.mrb[0].mxu0
        %v2727 = vadd.f32 %v2499, %v2726
        %v2728 = vpop.f32.mrb[0].mxu0
        %2729 = vmatprep.mubr.f32.mxu0 0.0
        %2730 = vmatmul.mubr.f32.gmra.mrb[0].mxu0 %v1579
        %v2731 = vpop.f32.mrb[0].mxu0
        %v2732 = vadd.f32 %v2504, %v2731
        %v2733 = vpop.f32.mrb[0].mxu0
        %2734 = vmatprep.mubr.f32.mxu0 0.0
        %2735 = vmatmul.mubr.f32.gmra.mrb[0].mxu0 %v1581
        %v2736 = vpop.f32.mrb[0].mxu0
        %v2737 = vadd.f32 %v2509, %v2736
        %v2738 = vpop.f32.mrb[0].mxu0
        %2739 = vmatprep.mubr.f32.mxu0 0.0
        %2740 = vmatmul.mubr.f32.gmra.mrb[0].mxu0 %v1583
        %v2741 = vpop.f32.mrb[0].mxu0
        %v2742 = vadd.f32 %v2514, %v2741
        %v2743 = vpop.f32.mrb[0].mxu0
        %2744 = vmatprep.mubr.f32.mxu0 0.0
        %2745 = vmatmul.mubr.f32.gmra.mrb[0].mxu0 %v1585
        %v2746 = vpop.f32.mrb[0].mxu0
        %v2747 = vadd.f32 %v2519, %v2746
        %v2748 = vpop.f32.mrb[0].mxu0
        %2749 = vmatprep.mubr.f32.mxu0 0.0
        %2750 = vmatmul.mubr.f32.gmra.mrb[0].mxu0 %v1587
        %v2751 = vpop.f32.mrb[0].mxu0
        %v2752 = vadd.f32 %v2524, %v2751
        %v2753 = vpop.f32.mrb[0].mxu0
        %2754 = vmatprep.mubr.f32.mxu0 0.0
        %2755 = vmatmul.mubr.f32.gmra.mrb[0].mxu0 %v1589
        %v2756 = vpop.f32.mrb[0].mxu0
        %v2757 = vadd.f32 %v2529, %v2756
        %v2758 = vpop.f32.mrb[0].mxu0
        %2759 = vmatprep.mubr.f32.mxu0 0.0
        %2760 = vmatmul.mubr.f32.gmra.mrb[0].mxu0 %v1591
        %v2761 = vpop.f32.mrb[0].mxu0
        %v2762 = vadd.f32 %v2534, %v2761
        %v2763 = vpop.f32.mrb[0].mxu0
        %2764 = vmatprep.mubr.f32.mxu0 0.0
        %2765 = vmatmul.mubr.f32.gmra.mrb[0].mxu0 %v1593
        %v2766 = vpop.f32.mrb[0].mxu0
        %v2767 = vadd.f32 %v2539, %v2766
        %v2768 = vpop.f32.mrb[0].mxu0
        %2769 = vmatprep.mubr.f32.mxu0 0.0
        %2770 = vmatmul.mubr.f32.gmra.mrb[0].mxu0 %v1595
        %v2771 = vpop.f32.mrb[0].mxu0
        %v2772 = vadd.f32 %v2544, %v2771
        %v2773 = vpop.f32.mrb[0].mxu0
        %2774 = vmatprep.mubr.f32.mxu0 0.0
        %2775 = vmatmul.mubr.f32.gmra.mrb[0].mxu0 %v1597
        %v2776 = vpop.f32.mrb[0].mxu0
        %v2777 = vadd.f32 %v2549, %v2776
        %v2778 = vpop.f32.mrb[0].mxu0
        %2779 = vmatprep.mubr.f32.mxu0 0.0
        %2780 = vmatmul.mubr.f32.gmra.mrb[0].mxu0 %v1599
        %v2781 = vpop.f32.mrb[0].mxu0
        %v2782 = vadd.f32 %v2554, %v2781
        %v2783 = vpop.f32.mrb[0].mxu0
        %2784 = vmatprep.mubr.f32.mxu0 0.0
        %2785 = vmatmul.mubr.f32.gmra.mrb[0].mxu0 %v1601
        %v2786 = vpop.f32.mrb[0].mxu0
        %v2787 = vadd.f32 %v2559, %v2786
        %v2788 = vpop.f32.mrb[0].mxu0
        %2789 = vmatprep.mubr.f32.mxu0 0.0
        %2790 = vmatmul.mubr.f32.gmra.mrb[0].mxu0 %v1603
        %v2791 = vpop.f32.mrb[0].mxu0
        %v2792 = vadd.f32 %v2564, %v2791
        %v2793 = vpop.f32.mrb[0].mxu0
        %2794 = vmatprep.mubr.f32.mxu0 0.0
        %2795 = vmatmul.mubr.f32.gmra.mrb[0].mxu0 %v1605
        %v2796 = vpop.f32.mrb[0].mxu0
        %v2797 = vadd.f32 %v2569, %v2796
        %v2798 = vpop.f32.mrb[0].mxu0
        %2799 = vmatprep.mubr.f32.mxu0 0.0
        %2800 = vmatmul.mubr.f32.gmra.mrb[0].mxu0 %v1607
        %v2801 = vpop.f32.mrb[0].mxu0
        %v2802 = vadd.f32 %v2574, %v2801
        %v2803 = vpop.f32.mrb[0].mxu0
        %2804 = vmatprep.mubr.f32.mxu0 0.0
        %2805 = vmatmul.mubr.f32.gmra.mrb[0].mxu0 %v1609
        %v2806 = vpop.f32.mrb[0].mxu0
        %v2807 = vadd.f32 %v2579, %v2806
        %v2808 = vpop.f32.mrb[0].mxu0
        %2809 = vmatprep.mubr.f32.mxu0 0.0
        %2810 = vmatmul.mubr.f32.gmra.mrb[0].mxu0 %v1611
        %v2811 = vpop.f32.mrb[0].mxu0
        %v2812 = vadd.f32 %v2584, %v2811
        %v2813 = vpop.f32.mrb[0].mxu0
        %2814 = vmatprep.mubr.f32.mxu0 0.0
        %2815 = vmatmul.mubr.f32.gmra.mrb[0].mxu0 %v1613
        %v2816 = vpop.f32.mrb[0].mxu0
        %v2817 = vadd.f32 %v2589, %v2816
        %v2818 = vpop.f32.mrb[0].mxu0
        %2819 = vmatprep.mubr.f32.mxu0 0.0
        %2820 = vmatmul.mubr.f32.gmra.mrb[0].mxu0 %v1615
        %v2821 = vpop.f32.mrb[0].mxu0
        %v2822 = vadd.f32 %v2594, %v2821
        %v2823 = vpop.f32.mrb[0].mxu0
        %2824 = vmatprep.mubr.f32.mxu0 0.0
        %2825 = vmatmul.mubr.f32.gmra.mrb[0].mxu0 %v1617
        %v2826 = vpop.f32.mrb[0].mxu0
        %v2827 = vadd.f32 %v2599, %v2826
        %v2828 = vpop.f32.mrb[0].mxu0
        %2829 = vmatprep.mubr.f32.mxu0 0.0
        %2830 = vmatmul.mubr.f32.gmra.mrb[0].mxu0 %v1619
        %v2831 = vpop.f32.mrb[0].mxu0
        %v2832 = vadd.f32 %v2604, %v2831
        %v2833 = vpop.f32.mrb[0].mxu0
        %2834 = vmatprep.mubr.f32.mxu0 0.0
        %2835 = vmatmul.mubr.f32.gmra.mrb[0].mxu0 %v1621
        %v2836 = vpop.f32.mrb[0].mxu0
        %v2837 = vadd.f32 %v2609, %v2836
        %v2838 = vpop.f32.mrb[0].mxu0
        %2839 = vmatprep.mubr.f32.mxu0 0.0
        %2840 = vmatmul.mubr.f32.gmra.mrb[0].mxu0 %v1623
        %v2841 = vpop.f32.mrb[0].mxu0
        %v2842 = vadd.f32 %v2614, %v2841
        %v2843 = vpop.f32.mrb[0].mxu0
        %2844 = vmatprep.mubr.f32.mxu0 0.0
        %2845 = vmatmul.mubr.f32.gmra.mrb[0].mxu0 %v1625
        %v2846 = vpop.f32.mrb[0].mxu0
        %v2847 = vadd.f32 %v2619, %v2846
        %v2848 = vpop.f32.mrb[0].mxu0
        %2849 = vmatprep.mubr.f32.mxu0 0.0
        %2850 = vmatmul.mubr.f32.gmra.mrb[0].mxu0 %v1627
        %v2851 = vpop.f32.mrb[0].mxu0
        %v2852 = vadd.f32 %v2624, %v2851
        %v2853 = vpop.f32.mrb[0].mxu0
        %2854 = vmatprep.mubr.f32.mxu0 0.0
        %2855 = vmatmul.mubr.f32.gmra.mrb[0].mxu0 %v1629
        %v2856 = vpop.f32.mrb[0].mxu0
        %v2857 = vadd.f32 %v2629, %v2856
        %v2858 = vpop.f32.mrb[0].mxu0
        %2859 = vmatprep.mubr.f32.mxu0 0.0
        %2860 = vmatmul.mubr.f32.gmra.mrb[0].mxu0 %v1631
        %v2861 = vpop.f32.mrb[0].mxu0
        %v2862 = vadd.f32 %v2634, %v2861
        %v2863 = vpop.f32.mrb[0].mxu0
        %2864 = vdwg.mxu0
        %s2865 = scalar_lea.vmem [#allocation10], 32
        %v2866 = vld [vmem:[%s2865] sm:$0xf]
        %s2867 = scalar_lea.vmem [#allocation10], 24
        %v2868 = vld [vmem:[%s2867] sm:$0xf]
        %v2870 = vsel %vm1633, %v2868, 0
        %2872 = vmatprep.subr.mxu0 0.0
        %2873 = vmatpush1.msra.mxu0 %v2870
        %2874 = vmatprep.subr.mxu0 0.0
        %2875 = vmatpush1.msra.mxu0 0.0
        %2876 = vmatprep.subr.mxu0 0.0
        %2877 = vmatpush1.msra.mxu0 0.0
        %2878 = vmatprep.subr.mxu0 0.0
        %2879 = vmatpush1.msra.mxu0 0.0
        %2880 = vmatprep.subr.mxu0 0.0
        %2881 = vmatpush1.msra.mxu0 0.0
        %2882 = vmatprep.subr.mxu0 0.0
        %2883 = vmatpush1.msra.mxu0 0.0
        %2884 = vmatprep.subr.mxu0 0.0
        %2885 = vmatpush1.msra.mxu0 0.0
        %2886 = vmatprep.subr.mxu0 0.0
        %2887 = vmatpush1.msra.mxu0 0.0
        %2888 = vmatprep.subr.mxu0 0.0
        %2889 = vmatpush1.msra.mxu0 0.0
        %2890 = vmatprep.subr.mxu0 0.0
        %2891 = vmatpush1.msra.mxu0 0.0
        %2892 = vmatprep.subr.mxu0 0.0
        %2893 = vmatpush1.msra.mxu0 0.0
        %2894 = vmatprep.subr.mxu0 0.0
        %2895 = vmatpush1.msra.mxu0 0.0
        %2896 = vmatprep.subr.mxu0 0.0
        %2897 = vmatpush1.msra.mxu0 0.0
        %2898 = vmatprep.subr.mxu0 0.0
        %2899 = vmatpush1.msra.mxu0 0.0
        %2900 = vmatprep.subr.mxu0 0.0
        %2901 = vmatpush1.msra.mxu0 0.0
        %2902 = vmatprep.subr.mxu0 0.0
        %2903 = vmatpush1.msra.mxu0 0.0
        %2904 = vmatprep.subr.mxu0 0.0
        %2905 = vmatpush1.msra.mxu0 0.0
        %2906 = vmatprep.subr.mxu0 0.0
        %2907 = vmatpush1.msra.mxu0 0.0
        %2908 = vmatprep.subr.mxu0 0.0
        %2909 = vmatpush1.msra.mxu0 0.0
        %2910 = vmatprep.subr.mxu0 0.0
        %2911 = vmatpush1.msra.mxu0 0.0
        %2912 = vmatprep.subr.mxu0 0.0
        %2913 = vmatpush1.msra.mxu0 0.0
        %2914 = vmatprep.subr.mxu0 0.0
        %2915 = vmatpush1.msra.mxu0 0.0
        %2916 = vmatprep.subr.mxu0 0.0
        %2917 = vmatpush1.msra.mxu0 0.0
        %2918 = vmatprep.subr.mxu0 0.0
        %2919 = vmatpush1.msra.mxu0 0.0
        %2920 = vmatprep.subr.mxu0 0.0
        %2921 = vmatpush1.msra.mxu0 0.0
        %2922 = vmatprep.subr.mxu0 0.0
        %2923 = vmatpush1.msra.mxu0 0.0
        %2924 = vmatprep.subr.mxu0 0.0
        %2925 = vmatpush1.msra.mxu0 0.0
        %2926 = vmatprep.subr.mxu0 0.0
        %2927 = vmatpush1.msra.mxu0 0.0
        %2928 = vmatprep.subr.mxu0 0.0
        %2929 = vmatpush1.msra.mxu0 0.0
        %2930 = vmatprep.subr.mxu0 0.0
        %2931 = vmatpush1.msra.mxu0 0.0
        %2932 = vmatprep.subr.mxu0 0.0
        %2933 = vmatpush1.msra.mxu0 0.0
        %2934 = vmatprep.subr.mxu0 0.0
        %2935 = vmatpush1.msra.mxu0 0.0
        %2936 = vmatprep.mubr.f32.mxu0 0.0
        %2937 = vmatmul.mubr.f32.gmra.mrb[0].mxu0 %v1866
        %v2938 = vpop.f32.mrb[0].mxu0
        %v2939 = vadd.f32 0.0, %v2938
        %v2940 = vpop.f32.mrb[0].mxu0
        %2941 = vmatprep.mubr.f32.mxu0 0.0
        %2942 = vmatmul.mubr.f32.gmra.mrb[0].mxu0 %v1869
        %v2943 = vpop.f32.mrb[0].mxu0
        %v2944 = vadd.f32 0.0, %v2943
        %v2945 = vpop.f32.mrb[0].mxu0
        %2946 = vmatprep.mubr.f32.mxu0 0.0
        %2947 = vmatmul.mubr.f32.gmra.mrb[0].mxu0 %v1871
        %v2948 = vpop.f32.mrb[0].mxu0
        %v2949 = vadd.f32 0.0, %v2948
        %v2950 = vpop.f32.mrb[0].mxu0
        %2951 = vmatprep.mubr.f32.mxu0 0.0
        %2952 = vmatmul.mubr.f32.gmra.mrb[0].mxu0 %v1874
        %v2953 = vpop.f32.mrb[0].mxu0
        %v2954 = vadd.f32 0.0, %v2953
        %v2955 = vpop.f32.mrb[0].mxu0
        %2956 = vmatprep.mubr.f32.mxu0 0.0
        %2957 = vmatmul.mubr.f32.gmra.mrb[0].mxu0 %v1876
        %v2958 = vpop.f32.mrb[0].mxu0
        %v2959 = vadd.f32 0.0, %v2958
        %v2960 = vpop.f32.mrb[0].mxu0
        %2961 = vmatprep.mubr.f32.mxu0 0.0
        %2962 = vmatmul.mubr.f32.gmra.mrb[0].mxu0 %v1879
        %v2963 = vpop.f32.mrb[0].mxu0
        %v2964 = vadd.f32 0.0, %v2963
        %v2965 = vpop.f32.mrb[0].mxu0
        %2966 = vmatprep.mubr.f32.mxu0 0.0
        %2967 = vmatmul.mubr.f32.gmra.mrb[0].mxu0 %v1881
        %v2968 = vpop.f32.mrb[0].mxu0
        %v2969 = vadd.f32 0.0, %v2968
        %v2970 = vpop.f32.mrb[0].mxu0
        %2971 = vmatprep.mubr.f32.mxu0 0.0
        %2972 = vmatmul.mubr.f32.gmra.mrb[0].mxu0 %v1884
        %v2973 = vpop.f32.mrb[0].mxu0
        %v2974 = vadd.f32 0.0, %v2973
        %v2975 = vpop.f32.mrb[0].mxu0
        %2976 = vmatprep.mubr.f32.mxu0 0.0
        %2977 = vmatmul.mubr.f32.gmra.mrb[0].mxu0 %v1886
        %v2978 = vpop.f32.mrb[0].mxu0
        %v2979 = vadd.f32 0.0, %v2978
        %v2980 = vpop.f32.mrb[0].mxu0
        %2981 = vmatprep.mubr.f32.mxu0 0.0
        %2982 = vmatmul.mubr.f32.gmra.mrb[0].mxu0 %v1889
        %v2983 = vpop.f32.mrb[0].mxu0
        %v2984 = vadd.f32 0.0, %v2983
        %v2985 = vpop.f32.mrb[0].mxu0
        %2986 = vmatprep.mubr.f32.mxu0 0.0
        %2987 = vmatmul.mubr.f32.gmra.mrb[0].mxu0 %v1891
        %v2988 = vpop.f32.mrb[0].mxu0
        %v2989 = vadd.f32 0.0, %v2988
        %v2990 = vpop.f32.mrb[0].mxu0
        %2991 = vmatprep.mubr.f32.mxu0 0.0
        %2992 = vmatmul.mubr.f32.gmra.mrb[0].mxu0 %v1894
        %v2993 = vpop.f32.mrb[0].mxu0
        %v2994 = vadd.f32 0.0, %v2993
        %v2995 = vpop.f32.mrb[0].mxu0
        %2996 = vmatprep.mubr.f32.mxu0 0.0
        %2997 = vmatmul.mubr.f32.gmra.mrb[0].mxu0 %v1896
        %v2998 = vpop.f32.mrb[0].mxu0
        %v2999 = vadd.f32 0.0, %v2998
        %v3000 = vpop.f32.mrb[0].mxu0
        %3001 = vmatprep.mubr.f32.mxu0 0.0
        %3002 = vmatmul.mubr.f32.gmra.mrb[0].mxu0 %v1899
        %v3003 = vpop.f32.mrb[0].mxu0
        %v3004 = vadd.f32 0.0, %v3003
        %v3005 = vpop.f32.mrb[0].mxu0
        %3006 = vmatprep.mubr.f32.mxu0 0.0
        %3007 = vmatmul.mubr.f32.gmra.mrb[0].mxu0 %v1901
        %v3008 = vpop.f32.mrb[0].mxu0
        %v3009 = vadd.f32 0.0, %v3008
        %v3010 = vpop.f32.mrb[0].mxu0
        %3011 = vmatprep.mubr.f32.mxu0 0.0
        %3012 = vmatmul.mubr.f32.gmra.mrb[0].mxu0 %v1904
        %v3013 = vpop.f32.mrb[0].mxu0
        %v3014 = vadd.f32 0.0, %v3013
        %v3015 = vpop.f32.mrb[0].mxu0
        %3016 = vmatprep.mubr.f32.mxu0 0.0
        %3017 = vmatmul.mubr.f32.gmra.mrb[0].mxu0 %v1906
        %v3018 = vpop.f32.mrb[0].mxu0
        %v3019 = vadd.f32 0.0, %v3018
        %v3020 = vpop.f32.mrb[0].mxu0
        %3021 = vmatprep.mubr.f32.mxu0 0.0
        %3022 = vmatmul.mubr.f32.gmra.mrb[0].mxu0 %v1909
        %v3023 = vpop.f32.mrb[0].mxu0
        %v3024 = vadd.f32 0.0, %v3023
        %v3025 = vpop.f32.mrb[0].mxu0
        %3026 = vmatprep.mubr.f32.mxu0 0.0
        %3027 = vmatmul.mubr.f32.gmra.mrb[0].mxu0 %v1911
        %v3028 = vpop.f32.mrb[0].mxu0
        %v3029 = vadd.f32 0.0, %v3028
        %v3030 = vpop.f32.mrb[0].mxu0
        %3031 = vmatprep.mubr.f32.mxu0 0.0
        %3032 = vmatmul.mubr.f32.gmra.mrb[0].mxu0 %v1914
        %v3033 = vpop.f32.mrb[0].mxu0
        %v3034 = vadd.f32 0.0, %v3033
        %v3035 = vpop.f32.mrb[0].mxu0
        %3036 = vmatprep.mubr.f32.mxu0 0.0
        %3037 = vmatmul.mubr.f32.gmra.mrb[0].mxu0 %v1916
        %v3038 = vpop.f32.mrb[0].mxu0
        %v3039 = vadd.f32 0.0, %v3038
        %v3040 = vpop.f32.mrb[0].mxu0
        %3041 = vmatprep.mubr.f32.mxu0 0.0
        %3042 = vmatmul.mubr.f32.gmra.mrb[0].mxu0 %v1919
        %v3043 = vpop.f32.mrb[0].mxu0
        %v3044 = vadd.f32 0.0, %v3043
        %v3045 = vpop.f32.mrb[0].mxu0
        %3046 = vmatprep.mubr.f32.mxu0 0.0
        %3047 = vmatmul.mubr.f32.gmra.mrb[0].mxu0 %v1921
        %v3048 = vpop.f32.mrb[0].mxu0
        %v3049 = vadd.f32 0.0, %v3048
        %v3050 = vpop.f32.mrb[0].mxu0
        %3051 = vmatprep.mubr.f32.mxu0 0.0
        %3052 = vmatmul.mubr.f32.gmra.mrb[0].mxu0 %v1924
        %v3053 = vpop.f32.mrb[0].mxu0
        %v3054 = vadd.f32 0.0, %v3053
        %v3055 = vpop.f32.mrb[0].mxu0
        %3056 = vmatprep.mubr.f32.mxu0 0.0
        %3057 = vmatmul.mubr.f32.gmra.mrb[0].mxu0 %v1926
        %v3058 = vpop.f32.mrb[0].mxu0
        %v3059 = vadd.f32 0.0, %v3058
        %v3060 = vpop.f32.mrb[0].mxu0
        %3061 = vmatprep.mubr.f32.mxu0 0.0
        %3062 = vmatmul.mubr.f32.gmra.mrb[0].mxu0 %v1929
        %v3063 = vpop.f32.mrb[0].mxu0
        %v3064 = vadd.f32 0.0, %v3063
        %v3065 = vpop.f32.mrb[0].mxu0
        %3066 = vmatprep.mubr.f32.mxu0 0.0
        %3067 = vmatmul.mubr.f32.gmra.mrb[0].mxu0 %v1931
        %v3068 = vpop.f32.mrb[0].mxu0
        %v3069 = vadd.f32 0.0, %v3068
        %v3070 = vpop.f32.mrb[0].mxu0
        %3071 = vmatprep.mubr.f32.mxu0 0.0
        %3072 = vmatmul.mubr.f32.gmra.mrb[0].mxu0 %v1934
        %v3073 = vpop.f32.mrb[0].mxu0
        %v3074 = vadd.f32 0.0, %v3073
        %v3075 = vpop.f32.mrb[0].mxu0
        %3076 = vmatprep.mubr.f32.mxu0 0.0
        %3077 = vmatmul.mubr.f32.gmra.mrb[0].mxu0 %v1936
        %v3078 = vpop.f32.mrb[0].mxu0
        %v3079 = vadd.f32 0.0, %v3078
        %v3080 = vpop.f32.mrb[0].mxu0
        %3081 = vmatprep.mubr.f32.mxu0 0.0
        %3082 = vmatmul.mubr.f32.gmra.mrb[0].mxu0 %v1939
        %v3083 = vpop.f32.mrb[0].mxu0
        %v3084 = vadd.f32 0.0, %v3083
        %v3085 = vpop.f32.mrb[0].mxu0
        %3086 = vmatprep.mubr.f32.mxu0 0.0
        %3087 = vmatmul.mubr.f32.gmra.mrb[0].mxu0 %v1941
        %v3088 = vpop.f32.mrb[0].mxu0
        %v3089 = vadd.f32 0.0, %v3088
        %v3090 = vpop.f32.mrb[0].mxu0
        %3091 = vmatprep.mubr.f32.mxu0 0.0
        %3092 = vmatmul.mubr.f32.gmra.mrb[0].mxu0 %v1944
        %v3093 = vpop.f32.mrb[0].mxu0
        %v3094 = vadd.f32 0.0, %v3093
        %v3095 = vpop.f32.mrb[0].mxu0
        %3096 = vdwg.mxu0
        %v3098 = vsel %vm1633, %v2866, 0
        %3100 = vmatprep.subr.mxu0 0.0
        %3101 = vmatpush1.msra.mxu0 %v3098
        %3102 = vmatprep.subr.mxu0 0.0
        %3103 = vmatpush1.msra.mxu0 0.0
        %3104 = vmatprep.subr.mxu0 0.0
        %3105 = vmatpush1.msra.mxu0 0.0
        %3106 = vmatprep.subr.mxu0 0.0
        %3107 = vmatpush1.msra.mxu0 0.0
        %3108 = vmatprep.subr.mxu0 0.0
        %3109 = vmatpush1.msra.mxu0 0.0
        %3110 = vmatprep.subr.mxu0 0.0
        %3111 = vmatpush1.msra.mxu0 0.0
        %3112 = vmatprep.subr.mxu0 0.0
        %3113 = vmatpush1.msra.mxu0 0.0
        %3114 = vmatprep.subr.mxu0 0.0
        %3115 = vmatpush1.msra.mxu0 0.0
        %3116 = vmatprep.subr.mxu0 0.0
        %3117 = vmatpush1.msra.mxu0 0.0
        %3118 = vmatprep.subr.mxu0 0.0
        %3119 = vmatpush1.msra.mxu0 0.0
        %3120 = vmatprep.subr.mxu0 0.0
        %3121 = vmatpush1.msra.mxu0 0.0
        %3122 = vmatprep.subr.mxu0 0.0
        %3123 = vmatpush1.msra.mxu0 0.0
        %3124 = vmatprep.subr.mxu0 0.0
        %3125 = vmatpush1.msra.mxu0 0.0
        %3126 = vmatprep.subr.mxu0 0.0
        %3127 = vmatpush1.msra.mxu0 0.0
        %3128 = vmatprep.subr.mxu0 0.0
        %3129 = vmatpush1.msra.mxu0 0.0
        %3130 = vmatprep.subr.mxu0 0.0
        %3131 = vmatpush1.msra.mxu0 0.0
        %3132 = vmatprep.subr.mxu0 0.0
        %3133 = vmatpush1.msra.mxu0 0.0
        %3134 = vmatprep.subr.mxu0 0.0
        %3135 = vmatpush1.msra.mxu0 0.0
        %3136 = vmatprep.subr.mxu0 0.0
        %3137 = vmatpush1.msra.mxu0 0.0
        %3138 = vmatprep.subr.mxu0 0.0
        %3139 = vmatpush1.msra.mxu0 0.0
        %3140 = vmatprep.subr.mxu0 0.0
        %3141 = vmatpush1.msra.mxu0 0.0
        %3142 = vmatprep.subr.mxu0 0.0
        %3143 = vmatpush1.msra.mxu0 0.0
        %3144 = vmatprep.subr.mxu0 0.0
        %3145 = vmatpush1.msra.mxu0 0.0
        %3146 = vmatprep.subr.mxu0 0.0
        %3147 = vmatpush1.msra.mxu0 0.0
        %3148 = vmatprep.subr.mxu0 0.0
        %3149 = vmatpush1.msra.mxu0 0.0
        %3150 = vmatprep.subr.mxu0 0.0
        %3151 = vmatpush1.msra.mxu0 0.0
        %3152 = vmatprep.subr.mxu0 0.0
        %3153 = vmatpush1.msra.mxu0 0.0
        %3154 = vmatprep.subr.mxu0 0.0
        %3155 = vmatpush1.msra.mxu0 0.0
        %3156 = vmatprep.subr.mxu0 0.0
        %3157 = vmatpush1.msra.mxu0 0.0
        %3158 = vmatprep.subr.mxu0 0.0
        %3159 = vmatpush1.msra.mxu0 0.0
        %3160 = vmatprep.subr.mxu0 0.0
        %3161 = vmatpush1.msra.mxu0 0.0
        %3162 = vmatprep.subr.mxu0 0.0
        %3163 = vmatpush1.msra.mxu0 0.0
        %3164 = vmatprep.mubr.f32.mxu0 0.0
        %3165 = vmatmul.mubr.f32.gmra.mrb[0].mxu0 %v1569
        %v3166 = vpop.f32.mrb[0].mxu0
        %v3167 = vadd.f32 %v2939, %v3166
        %v3168 = vpop.f32.mrb[0].mxu0
        %3169 = vmatprep.mubr.f32.mxu0 0.0
        %3170 = vmatmul.mubr.f32.gmra.mrb[0].mxu0 %v1571
        %v3171 = vpop.f32.mrb[0].mxu0
        %v3172 = vadd.f32 %v2944, %v3171
        %v3173 = vpop.f32.mrb[0].mxu0
        %3174 = vmatprep.mubr.f32.mxu0 0.0
        %3175 = vmatmul.mubr.f32.gmra.mrb[0].mxu0 %v1573
        %v3176 = vpop.f32.mrb[0].mxu0
        %v3177 = vadd.f32 %v2949, %v3176
        %v3178 = vpop.f32.mrb[0].mxu0
        %3179 = vmatprep.mubr.f32.mxu0 0.0
        %3180 = vmatmul.mubr.f32.gmra.mrb[0].mxu0 %v1575
        %v3181 = vpop.f32.mrb[0].mxu0
        %v3182 = vadd.f32 %v2954, %v3181
        %v3183 = vpop.f32.mrb[0].mxu0
        %3184 = vmatprep.mubr.f32.mxu0 0.0
        %3185 = vmatmul.mubr.f32.gmra.mrb[0].mxu0 %v1577
        %v3186 = vpop.f32.mrb[0].mxu0
        %v3187 = vadd.f32 %v2959, %v3186
        %v3188 = vpop.f32.mrb[0].mxu0
        %3189 = vmatprep.mubr.f32.mxu0 0.0
        %3190 = vmatmul.mubr.f32.gmra.mrb[0].mxu0 %v1579
        %v3191 = vpop.f32.mrb[0].mxu0
        %v3192 = vadd.f32 %v2964, %v3191
        %v3193 = vpop.f32.mrb[0].mxu0
        %3194 = vmatprep.mubr.f32.mxu0 0.0
        %3195 = vmatmul.mubr.f32.gmra.mrb[0].mxu0 %v1581
        %v3196 = vpop.f32.mrb[0].mxu0
        %v3197 = vadd.f32 %v2969, %v3196
        %v3198 = vpop.f32.mrb[0].mxu0
        %3199 = vmatprep.mubr.f32.mxu0 0.0
        %3200 = vmatmul.mubr.f32.gmra.mrb[0].mxu0 %v1583
        %v3201 = vpop.f32.mrb[0].mxu0
        %v3202 = vadd.f32 %v2974, %v3201
        %v3203 = vpop.f32.mrb[0].mxu0
        %3204 = vmatprep.mubr.f32.mxu0 0.0
        %3205 = vmatmul.mubr.f32.gmra.mrb[0].mxu0 %v1585
        %v3206 = vpop.f32.mrb[0].mxu0
        %v3207 = vadd.f32 %v2979, %v3206
        %v3208 = vpop.f32.mrb[0].mxu0
        %3209 = vmatprep.mubr.f32.mxu0 0.0
        %3210 = vmatmul.mubr.f32.gmra.mrb[0].mxu0 %v1587
        %v3211 = vpop.f32.mrb[0].mxu0
        %v3212 = vadd.f32 %v2984, %v3211
        %v3213 = vpop.f32.mrb[0].mxu0
        %3214 = vmatprep.mubr.f32.mxu0 0.0
        %3215 = vmatmul.mubr.f32.gmra.mrb[0].mxu0 %v1589
        %v3216 = vpop.f32.mrb[0].mxu0
        %v3217 = vadd.f32 %v2989, %v3216
        %v3218 = vpop.f32.mrb[0].mxu0
        %3219 = vmatprep.mubr.f32.mxu0 0.0
        %3220 = vmatmul.mubr.f32.gmra.mrb[0].mxu0 %v1591
        %v3221 = vpop.f32.mrb[0].mxu0
        %v3222 = vadd.f32 %v2994, %v3221
        %v3223 = vpop.f32.mrb[0].mxu0
        %3224 = vmatprep.mubr.f32.mxu0 0.0
        %3225 = vmatmul.mubr.f32.gmra.mrb[0].mxu0 %v1593
        %v3226 = vpop.f32.mrb[0].mxu0
        %v3227 = vadd.f32 %v2999, %v3226
        %v3228 = vpop.f32.mrb[0].mxu0
        %3229 = vmatprep.mubr.f32.mxu0 0.0
        %3230 = vmatmul.mubr.f32.gmra.mrb[0].mxu0 %v1595
        %v3231 = vpop.f32.mrb[0].mxu0
        %v3232 = vadd.f32 %v3004, %v3231
        %v3233 = vpop.f32.mrb[0].mxu0
        %3234 = vmatprep.mubr.f32.mxu0 0.0
        %3235 = vmatmul.mubr.f32.gmra.mrb[0].mxu0 %v1597
        %v3236 = vpop.f32.mrb[0].mxu0
        %v3237 = vadd.f32 %v3009, %v3236
        %v3238 = vpop.f32.mrb[0].mxu0
        %3239 = vmatprep.mubr.f32.mxu0 0.0
        %3240 = vmatmul.mubr.f32.gmra.mrb[0].mxu0 %v1599
        %v3241 = vpop.f32.mrb[0].mxu0
        %v3242 = vadd.f32 %v3014, %v3241
        %v3243 = vpop.f32.mrb[0].mxu0
        %3244 = vmatprep.mubr.f32.mxu0 0.0
        %3245 = vmatmul.mubr.f32.gmra.mrb[0].mxu0 %v1601
        %v3246 = vpop.f32.mrb[0].mxu0
        %v3247 = vadd.f32 %v3019, %v3246
        %v3248 = vpop.f32.mrb[0].mxu0
        %3249 = vmatprep.mubr.f32.mxu0 0.0
        %3250 = vmatmul.mubr.f32.gmra.mrb[0].mxu0 %v1603
        %v3251 = vpop.f32.mrb[0].mxu0
        %v3252 = vadd.f32 %v3024, %v3251
        %v3253 = vpop.f32.mrb[0].mxu0
        %3254 = vmatprep.mubr.f32.mxu0 0.0
        %3255 = vmatmul.mubr.f32.gmra.mrb[0].mxu0 %v1605
        %v3256 = vpop.f32.mrb[0].mxu0
        %v3257 = vadd.f32 %v3029, %v3256
        %v3258 = vpop.f32.mrb[0].mxu0
        %3259 = vmatprep.mubr.f32.mxu0 0.0
        %3260 = vmatmul.mubr.f32.gmra.mrb[0].mxu0 %v1607
        %v3261 = vpop.f32.mrb[0].mxu0
        %v3262 = vadd.f32 %v3034, %v3261
        %v3263 = vpop.f32.mrb[0].mxu0
        %3264 = vmatprep.mubr.f32.mxu0 0.0
        %3265 = vmatmul.mubr.f32.gmra.mrb[0].mxu0 %v1609
        %v3266 = vpop.f32.mrb[0].mxu0
        %v3267 = vadd.f32 %v3039, %v3266
        %v3268 = vpop.f32.mrb[0].mxu0
        %3269 = vmatprep.mubr.f32.mxu0 0.0
        %3270 = vmatmul.mubr.f32.gmra.mrb[0].mxu0 %v1611
        %v3271 = vpop.f32.mrb[0].mxu0
        %v3272 = vadd.f32 %v3044, %v3271
        %v3273 = vpop.f32.mrb[0].mxu0
        %3274 = vmatprep.mubr.f32.mxu0 0.0
        %3275 = vmatmul.mubr.f32.gmra.mrb[0].mxu0 %v1613
        %v3276 = vpop.f32.mrb[0].mxu0
        %v3277 = vadd.f32 %v3049, %v3276
        %v3278 = vpop.f32.mrb[0].mxu0
        %3279 = vmatprep.mubr.f32.mxu0 0.0
        %3280 = vmatmul.mubr.f32.gmra.mrb[0].mxu0 %v1615
        %v3281 = vpop.f32.mrb[0].mxu0
        %v3282 = vadd.f32 %v3054, %v3281
        %v3283 = vpop.f32.mrb[0].mxu0
        %3284 = vmatprep.mubr.f32.mxu0 0.0
        %3285 = vmatmul.mubr.f32.gmra.mrb[0].mxu0 %v1617
        %v3286 = vpop.f32.mrb[0].mxu0
        %v3287 = vadd.f32 %v3059, %v3286
        %v3288 = vpop.f32.mrb[0].mxu0
        %3289 = vmatprep.mubr.f32.mxu0 0.0
        %3290 = vmatmul.mubr.f32.gmra.mrb[0].mxu0 %v1619
        %v3291 = vpop.f32.mrb[0].mxu0
        %v3292 = vadd.f32 %v3064, %v3291
        %v3293 = vpop.f32.mrb[0].mxu0
        %3294 = vmatprep.mubr.f32.mxu0 0.0
        %3295 = vmatmul.mubr.f32.gmra.mrb[0].mxu0 %v1621
        %v3296 = vpop.f32.mrb[0].mxu0
        %v3297 = vadd.f32 %v3069, %v3296
        %v3298 = vpop.f32.mrb[0].mxu0
        %3299 = vmatprep.mubr.f32.mxu0 0.0
        %3300 = vmatmul.mubr.f32.gmra.mrb[0].mxu0 %v1623
        %v3301 = vpop.f32.mrb[0].mxu0
        %v3302 = vadd.f32 %v3074, %v3301
        %v3303 = vpop.f32.mrb[0].mxu0
        %3304 = vmatprep.mubr.f32.mxu0 0.0
        %3305 = vmatmul.mubr.f32.gmra.mrb[0].mxu0 %v1625
        %v3306 = vpop.f32.mrb[0].mxu0
        %v3307 = vadd.f32 %v3079, %v3306
        %v3308 = vpop.f32.mrb[0].mxu0
        %3309 = vmatprep.mubr.f32.mxu0 0.0
        %3310 = vmatmul.mubr.f32.gmra.mrb[0].mxu0 %v1627
        %v3311 = vpop.f32.mrb[0].mxu0
        %v3312 = vadd.f32 %v3084, %v3311
        %v3313 = vpop.f32.mrb[0].mxu0
        %3314 = vmatprep.mubr.f32.mxu0 0.0
        %3315 = vmatmul.mubr.f32.gmra.mrb[0].mxu0 %v1629
        %v3316 = vpop.f32.mrb[0].mxu0
        %v3317 = vadd.f32 %v3089, %v3316
        %v3318 = vpop.f32.mrb[0].mxu0
        %3319 = vmatprep.mubr.f32.mxu0 0.0
        %3320 = vmatmul.mubr.f32.gmra.mrb[0].mxu0 %v1631
        %v3321 = vpop.f32.mrb[0].mxu0
        %v3322 = vadd.f32 %v3094, %v3321
        %v3323 = vpop.f32.mrb[0].mxu0
        %3324 = vdwg.mxu0
        %s3325 = scalar_lea.vmem [#allocation10], 8
        %v3326 = vld [vmem:[%s3325] sm:$0xf]
        %v3328 = vsel %vm1633, %v3326, 0
        %3330 = vmatprep.subr.mxu0 0.0
        %3331 = vmatpush1.msra.mxu0 %v3328
        %3332 = vmatprep.subr.mxu0 0.0
        %3333 = vmatpush1.msra.mxu0 0.0
        %3334 = vmatprep.subr.mxu0 0.0
        %3335 = vmatpush1.msra.mxu0 0.0
        %3336 = vmatprep.subr.mxu0 0.0
        %3337 = vmatpush1.msra.mxu0 0.0
        %3338 = vmatprep.subr.mxu0 0.0
        %3339 = vmatpush1.msra.mxu0 0.0
        %3340 = vmatprep.subr.mxu0 0.0
        %3341 = vmatpush1.msra.mxu0 0.0
        %3342 = vmatprep.subr.mxu0 0.0
        %3343 = vmatpush1.msra.mxu0 0.0
        %3344 = vmatprep.subr.mxu0 0.0
        %3345 = vmatpush1.msra.mxu0 0.0
        %3346 = vmatprep.subr.mxu0 0.0
        %3347 = vmatpush1.msra.mxu0 0.0
        %3348 = vmatprep.subr.mxu0 0.0
        %3349 = vmatpush1.msra.mxu0 0.0
        %3350 = vmatprep.subr.mxu0 0.0
        %3351 = vmatpush1.msra.mxu0 0.0
        %3352 = vmatprep.subr.mxu0 0.0
        %3353 = vmatpush1.msra.mxu0 0.0
        %3354 = vmatprep.subr.mxu0 0.0
        %3355 = vmatpush1.msra.mxu0 0.0
        %3356 = vmatprep.subr.mxu0 0.0
        %3357 = vmatpush1.msra.mxu0 0.0
        %3358 = vmatprep.subr.mxu0 0.0
        %3359 = vmatpush1.msra.mxu0 0.0
        %3360 = vmatprep.subr.mxu0 0.0
        %3361 = vmatpush1.msra.mxu0 0.0
        %3362 = vmatprep.subr.mxu0 0.0
        %3363 = vmatpush1.msra.mxu0 0.0
        %3364 = vmatprep.subr.mxu0 0.0
        %3365 = vmatpush1.msra.mxu0 0.0
        %3366 = vmatprep.subr.mxu0 0.0
        %3367 = vmatpush1.msra.mxu0 0.0
        %3368 = vmatprep.subr.mxu0 0.0
        %3369 = vmatpush1.msra.mxu0 0.0
        %3370 = vmatprep.subr.mxu0 0.0
        %3371 = vmatpush1.msra.mxu0 0.0
        %3372 = vmatprep.subr.mxu0 0.0
        %3373 = vmatpush1.msra.mxu0 0.0
        %3374 = vmatprep.subr.mxu0 0.0
        %3375 = vmatpush1.msra.mxu0 0.0
        %3376 = vmatprep.subr.mxu0 0.0
        %3377 = vmatpush1.msra.mxu0 0.0
        %3378 = vmatprep.subr.mxu0 0.0
        %3379 = vmatpush1.msra.mxu0 0.0
        %3380 = vmatprep.subr.mxu0 0.0
        %3381 = vmatpush1.msra.mxu0 0.0
        %3382 = vmatprep.subr.mxu0 0.0
        %3383 = vmatpush1.msra.mxu0 0.0
        %3384 = vmatprep.subr.mxu0 0.0
        %3385 = vmatpush1.msra.mxu0 0.0
        %3386 = vmatprep.subr.mxu0 0.0
        %3387 = vmatpush1.msra.mxu0 0.0
        %3388 = vmatprep.subr.mxu0 0.0
        %3389 = vmatpush1.msra.mxu0 0.0
        %3390 = vmatprep.subr.mxu0 0.0
        %3391 = vmatpush1.msra.mxu0 0.0
        %3392 = vmatprep.subr.mxu0 0.0
        %3393 = vmatpush1.msra.mxu0 0.0
        %3394 = vmatprep.mubr.f32.mxu0 0.0
        %3395 = vmatmul.mubr.f32.gmra.mrb[0].mxu0 %v1573
        %v3396 = vpop.f32.mrb[0].mxu0
        %v3397 = vadd.f32 0.0, %v3396
        %v3398 = vpop.f32.mrb[0].mxu0
        %3399 = vmatprep.mubr.f32.mxu0 0.0
        %3400 = vmatmul.mubr.f32.gmra.mrb[0].mxu0 %v1575
        %v3401 = vpop.f32.mrb[0].mxu0
        %v3402 = vadd.f32 0.0, %v3401
        %v3403 = vpop.f32.mrb[0].mxu0
        %3404 = vmatprep.mubr.f32.mxu0 0.0
        %3405 = vmatmul.mubr.f32.gmra.mrb[0].mxu0 %v1577
        %v3406 = vpop.f32.mrb[0].mxu0
        %v3407 = vadd.f32 0.0, %v3406
        %v3408 = vpop.f32.mrb[0].mxu0
        %3409 = vmatprep.mubr.f32.mxu0 0.0
        %3410 = vmatmul.mubr.f32.gmra.mrb[0].mxu0 %v1579
        %v3411 = vpop.f32.mrb[0].mxu0
        %v3412 = vadd.f32 0.0, %v3411
        %v3413 = vpop.f32.mrb[0].mxu0
        %3414 = vmatprep.mubr.f32.mxu0 0.0
        %3415 = vmatmul.mubr.f32.gmra.mrb[0].mxu0 %v1581
        %v3416 = vpop.f32.mrb[0].mxu0
        %v3417 = vadd.f32 0.0, %v3416
        %v3418 = vpop.f32.mrb[0].mxu0
        %3419 = vmatprep.mubr.f32.mxu0 0.0
        %3420 = vmatmul.mubr.f32.gmra.mrb[0].mxu0 %v1583
        %v3421 = vpop.f32.mrb[0].mxu0
        %v3422 = vadd.f32 0.0, %v3421
        %v3423 = vpop.f32.mrb[0].mxu0
        %3424 = vmatprep.mubr.f32.mxu0 0.0
        %3425 = vmatmul.mubr.f32.gmra.mrb[0].mxu0 %v1585
        %v3426 = vpop.f32.mrb[0].mxu0
        %v3427 = vadd.f32 0.0, %v3426
        %v3428 = vpop.f32.mrb[0].mxu0
        %3429 = vmatprep.mubr.f32.mxu0 0.0
        %3430 = vmatmul.mubr.f32.gmra.mrb[0].mxu0 %v1587
        %v3431 = vpop.f32.mrb[0].mxu0
        %v3432 = vadd.f32 0.0, %v3431
        %v3433 = vpop.f32.mrb[0].mxu0
        %3434 = vmatprep.mubr.f32.mxu0 0.0
        %3435 = vmatmul.mubr.f32.gmra.mrb[0].mxu0 %v1589
        %v3436 = vpop.f32.mrb[0].mxu0
        %v3437 = vadd.f32 0.0, %v3436
        %v3438 = vpop.f32.mrb[0].mxu0
        %3439 = vmatprep.mubr.f32.mxu0 0.0
        %3440 = vmatmul.mubr.f32.gmra.mrb[0].mxu0 %v1591
        %v3441 = vpop.f32.mrb[0].mxu0
        %v3442 = vadd.f32 0.0, %v3441
        %v3443 = vpop.f32.mrb[0].mxu0
        %3444 = vmatprep.mubr.f32.mxu0 0.0
        %3445 = vmatmul.mubr.f32.gmra.mrb[0].mxu0 %v1593
        %v3446 = vpop.f32.mrb[0].mxu0
        %v3447 = vadd.f32 0.0, %v3446
        %v3448 = vpop.f32.mrb[0].mxu0
        %3449 = vmatprep.mubr.f32.mxu0 0.0
        %3450 = vmatmul.mubr.f32.gmra.mrb[0].mxu0 %v1595
        %v3451 = vpop.f32.mrb[0].mxu0
        %v3452 = vadd.f32 0.0, %v3451
        %v3453 = vpop.f32.mrb[0].mxu0
        %3454 = vmatprep.mubr.f32.mxu0 0.0
        %3455 = vmatmul.mubr.f32.gmra.mrb[0].mxu0 %v1597
        %v3456 = vpop.f32.mrb[0].mxu0
        %v3457 = vadd.f32 0.0, %v3456
        %v3458 = vpop.f32.mrb[0].mxu0
        %3459 = vmatprep.mubr.f32.mxu0 0.0
        %3460 = vmatmul.mubr.f32.gmra.mrb[0].mxu0 %v1599
        %v3461 = vpop.f32.mrb[0].mxu0
        %v3462 = vadd.f32 0.0, %v3461
        %v3463 = vpop.f32.mrb[0].mxu0
        %3464 = vmatprep.mubr.f32.mxu0 0.0
        %3465 = vmatmul.mubr.f32.gmra.mrb[0].mxu0 %v1601
        %v3466 = vpop.f32.mrb[0].mxu0
        %v3467 = vadd.f32 0.0, %v3466
        %v3468 = vpop.f32.mrb[0].mxu0
        %3469 = vmatprep.mubr.f32.mxu0 0.0
        %3470 = vmatmul.mubr.f32.gmra.mrb[0].mxu0 %v1603
        %v3471 = vpop.f32.mrb[0].mxu0
        %v3472 = vadd.f32 0.0, %v3471
        %v3473 = vpop.f32.mrb[0].mxu0
        %3474 = vmatprep.mubr.f32.mxu0 0.0
        %3475 = vmatmul.mubr.f32.gmra.mrb[0].mxu0 %v1605
        %v3476 = vpop.f32.mrb[0].mxu0
        %v3477 = vadd.f32 0.0, %v3476
        %v3478 = vpop.f32.mrb[0].mxu0
        %3479 = vmatprep.mubr.f32.mxu0 0.0
        %3480 = vmatmul.mubr.f32.gmra.mrb[0].mxu0 %v1607
        %v3481 = vpop.f32.mrb[0].mxu0
        %v3482 = vadd.f32 0.0, %v3481
        %v3483 = vpop.f32.mrb[0].mxu0
        %3484 = vmatprep.mubr.f32.mxu0 0.0
        %3485 = vmatmul.mubr.f32.gmra.mrb[0].mxu0 %v1609
        %v3486 = vpop.f32.mrb[0].mxu0
        %v3487 = vadd.f32 0.0, %v3486
        %v3488 = vpop.f32.mrb[0].mxu0
        %3489 = vmatprep.mubr.f32.mxu0 0.0
        %3490 = vmatmul.mubr.f32.gmra.mrb[0].mxu0 %v1611
        %v3491 = vpop.f32.mrb[0].mxu0
        %v3492 = vadd.f32 0.0, %v3491
        %v3493 = vpop.f32.mrb[0].mxu0
        %3494 = vmatprep.mubr.f32.mxu0 0.0
        %3495 = vmatmul.mubr.f32.gmra.mrb[0].mxu0 %v1613
        %v3496 = vpop.f32.mrb[0].mxu0
        %v3497 = vadd.f32 0.0, %v3496
        %v3498 = vpop.f32.mrb[0].mxu0
        %3499 = vmatprep.mubr.f32.mxu0 0.0
        %3500 = vmatmul.mubr.f32.gmra.mrb[0].mxu0 %v1615
        %v3501 = vpop.f32.mrb[0].mxu0
        %v3502 = vadd.f32 0.0, %v3501
        %v3503 = vpop.f32.mrb[0].mxu0
        %3504 = vmatprep.mubr.f32.mxu0 0.0
        %3505 = vmatmul.mubr.f32.gmra.mrb[0].mxu0 %v1617
        %v3506 = vpop.f32.mrb[0].mxu0
        %v3507 = vadd.f32 0.0, %v3506
        %v3508 = vpop.f32.mrb[0].mxu0
        %3509 = vmatprep.mubr.f32.mxu0 0.0
        %3510 = vmatmul.mubr.f32.gmra.mrb[0].mxu0 %v1619
        %v3511 = vpop.f32.mrb[0].mxu0
        %v3512 = vadd.f32 0.0, %v3511
        %v3513 = vpop.f32.mrb[0].mxu0
        %3514 = vmatprep.mubr.f32.mxu0 0.0
        %3515 = vmatmul.mubr.f32.gmra.mrb[0].mxu0 %v1621
        %v3516 = vpop.f32.mrb[0].mxu0
        %v3517 = vadd.f32 0.0, %v3516
        %v3518 = vpop.f32.mrb[0].mxu0
        %3519 = vmatprep.mubr.f32.mxu0 0.0
        %3520 = vmatmul.mubr.f32.gmra.mrb[0].mxu0 %v1623
        %v3521 = vpop.f32.mrb[0].mxu0
        %v3522 = vadd.f32 0.0, %v3521
        %v3523 = vpop.f32.mrb[0].mxu0
        %3524 = vmatprep.mubr.f32.mxu0 0.0
        %3525 = vmatmul.mubr.f32.gmra.mrb[0].mxu0 %v1625
        %v3526 = vpop.f32.mrb[0].mxu0
        %v3527 = vadd.f32 0.0, %v3526
        %v3528 = vpop.f32.mrb[0].mxu0
        %3529 = vmatprep.mubr.f32.mxu0 0.0
        %3530 = vmatmul.mubr.f32.gmra.mrb[0].mxu0 %v1627
        %v3531 = vpop.f32.mrb[0].mxu0
        %v3532 = vadd.f32 0.0, %v3531
        %v3533 = vpop.f32.mrb[0].mxu0
        %3534 = vmatprep.mubr.f32.mxu0 0.0
        %3535 = vmatmul.mubr.f32.gmra.mrb[0].mxu0 %v1629
        %v3536 = vpop.f32.mrb[0].mxu0
        %v3537 = vadd.f32 0.0, %v3536
        %v3538 = vpop.f32.mrb[0].mxu0
        %3539 = vmatprep.mubr.f32.mxu0 0.0
        %3540 = vmatmul.mubr.f32.gmra.mrb[0].mxu0 %v1631
        %v3541 = vpop.f32.mrb[0].mxu0
        %v3542 = vadd.f32 0.0, %v3541
        %v3543 = vpop.f32.mrb[0].mxu0
        %3544 = vmatprep.mubr.f32.mxu0 0.0
        %3545 = vmatmul.mubr.f32.gmra.mrb[0].mxu0 %v2407
        %v3546 = vpop.f32.mrb[0].mxu0
        %v3547 = vadd.f32 0.0, %v3546
        %v3548 = vpop.f32.mrb[0].mxu0
        %3549 = vmatprep.mubr.f32.mxu0 0.0
        %3550 = vmatmul.mubr.f32.gmra.mrb[0].mxu0 %v2407
        %v3551 = vpop.f32.mrb[0].mxu0
        %v3552 = vadd.f32 0.0, %v3551
        %v3553 = vpop.f32.mrb[0].mxu0
        %3554 = vdwg.mxu0
        %v3555 = vadd.f32 %v3167, %v3397
        %v3556 = vadd.f32 %v3172, %v3402
        %v3557 = vadd.f32 %v3177, %v3407
        %v3558 = vadd.f32 %v3182, %v3412
        %v3559 = vadd.f32 %v3187, %v3417
        %v3560 = vadd.f32 %v3192, %v3422
        %v3561 = vadd.f32 %v3197, %v3427
        %v3562 = vadd.f32 %v3202, %v3432
        %v3563 = vadd.f32 %v3207, %v3437
        %v3564 = vadd.f32 %v3212, %v3442
        %v3565 = vadd.f32 %v3217, %v3447
        %v3566 = vadd.f32 %v3222, %v3452
        %v3567 = vadd.f32 %v3227, %v3457
        %v3568 = vadd.f32 %v3232, %v3462
        %v3569 = vadd.f32 %v3237, %v3467
        %v3570 = vadd.f32 %v3242, %v3472
        %v3571 = vadd.f32 %v3247, %v3477
        %v3572 = vadd.f32 %v3252, %v3482
        %v3573 = vadd.f32 %v3257, %v3487
        %v3574 = vadd.f32 %v3262, %v3492
        %v3575 = vadd.f32 %v3267, %v3497
        %v3576 = vadd.f32 %v3272, %v3502
        %v3577 = vadd.f32 %v3277, %v3507
        %v3578 = vadd.f32 %v3282, %v3512
        %v3579 = vadd.f32 %v3287, %v3517
        %v3580 = vadd.f32 %v3292, %v3522
        %v3581 = vadd.f32 %v3297, %v3527
        %v3582 = vadd.f32 %v3302, %v3532
        %v3583 = vadd.f32 %v3307, %v3537
        %v3584 = vadd.f32 %v3312, %v3542
        %v3585 = vadd.f32 %v3317, %v3547
        %v3586 = vadd.f32 %v3322, %v3552
        %v3587 = vld [vmem:[#allocation10] sm:$0xf]
        %v3589 = vsel %vm1633, %v3587, 0
        %3591 = vmatprep.subr.mxu0 0.0
        %3592 = vmatpush1.msra.mxu0 %v3589
        %3593 = vmatprep.subr.mxu0 0.0
        %3594 = vmatpush1.msra.mxu0 0.0
        %3595 = vmatprep.subr.mxu0 0.0
        %3596 = vmatpush1.msra.mxu0 0.0
        %3597 = vmatprep.subr.mxu0 0.0
        %3598 = vmatpush1.msra.mxu0 0.0
        %3599 = vmatprep.subr.mxu0 0.0
        %3600 = vmatpush1.msra.mxu0 0.0
        %3601 = vmatprep.subr.mxu0 0.0
        %3602 = vmatpush1.msra.mxu0 0.0
        %3603 = vmatprep.subr.mxu0 0.0
        %3604 = vmatpush1.msra.mxu0 0.0
        %3605 = vmatprep.subr.mxu0 0.0
        %3606 = vmatpush1.msra.mxu0 0.0
        %3607 = vmatprep.subr.mxu0 0.0
        %3608 = vmatpush1.msra.mxu0 0.0
        %3609 = vmatprep.subr.mxu0 0.0
        %3610 = vmatpush1.msra.mxu0 0.0
        %3611 = vmatprep.subr.mxu0 0.0
        %3612 = vmatpush1.msra.mxu0 0.0
        %3613 = vmatprep.subr.mxu0 0.0
        %3614 = vmatpush1.msra.mxu0 0.0
        %3615 = vmatprep.subr.mxu0 0.0
        %3616 = vmatpush1.msra.mxu0 0.0
        %3617 = vmatprep.subr.mxu0 0.0
        %3618 = vmatpush1.msra.mxu0 0.0
        %3619 = vmatprep.subr.mxu0 0.0
        %3620 = vmatpush1.msra.mxu0 0.0
        %3621 = vmatprep.subr.mxu0 0.0
        %3622 = vmatpush1.msra.mxu0 0.0
        %3623 = vmatprep.subr.mxu0 0.0
        %3624 = vmatpush1.msra.mxu0 0.0
        %3625 = vmatprep.subr.mxu0 0.0
        %3626 = vmatpush1.msra.mxu0 0.0
        %3627 = vmatprep.subr.mxu0 0.0
        %3628 = vmatpush1.msra.mxu0 0.0
        %3629 = vmatprep.subr.mxu0 0.0
        %3630 = vmatpush1.msra.mxu0 0.0
        %3631 = vmatprep.subr.mxu0 0.0
        %3632 = vmatpush1.msra.mxu0 0.0
        %3633 = vmatprep.subr.mxu0 0.0
        %3634 = vmatpush1.msra.mxu0 0.0
        %3635 = vmatprep.subr.mxu0 0.0
        %3636 = vmatpush1.msra.mxu0 0.0
        %3637 = vmatprep.subr.mxu0 0.0
        %3638 = vmatpush1.msra.mxu0 0.0
        %3639 = vmatprep.subr.mxu0 0.0
        %3640 = vmatpush1.msra.mxu0 0.0
        %3641 = vmatprep.subr.mxu0 0.0
        %3642 = vmatpush1.msra.mxu0 0.0
        %3643 = vmatprep.subr.mxu0 0.0
        %3644 = vmatpush1.msra.mxu0 0.0
        %3645 = vmatprep.subr.mxu0 0.0
        %3646 = vmatpush1.msra.mxu0 0.0
        %3647 = vmatprep.subr.mxu0 0.0
        %3648 = vmatpush1.msra.mxu0 0.0
        %3649 = vmatprep.subr.mxu0 0.0
        %3650 = vmatpush1.msra.mxu0 0.0
        %3651 = vmatprep.subr.mxu0 0.0
        %3652 = vmatpush1.msra.mxu0 0.0
        %3653 = vmatprep.subr.mxu0 0.0
        %3654 = vmatpush1.msra.mxu0 0.0
        %3655 = vmatprep.mubr.f32.mxu0 0.0
        %3656 = vmatmul.mubr.f32.gmra.mrb[0].mxu0 %v1871
        %v3657 = vpop.f32.mrb[0].mxu0
        %v3658 = vadd.f32 0.0, %v3657
        %v3659 = vpop.f32.mrb[0].mxu0
        %3660 = vmatprep.mubr.f32.mxu0 0.0
        %3661 = vmatmul.mubr.f32.gmra.mrb[0].mxu0 %v1874
        %v3662 = vpop.f32.mrb[0].mxu0
        %v3663 = vadd.f32 0.0, %v3662
        %v3664 = vpop.f32.mrb[0].mxu0
        %3665 = vmatprep.mubr.f32.mxu0 0.0
        %3666 = vmatmul.mubr.f32.gmra.mrb[0].mxu0 %v1876
        %v3667 = vpop.f32.mrb[0].mxu0
        %v3668 = vadd.f32 0.0, %v3667
        %v3669 = vpop.f32.mrb[0].mxu0
        %3670 = vmatprep.mubr.f32.mxu0 0.0
        %3671 = vmatmul.mubr.f32.gmra.mrb[0].mxu0 %v1879
        %v3672 = vpop.f32.mrb[0].mxu0
        %v3673 = vadd.f32 0.0, %v3672
        %v3674 = vpop.f32.mrb[0].mxu0
        %3675 = vmatprep.mubr.f32.mxu0 0.0
        %3676 = vmatmul.mubr.f32.gmra.mrb[0].mxu0 %v1881
        %v3677 = vpop.f32.mrb[0].mxu0
        %v3678 = vadd.f32 0.0, %v3677
        %v3679 = vpop.f32.mrb[0].mxu0
        %3680 = vmatprep.mubr.f32.mxu0 0.0
        %3681 = vmatmul.mubr.f32.gmra.mrb[0].mxu0 %v1884
        %v3682 = vpop.f32.mrb[0].mxu0
        %v3683 = vadd.f32 0.0, %v3682
        %v3684 = vpop.f32.mrb[0].mxu0
        %3685 = vmatprep.mubr.f32.mxu0 0.0
        %3686 = vmatmul.mubr.f32.gmra.mrb[0].mxu0 %v1886
        %v3687 = vpop.f32.mrb[0].mxu0
        %v3688 = vadd.f32 0.0, %v3687
        %v3689 = vpop.f32.mrb[0].mxu0
        %3690 = vmatprep.mubr.f32.mxu0 0.0
        %3691 = vmatmul.mubr.f32.gmra.mrb[0].mxu0 %v1889
        %v3692 = vpop.f32.mrb[0].mxu0
        %v3693 = vadd.f32 0.0, %v3692
        %v3694 = vpop.f32.mrb[0].mxu0
        %3695 = vmatprep.mubr.f32.mxu0 0.0
        %3696 = vmatmul.mubr.f32.gmra.mrb[0].mxu0 %v1891
        %v3697 = vpop.f32.mrb[0].mxu0
        %v3698 = vadd.f32 0.0, %v3697
        %v3699 = vpop.f32.mrb[0].mxu0
        %3700 = vmatprep.mubr.f32.mxu0 0.0
        %3701 = vmatmul.mubr.f32.gmra.mrb[0].mxu0 %v1894
        %v3702 = vpop.f32.mrb[0].mxu0
        %v3703 = vadd.f32 0.0, %v3702
        %v3704 = vpop.f32.mrb[0].mxu0
        %3705 = vmatprep.mubr.f32.mxu0 0.0
        %3706 = vmatmul.mubr.f32.gmra.mrb[0].mxu0 %v1896
        %v3707 = vpop.f32.mrb[0].mxu0
        %v3708 = vadd.f32 0.0, %v3707
        %v3709 = vpop.f32.mrb[0].mxu0
        %3710 = vmatprep.mubr.f32.mxu0 0.0
        %3711 = vmatmul.mubr.f32.gmra.mrb[0].mxu0 %v1899
        %v3712 = vpop.f32.mrb[0].mxu0
        %v3713 = vadd.f32 0.0, %v3712
        %v3714 = vpop.f32.mrb[0].mxu0
        %3715 = vmatprep.mubr.f32.mxu0 0.0
        %3716 = vmatmul.mubr.f32.gmra.mrb[0].mxu0 %v1901
        %v3717 = vpop.f32.mrb[0].mxu0
        %v3718 = vadd.f32 0.0, %v3717
        %v3719 = vpop.f32.mrb[0].mxu0
        %3720 = vmatprep.mubr.f32.mxu0 0.0
        %3721 = vmatmul.mubr.f32.gmra.mrb[0].mxu0 %v1904
        %v3722 = vpop.f32.mrb[0].mxu0
        %v3723 = vadd.f32 0.0, %v3722
        %v3724 = vpop.f32.mrb[0].mxu0
        %3725 = vmatprep.mubr.f32.mxu0 0.0
        %3726 = vmatmul.mubr.f32.gmra.mrb[0].mxu0 %v1906
        %v3727 = vpop.f32.mrb[0].mxu0
        %v3728 = vadd.f32 0.0, %v3727
        %v3729 = vpop.f32.mrb[0].mxu0
        %3730 = vmatprep.mubr.f32.mxu0 0.0
        %3731 = vmatmul.mubr.f32.gmra.mrb[0].mxu0 %v1909
        %v3732 = vpop.f32.mrb[0].mxu0
        %v3733 = vadd.f32 0.0, %v3732
        %v3734 = vpop.f32.mrb[0].mxu0
        %3735 = vmatprep.mubr.f32.mxu0 0.0
        %3736 = vmatmul.mubr.f32.gmra.mrb[0].mxu0 %v1911
        %v3737 = vpop.f32.mrb[0].mxu0
        %v3738 = vadd.f32 0.0, %v3737
        %v3739 = vpop.f32.mrb[0].mxu0
        %3740 = vmatprep.mubr.f32.mxu0 0.0
        %3741 = vmatmul.mubr.f32.gmra.mrb[0].mxu0 %v1914
        %v3742 = vpop.f32.mrb[0].mxu0
        %v3743 = vadd.f32 0.0, %v3742
        %v3744 = vpop.f32.mrb[0].mxu0
        %3745 = vmatprep.mubr.f32.mxu0 0.0
        %3746 = vmatmul.mubr.f32.gmra.mrb[0].mxu0 %v1916
        %v3747 = vpop.f32.mrb[0].mxu0
        %v3748 = vadd.f32 0.0, %v3747
        %v3749 = vpop.f32.mrb[0].mxu0
        %3750 = vmatprep.mubr.f32.mxu0 0.0
        %3751 = vmatmul.mubr.f32.gmra.mrb[0].mxu0 %v1919
        %v3752 = vpop.f32.mrb[0].mxu0
        %v3753 = vadd.f32 0.0, %v3752
        %v3754 = vpop.f32.mrb[0].mxu0
        %3755 = vmatprep.mubr.f32.mxu0 0.0
        %3756 = vmatmul.mubr.f32.gmra.mrb[0].mxu0 %v1921
        %v3757 = vpop.f32.mrb[0].mxu0
        %v3758 = vadd.f32 0.0, %v3757
        %v3759 = vpop.f32.mrb[0].mxu0
        %3760 = vmatprep.mubr.f32.mxu0 0.0
        %3761 = vmatmul.mubr.f32.gmra.mrb[0].mxu0 %v1924
        %v3762 = vpop.f32.mrb[0].mxu0
        %v3763 = vadd.f32 0.0, %v3762
        %v3764 = vpop.f32.mrb[0].mxu0
        %3765 = vmatprep.mubr.f32.mxu0 0.0
        %3766 = vmatmul.mubr.f32.gmra.mrb[0].mxu0 %v1926
        %v3767 = vpop.f32.mrb[0].mxu0
        %v3768 = vadd.f32 0.0, %v3767
        %v3769 = vpop.f32.mrb[0].mxu0
        %3770 = vmatprep.mubr.f32.mxu0 0.0
        %3771 = vmatmul.mubr.f32.gmra.mrb[0].mxu0 %v1929
        %v3772 = vpop.f32.mrb[0].mxu0
        %v3773 = vadd.f32 0.0, %v3772
        %v3774 = vpop.f32.mrb[0].mxu0
        %3775 = vmatprep.mubr.f32.mxu0 0.0
        %3776 = vmatmul.mubr.f32.gmra.mrb[0].mxu0 %v1931
        %v3777 = vpop.f32.mrb[0].mxu0
        %v3778 = vadd.f32 0.0, %v3777
        %v3779 = vpop.f32.mrb[0].mxu0
        %3780 = vmatprep.mubr.f32.mxu0 0.0
        %3781 = vmatmul.mubr.f32.gmra.mrb[0].mxu0 %v1934
        %v3782 = vpop.f32.mrb[0].mxu0
        %v3783 = vadd.f32 0.0, %v3782
        %v3784 = vpop.f32.mrb[0].mxu0
        %3785 = vmatprep.mubr.f32.mxu0 0.0
        %3786 = vmatmul.mubr.f32.gmra.mrb[0].mxu0 %v1936
        %v3787 = vpop.f32.mrb[0].mxu0
        %v3788 = vadd.f32 0.0, %v3787
        %v3789 = vpop.f32.mrb[0].mxu0
        %3790 = vmatprep.mubr.f32.mxu0 0.0
        %3791 = vmatmul.mubr.f32.gmra.mrb[0].mxu0 %v1939
        %v3792 = vpop.f32.mrb[0].mxu0
        %v3793 = vadd.f32 0.0, %v3792
        %v3794 = vpop.f32.mrb[0].mxu0
        %3795 = vmatprep.mubr.f32.mxu0 0.0
        %3796 = vmatmul.mubr.f32.gmra.mrb[0].mxu0 %v1941
        %v3797 = vpop.f32.mrb[0].mxu0
        %v3798 = vadd.f32 0.0, %v3797
        %v3799 = vpop.f32.mrb[0].mxu0
        %3800 = vmatprep.mubr.f32.mxu0 0.0
        %3801 = vmatmul.mubr.f32.gmra.mrb[0].mxu0 %v1944
        %v3802 = vpop.f32.mrb[0].mxu0
        %v3803 = vadd.f32 0.0, %v3802
        %v3804 = vpop.f32.mrb[0].mxu0
        %3805 = vmatprep.mubr.f32.mxu0 0.0
        %3806 = vmatmul.mubr.f32.gmra.mrb[0].mxu0 %v2407
        %v3807 = vpop.f32.mrb[0].mxu0
        %v3808 = vadd.f32 0.0, %v3807
        %v3809 = vpop.f32.mrb[0].mxu0
        %3810 = vmatprep.mubr.f32.mxu0 0.0
        %3811 = vmatmul.mubr.f32.gmra.mrb[0].mxu0 %v2407
        %v3812 = vpop.f32.mrb[0].mxu0
        %v3813 = vadd.f32 0.0, %v3812
        %v3814 = vpop.f32.mrb[0].mxu0
        %3815 = vdwg.mxu0
        %v3816 = vadd.f32 %v3555, %v3658
        %v3817 = vadd.f32 %v3556, %v3663
        %v3818 = vadd.f32 %v3557, %v3668
        %v3819 = vadd.f32 %v3558, %v3673
        %v3820 = vadd.f32 %v3559, %v3678
        %v3821 = vadd.f32 %v3560, %v3683
        %v3822 = vadd.f32 %v3561, %v3688
        %v3823 = vadd.f32 %v3562, %v3693
        %v3824 = vadd.f32 %v3563, %v3698
        %v3825 = vadd.f32 %v3564, %v3703
        %v3826 = vadd.f32 %v3565, %v3708
        %v3827 = vadd.f32 %v3566, %v3713
        %v3828 = vadd.f32 %v3567, %v3718
        %v3829 = vadd.f32 %v3568, %v3723
        %v3830 = vadd.f32 %v3569, %v3728
        %v3831 = vadd.f32 %v3570, %v3733
        %v3832 = vadd.f32 %v3571, %v3738
        %v3833 = vadd.f32 %v3572, %v3743
        %v3834 = vadd.f32 %v3573, %v3748
        %v3835 = vadd.f32 %v3574, %v3753
        %v3836 = vadd.f32 %v3575, %v3758
        %v3837 = vadd.f32 %v3576, %v3763
        %v3838 = vadd.f32 %v3577, %v3768
        %v3839 = vadd.f32 %v3578, %v3773
        %v3840 = vadd.f32 %v3579, %v3778
        %v3841 = vadd.f32 %v3580, %v3783
        %v3842 = vadd.f32 %v3581, %v3788
        %v3843 = vadd.f32 %v3582, %v3793
        %v3844 = vadd.f32 %v3583, %v3798
        %v3845 = vadd.f32 %v3584, %v3803
        %v3846 = vadd.f32 %v3585, %v3808
        %v3847 = vadd.f32 %v3586, %v3813
        %v3848 = vld [vmem:[%s584] sm:$0xff]
        %v3849 = vld [vmem:[%s584 + $0x8] sm:$0xff]
        %v3850 = vld [vmem:[%s584 + $0x10] sm:$0xff]
        %v3851 = vld [vmem:[%s584 + $0x18] sm:$0xff]
        %v3852 = vld [vmem:[%s584 + $0x20] sm:$0xff]
        %v3853 = vld [vmem:[%s584 + $0x28] sm:$0xff]
        %v3854 = vld [vmem:[%s584 + $0x30] sm:$0xff]
        %v3855 = vld [vmem:[%s584 + $0x38] sm:$0xff]
        %v3856 = vld [vmem:[%s584 + $0x40] sm:$0xff]
        %v3857 = vld [vmem:[%s584 + $0x48] sm:$0xff]
        %v3858 = vld [vmem:[%s584 + $0x50] sm:$0xff]
        %v3859 = vld [vmem:[%s584 + $0x58] sm:$0xff]
        %v3860 = vld [vmem:[%s584 + $0x60] sm:$0xff]
        %v3861 = vld [vmem:[%s584 + $0x68] sm:$0xff]
        %v3862 = vld [vmem:[%s584 + $0x70] sm:$0xff]
        %v3863 = vld [vmem:[%s584 + $0x78] sm:$0xff]
        %v3864 = vld [vmem:[%s584 + $0x80] sm:$0xff]
        %v3865 = vld [vmem:[%s584 + $0x88] sm:$0xff]
        %v3866 = vld [vmem:[%s584 + $0x90] sm:$0xff]
        %v3867 = vld [vmem:[%s584 + $0x98] sm:$0xff]
        %v3868 = vld [vmem:[%s584 + $0xa0] sm:$0xff]
        %v3869 = vld [vmem:[%s584 + $0xa8] sm:$0xff]
        %v3870 = vld [vmem:[%s584 + $0xb0] sm:$0xff]
        %v3871 = vld [vmem:[%s584 + $0xb8] sm:$0xff]
        %v3872 = vld [vmem:[%s584 + $0xc0] sm:$0xff]
        %v3873 = vld [vmem:[%s584 + $0xc8] sm:$0xff]
        %v3874 = vld [vmem:[%s584 + $0xd0] sm:$0xff]
        %v3875 = vld [vmem:[%s584 + $0xd8] sm:$0xff]
        %v3876 = vld [vmem:[%s584 + $0xe0] sm:$0xff]
        %v3877 = vld [vmem:[%s584 + $0xe8] sm:$0xff]
        %v3878 = vld [vmem:[%s584 + $0xf0] sm:$0xff]
        %v3879 = vld [vmem:[%s584 + $0xf8] sm:$0xff]
        %v3880 = vlaneseq
        %v3881 = vshrl.u32 %v3880, 7
        %v3882 = vadd.s32 %v3881, 8
        %v3883 = vld [vmem:[#allocation19] sm:$0x1]
        %v3885 = vlaneseq
        %v3886 = vshrl.u32 %v3885, 7
        %v3887 = vsub.s32 0, %v3886
        %v3888 = vrot.slane %v3883, %v3887
        %v3890 = vmul.f32 %v1704, %v3888
        %v3891 = vmul.f32 %v1709, %v3888
        %v3892 = vmul.f32 %v1714, %v3888
        %v3893 = vmul.f32 %v1719, %v3888
        %v3894 = vmul.f32 %v1724, %v3888
        %v3895 = vmul.f32 %v1729, %v3888
        %v3896 = vmul.f32 %v1734, %v3888
        %v3897 = vmul.f32 %v1739, %v3888
        %v3898 = vmul.f32 %v1744, %v3888
        %v3899 = vmul.f32 %v1749, %v3888
        %v3900 = vmul.f32 %v1754, %v3888
        %v3901 = vmul.f32 %v1759, %v3888
        %v3902 = vmul.f32 %v1764, %v3888
        %v3903 = vmul.f32 %v1769, %v3888
        %v3904 = vmul.f32 %v1774, %v3888
        %v3905 = vmul.f32 %v1779, %v3888
        %v3906 = vmul.f32 %v1784, %v3888
        %v3907 = vmul.f32 %v1789, %v3888
        %v3908 = vmul.f32 %v1794, %v3888
        %v3909 = vmul.f32 %v1799, %v3888
        %v3910 = vmul.f32 %v1804, %v3888
        %v3911 = vmul.f32 %v1809, %v3888
        %v3912 = vmul.f32 %v1814, %v3888
        %v3913 = vmul.f32 %v1819, %v3888
        %v3914 = vmul.f32 %v1824, %v3888
        %v3915 = vmul.f32 %v1829, %v3888
        %v3916 = vmul.f32 %v1834, %v3888
        %v3917 = vmul.f32 %v1839, %v3888
        %v3918 = vmul.f32 %v1844, %v3888
        %v3919 = vmul.f32 %v1849, %v3888
        %v3920 = vmul.f32 %v1854, %v3888
        %v3921 = vmul.f32 %v1859, %v3888
        %v3922 = vld [vmem:[#allocation20] sm:$0x1]
        %v3924 = vlaneseq
        %v3925 = vshrl.u32 %v3924, 7
        %v3926 = vsub.s32 0, %v3925
        %v3927 = vrot.slane %v3922, %v3926
        %v3929 = vadd.f32 %v3890, %v3927
        %v3930 = vadd.f32 %v3891, %v3927
        %v3931 = vadd.f32 %v3892, %v3927
        %v3932 = vadd.f32 %v3893, %v3927
        %v3933 = vadd.f32 %v3894, %v3927
        %v3934 = vadd.f32 %v3895, %v3927
        %v3935 = vadd.f32 %v3896, %v3927
        %v3936 = vadd.f32 %v3897, %v3927
        %v3937 = vadd.f32 %v3898, %v3927
        %v3938 = vadd.f32 %v3899, %v3927
        %v3939 = vadd.f32 %v3900, %v3927
        %v3940 = vadd.f32 %v3901, %v3927
        %v3941 = vadd.f32 %v3902, %v3927
        %v3942 = vadd.f32 %v3903, %v3927
        %v3943 = vadd.f32 %v3904, %v3927
        %v3944 = vadd.f32 %v3905, %v3927
        %v3945 = vadd.f32 %v3906, %v3927
        %v3946 = vadd.f32 %v3907, %v3927
        %v3947 = vadd.f32 %v3908, %v3927
        %v3948 = vadd.f32 %v3909, %v3927
        %v3949 = vadd.f32 %v3910, %v3927
        %v3950 = vadd.f32 %v3911, %v3927
        %v3951 = vadd.f32 %v3912, %v3927
        %v3952 = vadd.f32 %v3913, %v3927
        %v3953 = vadd.f32 %v3914, %v3927
        %v3954 = vadd.f32 %v3915, %v3927
        %v3955 = vadd.f32 %v3916, %v3927
        %v3956 = vadd.f32 %v3917, %v3927
        %v3957 = vadd.f32 %v3918, %v3927
        %v3958 = vadd.f32 %v3919, %v3927
        %v3959 = vadd.f32 %v3920, %v3927
        %v3960 = vadd.f32 %v3921, %v3927
        %v3961 = vmax.f32 %v3929, 0.0
        %v3962 = vmax.f32 %v3930, 0.0
        %v3963 = vmax.f32 %v3931, 0.0
        %v3964 = vmax.f32 %v3932, 0.0
        %v3965 = vmax.f32 %v3933, 0.0
        %v3966 = vmax.f32 %v3934, 0.0
        %v3967 = vmax.f32 %v3935, 0.0
        %v3968 = vmax.f32 %v3936, 0.0
        %v3969 = vmax.f32 %v3937, 0.0
        %v3970 = vmax.f32 %v3938, 0.0
        %v3971 = vmax.f32 %v3939, 0.0
        %v3972 = vmax.f32 %v3940, 0.0
        %v3973 = vmax.f32 %v3941, 0.0
        %v3974 = vmax.f32 %v3942, 0.0
        %v3975 = vmax.f32 %v3943, 0.0
        %v3976 = vmax.f32 %v3944, 0.0
        %v3977 = vmax.f32 %v3945, 0.0
        %v3978 = vmax.f32 %v3946, 0.0
        %v3979 = vmax.f32 %v3947, 0.0
        %v3980 = vmax.f32 %v3948, 0.0
        %v3981 = vmax.f32 %v3949, 0.0
        %v3982 = vmax.f32 %v3950, 0.0
        %v3983 = vmax.f32 %v3951, 0.0
        %v3984 = vmax.f32 %v3952, 0.0
        %v3985 = vmax.f32 %v3953, 0.0
        %v3986 = vmax.f32 %v3954, 0.0
        %v3987 = vmax.f32 %v3955, 0.0
        %v3988 = vmax.f32 %v3956, 0.0
        %v3989 = vmax.f32 %v3957, 0.0
        %v3990 = vmax.f32 %v3958, 0.0
        %v3991 = vmax.f32 %v3959, 0.0
        %v3992 = vmax.f32 %v3960, 0.0
        %v3993 = vld [vmem:[#allocation11] sm:$0xf]
        %v3995 = vsel %vm1568, %v3961, 0
        %v3998 = vsel %vm1568, %v3962, 0
        %v4001 = vsel %vm1568, %v3963, 0
        %v4004 = vsel %vm1568, %v3964, 0
        %v4007 = vsel %vm1568, %v3965, 0
        %v4010 = vsel %vm1568, %v3966, 0
        %v4013 = vsel %vm1568, %v3967, 0
        %v4016 = vsel %vm1568, %v3968, 0
        %v4019 = vsel %vm1568, %v3969, 0
        %v4022 = vsel %vm1568, %v3970, 0
        %v4025 = vsel %vm1568, %v3971, 0
        %v4028 = vsel %vm1568, %v3972, 0
        %v4031 = vsel %vm1568, %v3973, 0
        %v4034 = vsel %vm1568, %v3974, 0
        %v4037 = vsel %vm1568, %v3975, 0
        %v4040 = vsel %vm1568, %v3976, 0
        %v4043 = vsel %vm1568, %v3977, 0
        %v4046 = vsel %vm1568, %v3978, 0
        %v4049 = vsel %vm1568, %v3979, 0
        %v4052 = vsel %vm1568, %v3980, 0
        %v4055 = vsel %vm1568, %v3981, 0
        %v4058 = vsel %vm1568, %v3982, 0
        %v4061 = vsel %vm1568, %v3983, 0
        %v4064 = vsel %vm1568, %v3984, 0
        %v4067 = vsel %vm1568, %v3985, 0
        %v4070 = vsel %vm1568, %v3986, 0
        %v4073 = vsel %vm1568, %v3987, 0
        %v4076 = vsel %vm1568, %v3988, 0
        %v4079 = vsel %vm1568, %v3989, 0
        %v4082 = vsel %vm1568, %v3990, 0
        %v4085 = vsel %vm1568, %v3991, 0
        %v4088 = vsel %vm1568, %v3992, 0
        %v4091 = vsel %vm1633, %v3993, 0
        %4093 = vmatprep.subr.mxu0 0.0
        %4094 = vmatpush1.msra.mxu0 %v4091
        %4095 = vmatprep.subr.mxu0 0.0
        %4096 = vmatpush1.msra.mxu0 0.0
        %4097 = vmatprep.subr.mxu0 0.0
        %4098 = vmatpush1.msra.mxu0 0.0
        %4099 = vmatprep.subr.mxu0 0.0
        %4100 = vmatpush1.msra.mxu0 0.0
        %4101 = vmatprep.subr.mxu0 0.0
        %4102 = vmatpush1.msra.mxu0 0.0
        %4103 = vmatprep.subr.mxu0 0.0
        %4104 = vmatpush1.msra.mxu0 0.0
        %4105 = vmatprep.subr.mxu0 0.0
        %4106 = vmatpush1.msra.mxu0 0.0
        %4107 = vmatprep.subr.mxu0 0.0
        %4108 = vmatpush1.msra.mxu0 0.0
        %4109 = vmatprep.subr.mxu0 0.0
        %4110 = vmatpush1.msra.mxu0 0.0
        %4111 = vmatprep.subr.mxu0 0.0
        %4112 = vmatpush1.msra.mxu0 0.0
        %4113 = vmatprep.subr.mxu0 0.0
        %4114 = vmatpush1.msra.mxu0 0.0
        %4115 = vmatprep.subr.mxu0 0.0
        %4116 = vmatpush1.msra.mxu0 0.0
        %4117 = vmatprep.subr.mxu0 0.0
        %4118 = vmatpush1.msra.mxu0 0.0
        %4119 = vmatprep.subr.mxu0 0.0
        %4120 = vmatpush1.msra.mxu0 0.0
        %4121 = vmatprep.subr.mxu0 0.0
        %4122 = vmatpush1.msra.mxu0 0.0
        %4123 = vmatprep.subr.mxu0 0.0
        %4124 = vmatpush1.msra.mxu0 0.0
        %4125 = vmatprep.subr.mxu0 0.0
        %4126 = vmatpush1.msra.mxu0 0.0
        %4127 = vmatprep.subr.mxu0 0.0
        %4128 = vmatpush1.msra.mxu0 0.0
        %4129 = vmatprep.subr.mxu0 0.0
        %4130 = vmatpush1.msra.mxu0 0.0
        %4131 = vmatprep.subr.mxu0 0.0
        %4132 = vmatpush1.msra.mxu0 0.0
        %4133 = vmatprep.subr.mxu0 0.0
        %4134 = vmatpush1.msra.mxu0 0.0
        %4135 = vmatprep.subr.mxu0 0.0
        %4136 = vmatpush1.msra.mxu0 0.0
        %4137 = vmatprep.subr.mxu0 0.0
        %4138 = vmatpush1.msra.mxu0 0.0
        %4139 = vmatprep.subr.mxu0 0.0
        %4140 = vmatpush1.msra.mxu0 0.0
        %4141 = vmatprep.subr.mxu0 0.0
        %4142 = vmatpush1.msra.mxu0 0.0
        %4143 = vmatprep.subr.mxu0 0.0
        %4144 = vmatpush1.msra.mxu0 0.0
        %4145 = vmatprep.subr.mxu0 0.0
        %4146 = vmatpush1.msra.mxu0 0.0
        %4147 = vmatprep.subr.mxu0 0.0
        %4148 = vmatpush1.msra.mxu0 0.0
        %4149 = vmatprep.subr.mxu0 0.0
        %4150 = vmatpush1.msra.mxu0 0.0
        %4151 = vmatprep.subr.mxu0 0.0
        %4152 = vmatpush1.msra.mxu0 0.0
        %4153 = vmatprep.subr.mxu0 0.0
        %4154 = vmatpush1.msra.mxu0 0.0
        %4155 = vmatprep.subr.mxu0 0.0
        %4156 = vmatpush1.msra.mxu0 0.0
        %4157 = vmatprep.mubr.f32.mxu0 0.0
        %4158 = vmatmul.mubr.f32.gmra.mrb[0].mxu0 %v3995
        %v4159 = vpop.f32.mrb[0].mxu0
        %v4160 = vadd.f32 0.0, %v4159
        %v4161 = vpop.f32.mrb[0].mxu0
        %4162 = vmatprep.mubr.f32.mxu0 0.0
        %4163 = vmatmul.mubr.f32.gmra.mrb[0].mxu0 %v3998
        %v4164 = vpop.f32.mrb[0].mxu0
        %v4165 = vadd.f32 0.0, %v4164
        %v4166 = vpop.f32.mrb[0].mxu0
        %4167 = vmatprep.mubr.f32.mxu0 0.0
        %4168 = vmatmul.mubr.f32.gmra.mrb[0].mxu0 %v4001
        %v4169 = vpop.f32.mrb[0].mxu0
        %v4170 = vadd.f32 0.0, %v4169
        %v4171 = vpop.f32.mrb[0].mxu0
        %4172 = vmatprep.mubr.f32.mxu0 0.0
        %4173 = vmatmul.mubr.f32.gmra.mrb[0].mxu0 %v4004
        %v4174 = vpop.f32.mrb[0].mxu0
        %v4175 = vadd.f32 0.0, %v4174
        %v4176 = vpop.f32.mrb[0].mxu0
        %4177 = vmatprep.mubr.f32.mxu0 0.0
        %4178 = vmatmul.mubr.f32.gmra.mrb[0].mxu0 %v4007
        %v4179 = vpop.f32.mrb[0].mxu0
        %v4180 = vadd.f32 0.0, %v4179
        %v4181 = vpop.f32.mrb[0].mxu0
        %4182 = vmatprep.mubr.f32.mxu0 0.0
        %4183 = vmatmul.mubr.f32.gmra.mrb[0].mxu0 %v4010
        %v4184 = vpop.f32.mrb[0].mxu0
        %v4185 = vadd.f32 0.0, %v4184
        %v4186 = vpop.f32.mrb[0].mxu0
        %4187 = vmatprep.mubr.f32.mxu0 0.0
        %4188 = vmatmul.mubr.f32.gmra.mrb[0].mxu0 %v4013
        %v4189 = vpop.f32.mrb[0].mxu0
        %v4190 = vadd.f32 0.0, %v4189
        %v4191 = vpop.f32.mrb[0].mxu0
        %4192 = vmatprep.mubr.f32.mxu0 0.0
        %4193 = vmatmul.mubr.f32.gmra.mrb[0].mxu0 %v4016
        %v4194 = vpop.f32.mrb[0].mxu0
        %v4195 = vadd.f32 0.0, %v4194
        %v4196 = vpop.f32.mrb[0].mxu0
        %4197 = vmatprep.mubr.f32.mxu0 0.0
        %4198 = vmatmul.mubr.f32.gmra.mrb[0].mxu0 %v4019
        %v4199 = vpop.f32.mrb[0].mxu0
        %v4200 = vadd.f32 0.0, %v4199
        %v4201 = vpop.f32.mrb[0].mxu0
        %4202 = vmatprep.mubr.f32.mxu0 0.0
        %4203 = vmatmul.mubr.f32.gmra.mrb[0].mxu0 %v4022
        %v4204 = vpop.f32.mrb[0].mxu0
        %v4205 = vadd.f32 0.0, %v4204
        %v4206 = vpop.f32.mrb[0].mxu0
        %4207 = vmatprep.mubr.f32.mxu0 0.0
        %4208 = vmatmul.mubr.f32.gmra.mrb[0].mxu0 %v4025
        %v4209 = vpop.f32.mrb[0].mxu0
        %v4210 = vadd.f32 0.0, %v4209
        %v4211 = vpop.f32.mrb[0].mxu0
        %4212 = vmatprep.mubr.f32.mxu0 0.0
        %4213 = vmatmul.mubr.f32.gmra.mrb[0].mxu0 %v4028
        %v4214 = vpop.f32.mrb[0].mxu0
        %v4215 = vadd.f32 0.0, %v4214
        %v4216 = vpop.f32.mrb[0].mxu0
        %4217 = vmatprep.mubr.f32.mxu0 0.0
        %4218 = vmatmul.mubr.f32.gmra.mrb[0].mxu0 %v4031
        %v4219 = vpop.f32.mrb[0].mxu0
        %v4220 = vadd.f32 0.0, %v4219
        %v4221 = vpop.f32.mrb[0].mxu0
        %4222 = vmatprep.mubr.f32.mxu0 0.0
        %4223 = vmatmul.mubr.f32.gmra.mrb[0].mxu0 %v4034
        %v4224 = vpop.f32.mrb[0].mxu0
        %v4225 = vadd.f32 0.0, %v4224
        %v4226 = vpop.f32.mrb[0].mxu0
        %4227 = vmatprep.mubr.f32.mxu0 0.0
        %4228 = vmatmul.mubr.f32.gmra.mrb[0].mxu0 %v4037
        %v4229 = vpop.f32.mrb[0].mxu0
        %v4230 = vadd.f32 0.0, %v4229
        %v4231 = vpop.f32.mrb[0].mxu0
        %4232 = vmatprep.mubr.f32.mxu0 0.0
        %4233 = vmatmul.mubr.f32.gmra.mrb[0].mxu0 %v4040
        %v4234 = vpop.f32.mrb[0].mxu0
        %v4235 = vadd.f32 0.0, %v4234
        %v4236 = vpop.f32.mrb[0].mxu0
        %4237 = vmatprep.mubr.f32.mxu0 0.0
        %4238 = vmatmul.mubr.f32.gmra.mrb[0].mxu0 %v4043
        %v4239 = vpop.f32.mrb[0].mxu0
        %v4240 = vadd.f32 0.0, %v4239
        %v4241 = vpop.f32.mrb[0].mxu0
        %4242 = vmatprep.mubr.f32.mxu0 0.0
        %4243 = vmatmul.mubr.f32.gmra.mrb[0].mxu0 %v4046
        %v4244 = vpop.f32.mrb[0].mxu0
        %v4245 = vadd.f32 0.0, %v4244
        %v4246 = vpop.f32.mrb[0].mxu0
        %4247 = vmatprep.mubr.f32.mxu0 0.0
        %4248 = vmatmul.mubr.f32.gmra.mrb[0].mxu0 %v4049
        %v4249 = vpop.f32.mrb[0].mxu0
        %v4250 = vadd.f32 0.0, %v4249
        %v4251 = vpop.f32.mrb[0].mxu0
        %4252 = vmatprep.mubr.f32.mxu0 0.0
        %4253 = vmatmul.mubr.f32.gmra.mrb[0].mxu0 %v4052
        %v4254 = vpop.f32.mrb[0].mxu0
        %v4255 = vadd.f32 0.0, %v4254
        %v4256 = vpop.f32.mrb[0].mxu0
        %4257 = vmatprep.mubr.f32.mxu0 0.0
        %4258 = vmatmul.mubr.f32.gmra.mrb[0].mxu0 %v4055
        %v4259 = vpop.f32.mrb[0].mxu0
        %v4260 = vadd.f32 0.0, %v4259
        %v4261 = vpop.f32.mrb[0].mxu0
        %4262 = vmatprep.mubr.f32.mxu0 0.0
        %4263 = vmatmul.mubr.f32.gmra.mrb[0].mxu0 %v4058
        %v4264 = vpop.f32.mrb[0].mxu0
        %v4265 = vadd.f32 0.0, %v4264
        %v4266 = vpop.f32.mrb[0].mxu0
        %4267 = vmatprep.mubr.f32.mxu0 0.0
        %4268 = vmatmul.mubr.f32.gmra.mrb[0].mxu0 %v4061
        %v4269 = vpop.f32.mrb[0].mxu0
        %v4270 = vadd.f32 0.0, %v4269
        %v4271 = vpop.f32.mrb[0].mxu0
        %4272 = vmatprep.mubr.f32.mxu0 0.0
        %4273 = vmatmul.mubr.f32.gmra.mrb[0].mxu0 %v4064
        %v4274 = vpop.f32.mrb[0].mxu0
        %v4275 = vadd.f32 0.0, %v4274
        %v4276 = vpop.f32.mrb[0].mxu0
        %4277 = vmatprep.mubr.f32.mxu0 0.0
        %4278 = vmatmul.mubr.f32.gmra.mrb[0].mxu0 %v4067
        %v4279 = vpop.f32.mrb[0].mxu0
        %v4280 = vadd.f32 0.0, %v4279
        %v4281 = vpop.f32.mrb[0].mxu0
        %4282 = vmatprep.mubr.f32.mxu0 0.0
        %4283 = vmatmul.mubr.f32.gmra.mrb[0].mxu0 %v4070
        %v4284 = vpop.f32.mrb[0].mxu0
        %v4285 = vadd.f32 0.0, %v4284
        %v4286 = vpop.f32.mrb[0].mxu0
        %4287 = vmatprep.mubr.f32.mxu0 0.0
        %4288 = vmatmul.mubr.f32.gmra.mrb[0].mxu0 %v4073
        %v4289 = vpop.f32.mrb[0].mxu0
        %v4290 = vadd.f32 0.0, %v4289
        %v4291 = vpop.f32.mrb[0].mxu0
        %4292 = vmatprep.mubr.f32.mxu0 0.0
        %4293 = vmatmul.mubr.f32.gmra.mrb[0].mxu0 %v4076
        %v4294 = vpop.f32.mrb[0].mxu0
        %v4295 = vadd.f32 0.0, %v4294
        %v4296 = vpop.f32.mrb[0].mxu0
        %4297 = vmatprep.mubr.f32.mxu0 0.0
        %4298 = vmatmul.mubr.f32.gmra.mrb[0].mxu0 %v4079
        %v4299 = vpop.f32.mrb[0].mxu0
        %v4300 = vadd.f32 0.0, %v4299
        %v4301 = vpop.f32.mrb[0].mxu0
        %4302 = vmatprep.mubr.f32.mxu0 0.0
        %4303 = vmatmul.mubr.f32.gmra.mrb[0].mxu0 %v4082
        %v4304 = vpop.f32.mrb[0].mxu0
        %v4305 = vadd.f32 0.0, %v4304
        %v4306 = vpop.f32.mrb[0].mxu0
        %4307 = vmatprep.mubr.f32.mxu0 0.0
        %4308 = vmatmul.mubr.f32.gmra.mrb[0].mxu0 %v4085
        %v4309 = vpop.f32.mrb[0].mxu0
        %v4310 = vadd.f32 0.0, %v4309
        %v4311 = vpop.f32.mrb[0].mxu0
        %4312 = vmatprep.mubr.f32.mxu0 0.0
        %4313 = vmatmul.mubr.f32.gmra.mrb[0].mxu0 %v4088
        %v4314 = vpop.f32.mrb[0].mxu0
        %v4315 = vadd.f32 0.0, %v4314
        %v4316 = vpop.f32.mrb[0].mxu0
        %4317 = vdwg.mxu0
        %v4318 = vld [vmem:[#allocation22] sm:$0x1]
        %v4320 = vlaneseq
        %v4321 = vshrl.u32 %v4320, 7
        %v4322 = vsub.s32 0, %v4321
        %v4323 = vrot.slane %v4318, %v4322
        %v4325 = vmul.f32 %v4160, %v4323
        %v4326 = vmul.f32 %v4165, %v4323
        %v4327 = vmul.f32 %v4170, %v4323
        %v4328 = vmul.f32 %v4175, %v4323
        %v4329 = vmul.f32 %v4180, %v4323
        %v4330 = vmul.f32 %v4185, %v4323
        %v4331 = vmul.f32 %v4190, %v4323
        %v4332 = vmul.f32 %v4195, %v4323
        %v4333 = vmul.f32 %v4200, %v4323
        %v4334 = vmul.f32 %v4205, %v4323
        %v4335 = vmul.f32 %v4210, %v4323
        %v4336 = vmul.f32 %v4215, %v4323
        %v4337 = vmul.f32 %v4220, %v4323
        %v4338 = vmul.f32 %v4225, %v4323
        %v4339 = vmul.f32 %v4230, %v4323
        %v4340 = vmul.f32 %v4235, %v4323
        %v4341 = vmul.f32 %v4240, %v4323
        %v4342 = vmul.f32 %v4245, %v4323
        %v4343 = vmul.f32 %v4250, %v4323
        %v4344 = vmul.f32 %v4255, %v4323
        %v4345 = vmul.f32 %v4260, %v4323
        %v4346 = vmul.f32 %v4265, %v4323
        %v4347 = vmul.f32 %v4270, %v4323
        %v4348 = vmul.f32 %v4275, %v4323
        %v4349 = vmul.f32 %v4280, %v4323
        %v4350 = vmul.f32 %v4285, %v4323
        %v4351 = vmul.f32 %v4290, %v4323
        %v4352 = vmul.f32 %v4295, %v4323
        %v4353 = vmul.f32 %v4300, %v4323
        %v4354 = vmul.f32 %v4305, %v4323
        %v4355 = vmul.f32 %v4310, %v4323
        %v4356 = vmul.f32 %v4315, %v4323
        %v4357 = vld [vmem:[#allocation23] sm:$0x1]
        %v4359 = vlaneseq
        %v4360 = vshrl.u32 %v4359, 7
        %v4361 = vsub.s32 0, %v4360
        %v4362 = vrot.slane %v4357, %v4361
        %v4364 = vadd.f32 %v4325, %v4362
        %v4365 = vadd.f32 %v4326, %v4362
        %v4366 = vadd.f32 %v4327, %v4362
        %v4367 = vadd.f32 %v4328, %v4362
        %v4368 = vadd.f32 %v4329, %v4362
        %v4369 = vadd.f32 %v4330, %v4362
        %v4370 = vadd.f32 %v4331, %v4362
        %v4371 = vadd.f32 %v4332, %v4362
        %v4372 = vadd.f32 %v4333, %v4362
        %v4373 = vadd.f32 %v4334, %v4362
        %v4374 = vadd.f32 %v4335, %v4362
        %v4375 = vadd.f32 %v4336, %v4362
        %v4376 = vadd.f32 %v4337, %v4362
        %v4377 = vadd.f32 %v4338, %v4362
        %v4378 = vadd.f32 %v4339, %v4362
        %v4379 = vadd.f32 %v4340, %v4362
        %v4380 = vadd.f32 %v4341, %v4362
        %v4381 = vadd.f32 %v4342, %v4362
        %v4382 = vadd.f32 %v4343, %v4362
        %v4383 = vadd.f32 %v4344, %v4362
        %v4384 = vadd.f32 %v4345, %v4362
        %v4385 = vadd.f32 %v4346, %v4362
        %v4386 = vadd.f32 %v4347, %v4362
        %v4387 = vadd.f32 %v4348, %v4362
        %v4388 = vadd.f32 %v4349, %v4362
        %v4389 = vadd.f32 %v4350, %v4362
        %v4390 = vadd.f32 %v4351, %v4362
        %v4391 = vadd.f32 %v4352, %v4362
        %v4392 = vadd.f32 %v4353, %v4362
        %v4393 = vadd.f32 %v4354, %v4362
        %v4394 = vadd.f32 %v4355, %v4362
        %v4395 = vadd.f32 %v4356, %v4362
        %v4396 = vmax.f32 %v4364, 0.0
        %v4397 = vmax.f32 %v4365, 0.0
        %v4398 = vmax.f32 %v4366, 0.0
        %v4399 = vmax.f32 %v4367, 0.0
        %v4400 = vmax.f32 %v4368, 0.0
        %v4401 = vmax.f32 %v4369, 0.0
        %v4402 = vmax.f32 %v4370, 0.0
        %v4403 = vmax.f32 %v4371, 0.0
        %v4404 = vmax.f32 %v4372, 0.0
        %v4405 = vmax.f32 %v4373, 0.0
        %v4406 = vmax.f32 %v4374, 0.0
        %v4407 = vmax.f32 %v4375, 0.0
        %v4408 = vmax.f32 %v4376, 0.0
        %v4409 = vmax.f32 %v4377, 0.0
        %v4410 = vmax.f32 %v4378, 0.0
        %v4411 = vmax.f32 %v4379, 0.0
        %v4412 = vmax.f32 %v4380, 0.0
        %v4413 = vmax.f32 %v4381, 0.0
        %v4414 = vmax.f32 %v4382, 0.0
        %v4415 = vmax.f32 %v4383, 0.0
        %v4416 = vmax.f32 %v4384, 0.0
        %v4417 = vmax.f32 %v4385, 0.0
        %v4418 = vmax.f32 %v4386, 0.0
        %v4419 = vmax.f32 %v4387, 0.0
        %v4420 = vmax.f32 %v4388, 0.0
        %v4421 = vmax.f32 %v4389, 0.0
        %v4422 = vmax.f32 %v4390, 0.0
        %v4423 = vmax.f32 %v4391, 0.0
        %v4424 = vmax.f32 %v4392, 0.0
        %v4425 = vmax.f32 %v4393, 0.0
        %v4426 = vmax.f32 %v4394, 0.0
        %v4427 = vmax.f32 %v4395, 0.0
        %v4428 = vmul.u32 %v3881, 2
        %v4429 = vmul.u32 %v3882, 2
        %v4430 = vadd.s32 %v4428, 64
        %v4431 = vadd.s32 %v4429, 64
        %v4432 = vadd.s32 %v4428, 128
        %v4433 = vadd.s32 %v4429, 128
        %v4434 = vadd.s32 %v4428, 192
        %v4435 = vadd.s32 %v4429, 192
        %v4436 = vadd.s32 %v4428, 256
        %v4437 = vadd.s32 %v4429, 256
        %v4438 = vadd.s32 %v4428, 320
        %v4439 = vadd.s32 %v4429, 320
        %v4440 = vadd.s32 %v4428, 384
        %v4441 = vadd.s32 %v4429, 384
        %v4442 = vadd.s32 %v4428, 448
        %v4443 = vadd.s32 %v4429, 448
        %v4444 = vadd.s32 %v4428, 512
        %v4445 = vadd.s32 %v4429, 512
        %v4446 = vadd.s32 %v4428, 576
        %v4447 = vadd.s32 %v4429, 576
        %v4448 = vadd.s32 %v4428, 640
        %v4449 = vadd.s32 %v4429, 640
        %v4450 = vadd.s32 %v4428, 704
        %v4451 = vadd.s32 %v4429, 704
        %v4452 = vadd.s32 %v4428, 768
        %v4453 = vadd.s32 %v4429, 768
        %v4454 = vadd.s32 %v4428, 832
        %v4455 = vadd.s32 %v4429, 832
        %v4456 = vadd.s32 %v4428, 896
        %v4457 = vadd.s32 %v4429, 896
        %v4458 = vadd.s32 %v4428, 960
        %v4459 = vadd.s32 %v4429, 960
        %vm4460 = vcmp.eq.s32.totalorder %v3848, %v4428
        %vm4461 = vcmp.eq.s32.totalorder %v3849, %v4429
        %vm4462 = vcmp.eq.s32.totalorder %v3850, %v4430
        %vm4463 = vcmp.eq.s32.totalorder %v3851, %v4431
        %vm4464 = vcmp.eq.s32.totalorder %v3852, %v4432
        %vm4465 = vcmp.eq.s32.totalorder %v3853, %v4433
        %vm4466 = vcmp.eq.s32.totalorder %v3854, %v4434
        %vm4467 = vcmp.eq.s32.totalorder %v3855, %v4435
        %vm4468 = vcmp.eq.s32.totalorder %v3856, %v4436
        %vm4469 = vcmp.eq.s32.totalorder %v3857, %v4437
        %vm4470 = vcmp.eq.s32.totalorder %v3858, %v4438
        %vm4471 = vcmp.eq.s32.totalorder %v3859, %v4439
        %vm4472 = vcmp.eq.s32.totalorder %v3860, %v4440
        %vm4473 = vcmp.eq.s32.totalorder %v3861, %v4441
        %vm4474 = vcmp.eq.s32.totalorder %v3862, %v4442
        %vm4475 = vcmp.eq.s32.totalorder %v3863, %v4443
        %vm4476 = vcmp.eq.s32.totalorder %v3864, %v4444
        %vm4477 = vcmp.eq.s32.totalorder %v3865, %v4445
        %vm4478 = vcmp.eq.s32.totalorder %v3866, %v4446
        %vm4479 = vcmp.eq.s32.totalorder %v3867, %v4447
        %vm4480 = vcmp.eq.s32.totalorder %v3868, %v4448
        %vm4481 = vcmp.eq.s32.totalorder %v3869, %v4449
        %vm4482 = vcmp.eq.s32.totalorder %v3870, %v4450
        %vm4483 = vcmp.eq.s32.totalorder %v3871, %v4451
        %vm4484 = vcmp.eq.s32.totalorder %v3872, %v4452
        %vm4485 = vcmp.eq.s32.totalorder %v3873, %v4453
        %vm4486 = vcmp.eq.s32.totalorder %v3874, %v4454
        %vm4487 = vcmp.eq.s32.totalorder %v3875, %v4455
        %vm4488 = vcmp.eq.s32.totalorder %v3876, %v4456
        %vm4489 = vcmp.eq.s32.totalorder %v3877, %v4457
        %vm4490 = vcmp.eq.s32.totalorder %v3878, %v4458
        %vm4491 = vcmp.eq.s32.totalorder %v3879, %v4459
        %v4492 = vsel %vm4460, %v1084, 0.0
        %v4493 = vsel %vm4461, %v1085, 0.0
        %v4494 = vsel %vm4462, %v1086, 0.0
        %v4495 = vsel %vm4463, %v1087, 0.0
        %v4496 = vsel %vm4464, %v1088, 0.0
        %v4497 = vsel %vm4465, %v1089, 0.0
        %v4498 = vsel %vm4466, %v1090, 0.0
        %v4499 = vsel %vm4467, %v1091, 0.0
        %v4500 = vsel %vm4468, %v1092, 0.0
        %v4501 = vsel %vm4469, %v1093, 0.0
        %v4502 = vsel %vm4470, %v1094, 0.0
        %v4503 = vsel %vm4471, %v1095, 0.0
        %v4504 = vsel %vm4472, %v1096, 0.0
        %v4505 = vsel %vm4473, %v1097, 0.0
        %v4506 = vsel %vm4474, %v1098, 0.0
        %v4507 = vsel %vm4475, %v1099, 0.0
        %v4508 = vsel %vm4476, %v1100, 0.0
        %v4509 = vsel %vm4477, %v1101, 0.0
        %v4510 = vsel %vm4478, %v1102, 0.0
        %v4511 = vsel %vm4479, %v1103, 0.0
        %v4512 = vsel %vm4480, %v1104, 0.0
        %v4513 = vsel %vm4481, %v1105, 0.0
        %v4514 = vsel %vm4482, %v1106, 0.0
        %v4515 = vsel %vm4483, %v1107, 0.0
        %v4516 = vsel %vm4484, %v1108, 0.0
        %v4517 = vsel %vm4485, %v1109, 0.0
        %v4518 = vsel %vm4486, %v1110, 0.0
        %v4519 = vsel %vm4487, %v1111, 0.0
        %v4520 = vsel %vm4488, %v1112, 0.0
        %v4521 = vsel %vm4489, %v1113, 0.0
        %v4522 = vsel %vm4490, %v1114, 0.0
        %v4523 = vsel %vm4491, %v1115, 0.0
        %v4524 = vadd.f32 %v4492, %v4396
        %v4525 = vadd.f32 %v4493, %v4397
        %v4526 = vadd.f32 %v4494, %v4398
        %v4527 = vadd.f32 %v4495, %v4399
        %v4528 = vadd.f32 %v4496, %v4400
        %v4529 = vadd.f32 %v4497, %v4401
        %v4530 = vadd.f32 %v4498, %v4402
        %v4531 = vadd.f32 %v4499, %v4403
        %v4532 = vadd.f32 %v4500, %v4404
        %v4533 = vadd.f32 %v4501, %v4405
        %v4534 = vadd.f32 %v4502, %v4406
        %v4535 = vadd.f32 %v4503, %v4407
        %v4536 = vadd.f32 %v4504, %v4408
        %v4537 = vadd.f32 %v4505, %v4409
        %v4538 = vadd.f32 %v4506, %v4410
        %v4539 = vadd.f32 %v4507, %v4411
        %v4540 = vadd.f32 %v4508, %v4412
        %v4541 = vadd.f32 %v4509, %v4413
        %v4542 = vadd.f32 %v4510, %v4414
        %v4543 = vadd.f32 %v4511, %v4415
        %v4544 = vadd.f32 %v4512, %v4416
        %v4545 = vadd.f32 %v4513, %v4417
        %v4546 = vadd.f32 %v4514, %v4418
        %v4547 = vadd.f32 %v4515, %v4419
        %v4548 = vadd.f32 %v4516, %v4420
        %v4549 = vadd.f32 %v4517, %v4421
        %v4550 = vadd.f32 %v4518, %v4422
        %v4551 = vadd.f32 %v4519, %v4423
        %v4552 = vadd.f32 %v4520, %v4424
        %v4553 = vadd.f32 %v4521, %v4425
        %v4554 = vadd.f32 %v4522, %v4426
        %v4555 = vadd.f32 %v4523, %v4427
        %v4556 = vmax.f32 %v4524, 0.0
        %v4557 = vmax.f32 %v4525, 0.0
        %v4558 = vmax.f32 %v4526, 0.0
        %v4559 = vmax.f32 %v4527, 0.0
        %v4560 = vmax.f32 %v4528, 0.0
        %v4561 = vmax.f32 %v4529, 0.0
        %v4562 = vmax.f32 %v4530, 0.0
        %v4563 = vmax.f32 %v4531, 0.0
        %v4564 = vmax.f32 %v4532, 0.0
        %v4565 = vmax.f32 %v4533, 0.0
        %v4566 = vmax.f32 %v4534, 0.0
        %v4567 = vmax.f32 %v4535, 0.0
        %v4568 = vmax.f32 %v4536, 0.0
        %v4569 = vmax.f32 %v4537, 0.0
        %v4570 = vmax.f32 %v4538, 0.0
        %v4571 = vmax.f32 %v4539, 0.0
        %v4572 = vmax.f32 %v4540, 0.0
        %v4573 = vmax.f32 %v4541, 0.0
        %v4574 = vmax.f32 %v4542, 0.0
        %v4575 = vmax.f32 %v4543, 0.0
        %v4576 = vmax.f32 %v4544, 0.0
        %v4577 = vmax.f32 %v4545, 0.0
        %v4578 = vmax.f32 %v4546, 0.0
        %v4579 = vmax.f32 %v4547, 0.0
        %v4580 = vmax.f32 %v4548, 0.0
        %v4581 = vmax.f32 %v4549, 0.0
        %v4582 = vmax.f32 %v4550, 0.0
        %v4583 = vmax.f32 %v4551, 0.0
        %v4584 = vmax.f32 %v4552, 0.0
        %v4585 = vmax.f32 %v4553, 0.0
        %v4586 = vmax.f32 %v4554, 0.0
        %v4587 = vmax.f32 %v4555, 0.0
        %v4588 = vmul.f32 %v2244, %v3888
        %v4589 = vmul.f32 %v2249, %v3888
        %v4590 = vmul.f32 %v2254, %v3888
        %v4591 = vmul.f32 %v2259, %v3888
        %v4592 = vmul.f32 %v2264, %v3888
        %v4593 = vmul.f32 %v2269, %v3888
        %v4594 = vmul.f32 %v2274, %v3888
        %v4595 = vmul.f32 %v2279, %v3888
        %v4596 = vmul.f32 %v2284, %v3888
        %v4597 = vmul.f32 %v2289, %v3888
        %v4598 = vmul.f32 %v2294, %v3888
        %v4599 = vmul.f32 %v2299, %v3888
        %v4600 = vmul.f32 %v2304, %v3888
        %v4601 = vmul.f32 %v2309, %v3888
        %v4602 = vmul.f32 %v2314, %v3888
        %v4603 = vmul.f32 %v2319, %v3888
        %v4604 = vmul.f32 %v2324, %v3888
        %v4605 = vmul.f32 %v2329, %v3888
        %v4606 = vmul.f32 %v2334, %v3888
        %v4607 = vmul.f32 %v2339, %v3888
        %v4608 = vmul.f32 %v2344, %v3888
        %v4609 = vmul.f32 %v2349, %v3888
        %v4610 = vmul.f32 %v2354, %v3888
        %v4611 = vmul.f32 %v2359, %v3888
        %v4612 = vmul.f32 %v2364, %v3888
        %v4613 = vmul.f32 %v2369, %v3888
        %v4614 = vmul.f32 %v2374, %v3888
        %v4615 = vmul.f32 %v2379, %v3888
        %v4616 = vmul.f32 %v2384, %v3888
        %v4617 = vmul.f32 %v2389, %v3888
        %v4618 = vmul.f32 %v2394, %v3888
        %v4619 = vmul.f32 %v2399, %v3888
        %v4620 = vadd.f32 %v4588, %v3927
        %v4621 = vadd.f32 %v4589, %v3927
        %v4622 = vadd.f32 %v4590, %v3927
        %v4623 = vadd.f32 %v4591, %v3927
        %v4624 = vadd.f32 %v4592, %v3927
        %v4625 = vadd.f32 %v4593, %v3927
        %v4626 = vadd.f32 %v4594, %v3927
        %v4627 = vadd.f32 %v4595, %v3927
        %v4628 = vadd.f32 %v4596, %v3927
        %v4629 = vadd.f32 %v4597, %v3927
        %v4630 = vadd.f32 %v4598, %v3927
        %v4631 = vadd.f32 %v4599, %v3927
        %v4632 = vadd.f32 %v4600, %v3927
        %v4633 = vadd.f32 %v4601, %v3927
        %v4634 = vadd.f32 %v4602, %v3927
        %v4635 = vadd.f32 %v4603, %v3927
        %v4636 = vadd.f32 %v4604, %v3927
        %v4637 = vadd.f32 %v4605, %v3927
        %v4638 = vadd.f32 %v4606, %v3927
        %v4639 = vadd.f32 %v4607, %v3927
        %v4640 = vadd.f32 %v4608, %v3927
        %v4641 = vadd.f32 %v4609, %v3927
        %v4642 = vadd.f32 %v4610, %v3927
        %v4643 = vadd.f32 %v4611, %v3927
        %v4644 = vadd.f32 %v4612, %v3927
        %v4645 = vadd.f32 %v4613, %v3927
        %v4646 = vadd.f32 %v4614, %v3927
        %v4647 = vadd.f32 %v4615, %v3927
        %v4648 = vadd.f32 %v4616, %v3927
        %v4649 = vadd.f32 %v4617, %v3927
        %v4650 = vadd.f32 %v4618, %v3927
        %v4651 = vadd.f32 %v4619, %v3927
        %v4652 = vmax.f32 %v4620, 0.0
        %v4653 = vmax.f32 %v4621, 0.0
        %v4654 = vmax.f32 %v4622, 0.0
        %v4655 = vmax.f32 %v4623, 0.0
        %v4656 = vmax.f32 %v4624, 0.0
        %v4657 = vmax.f32 %v4625, 0.0
        %v4658 = vmax.f32 %v4626, 0.0
        %v4659 = vmax.f32 %v4627, 0.0
        %v4660 = vmax.f32 %v4628, 0.0
        %v4661 = vmax.f32 %v4629, 0.0
        %v4662 = vmax.f32 %v4630, 0.0
        %v4663 = vmax.f32 %v4631, 0.0
        %v4664 = vmax.f32 %v4632, 0.0
        %v4665 = vmax.f32 %v4633, 0.0
        %v4666 = vmax.f32 %v4634, 0.0
        %v4667 = vmax.f32 %v4635, 0.0
        %v4668 = vmax.f32 %v4636, 0.0
        %v4669 = vmax.f32 %v4637, 0.0
        %v4670 = vmax.f32 %v4638, 0.0
        %v4671 = vmax.f32 %v4639, 0.0
        %v4672 = vmax.f32 %v4640, 0.0
        %v4673 = vmax.f32 %v4641, 0.0
        %v4674 = vmax.f32 %v4642, 0.0
        %v4675 = vmax.f32 %v4643, 0.0
        %v4676 = vmax.f32 %v4644, 0.0
        %v4677 = vmax.f32 %v4645, 0.0
        %v4678 = vmax.f32 %v4646, 0.0
        %v4679 = vmax.f32 %v4647, 0.0
        %v4680 = vmax.f32 %v4648, 0.0
        %v4681 = vmax.f32 %v4649, 0.0
        %v4682 = vmax.f32 %v4650, 0.0
        %v4683 = vmax.f32 %v4651, 0.0
        %v4685 = vsel %vm1568, %v4652, 0
        %v4688 = vsel %vm1568, %v4653, 0
        %v4691 = vsel %vm1568, %v4654, 0
        %v4694 = vsel %vm1568, %v4655, 0
        %v4697 = vsel %vm1568, %v4656, 0
        %v4700 = vsel %vm1568, %v4657, 0
        %v4703 = vsel %vm1568, %v4658, 0
        %v4706 = vsel %vm1568, %v4659, 0
        %v4709 = vsel %vm1568, %v4660, 0
        %v4712 = vsel %vm1568, %v4661, 0
        %v4715 = vsel %vm1568, %v4662, 0
        %v4718 = vsel %vm1568, %v4663, 0
        %v4721 = vsel %vm1568, %v4664, 0
        %v4724 = vsel %vm1568, %v4665, 0
        %v4727 = vsel %vm1568, %v4666, 0
        %v4730 = vsel %vm1568, %v4667, 0
        %v4733 = vsel %vm1568, %v4668, 0
        %v4736 = vsel %vm1568, %v4669, 0
        %v4739 = vsel %vm1568, %v4670, 0
        %v4742 = vsel %vm1568, %v4671, 0
        %v4745 = vsel %vm1568, %v4672, 0
        %v4748 = vsel %vm1568, %v4673, 0
        %v4751 = vsel %vm1568, %v4674, 0
        %v4754 = vsel %vm1568, %v4675, 0
        %v4757 = vsel %vm1568, %v4676, 0
        %v4760 = vsel %vm1568, %v4677, 0
        %v4763 = vsel %vm1568, %v4678, 0
        %v4766 = vsel %vm1568, %v4679, 0
        %v4769 = vsel %vm1568, %v4680, 0
        %v4772 = vsel %vm1568, %v4681, 0
        %v4775 = vsel %vm1568, %v4682, 0
        %v4778 = vsel %vm1568, %v4683, 0
        %4780 = vmatprep.subr.mxu0 0.0
        %4781 = vmatpush1.msra.mxu0 %v4091
        %4782 = vmatprep.subr.mxu0 0.0
        %4783 = vmatpush1.msra.mxu0 0.0
        %4784 = vmatprep.subr.mxu0 0.0
        %4785 = vmatpush1.msra.mxu0 0.0
        %4786 = vmatprep.subr.mxu0 0.0
        %4787 = vmatpush1.msra.mxu0 0.0
        %4788 = vmatprep.subr.mxu0 0.0
        %4789 = vmatpush1.msra.mxu0 0.0
        %4790 = vmatprep.subr.mxu0 0.0
        %4791 = vmatpush1.msra.mxu0 0.0
        %4792 = vmatprep.subr.mxu0 0.0
        %4793 = vmatpush1.msra.mxu0 0.0
        %4794 = vmatprep.subr.mxu0 0.0
        %4795 = vmatpush1.msra.mxu0 0.0
        %4796 = vmatprep.subr.mxu0 0.0
        %4797 = vmatpush1.msra.mxu0 0.0
        %4798 = vmatprep.subr.mxu0 0.0
        %4799 = vmatpush1.msra.mxu0 0.0
        %4800 = vmatprep.subr.mxu0 0.0
        %4801 = vmatpush1.msra.mxu0 0.0
        %4802 = vmatprep.subr.mxu0 0.0
        %4803 = vmatpush1.msra.mxu0 0.0
        %4804 = vmatprep.subr.mxu0 0.0
        %4805 = vmatpush1.msra.mxu0 0.0
        %4806 = vmatprep.subr.mxu0 0.0
        %4807 = vmatpush1.msra.mxu0 0.0
        %4808 = vmatprep.subr.mxu0 0.0
        %4809 = vmatpush1.msra.mxu0 0.0
        %4810 = vmatprep.subr.mxu0 0.0
        %4811 = vmatpush1.msra.mxu0 0.0
        %4812 = vmatprep.subr.mxu0 0.0
        %4813 = vmatpush1.msra.mxu0 0.0
        %4814 = vmatprep.subr.mxu0 0.0
        %4815 = vmatpush1.msra.mxu0 0.0
        %4816 = vmatprep.subr.mxu0 0.0
        %4817 = vmatpush1.msra.mxu0 0.0
        %4818 = vmatprep.subr.mxu0 0.0
        %4819 = vmatpush1.msra.mxu0 0.0
        %4820 = vmatprep.subr.mxu0 0.0
        %4821 = vmatpush1.msra.mxu0 0.0
        %4822 = vmatprep.subr.mxu0 0.0
        %4823 = vmatpush1.msra.mxu0 0.0
        %4824 = vmatprep.subr.mxu0 0.0
        %4825 = vmatpush1.msra.mxu0 0.0
        %4826 = vmatprep.subr.mxu0 0.0
        %4827 = vmatpush1.msra.mxu0 0.0
        %4828 = vmatprep.subr.mxu0 0.0
        %4829 = vmatpush1.msra.mxu0 0.0
        %4830 = vmatprep.subr.mxu0 0.0
        %4831 = vmatpush1.msra.mxu0 0.0
        %4832 = vmatprep.subr.mxu0 0.0
        %4833 = vmatpush1.msra.mxu0 0.0
        %4834 = vmatprep.subr.mxu0 0.0
        %4835 = vmatpush1.msra.mxu0 0.0
        %4836 = vmatprep.subr.mxu0 0.0
        %4837 = vmatpush1.msra.mxu0 0.0
        %4838 = vmatprep.subr.mxu0 0.0
        %4839 = vmatpush1.msra.mxu0 0.0
        %4840 = vmatprep.subr.mxu0 0.0
        %4841 = vmatpush1.msra.mxu0 0.0
        %4842 = vmatprep.subr.mxu0 0.0
        %4843 = vmatpush1.msra.mxu0 0.0
        %4844 = vmatprep.mubr.f32.mxu0 0.0
        %4845 = vmatmul.mubr.f32.gmra.mrb[0].mxu0 %v4685
        %v4846 = vpop.f32.mrb[0].mxu0
        %v4847 = vadd.f32 0.0, %v4846
        %v4848 = vpop.f32.mrb[0].mxu0
        %4849 = vmatprep.mubr.f32.mxu0 0.0
        %4850 = vmatmul.mubr.f32.gmra.mrb[0].mxu0 %v4688
        %v4851 = vpop.f32.mrb[0].mxu0
        %v4852 = vadd.f32 0.0, %v4851
        %v4853 = vpop.f32.mrb[0].mxu0
        %4854 = vmatprep.mubr.f32.mxu0 0.0
        %4855 = vmatmul.mubr.f32.gmra.mrb[0].mxu0 %v4691
        %v4856 = vpop.f32.mrb[0].mxu0
        %v4857 = vadd.f32 0.0, %v4856
        %v4858 = vpop.f32.mrb[0].mxu0
        %4859 = vmatprep.mubr.f32.mxu0 0.0
        %4860 = vmatmul.mubr.f32.gmra.mrb[0].mxu0 %v4694
        %v4861 = vpop.f32.mrb[0].mxu0
        %v4862 = vadd.f32 0.0, %v4861
        %v4863 = vpop.f32.mrb[0].mxu0
        %4864 = vmatprep.mubr.f32.mxu0 0.0
        %4865 = vmatmul.mubr.f32.gmra.mrb[0].mxu0 %v4697
        %v4866 = vpop.f32.mrb[0].mxu0
        %v4867 = vadd.f32 0.0, %v4866
        %v4868 = vpop.f32.mrb[0].mxu0
        %4869 = vmatprep.mubr.f32.mxu0 0.0
        %4870 = vmatmul.mubr.f32.gmra.mrb[0].mxu0 %v4700
        %v4871 = vpop.f32.mrb[0].mxu0
        %v4872 = vadd.f32 0.0, %v4871
        %v4873 = vpop.f32.mrb[0].mxu0
        %4874 = vmatprep.mubr.f32.mxu0 0.0
        %4875 = vmatmul.mubr.f32.gmra.mrb[0].mxu0 %v4703
        %v4876 = vpop.f32.mrb[0].mxu0
        %v4877 = vadd.f32 0.0, %v4876
        %v4878 = vpop.f32.mrb[0].mxu0
        %4879 = vmatprep.mubr.f32.mxu0 0.0
        %4880 = vmatmul.mubr.f32.gmra.mrb[0].mxu0 %v4706
        %v4881 = vpop.f32.mrb[0].mxu0
        %v4882 = vadd.f32 0.0, %v4881
        %v4883 = vpop.f32.mrb[0].mxu0
        %4884 = vmatprep.mubr.f32.mxu0 0.0
        %4885 = vmatmul.mubr.f32.gmra.mrb[0].mxu0 %v4709
        %v4886 = vpop.f32.mrb[0].mxu0
        %v4887 = vadd.f32 0.0, %v4886
        %v4888 = vpop.f32.mrb[0].mxu0
        %4889 = vmatprep.mubr.f32.mxu0 0.0
        %4890 = vmatmul.mubr.f32.gmra.mrb[0].mxu0 %v4712
        %v4891 = vpop.f32.mrb[0].mxu0
        %v4892 = vadd.f32 0.0, %v4891
        %v4893 = vpop.f32.mrb[0].mxu0
        %4894 = vmatprep.mubr.f32.mxu0 0.0
        %4895 = vmatmul.mubr.f32.gmra.mrb[0].mxu0 %v4715
        %v4896 = vpop.f32.mrb[0].mxu0
        %v4897 = vadd.f32 0.0, %v4896
        %v4898 = vpop.f32.mrb[0].mxu0
        %4899 = vmatprep.mubr.f32.mxu0 0.0
        %4900 = vmatmul.mubr.f32.gmra.mrb[0].mxu0 %v4718
        %v4901 = vpop.f32.mrb[0].mxu0
        %v4902 = vadd.f32 0.0, %v4901
        %v4903 = vpop.f32.mrb[0].mxu0
        %4904 = vmatprep.mubr.f32.mxu0 0.0
        %4905 = vmatmul.mubr.f32.gmra.mrb[0].mxu0 %v4721
        %v4906 = vpop.f32.mrb[0].mxu0
        %v4907 = vadd.f32 0.0, %v4906
        %v4908 = vpop.f32.mrb[0].mxu0
        %4909 = vmatprep.mubr.f32.mxu0 0.0
        %4910 = vmatmul.mubr.f32.gmra.mrb[0].mxu0 %v4724
        %v4911 = vpop.f32.mrb[0].mxu0
        %v4912 = vadd.f32 0.0, %v4911
        %v4913 = vpop.f32.mrb[0].mxu0
        %4914 = vmatprep.mubr.f32.mxu0 0.0
        %4915 = vmatmul.mubr.f32.gmra.mrb[0].mxu0 %v4727
        %v4916 = vpop.f32.mrb[0].mxu0
        %v4917 = vadd.f32 0.0, %v4916
        %v4918 = vpop.f32.mrb[0].mxu0
        %4919 = vmatprep.mubr.f32.mxu0 0.0
        %4920 = vmatmul.mubr.f32.gmra.mrb[0].mxu0 %v4730
        %v4921 = vpop.f32.mrb[0].mxu0
        %v4922 = vadd.f32 0.0, %v4921
        %v4923 = vpop.f32.mrb[0].mxu0
        %4924 = vmatprep.mubr.f32.mxu0 0.0
        %4925 = vmatmul.mubr.f32.gmra.mrb[0].mxu0 %v4733
        %v4926 = vpop.f32.mrb[0].mxu0
        %v4927 = vadd.f32 0.0, %v4926
        %v4928 = vpop.f32.mrb[0].mxu0
        %4929 = vmatprep.mubr.f32.mxu0 0.0
        %4930 = vmatmul.mubr.f32.gmra.mrb[0].mxu0 %v4736
        %v4931 = vpop.f32.mrb[0].mxu0
        %v4932 = vadd.f32 0.0, %v4931
        %v4933 = vpop.f32.mrb[0].mxu0
        %4934 = vmatprep.mubr.f32.mxu0 0.0
        %4935 = vmatmul.mubr.f32.gmra.mrb[0].mxu0 %v4739
        %v4936 = vpop.f32.mrb[0].mxu0
        %v4937 = vadd.f32 0.0, %v4936
        %v4938 = vpop.f32.mrb[0].mxu0
        %4939 = vmatprep.mubr.f32.mxu0 0.0
        %4940 = vmatmul.mubr.f32.gmra.mrb[0].mxu0 %v4742
        %v4941 = vpop.f32.mrb[0].mxu0
        %v4942 = vadd.f32 0.0, %v4941
        %v4943 = vpop.f32.mrb[0].mxu0
        %4944 = vmatprep.mubr.f32.mxu0 0.0
        %4945 = vmatmul.mubr.f32.gmra.mrb[0].mxu0 %v4745
        %v4946 = vpop.f32.mrb[0].mxu0
        %v4947 = vadd.f32 0.0, %v4946
        %v4948 = vpop.f32.mrb[0].mxu0
        %4949 = vmatprep.mubr.f32.mxu0 0.0
        %4950 = vmatmul.mubr.f32.gmra.mrb[0].mxu0 %v4748
        %v4951 = vpop.f32.mrb[0].mxu0
        %v4952 = vadd.f32 0.0, %v4951
        %v4953 = vpop.f32.mrb[0].mxu0
        %4954 = vmatprep.mubr.f32.mxu0 0.0
        %4955 = vmatmul.mubr.f32.gmra.mrb[0].mxu0 %v4751
        %v4956 = vpop.f32.mrb[0].mxu0
        %v4957 = vadd.f32 0.0, %v4956
        %v4958 = vpop.f32.mrb[0].mxu0
        %4959 = vmatprep.mubr.f32.mxu0 0.0
        %4960 = vmatmul.mubr.f32.gmra.mrb[0].mxu0 %v4754
        %v4961 = vpop.f32.mrb[0].mxu0
        %v4962 = vadd.f32 0.0, %v4961
        %v4963 = vpop.f32.mrb[0].mxu0
        %4964 = vmatprep.mubr.f32.mxu0 0.0
        %4965 = vmatmul.mubr.f32.gmra.mrb[0].mxu0 %v4757
        %v4966 = vpop.f32.mrb[0].mxu0
        %v4967 = vadd.f32 0.0, %v4966
        %v4968 = vpop.f32.mrb[0].mxu0
        %4969 = vmatprep.mubr.f32.mxu0 0.0
        %4970 = vmatmul.mubr.f32.gmra.mrb[0].mxu0 %v4760
        %v4971 = vpop.f32.mrb[0].mxu0
        %v4972 = vadd.f32 0.0, %v4971
        %v4973 = vpop.f32.mrb[0].mxu0
        %4974 = vmatprep.mubr.f32.mxu0 0.0
        %4975 = vmatmul.mubr.f32.gmra.mrb[0].mxu0 %v4763
        %v4976 = vpop.f32.mrb[0].mxu0
        %v4977 = vadd.f32 0.0, %v4976
        %v4978 = vpop.f32.mrb[0].mxu0
        %4979 = vmatprep.mubr.f32.mxu0 0.0
        %4980 = vmatmul.mubr.f32.gmra.mrb[0].mxu0 %v4766
        %v4981 = vpop.f32.mrb[0].mxu0
        %v4982 = vadd.f32 0.0, %v4981
        %v4983 = vpop.f32.mrb[0].mxu0
        %4984 = vmatprep.mubr.f32.mxu0 0.0
        %4985 = vmatmul.mubr.f32.gmra.mrb[0].mxu0 %v4769
        %v4986 = vpop.f32.mrb[0].mxu0
        %v4987 = vadd.f32 0.0, %v4986
        %v4988 = vpop.f32.mrb[0].mxu0
        %4989 = vmatprep.mubr.f32.mxu0 0.0
        %4990 = vmatmul.mubr.f32.gmra.mrb[0].mxu0 %v4772
        %v4991 = vpop.f32.mrb[0].mxu0
        %v4992 = vadd.f32 0.0, %v4991
        %v4993 = vpop.f32.mrb[0].mxu0
        %4994 = vmatprep.mubr.f32.mxu0 0.0
        %4995 = vmatmul.mubr.f32.gmra.mrb[0].mxu0 %v4775
        %v4996 = vpop.f32.mrb[0].mxu0
        %v4997 = vadd.f32 0.0, %v4996
        %v4998 = vpop.f32.mrb[0].mxu0
        %4999 = vmatprep.mubr.f32.mxu0 0.0
        %5000 = vmatmul.mubr.f32.gmra.mrb[0].mxu0 %v4778
        %v5001 = vpop.f32.mrb[0].mxu0
        %v5002 = vadd.f32 0.0, %v5001
        %v5003 = vpop.f32.mrb[0].mxu0
        %5004 = vdwg.mxu0
        %v5005 = vmul.f32 %v4847, %v4323
        %v5006 = vmul.f32 %v4852, %v4323
        %v5007 = vmul.f32 %v4857, %v4323
        %v5008 = vmul.f32 %v4862, %v4323
        %v5009 = vmul.f32 %v4867, %v4323
        %v5010 = vmul.f32 %v4872, %v4323
        %v5011 = vmul.f32 %v4877, %v4323
        %v5012 = vmul.f32 %v4882, %v4323
        %v5013 = vmul.f32 %v4887, %v4323
        %v5014 = vmul.f32 %v4892, %v4323
        %v5015 = vmul.f32 %v4897, %v4323
        %v5016 = vmul.f32 %v4902, %v4323
        %v5017 = vmul.f32 %v4907, %v4323
        %v5018 = vmul.f32 %v4912, %v4323
        %v5019 = vmul.f32 %v4917, %v4323
        %v5020 = vmul.f32 %v4922, %v4323
        %v5021 = vmul.f32 %v4927, %v4323
        %v5022 = vmul.f32 %v4932, %v4323
        %v5023 = vmul.f32 %v4937, %v4323
        %v5024 = vmul.f32 %v4942, %v4323
        %v5025 = vmul.f32 %v4947, %v4323
        %v5026 = vmul.f32 %v4952, %v4323
        %v5027 = vmul.f32 %v4957, %v4323
        %v5028 = vmul.f32 %v4962, %v4323
        %v5029 = vmul.f32 %v4967, %v4323
        %v5030 = vmul.f32 %v4972, %v4323
        %v5031 = vmul.f32 %v4977, %v4323
        %v5032 = vmul.f32 %v4982, %v4323
        %v5033 = vmul.f32 %v4987, %v4323
        %v5034 = vmul.f32 %v4992, %v4323
        %v5035 = vmul.f32 %v4997, %v4323
        %v5036 = vmul.f32 %v5002, %v4323
        %v5037 = vadd.f32 %v5005, %v4362
        %v5038 = vadd.f32 %v5006, %v4362
        %v5039 = vadd.f32 %v5007, %v4362
        %v5040 = vadd.f32 %v5008, %v4362
        %v5041 = vadd.f32 %v5009, %v4362
        %v5042 = vadd.f32 %v5010, %v4362
        %v5043 = vadd.f32 %v5011, %v4362
        %v5044 = vadd.f32 %v5012, %v4362
        %v5045 = vadd.f32 %v5013, %v4362
        %v5046 = vadd.f32 %v5014, %v4362
        %v5047 = vadd.f32 %v5015, %v4362
        %v5048 = vadd.f32 %v5016, %v4362
        %v5049 = vadd.f32 %v5017, %v4362
        %v5050 = vadd.f32 %v5018, %v4362
        %v5051 = vadd.f32 %v5019, %v4362
        %v5052 = vadd.f32 %v5020, %v4362
        %v5053 = vadd.f32 %v5021, %v4362
        %v5054 = vadd.f32 %v5022, %v4362
        %v5055 = vadd.f32 %v5023, %v4362
        %v5056 = vadd.f32 %v5024, %v4362
        %v5057 = vadd.f32 %v5025, %v4362
        %v5058 = vadd.f32 %v5026, %v4362
        %v5059 = vadd.f32 %v5027, %v4362
        %v5060 = vadd.f32 %v5028, %v4362
        %v5061 = vadd.f32 %v5029, %v4362
        %v5062 = vadd.f32 %v5030, %v4362
        %v5063 = vadd.f32 %v5031, %v4362
        %v5064 = vadd.f32 %v5032, %v4362
        %v5065 = vadd.f32 %v5033, %v4362
        %v5066 = vadd.f32 %v5034, %v4362
        %v5067 = vadd.f32 %v5035, %v4362
        %v5068 = vadd.f32 %v5036, %v4362
        %v5069 = vmax.f32 %v5037, 0.0
        %v5070 = vmax.f32 %v5038, 0.0
        %v5071 = vmax.f32 %v5039, 0.0
        %v5072 = vmax.f32 %v5040, 0.0
        %v5073 = vmax.f32 %v5041, 0.0
        %v5074 = vmax.f32 %v5042, 0.0
        %v5075 = vmax.f32 %v5043, 0.0
        %v5076 = vmax.f32 %v5044, 0.0
        %v5077 = vmax.f32 %v5045, 0.0
        %v5078 = vmax.f32 %v5046, 0.0
        %v5079 = vmax.f32 %v5047, 0.0
        %v5080 = vmax.f32 %v5048, 0.0
        %v5081 = vmax.f32 %v5049, 0.0
        %v5082 = vmax.f32 %v5050, 0.0
        %v5083 = vmax.f32 %v5051, 0.0
        %v5084 = vmax.f32 %v5052, 0.0
        %v5085 = vmax.f32 %v5053, 0.0
        %v5086 = vmax.f32 %v5054, 0.0
        %v5087 = vmax.f32 %v5055, 0.0
        %v5088 = vmax.f32 %v5056, 0.0
        %v5089 = vmax.f32 %v5057, 0.0
        %v5090 = vmax.f32 %v5058, 0.0
        %v5091 = vmax.f32 %v5059, 0.0
        %v5092 = vmax.f32 %v5060, 0.0
        %v5093 = vmax.f32 %v5061, 0.0
        %v5094 = vmax.f32 %v5062, 0.0
        %v5095 = vmax.f32 %v5063, 0.0
        %v5096 = vmax.f32 %v5064, 0.0
        %v5097 = vmax.f32 %v5065, 0.0
        %v5098 = vmax.f32 %v5066, 0.0
        %v5099 = vmax.f32 %v5067, 0.0
        %v5100 = vmax.f32 %v5068, 0.0
        %v5101 = vadd.s32 %v4428, 1
        %v5102 = vadd.s32 %v4429, 1
        %v5103 = vadd.s32 %v5101, 64
        %v5104 = vadd.s32 %v5102, 64
        %v5105 = vadd.s32 %v5101, 128
        %v5106 = vadd.s32 %v5102, 128
        %v5107 = vadd.s32 %v5101, 192
        %v5108 = vadd.s32 %v5102, 192
        %v5109 = vadd.s32 %v5101, 256
        %v5110 = vadd.s32 %v5102, 256
        %v5111 = vadd.s32 %v5101, 320
        %v5112 = vadd.s32 %v5102, 320
        %v5113 = vadd.s32 %v5101, 384
        %v5114 = vadd.s32 %v5102, 384
        %v5115 = vadd.s32 %v5101, 448
        %v5116 = vadd.s32 %v5102, 448
        %v5117 = vadd.s32 %v5101, 512
        %v5118 = vadd.s32 %v5102, 512
        %v5119 = vadd.s32 %v5101, 576
        %v5120 = vadd.s32 %v5102, 576
        %v5121 = vadd.s32 %v5101, 640
        %v5122 = vadd.s32 %v5102, 640
        %v5123 = vadd.s32 %v5101, 704
        %v5124 = vadd.s32 %v5102, 704
        %v5125 = vadd.s32 %v5101, 768
        %v5126 = vadd.s32 %v5102, 768
        %v5127 = vadd.s32 %v5101, 832
        %v5128 = vadd.s32 %v5102, 832
        %v5129 = vadd.s32 %v5101, 896
        %v5130 = vadd.s32 %v5102, 896
        %v5131 = vadd.s32 %v5101, 960
        %v5132 = vadd.s32 %v5102, 960
        %vm5133 = vcmp.eq.s32.totalorder %v3848, %v5101
        %vm5134 = vcmp.eq.s32.totalorder %v3849, %v5102
        %vm5135 = vcmp.eq.s32.totalorder %v3850, %v5103
        %vm5136 = vcmp.eq.s32.totalorder %v3851, %v5104
        %vm5137 = vcmp.eq.s32.totalorder %v3852, %v5105
        %vm5138 = vcmp.eq.s32.totalorder %v3853, %v5106
        %vm5139 = vcmp.eq.s32.totalorder %v3854, %v5107
        %vm5140 = vcmp.eq.s32.totalorder %v3855, %v5108
        %vm5141 = vcmp.eq.s32.totalorder %v3856, %v5109
        %vm5142 = vcmp.eq.s32.totalorder %v3857, %v5110
        %vm5143 = vcmp.eq.s32.totalorder %v3858, %v5111
        %vm5144 = vcmp.eq.s32.totalorder %v3859, %v5112
        %vm5145 = vcmp.eq.s32.totalorder %v3860, %v5113
        %vm5146 = vcmp.eq.s32.totalorder %v3861, %v5114
        %vm5147 = vcmp.eq.s32.totalorder %v3862, %v5115
        %vm5148 = vcmp.eq.s32.totalorder %v3863, %v5116
        %vm5149 = vcmp.eq.s32.totalorder %v3864, %v5117
        %vm5150 = vcmp.eq.s32.totalorder %v3865, %v5118
        %vm5151 = vcmp.eq.s32.totalorder %v3866, %v5119
        %vm5152 = vcmp.eq.s32.totalorder %v3867, %v5120
        %vm5153 = vcmp.eq.s32.totalorder %v3868, %v5121
        %vm5154 = vcmp.eq.s32.totalorder %v3869, %v5122
        %vm5155 = vcmp.eq.s32.totalorder %v3870, %v5123
        %vm5156 = vcmp.eq.s32.totalorder %v3871, %v5124
        %vm5157 = vcmp.eq.s32.totalorder %v3872, %v5125
        %vm5158 = vcmp.eq.s32.totalorder %v3873, %v5126
        %vm5159 = vcmp.eq.s32.totalorder %v3874, %v5127
        %vm5160 = vcmp.eq.s32.totalorder %v3875, %v5128
        %vm5161 = vcmp.eq.s32.totalorder %v3876, %v5129
        %vm5162 = vcmp.eq.s32.totalorder %v3877, %v5130
        %vm5163 = vcmp.eq.s32.totalorder %v3878, %v5131
        %vm5164 = vcmp.eq.s32.totalorder %v3879, %v5132
        %v5165 = vsel %vm5133, %v1084, 0.0
        %v5166 = vsel %vm5134, %v1085, 0.0
        %v5167 = vsel %vm5135, %v1086, 0.0
        %v5168 = vsel %vm5136, %v1087, 0.0
        %v5169 = vsel %vm5137, %v1088, 0.0
        %v5170 = vsel %vm5138, %v1089, 0.0
        %v5171 = vsel %vm5139, %v1090, 0.0
        %v5172 = vsel %vm5140, %v1091, 0.0
        %v5173 = vsel %vm5141, %v1092, 0.0
        %v5174 = vsel %vm5142, %v1093, 0.0
        %v5175 = vsel %vm5143, %v1094, 0.0
        %v5176 = vsel %vm5144, %v1095, 0.0
        %v5177 = vsel %vm5145, %v1096, 0.0
        %v5178 = vsel %vm5146, %v1097, 0.0
        %v5179 = vsel %vm5147, %v1098, 0.0
        %v5180 = vsel %vm5148, %v1099, 0.0
        %v5181 = vsel %vm5149, %v1100, 0.0
        %v5182 = vsel %vm5150, %v1101, 0.0
        %v5183 = vsel %vm5151, %v1102, 0.0
        %v5184 = vsel %vm5152, %v1103, 0.0
        %v5185 = vsel %vm5153, %v1104, 0.0
        %v5186 = vsel %vm5154, %v1105, 0.0
        %v5187 = vsel %vm5155, %v1106, 0.0
        %v5188 = vsel %vm5156, %v1107, 0.0
        %v5189 = vsel %vm5157, %v1108, 0.0
        %v5190 = vsel %vm5158, %v1109, 0.0
        %v5191 = vsel %vm5159, %v1110, 0.0
        %v5192 = vsel %vm5160, %v1111, 0.0
        %v5193 = vsel %vm5161, %v1112, 0.0
        %v5194 = vsel %vm5162, %v1113, 0.0
        %v5195 = vsel %vm5163, %v1114, 0.0
        %v5196 = vsel %vm5164, %v1115, 0.0
        %v5197 = vadd.f32 %v5165, %v5069
        %v5198 = vadd.f32 %v5166, %v5070
        %v5199 = vadd.f32 %v5167, %v5071
        %v5200 = vadd.f32 %v5168, %v5072
        %v5201 = vadd.f32 %v5169, %v5073
        %v5202 = vadd.f32 %v5170, %v5074
        %v5203 = vadd.f32 %v5171, %v5075
        %v5204 = vadd.f32 %v5172, %v5076
        %v5205 = vadd.f32 %v5173, %v5077
        %v5206 = vadd.f32 %v5174, %v5078
        %v5207 = vadd.f32 %v5175, %v5079
        %v5208 = vadd.f32 %v5176, %v5080
        %v5209 = vadd.f32 %v5177, %v5081
        %v5210 = vadd.f32 %v5178, %v5082
        %v5211 = vadd.f32 %v5179, %v5083
        %v5212 = vadd.f32 %v5180, %v5084
        %v5213 = vadd.f32 %v5181, %v5085
        %v5214 = vadd.f32 %v5182, %v5086
        %v5215 = vadd.f32 %v5183, %v5087
        %v5216 = vadd.f32 %v5184, %v5088
        %v5217 = vadd.f32 %v5185, %v5089
        %v5218 = vadd.f32 %v5186, %v5090
        %v5219 = vadd.f32 %v5187, %v5091
        %v5220 = vadd.f32 %v5188, %v5092
        %v5221 = vadd.f32 %v5189, %v5093
        %v5222 = vadd.f32 %v5190, %v5094
        %v5223 = vadd.f32 %v5191, %v5095
        %v5224 = vadd.f32 %v5192, %v5096
        %v5225 = vadd.f32 %v5193, %v5097
        %v5226 = vadd.f32 %v5194, %v5098
        %v5227 = vadd.f32 %v5195, %v5099
        %v5228 = vadd.f32 %v5196, %v5100
        %v5229 = vmax.f32 %v5197, 0.0
        %v5230 = vmax.f32 %v5198, 0.0
        %v5231 = vmax.f32 %v5199, 0.0
        %v5232 = vmax.f32 %v5200, 0.0
        %v5233 = vmax.f32 %v5201, 0.0
        %v5234 = vmax.f32 %v5202, 0.0
        %v5235 = vmax.f32 %v5203, 0.0
        %v5236 = vmax.f32 %v5204, 0.0
        %v5237 = vmax.f32 %v5205, 0.0
        %v5238 = vmax.f32 %v5206, 0.0
        %v5239 = vmax.f32 %v5207, 0.0
        %v5240 = vmax.f32 %v5208, 0.0
        %v5241 = vmax.f32 %v5209, 0.0
        %v5242 = vmax.f32 %v5210, 0.0
        %v5243 = vmax.f32 %v5211, 0.0
        %v5244 = vmax.f32 %v5212, 0.0
        %v5245 = vmax.f32 %v5213, 0.0
        %v5246 = vmax.f32 %v5214, 0.0
        %v5247 = vmax.f32 %v5215, 0.0
        %v5248 = vmax.f32 %v5216, 0.0
        %v5249 = vmax.f32 %v5217, 0.0
        %v5250 = vmax.f32 %v5218, 0.0
        %v5251 = vmax.f32 %v5219, 0.0
        %v5252 = vmax.f32 %v5220, 0.0
        %v5253 = vmax.f32 %v5221, 0.0
        %v5254 = vmax.f32 %v5222, 0.0
        %v5255 = vmax.f32 %v5223, 0.0
        %v5256 = vmax.f32 %v5224, 0.0
        %v5257 = vmax.f32 %v5225, 0.0
        %v5258 = vmax.f32 %v5226, 0.0
        %v5259 = vmax.f32 %v5227, 0.0
        %v5260 = vmax.f32 %v5228, 0.0
        %5293 = vrot.lane.b32.xlu0 %v5229, 8
        %v5294 = vpop.permute.xlu0 %5293
        %5295 = vrot.lane.b32.xlu0 %v5230, 8
        %v5296 = vpop.permute.xlu0 %5295
        %5297 = vrot.lane.b32.xlu0 %v5231, 8
        %v5298 = vpop.permute.xlu0 %5297
        %5299 = vrot.lane.b32.xlu0 %v5232, 8
        %v5300 = vpop.permute.xlu0 %5299
        %5301 = vrot.lane.b32.xlu0 %v5233, 8
        %v5302 = vpop.permute.xlu0 %5301
        %5303 = vrot.lane.b32.xlu0 %v5234, 8
        %v5304 = vpop.permute.xlu0 %5303
        %5305 = vrot.lane.b32.xlu0 %v5235, 8
        %v5306 = vpop.permute.xlu0 %5305
        %5307 = vrot.lane.b32.xlu0 %v5236, 8
        %v5308 = vpop.permute.xlu0 %5307
        %5309 = vrot.lane.b32.xlu0 %v5237, 8
        %v5310 = vpop.permute.xlu0 %5309
        %5311 = vrot.lane.b32.xlu0 %v5238, 8
        %v5312 = vpop.permute.xlu0 %5311
        %5313 = vrot.lane.b32.xlu0 %v5239, 8
        %v5314 = vpop.permute.xlu0 %5313
        %5315 = vrot.lane.b32.xlu0 %v5240, 8
        %v5316 = vpop.permute.xlu0 %5315
        %5317 = vrot.lane.b32.xlu0 %v5241, 8
        %v5318 = vpop.permute.xlu0 %5317
        %5319 = vrot.lane.b32.xlu0 %v5242, 8
        %v5320 = vpop.permute.xlu0 %5319
        %5321 = vrot.lane.b32.xlu0 %v5243, 8
        %v5322 = vpop.permute.xlu0 %5321
        %5323 = vrot.lane.b32.xlu0 %v5244, 8
        %v5324 = vpop.permute.xlu0 %5323
        %5325 = vrot.lane.b32.xlu0 %v5245, 8
        %v5326 = vpop.permute.xlu0 %5325
        %5327 = vrot.lane.b32.xlu0 %v5246, 8
        %v5328 = vpop.permute.xlu0 %5327
        %5329 = vrot.lane.b32.xlu0 %v5247, 8
        %v5330 = vpop.permute.xlu0 %5329
        %5331 = vrot.lane.b32.xlu0 %v5248, 8
        %v5332 = vpop.permute.xlu0 %5331
        %5333 = vrot.lane.b32.xlu0 %v5249, 8
        %v5334 = vpop.permute.xlu0 %5333
        %5335 = vrot.lane.b32.xlu0 %v5250, 8
        %v5336 = vpop.permute.xlu0 %5335
        %5337 = vrot.lane.b32.xlu0 %v5251, 8
        %v5338 = vpop.permute.xlu0 %5337
        %5339 = vrot.lane.b32.xlu0 %v5252, 8
        %v5340 = vpop.permute.xlu0 %5339
        %5341 = vrot.lane.b32.xlu0 %v5253, 8
        %v5342 = vpop.permute.xlu0 %5341
        %5343 = vrot.lane.b32.xlu0 %v5254, 8
        %v5344 = vpop.permute.xlu0 %5343
        %5345 = vrot.lane.b32.xlu0 %v5255, 8
        %v5346 = vpop.permute.xlu0 %5345
        %5347 = vrot.lane.b32.xlu0 %v5256, 8
        %v5348 = vpop.permute.xlu0 %5347
        %5349 = vrot.lane.b32.xlu0 %v5257, 8
        %v5350 = vpop.permute.xlu0 %5349
        %5351 = vrot.lane.b32.xlu0 %v5258, 8
        %v5352 = vpop.permute.xlu0 %5351
        %5353 = vrot.lane.b32.xlu0 %v5259, 8
        %v5354 = vpop.permute.xlu0 %5353
        %5355 = vrot.lane.b32.xlu0 %v5260, 8
        %v5356 = vpop.permute.xlu0 %5355
        %vm5389 = vcmask 64512
        %v5390 = vsel %vm5389, %v4556, %v5294
        %v5391 = vsel %vm5389, %v4557, %v5296
        %v5392 = vsel %vm5389, %v4558, %v5298
        %v5393 = vsel %vm5389, %v4559, %v5300
        %v5394 = vsel %vm5389, %v4560, %v5302
        %v5395 = vsel %vm5389, %v4561, %v5304
        %v5396 = vsel %vm5389, %v4562, %v5306
        %v5397 = vsel %vm5389, %v4563, %v5308
        %v5398 = vsel %vm5389, %v4564, %v5310
        %v5399 = vsel %vm5389, %v4565, %v5312
        %v5400 = vsel %vm5389, %v4566, %v5314
        %v5401 = vsel %vm5389, %v4567, %v5316
        %v5402 = vsel %vm5389, %v4568, %v5318
        %v5403 = vsel %vm5389, %v4569, %v5320
        %v5404 = vsel %vm5389, %v4570, %v5322
        %v5405 = vsel %vm5389, %v4571, %v5324
        %v5406 = vsel %vm5389, %v4572, %v5326
        %v5407 = vsel %vm5389, %v4573, %v5328
        %v5408 = vsel %vm5389, %v4574, %v5330
        %v5409 = vsel %vm5389, %v4575, %v5332
        %v5410 = vsel %vm5389, %v4576, %v5334
        %v5411 = vsel %vm5389, %v4577, %v5336
        %v5412 = vsel %vm5389, %v4578, %v5338
        %v5413 = vsel %vm5389, %v4579, %v5340
        %v5414 = vsel %vm5389, %v4580, %v5342
        %v5415 = vsel %vm5389, %v4581, %v5344
        %v5416 = vsel %vm5389, %v4582, %v5346
        %v5417 = vsel %vm5389, %v4583, %v5348
        %v5418 = vsel %vm5389, %v4584, %v5350
        %v5419 = vsel %vm5389, %v4585, %v5352
        %v5420 = vsel %vm5389, %v4586, %v5354
        %v5421 = vsel %vm5389, %v4587, %v5356
        %v5422 = vmul.f32 %v2707, %v3888
        %v5423 = vmul.f32 %v2712, %v3888
        %v5424 = vmul.f32 %v2717, %v3888
        %v5425 = vmul.f32 %v2722, %v3888
        %v5426 = vmul.f32 %v2727, %v3888
        %v5427 = vmul.f32 %v2732, %v3888
        %v5428 = vmul.f32 %v2737, %v3888
        %v5429 = vmul.f32 %v2742, %v3888
        %v5430 = vmul.f32 %v2747, %v3888
        %v5431 = vmul.f32 %v2752, %v3888
        %v5432 = vmul.f32 %v2757, %v3888
        %v5433 = vmul.f32 %v2762, %v3888
        %v5434 = vmul.f32 %v2767, %v3888
        %v5435 = vmul.f32 %v2772, %v3888
        %v5436 = vmul.f32 %v2777, %v3888
        %v5437 = vmul.f32 %v2782, %v3888
        %v5438 = vmul.f32 %v2787, %v3888
        %v5439 = vmul.f32 %v2792, %v3888
        %v5440 = vmul.f32 %v2797, %v3888
        %v5441 = vmul.f32 %v2802, %v3888
        %v5442 = vmul.f32 %v2807, %v3888
        %v5443 = vmul.f32 %v2812, %v3888
        %v5444 = vmul.f32 %v2817, %v3888
        %v5445 = vmul.f32 %v2822, %v3888
        %v5446 = vmul.f32 %v2827, %v3888
        %v5447 = vmul.f32 %v2832, %v3888
        %v5448 = vmul.f32 %v2837, %v3888
        %v5449 = vmul.f32 %v2842, %v3888
        %v5450 = vmul.f32 %v2847, %v3888
        %v5451 = vmul.f32 %v2852, %v3888
        %v5452 = vmul.f32 %v2857, %v3888
        %v5453 = vmul.f32 %v2862, %v3888
        %v5454 = vadd.f32 %v5422, %v3927
        %v5455 = vadd.f32 %v5423, %v3927
        %v5456 = vadd.f32 %v5424, %v3927
        %v5457 = vadd.f32 %v5425, %v3927
        %v5458 = vadd.f32 %v5426, %v3927
        %v5459 = vadd.f32 %v5427, %v3927
        %v5460 = vadd.f32 %v5428, %v3927
        %v5461 = vadd.f32 %v5429, %v3927
        %v5462 = vadd.f32 %v5430, %v3927
        %v5463 = vadd.f32 %v5431, %v3927
        %v5464 = vadd.f32 %v5432, %v3927
        %v5465 = vadd.f32 %v5433, %v3927
        %v5466 = vadd.f32 %v5434, %v3927
        %v5467 = vadd.f32 %v5435, %v3927
        %v5468 = vadd.f32 %v5436, %v3927
        %v5469 = vadd.f32 %v5437, %v3927
        %v5470 = vadd.f32 %v5438, %v3927
        %v5471 = vadd.f32 %v5439, %v3927
        %v5472 = vadd.f32 %v5440, %v3927
        %v5473 = vadd.f32 %v5441, %v3927
        %v5474 = vadd.f32 %v5442, %v3927
        %v5475 = vadd.f32 %v5443, %v3927
        %v5476 = vadd.f32 %v5444, %v3927
        %v5477 = vadd.f32 %v5445, %v3927
        %v5478 = vadd.f32 %v5446, %v3927
        %v5479 = vadd.f32 %v5447, %v3927
        %v5480 = vadd.f32 %v5448, %v3927
        %v5481 = vadd.f32 %v5449, %v3927
        %v5482 = vadd.f32 %v5450, %v3927
        %v5483 = vadd.f32 %v5451, %v3927
        %v5484 = vadd.f32 %v5452, %v3927
        %v5485 = vadd.f32 %v5453, %v3927
        %v5486 = vmax.f32 %v5454, 0.0
        %v5487 = vmax.f32 %v5455, 0.0
        %v5488 = vmax.f32 %v5456, 0.0
        %v5489 = vmax.f32 %v5457, 0.0
        %v5490 = vmax.f32 %v5458, 0.0
        %v5491 = vmax.f32 %v5459, 0.0
        %v5492 = vmax.f32 %v5460, 0.0
        %v5493 = vmax.f32 %v5461, 0.0
        %v5494 = vmax.f32 %v5462, 0.0
        %v5495 = vmax.f32 %v5463, 0.0
        %v5496 = vmax.f32 %v5464, 0.0
        %v5497 = vmax.f32 %v5465, 0.0
        %v5498 = vmax.f32 %v5466, 0.0
        %v5499 = vmax.f32 %v5467, 0.0
        %v5500 = vmax.f32 %v5468, 0.0
        %v5501 = vmax.f32 %v5469, 0.0
        %v5502 = vmax.f32 %v5470, 0.0
        %v5503 = vmax.f32 %v5471, 0.0
        %v5504 = vmax.f32 %v5472, 0.0
        %v5505 = vmax.f32 %v5473, 0.0
        %v5506 = vmax.f32 %v5474, 0.0
        %v5507 = vmax.f32 %v5475, 0.0
        %v5508 = vmax.f32 %v5476, 0.0
        %v5509 = vmax.f32 %v5477, 0.0
        %v5510 = vmax.f32 %v5478, 0.0
        %v5511 = vmax.f32 %v5479, 0.0
        %v5512 = vmax.f32 %v5480, 0.0
        %v5513 = vmax.f32 %v5481, 0.0
        %v5514 = vmax.f32 %v5482, 0.0
        %v5515 = vmax.f32 %v5483, 0.0
        %v5516 = vmax.f32 %v5484, 0.0
        %v5517 = vmax.f32 %v5485, 0.0
        %v5519 = vsel %vm1568, %v5486, 0
        %v5522 = vsel %vm1568, %v5487, 0
        %v5525 = vsel %vm1568, %v5488, 0
        %v5528 = vsel %vm1568, %v5489, 0
        %v5531 = vsel %vm1568, %v5490, 0
        %v5534 = vsel %vm1568, %v5491, 0
        %v5537 = vsel %vm1568, %v5492, 0
        %v5540 = vsel %vm1568, %v5493, 0
        %v5543 = vsel %vm1568, %v5494, 0
        %v5546 = vsel %vm1568, %v5495, 0
        %v5549 = vsel %vm1568, %v5496, 0
        %v5552 = vsel %vm1568, %v5497, 0
        %v5555 = vsel %vm1568, %v5498, 0
        %v5558 = vsel %vm1568, %v5499, 0
        %v5561 = vsel %vm1568, %v5500, 0
        %v5564 = vsel %vm1568, %v5501, 0
        %v5567 = vsel %vm1568, %v5502, 0
        %v5570 = vsel %vm1568, %v5503, 0
        %v5573 = vsel %vm1568, %v5504, 0
        %v5576 = vsel %vm1568, %v5505, 0
        %v5579 = vsel %vm1568, %v5506, 0
        %v5582 = vsel %vm1568, %v5507, 0
        %v5585 = vsel %vm1568, %v5508, 0
        %v5588 = vsel %vm1568, %v5509, 0
        %v5591 = vsel %vm1568, %v5510, 0
        %v5594 = vsel %vm1568, %v5511, 0
        %v5597 = vsel %vm1568, %v5512, 0
        %v5600 = vsel %vm1568, %v5513, 0
        %v5603 = vsel %vm1568, %v5514, 0
        %v5606 = vsel %vm1568, %v5515, 0
        %v5609 = vsel %vm1568, %v5516, 0
        %v5612 = vsel %vm1568, %v5517, 0
        %5614 = vmatprep.subr.mxu0 0.0
        %5615 = vmatpush1.msra.mxu0 %v4091
        %5616 = vmatprep.subr.mxu0 0.0
        %5617 = vmatpush1.msra.mxu0 0.0
        %5618 = vmatprep.subr.mxu0 0.0
        %5619 = vmatpush1.msra.mxu0 0.0
        %5620 = vmatprep.subr.mxu0 0.0
        %5621 = vmatpush1.msra.mxu0 0.0
        %5622 = vmatprep.subr.mxu0 0.0
        %5623 = vmatpush1.msra.mxu0 0.0
        %5624 = vmatprep.subr.mxu0 0.0
        %5625 = vmatpush1.msra.mxu0 0.0
        %5626 = vmatprep.subr.mxu0 0.0
        %5627 = vmatpush1.msra.mxu0 0.0
        %5628 = vmatprep.subr.mxu0 0.0
        %5629 = vmatpush1.msra.mxu0 0.0
        %5630 = vmatprep.subr.mxu0 0.0
        %5631 = vmatpush1.msra.mxu0 0.0
        %5632 = vmatprep.subr.mxu0 0.0
        %5633 = vmatpush1.msra.mxu0 0.0
        %5634 = vmatprep.subr.mxu0 0.0
        %5635 = vmatpush1.msra.mxu0 0.0
        %5636 = vmatprep.subr.mxu0 0.0
        %5637 = vmatpush1.msra.mxu0 0.0
        %5638 = vmatprep.subr.mxu0 0.0
        %5639 = vmatpush1.msra.mxu0 0.0
        %5640 = vmatprep.subr.mxu0 0.0
        %5641 = vmatpush1.msra.mxu0 0.0
        %5642 = vmatprep.subr.mxu0 0.0
        %5643 = vmatpush1.msra.mxu0 0.0
        %5644 = vmatprep.subr.mxu0 0.0
        %5645 = vmatpush1.msra.mxu0 0.0
        %5646 = vmatprep.subr.mxu0 0.0
        %5647 = vmatpush1.msra.mxu0 0.0
        %5648 = vmatprep.subr.mxu0 0.0
        %5649 = vmatpush1.msra.mxu0 0.0
        %5650 = vmatprep.subr.mxu0 0.0
        %5651 = vmatpush1.msra.mxu0 0.0
        %5652 = vmatprep.subr.mxu0 0.0
        %5653 = vmatpush1.msra.mxu0 0.0
        %5654 = vmatprep.subr.mxu0 0.0
        %5655 = vmatpush1.msra.mxu0 0.0
        %5656 = vmatprep.subr.mxu0 0.0
        %5657 = vmatpush1.msra.mxu0 0.0
        %5658 = vmatprep.subr.mxu0 0.0
        %5659 = vmatpush1.msra.mxu0 0.0
        %5660 = vmatprep.subr.mxu0 0.0
        %5661 = vmatpush1.msra.mxu0 0.0
        %5662 = vmatprep.subr.mxu0 0.0
        %5663 = vmatpush1.msra.mxu0 0.0
        %5664 = vmatprep.subr.mxu0 0.0
        %5665 = vmatpush1.msra.mxu0 0.0
        %5666 = vmatprep.subr.mxu0 0.0
        %5667 = vmatpush1.msra.mxu0 0.0
        %5668 = vmatprep.subr.mxu0 0.0
        %5669 = vmatpush1.msra.mxu0 0.0
        %5670 = vmatprep.subr.mxu0 0.0
        %5671 = vmatpush1.msra.mxu0 0.0
        %5672 = vmatprep.subr.mxu0 0.0
        %5673 = vmatpush1.msra.mxu0 0.0
        %5674 = vmatprep.subr.mxu0 0.0
        %5675 = vmatpush1.msra.mxu0 0.0
        %5676 = vmatprep.subr.mxu0 0.0
        %5677 = vmatpush1.msra.mxu0 0.0
        %5678 = vmatprep.mubr.f32.mxu0 0.0
        %5679 = vmatmul.mubr.f32.gmra.mrb[0].mxu0 %v5519
        %v5680 = vpop.f32.mrb[0].mxu0
        %v5681 = vadd.f32 0.0, %v5680
        %v5682 = vpop.f32.mrb[0].mxu0
        %5683 = vmatprep.mubr.f32.mxu0 0.0
        %5684 = vmatmul.mubr.f32.gmra.mrb[0].mxu0 %v5522
        %v5685 = vpop.f32.mrb[0].mxu0
        %v5686 = vadd.f32 0.0, %v5685
        %v5687 = vpop.f32.mrb[0].mxu0
        %5688 = vmatprep.mubr.f32.mxu0 0.0
        %5689 = vmatmul.mubr.f32.gmra.mrb[0].mxu0 %v5525
        %v5690 = vpop.f32.mrb[0].mxu0
        %v5691 = vadd.f32 0.0, %v5690
        %v5692 = vpop.f32.mrb[0].mxu0
        %5693 = vmatprep.mubr.f32.mxu0 0.0
        %5694 = vmatmul.mubr.f32.gmra.mrb[0].mxu0 %v5528
        %v5695 = vpop.f32.mrb[0].mxu0
        %v5696 = vadd.f32 0.0, %v5695
        %v5697 = vpop.f32.mrb[0].mxu0
        %5698 = vmatprep.mubr.f32.mxu0 0.0
        %5699 = vmatmul.mubr.f32.gmra.mrb[0].mxu0 %v5531
        %v5700 = vpop.f32.mrb[0].mxu0
        %v5701 = vadd.f32 0.0, %v5700
        %v5702 = vpop.f32.mrb[0].mxu0
        %5703 = vmatprep.mubr.f32.mxu0 0.0
        %5704 = vmatmul.mubr.f32.gmra.mrb[0].mxu0 %v5534
        %v5705 = vpop.f32.mrb[0].mxu0
        %v5706 = vadd.f32 0.0, %v5705
        %v5707 = vpop.f32.mrb[0].mxu0
        %5708 = vmatprep.mubr.f32.mxu0 0.0
        %5709 = vmatmul.mubr.f32.gmra.mrb[0].mxu0 %v5537
        %v5710 = vpop.f32.mrb[0].mxu0
        %v5711 = vadd.f32 0.0, %v5710
        %v5712 = vpop.f32.mrb[0].mxu0
        %5713 = vmatprep.mubr.f32.mxu0 0.0
        %5714 = vmatmul.mubr.f32.gmra.mrb[0].mxu0 %v5540
        %v5715 = vpop.f32.mrb[0].mxu0
        %v5716 = vadd.f32 0.0, %v5715
        %v5717 = vpop.f32.mrb[0].mxu0
        %5718 = vmatprep.mubr.f32.mxu0 0.0
        %5719 = vmatmul.mubr.f32.gmra.mrb[0].mxu0 %v5543
        %v5720 = vpop.f32.mrb[0].mxu0
        %v5721 = vadd.f32 0.0, %v5720
        %v5722 = vpop.f32.mrb[0].mxu0
        %5723 = vmatprep.mubr.f32.mxu0 0.0
        %5724 = vmatmul.mubr.f32.gmra.mrb[0].mxu0 %v5546
        %v5725 = vpop.f32.mrb[0].mxu0
        %v5726 = vadd.f32 0.0, %v5725
        %v5727 = vpop.f32.mrb[0].mxu0
        %5728 = vmatprep.mubr.f32.mxu0 0.0
        %5729 = vmatmul.mubr.f32.gmra.mrb[0].mxu0 %v5549
        %v5730 = vpop.f32.mrb[0].mxu0
        %v5731 = vadd.f32 0.0, %v5730
        %v5732 = vpop.f32.mrb[0].mxu0
        %5733 = vmatprep.mubr.f32.mxu0 0.0
        %5734 = vmatmul.mubr.f32.gmra.mrb[0].mxu0 %v5552
        %v5735 = vpop.f32.mrb[0].mxu0
        %v5736 = vadd.f32 0.0, %v5735
        %v5737 = vpop.f32.mrb[0].mxu0
        %5738 = vmatprep.mubr.f32.mxu0 0.0
        %5739 = vmatmul.mubr.f32.gmra.mrb[0].mxu0 %v5555
        %v5740 = vpop.f32.mrb[0].mxu0
        %v5741 = vadd.f32 0.0, %v5740
        %v5742 = vpop.f32.mrb[0].mxu0
        %5743 = vmatprep.mubr.f32.mxu0 0.0
        %5744 = vmatmul.mubr.f32.gmra.mrb[0].mxu0 %v5558
        %v5745 = vpop.f32.mrb[0].mxu0
        %v5746 = vadd.f32 0.0, %v5745
        %v5747 = vpop.f32.mrb[0].mxu0
        %5748 = vmatprep.mubr.f32.mxu0 0.0
        %5749 = vmatmul.mubr.f32.gmra.mrb[0].mxu0 %v5561
        %v5750 = vpop.f32.mrb[0].mxu0
        %v5751 = vadd.f32 0.0, %v5750
        %v5752 = vpop.f32.mrb[0].mxu0
        %5753 = vmatprep.mubr.f32.mxu0 0.0
        %5754 = vmatmul.mubr.f32.gmra.mrb[0].mxu0 %v5564
        %v5755 = vpop.f32.mrb[0].mxu0
        %v5756 = vadd.f32 0.0, %v5755
        %v5757 = vpop.f32.mrb[0].mxu0
        %5758 = vmatprep.mubr.f32.mxu0 0.0
        %5759 = vmatmul.mubr.f32.gmra.mrb[0].mxu0 %v5567
        %v5760 = vpop.f32.mrb[0].mxu0
        %v5761 = vadd.f32 0.0, %v5760
        %v5762 = vpop.f32.mrb[0].mxu0
        %5763 = vmatprep.mubr.f32.mxu0 0.0
        %5764 = vmatmul.mubr.f32.gmra.mrb[0].mxu0 %v5570
        %v5765 = vpop.f32.mrb[0].mxu0
        %v5766 = vadd.f32 0.0, %v5765
        %v5767 = vpop.f32.mrb[0].mxu0
        %5768 = vmatprep.mubr.f32.mxu0 0.0
        %5769 = vmatmul.mubr.f32.gmra.mrb[0].mxu0 %v5573
        %v5770 = vpop.f32.mrb[0].mxu0
        %v5771 = vadd.f32 0.0, %v5770
        %v5772 = vpop.f32.mrb[0].mxu0
        %5773 = vmatprep.mubr.f32.mxu0 0.0
        %5774 = vmatmul.mubr.f32.gmra.mrb[0].mxu0 %v5576
        %v5775 = vpop.f32.mrb[0].mxu0
        %v5776 = vadd.f32 0.0, %v5775
        %v5777 = vpop.f32.mrb[0].mxu0
        %5778 = vmatprep.mubr.f32.mxu0 0.0
        %5779 = vmatmul.mubr.f32.gmra.mrb[0].mxu0 %v5579
        %v5780 = vpop.f32.mrb[0].mxu0
        %v5781 = vadd.f32 0.0, %v5780
        %v5782 = vpop.f32.mrb[0].mxu0
        %5783 = vmatprep.mubr.f32.mxu0 0.0
        %5784 = vmatmul.mubr.f32.gmra.mrb[0].mxu0 %v5582
        %v5785 = vpop.f32.mrb[0].mxu0
        %v5786 = vadd.f32 0.0, %v5785
        %v5787 = vpop.f32.mrb[0].mxu0
        %5788 = vmatprep.mubr.f32.mxu0 0.0
        %5789 = vmatmul.mubr.f32.gmra.mrb[0].mxu0 %v5585
        %v5790 = vpop.f32.mrb[0].mxu0
        %v5791 = vadd.f32 0.0, %v5790
        %v5792 = vpop.f32.mrb[0].mxu0
        %5793 = vmatprep.mubr.f32.mxu0 0.0
        %5794 = vmatmul.mubr.f32.gmra.mrb[0].mxu0 %v5588
        %v5795 = vpop.f32.mrb[0].mxu0
        %v5796 = vadd.f32 0.0, %v5795
        %v5797 = vpop.f32.mrb[0].mxu0
        %5798 = vmatprep.mubr.f32.mxu0 0.0
        %5799 = vmatmul.mubr.f32.gmra.mrb[0].mxu0 %v5591
        %v5800 = vpop.f32.mrb[0].mxu0
        %v5801 = vadd.f32 0.0, %v5800
        %v5802 = vpop.f32.mrb[0].mxu0
        %5803 = vmatprep.mubr.f32.mxu0 0.0
        %5804 = vmatmul.mubr.f32.gmra.mrb[0].mxu0 %v5594
        %v5805 = vpop.f32.mrb[0].mxu0
        %v5806 = vadd.f32 0.0, %v5805
        %v5807 = vpop.f32.mrb[0].mxu0
        %5808 = vmatprep.mubr.f32.mxu0 0.0
        %5809 = vmatmul.mubr.f32.gmra.mrb[0].mxu0 %v5597
        %v5810 = vpop.f32.mrb[0].mxu0
        %v5811 = vadd.f32 0.0, %v5810
        %v5812 = vpop.f32.mrb[0].mxu0
        %5813 = vmatprep.mubr.f32.mxu0 0.0
        %5814 = vmatmul.mubr.f32.gmra.mrb[0].mxu0 %v5600
        %v5815 = vpop.f32.mrb[0].mxu0
        %v5816 = vadd.f32 0.0, %v5815
        %v5817 = vpop.f32.mrb[0].mxu0
        %5818 = vmatprep.mubr.f32.mxu0 0.0
        %5819 = vmatmul.mubr.f32.gmra.mrb[0].mxu0 %v5603
        %v5820 = vpop.f32.mrb[0].mxu0
        %v5821 = vadd.f32 0.0, %v5820
        %v5822 = vpop.f32.mrb[0].mxu0
        %5823 = vmatprep.mubr.f32.mxu0 0.0
        %5824 = vmatmul.mubr.f32.gmra.mrb[0].mxu0 %v5606
        %v5825 = vpop.f32.mrb[0].mxu0
        %v5826 = vadd.f32 0.0, %v5825
        %v5827 = vpop.f32.mrb[0].mxu0
        %5828 = vmatprep.mubr.f32.mxu0 0.0
        %5829 = vmatmul.mubr.f32.gmra.mrb[0].mxu0 %v5609
        %v5830 = vpop.f32.mrb[0].mxu0
        %v5831 = vadd.f32 0.0, %v5830
        %v5832 = vpop.f32.mrb[0].mxu0
        %5833 = vmatprep.mubr.f32.mxu0 0.0
        %5834 = vmatmul.mubr.f32.gmra.mrb[0].mxu0 %v5612
        %v5835 = vpop.f32.mrb[0].mxu0
        %v5836 = vadd.f32 0.0, %v5835
        %v5837 = vpop.f32.mrb[0].mxu0
        %5838 = vdwg.mxu0
        %v5839 = vmul.f32 %v5681, %v4323
        %v5840 = vmul.f32 %v5686, %v4323
        %v5841 = vmul.f32 %v5691, %v4323
        %v5842 = vmul.f32 %v5696, %v4323
        %v5843 = vmul.f32 %v5701, %v4323
        %v5844 = vmul.f32 %v5706, %v4323
        %v5845 = vmul.f32 %v5711, %v4323
        %v5846 = vmul.f32 %v5716, %v4323
        %v5847 = vmul.f32 %v5721, %v4323
        %v5848 = vmul.f32 %v5726, %v4323
        %v5849 = vmul.f32 %v5731, %v4323
        %v5850 = vmul.f32 %v5736, %v4323
        %v5851 = vmul.f32 %v5741, %v4323
        %v5852 = vmul.f32 %v5746, %v4323
        %v5853 = vmul.f32 %v5751, %v4323
        %v5854 = vmul.f32 %v5756, %v4323
        %v5855 = vmul.f32 %v5761, %v4323
        %v5856 = vmul.f32 %v5766, %v4323
        %v5857 = vmul.f32 %v5771, %v4323
        %v5858 = vmul.f32 %v5776, %v4323
        %v5859 = vmul.f32 %v5781, %v4323
        %v5860 = vmul.f32 %v5786, %v4323
        %v5861 = vmul.f32 %v5791, %v4323
        %v5862 = vmul.f32 %v5796, %v4323
        %v5863 = vmul.f32 %v5801, %v4323
        %v5864 = vmul.f32 %v5806, %v4323
        %v5865 = vmul.f32 %v5811, %v4323
        %v5866 = vmul.f32 %v5816, %v4323
        %v5867 = vmul.f32 %v5821, %v4323
        %v5868 = vmul.f32 %v5826, %v4323
        %v5869 = vmul.f32 %v5831, %v4323
        %v5870 = vmul.f32 %v5836, %v4323
        %v5871 = vadd.f32 %v5839, %v4362
        %v5872 = vadd.f32 %v5840, %v4362
        %v5873 = vadd.f32 %v5841, %v4362
        %v5874 = vadd.f32 %v5842, %v4362
        %v5875 = vadd.f32 %v5843, %v4362
        %v5876 = vadd.f32 %v5844, %v4362
        %v5877 = vadd.f32 %v5845, %v4362
        %v5878 = vadd.f32 %v5846, %v4362
        %v5879 = vadd.f32 %v5847, %v4362
        %v5880 = vadd.f32 %v5848, %v4362
        %v5881 = vadd.f32 %v5849, %v4362
        %v5882 = vadd.f32 %v5850, %v4362
        %v5883 = vadd.f32 %v5851, %v4362
        %v5884 = vadd.f32 %v5852, %v4362
        %v5885 = vadd.f32 %v5853, %v4362
        %v5886 = vadd.f32 %v5854, %v4362
        %v5887 = vadd.f32 %v5855, %v4362
        %v5888 = vadd.f32 %v5856, %v4362
        %v5889 = vadd.f32 %v5857, %v4362
        %v5890 = vadd.f32 %v5858, %v4362
        %v5891 = vadd.f32 %v5859, %v4362
        %v5892 = vadd.f32 %v5860, %v4362
        %v5893 = vadd.f32 %v5861, %v4362
        %v5894 = vadd.f32 %v5862, %v4362
        %v5895 = vadd.f32 %v5863, %v4362
        %v5896 = vadd.f32 %v5864, %v4362
        %v5897 = vadd.f32 %v5865, %v4362
        %v5898 = vadd.f32 %v5866, %v4362
        %v5899 = vadd.f32 %v5867, %v4362
        %v5900 = vadd.f32 %v5868, %v4362
        %v5901 = vadd.f32 %v5869, %v4362
        %v5902 = vadd.f32 %v5870, %v4362
        %v5903 = vmax.f32 %v5871, 0.0
        %v5904 = vmax.f32 %v5872, 0.0
        %v5905 = vmax.f32 %v5873, 0.0
        %v5906 = vmax.f32 %v5874, 0.0
        %v5907 = vmax.f32 %v5875, 0.0
        %v5908 = vmax.f32 %v5876, 0.0
        %v5909 = vmax.f32 %v5877, 0.0
        %v5910 = vmax.f32 %v5878, 0.0
        %v5911 = vmax.f32 %v5879, 0.0
        %v5912 = vmax.f32 %v5880, 0.0
        %v5913 = vmax.f32 %v5881, 0.0
        %v5914 = vmax.f32 %v5882, 0.0
        %v5915 = vmax.f32 %v5883, 0.0
        %v5916 = vmax.f32 %v5884, 0.0
        %v5917 = vmax.f32 %v5885, 0.0
        %v5918 = vmax.f32 %v5886, 0.0
        %v5919 = vmax.f32 %v5887, 0.0
        %v5920 = vmax.f32 %v5888, 0.0
        %v5921 = vmax.f32 %v5889, 0.0
        %v5922 = vmax.f32 %v5890, 0.0
        %v5923 = vmax.f32 %v5891, 0.0
        %v5924 = vmax.f32 %v5892, 0.0
        %v5925 = vmax.f32 %v5893, 0.0
        %v5926 = vmax.f32 %v5894, 0.0
        %v5927 = vmax.f32 %v5895, 0.0
        %v5928 = vmax.f32 %v5896, 0.0
        %v5929 = vmax.f32 %v5897, 0.0
        %v5930 = vmax.f32 %v5898, 0.0
        %v5931 = vmax.f32 %v5899, 0.0
        %v5932 = vmax.f32 %v5900, 0.0
        %v5933 = vmax.f32 %v5901, 0.0
        %v5934 = vmax.f32 %v5902, 0.0
        %v5935 = vadd.s32 %v4428, 32
        %v5936 = vadd.s32 %v4429, 32
        %v5937 = vadd.s32 %v4428, 96
        %v5938 = vadd.s32 %v4429, 96
        %v5939 = vadd.s32 %v4428, 160
        %v5940 = vadd.s32 %v4429, 160
        %v5941 = vadd.s32 %v4428, 224
        %v5942 = vadd.s32 %v4429, 224
        %v5943 = vadd.s32 %v4428, 288
        %v5944 = vadd.s32 %v4429, 288
        %v5945 = vadd.s32 %v4428, 352
        %v5946 = vadd.s32 %v4429, 352
        %v5947 = vadd.s32 %v4428, 416
        %v5948 = vadd.s32 %v4429, 416
        %v5949 = vadd.s32 %v4428, 480
        %v5950 = vadd.s32 %v4429, 480
        %v5951 = vadd.s32 %v4428, 544
        %v5952 = vadd.s32 %v4429, 544
        %v5953 = vadd.s32 %v4428, 608
        %v5954 = vadd.s32 %v4429, 608
        %v5955 = vadd.s32 %v4428, 672
        %v5956 = vadd.s32 %v4429, 672
        %v5957 = vadd.s32 %v4428, 736
        %v5958 = vadd.s32 %v4429, 736
        %v5959 = vadd.s32 %v4428, 800
        %v5960 = vadd.s32 %v4429, 800
        %v5961 = vadd.s32 %v4428, 864
        %v5962 = vadd.s32 %v4429, 864
        %v5963 = vadd.s32 %v4428, 928
        %v5964 = vadd.s32 %v4429, 928
        %v5965 = vadd.s32 %v4428, 992
        %v5966 = vadd.s32 %v4429, 992
        %vm5967 = vcmp.eq.s32.totalorder %v3848, %v5935
        %vm5968 = vcmp.eq.s32.totalorder %v3849, %v5936
        %vm5969 = vcmp.eq.s32.totalorder %v3850, %v5937
        %vm5970 = vcmp.eq.s32.totalorder %v3851, %v5938
        %vm5971 = vcmp.eq.s32.totalorder %v3852, %v5939
        %vm5972 = vcmp.eq.s32.totalorder %v3853, %v5940
        %vm5973 = vcmp.eq.s32.totalorder %v3854, %v5941
        %vm5974 = vcmp.eq.s32.totalorder %v3855, %v5942
        %vm5975 = vcmp.eq.s32.totalorder %v3856, %v5943
        %vm5976 = vcmp.eq.s32.totalorder %v3857, %v5944
        %vm5977 = vcmp.eq.s32.totalorder %v3858, %v5945
        %vm5978 = vcmp.eq.s32.totalorder %v3859, %v5946
        %vm5979 = vcmp.eq.s32.totalorder %v3860, %v5947
        %vm5980 = vcmp.eq.s32.totalorder %v3861, %v5948
        %vm5981 = vcmp.eq.s32.totalorder %v3862, %v5949
        %vm5982 = vcmp.eq.s32.totalorder %v3863, %v5950
        %vm5983 = vcmp.eq.s32.totalorder %v3864, %v5951
        %vm5984 = vcmp.eq.s32.totalorder %v3865, %v5952
        %vm5985 = vcmp.eq.s32.totalorder %v3866, %v5953
        %vm5986 = vcmp.eq.s32.totalorder %v3867, %v5954
        %vm5987 = vcmp.eq.s32.totalorder %v3868, %v5955
        %vm5988 = vcmp.eq.s32.totalorder %v3869, %v5956
        %vm5989 = vcmp.eq.s32.totalorder %v3870, %v5957
        %vm5990 = vcmp.eq.s32.totalorder %v3871, %v5958
        %vm5991 = vcmp.eq.s32.totalorder %v3872, %v5959
        %vm5992 = vcmp.eq.s32.totalorder %v3873, %v5960
        %vm5993 = vcmp.eq.s32.totalorder %v3874, %v5961
        %vm5994 = vcmp.eq.s32.totalorder %v3875, %v5962
        %vm5995 = vcmp.eq.s32.totalorder %v3876, %v5963
        %vm5996 = vcmp.eq.s32.totalorder %v3877, %v5964
        %vm5997 = vcmp.eq.s32.totalorder %v3878, %v5965
        %vm5998 = vcmp.eq.s32.totalorder %v3879, %v5966
        %v5999 = vsel %vm5967, %v1084, 0.0
        %v6000 = vsel %vm5968, %v1085, 0.0
        %v6001 = vsel %vm5969, %v1086, 0.0
        %v6002 = vsel %vm5970, %v1087, 0.0
        %v6003 = vsel %vm5971, %v1088, 0.0
        %v6004 = vsel %vm5972, %v1089, 0.0
        %v6005 = vsel %vm5973, %v1090, 0.0
        %v6006 = vsel %vm5974, %v1091, 0.0
        %v6007 = vsel %vm5975, %v1092, 0.0
        %v6008 = vsel %vm5976, %v1093, 0.0
        %v6009 = vsel %vm5977, %v1094, 0.0
        %v6010 = vsel %vm5978, %v1095, 0.0
        %v6011 = vsel %vm5979, %v1096, 0.0
        %v6012 = vsel %vm5980, %v1097, 0.0
        %v6013 = vsel %vm5981, %v1098, 0.0
        %v6014 = vsel %vm5982, %v1099, 0.0
        %v6015 = vsel %vm5983, %v1100, 0.0
        %v6016 = vsel %vm5984, %v1101, 0.0
        %v6017 = vsel %vm5985, %v1102, 0.0
        %v6018 = vsel %vm5986, %v1103, 0.0
        %v6019 = vsel %vm5987, %v1104, 0.0
        %v6020 = vsel %vm5988, %v1105, 0.0
        %v6021 = vsel %vm5989, %v1106, 0.0
        %v6022 = vsel %vm5990, %v1107, 0.0
        %v6023 = vsel %vm5991, %v1108, 0.0
        %v6024 = vsel %vm5992, %v1109, 0.0
        %v6025 = vsel %vm5993, %v1110, 0.0
        %v6026 = vsel %vm5994, %v1111, 0.0
        %v6027 = vsel %vm5995, %v1112, 0.0
        %v6028 = vsel %vm5996, %v1113, 0.0
        %v6029 = vsel %vm5997, %v1114, 0.0
        %v6030 = vsel %vm5998, %v1115, 0.0
        %v6031 = vadd.f32 %v5999, %v5903
        %v6032 = vadd.f32 %v6000, %v5904
        %v6033 = vadd.f32 %v6001, %v5905
        %v6034 = vadd.f32 %v6002, %v5906
        %v6035 = vadd.f32 %v6003, %v5907
        %v6036 = vadd.f32 %v6004, %v5908
        %v6037 = vadd.f32 %v6005, %v5909
        %v6038 = vadd.f32 %v6006, %v5910
        %v6039 = vadd.f32 %v6007, %v5911
        %v6040 = vadd.f32 %v6008, %v5912
        %v6041 = vadd.f32 %v6009, %v5913
        %v6042 = vadd.f32 %v6010, %v5914
        %v6043 = vadd.f32 %v6011, %v5915
        %v6044 = vadd.f32 %v6012, %v5916
        %v6045 = vadd.f32 %v6013, %v5917
        %v6046 = vadd.f32 %v6014, %v5918
        %v6047 = vadd.f32 %v6015, %v5919
        %v6048 = vadd.f32 %v6016, %v5920
        %v6049 = vadd.f32 %v6017, %v5921
        %v6050 = vadd.f32 %v6018, %v5922
        %v6051 = vadd.f32 %v6019, %v5923
        %v6052 = vadd.f32 %v6020, %v5924
        %v6053 = vadd.f32 %v6021, %v5925
        %v6054 = vadd.f32 %v6022, %v5926
        %v6055 = vadd.f32 %v6023, %v5927
        %v6056 = vadd.f32 %v6024, %v5928
        %v6057 = vadd.f32 %v6025, %v5929
        %v6058 = vadd.f32 %v6026, %v5930
        %v6059 = vadd.f32 %v6027, %v5931
        %v6060 = vadd.f32 %v6028, %v5932
        %v6061 = vadd.f32 %v6029, %v5933
        %v6062 = vadd.f32 %v6030, %v5934
        %v6063 = vmax.f32 %v6031, 0.0
        %v6064 = vmax.f32 %v6032, 0.0
        %v6065 = vmax.f32 %v6033, 0.0
        %v6066 = vmax.f32 %v6034, 0.0
        %v6067 = vmax.f32 %v6035, 0.0
        %v6068 = vmax.f32 %v6036, 0.0
        %v6069 = vmax.f32 %v6037, 0.0
        %v6070 = vmax.f32 %v6038, 0.0
        %v6071 = vmax.f32 %v6039, 0.0
        %v6072 = vmax.f32 %v6040, 0.0
        %v6073 = vmax.f32 %v6041, 0.0
        %v6074 = vmax.f32 %v6042, 0.0
        %v6075 = vmax.f32 %v6043, 0.0
        %v6076 = vmax.f32 %v6044, 0.0
        %v6077 = vmax.f32 %v6045, 0.0
        %v6078 = vmax.f32 %v6046, 0.0
        %v6079 = vmax.f32 %v6047, 0.0
        %v6080 = vmax.f32 %v6048, 0.0
        %v6081 = vmax.f32 %v6049, 0.0
        %v6082 = vmax.f32 %v6050, 0.0
        %v6083 = vmax.f32 %v6051, 0.0
        %v6084 = vmax.f32 %v6052, 0.0
        %v6085 = vmax.f32 %v6053, 0.0
        %v6086 = vmax.f32 %v6054, 0.0
        %v6087 = vmax.f32 %v6055, 0.0
        %v6088 = vmax.f32 %v6056, 0.0
        %v6089 = vmax.f32 %v6057, 0.0
        %v6090 = vmax.f32 %v6058, 0.0
        %v6091 = vmax.f32 %v6059, 0.0
        %v6092 = vmax.f32 %v6060, 0.0
        %v6093 = vmax.f32 %v6061, 0.0
        %v6094 = vmax.f32 %v6062, 0.0
        %v6095 = vmul.f32 %v3816, %v3888
        %v6096 = vmul.f32 %v3817, %v3888
        %v6097 = vmul.f32 %v3818, %v3888
        %v6098 = vmul.f32 %v3819, %v3888
        %v6099 = vmul.f32 %v3820, %v3888
        %v6100 = vmul.f32 %v3821, %v3888
        %v6101 = vmul.f32 %v3822, %v3888
        %v6102 = vmul.f32 %v3823, %v3888
        %v6103 = vmul.f32 %v3824, %v3888
        %v6104 = vmul.f32 %v3825, %v3888
        %v6105 = vmul.f32 %v3826, %v3888
        %v6106 = vmul.f32 %v3827, %v3888
        %v6107 = vmul.f32 %v3828, %v3888
        %v6108 = vmul.f32 %v3829, %v3888
        %v6109 = vmul.f32 %v3830, %v3888
        %v6110 = vmul.f32 %v3831, %v3888
        %v6111 = vmul.f32 %v3832, %v3888
        %v6112 = vmul.f32 %v3833, %v3888
        %v6113 = vmul.f32 %v3834, %v3888
        %v6114 = vmul.f32 %v3835, %v3888
        %v6115 = vmul.f32 %v3836, %v3888
        %v6116 = vmul.f32 %v3837, %v3888
        %v6117 = vmul.f32 %v3838, %v3888
        %v6118 = vmul.f32 %v3839, %v3888
        %v6119 = vmul.f32 %v3840, %v3888
        %v6120 = vmul.f32 %v3841, %v3888
        %v6121 = vmul.f32 %v3842, %v3888
        %v6122 = vmul.f32 %v3843, %v3888
        %v6123 = vmul.f32 %v3844, %v3888
        %v6124 = vmul.f32 %v3845, %v3888
        %v6125 = vmul.f32 %v3846, %v3888
        %v6126 = vmul.f32 %v3847, %v3888
        %v6127 = vadd.f32 %v6095, %v3927
        %v6128 = vadd.f32 %v6096, %v3927
        %v6129 = vadd.f32 %v6097, %v3927
        %v6130 = vadd.f32 %v6098, %v3927
        %v6131 = vadd.f32 %v6099, %v3927
        %v6132 = vadd.f32 %v6100, %v3927
        %v6133 = vadd.f32 %v6101, %v3927
        %v6134 = vadd.f32 %v6102, %v3927
        %v6135 = vadd.f32 %v6103, %v3927
        %v6136 = vadd.f32 %v6104, %v3927
        %v6137 = vadd.f32 %v6105, %v3927
        %v6138 = vadd.f32 %v6106, %v3927
        %v6139 = vadd.f32 %v6107, %v3927
        %v6140 = vadd.f32 %v6108, %v3927
        %v6141 = vadd.f32 %v6109, %v3927
        %v6142 = vadd.f32 %v6110, %v3927
        %v6143 = vadd.f32 %v6111, %v3927
        %v6144 = vadd.f32 %v6112, %v3927
        %v6145 = vadd.f32 %v6113, %v3927
        %v6146 = vadd.f32 %v6114, %v3927
        %v6147 = vadd.f32 %v6115, %v3927
        %v6148 = vadd.f32 %v6116, %v3927
        %v6149 = vadd.f32 %v6117, %v3927
        %v6150 = vadd.f32 %v6118, %v3927
        %v6151 = vadd.f32 %v6119, %v3927
        %v6152 = vadd.f32 %v6120, %v3927
        %v6153 = vadd.f32 %v6121, %v3927
        %v6154 = vadd.f32 %v6122, %v3927
        %v6155 = vadd.f32 %v6123, %v3927
        %v6156 = vadd.f32 %v6124, %v3927
        %v6157 = vadd.f32 %v6125, %v3927
        %v6158 = vadd.f32 %v6126, %v3927
        %v6159 = vmax.f32 %v6127, 0.0
        %v6160 = vmax.f32 %v6128, 0.0
        %v6161 = vmax.f32 %v6129, 0.0
        %v6162 = vmax.f32 %v6130, 0.0
        %v6163 = vmax.f32 %v6131, 0.0
        %v6164 = vmax.f32 %v6132, 0.0
        %v6165 = vmax.f32 %v6133, 0.0
        %v6166 = vmax.f32 %v6134, 0.0
        %v6167 = vmax.f32 %v6135, 0.0
        %v6168 = vmax.f32 %v6136, 0.0
        %v6169 = vmax.f32 %v6137, 0.0
        %v6170 = vmax.f32 %v6138, 0.0
        %v6171 = vmax.f32 %v6139, 0.0
        %v6172 = vmax.f32 %v6140, 0.0
        %v6173 = vmax.f32 %v6141, 0.0
        %v6174 = vmax.f32 %v6142, 0.0
        %v6175 = vmax.f32 %v6143, 0.0
        %v6176 = vmax.f32 %v6144, 0.0
        %v6177 = vmax.f32 %v6145, 0.0
        %v6178 = vmax.f32 %v6146, 0.0
        %v6179 = vmax.f32 %v6147, 0.0
        %v6180 = vmax.f32 %v6148, 0.0
        %v6181 = vmax.f32 %v6149, 0.0
        %v6182 = vmax.f32 %v6150, 0.0
        %v6183 = vmax.f32 %v6151, 0.0
        %v6184 = vmax.f32 %v6152, 0.0
        %v6185 = vmax.f32 %v6153, 0.0
        %v6186 = vmax.f32 %v6154, 0.0
        %v6187 = vmax.f32 %v6155, 0.0
        %v6188 = vmax.f32 %v6156, 0.0
        %v6189 = vmax.f32 %v6157, 0.0
        %v6190 = vmax.f32 %v6158, 0.0
        %v6192 = vsel %vm1568, %v6159, 0
        %v6195 = vsel %vm1568, %v6160, 0
        %v6198 = vsel %vm1568, %v6161, 0
        %v6201 = vsel %vm1568, %v6162, 0
        %v6204 = vsel %vm1568, %v6163, 0
        %v6207 = vsel %vm1568, %v6164, 0
        %v6210 = vsel %vm1568, %v6165, 0
        %v6213 = vsel %vm1568, %v6166, 0
        %v6216 = vsel %vm1568, %v6167, 0
        %v6219 = vsel %vm1568, %v6168, 0
        %v6222 = vsel %vm1568, %v6169, 0
        %v6225 = vsel %vm1568, %v6170, 0
        %v6228 = vsel %vm1568, %v6171, 0
        %v6231 = vsel %vm1568, %v6172, 0
        %v6234 = vsel %vm1568, %v6173, 0
        %v6237 = vsel %vm1568, %v6174, 0
        %v6240 = vsel %vm1568, %v6175, 0
        %v6243 = vsel %vm1568, %v6176, 0
        %v6246 = vsel %vm1568, %v6177, 0
        %v6249 = vsel %vm1568, %v6178, 0
        %v6252 = vsel %vm1568, %v6179, 0
        %v6255 = vsel %vm1568, %v6180, 0
        %v6258 = vsel %vm1568, %v6181, 0
        %v6261 = vsel %vm1568, %v6182, 0
        %v6264 = vsel %vm1568, %v6183, 0
        %v6267 = vsel %vm1568, %v6184, 0
        %v6270 = vsel %vm1568, %v6185, 0
        %v6273 = vsel %vm1568, %v6186, 0
        %v6276 = vsel %vm1568, %v6187, 0
        %v6279 = vsel %vm1568, %v6188, 0
        %v6282 = vsel %vm1568, %v6189, 0
        %v6285 = vsel %vm1568, %v6190, 0
        %6287 = vmatprep.subr.mxu0 0.0
        %6288 = vmatpush1.msra.mxu0 %v4091
        %6289 = vmatprep.subr.mxu0 0.0
        %6290 = vmatpush1.msra.mxu0 0.0
        %6291 = vmatprep.subr.mxu0 0.0
        %6292 = vmatpush1.msra.mxu0 0.0
        %6293 = vmatprep.subr.mxu0 0.0
        %6294 = vmatpush1.msra.mxu0 0.0
        %6295 = vmatprep.subr.mxu0 0.0
        %6296 = vmatpush1.msra.mxu0 0.0
        %6297 = vmatprep.subr.mxu0 0.0
        %6298 = vmatpush1.msra.mxu0 0.0
        %6299 = vmatprep.subr.mxu0 0.0
        %6300 = vmatpush1.msra.mxu0 0.0
        %6301 = vmatprep.subr.mxu0 0.0
        %6302 = vmatpush1.msra.mxu0 0.0
        %6303 = vmatprep.subr.mxu0 0.0
        %6304 = vmatpush1.msra.mxu0 0.0
        %6305 = vmatprep.subr.mxu0 0.0
        %6306 = vmatpush1.msra.mxu0 0.0
        %6307 = vmatprep.subr.mxu0 0.0
        %6308 = vmatpush1.msra.mxu0 0.0
        %6309 = vmatprep.subr.mxu0 0.0
        %6310 = vmatpush1.msra.mxu0 0.0
        %6311 = vmatprep.subr.mxu0 0.0
        %6312 = vmatpush1.msra.mxu0 0.0
        %6313 = vmatprep.subr.mxu0 0.0
        %6314 = vmatpush1.msra.mxu0 0.0
        %6315 = vmatprep.subr.mxu0 0.0
        %6316 = vmatpush1.msra.mxu0 0.0
        %6317 = vmatprep.subr.mxu0 0.0
        %6318 = vmatpush1.msra.mxu0 0.0
        %6319 = vmatprep.subr.mxu0 0.0
        %6320 = vmatpush1.msra.mxu0 0.0
        %6321 = vmatprep.subr.mxu0 0.0
        %6322 = vmatpush1.msra.mxu0 0.0
        %6323 = vmatprep.subr.mxu0 0.0
        %6324 = vmatpush1.msra.mxu0 0.0
        %6325 = vmatprep.subr.mxu0 0.0
        %6326 = vmatpush1.msra.mxu0 0.0
        %6327 = vmatprep.subr.mxu0 0.0
        %6328 = vmatpush1.msra.mxu0 0.0
        %6329 = vmatprep.subr.mxu0 0.0
        %6330 = vmatpush1.msra.mxu0 0.0
        %6331 = vmatprep.subr.mxu0 0.0
        %6332 = vmatpush1.msra.mxu0 0.0
        %6333 = vmatprep.subr.mxu0 0.0
        %6334 = vmatpush1.msra.mxu0 0.0
        %6335 = vmatprep.subr.mxu0 0.0
        %6336 = vmatpush1.msra.mxu0 0.0
        %6337 = vmatprep.subr.mxu0 0.0
        %6338 = vmatpush1.msra.mxu0 0.0
        %6339 = vmatprep.subr.mxu0 0.0
        %6340 = vmatpush1.msra.mxu0 0.0
        %6341 = vmatprep.subr.mxu0 0.0
        %6342 = vmatpush1.msra.mxu0 0.0
        %6343 = vmatprep.subr.mxu0 0.0
        %6344 = vmatpush1.msra.mxu0 0.0
        %6345 = vmatprep.subr.mxu0 0.0
        %6346 = vmatpush1.msra.mxu0 0.0
        %6347 = vmatprep.subr.mxu0 0.0
        %6348 = vmatpush1.msra.mxu0 0.0
        %6349 = vmatprep.subr.mxu0 0.0
        %6350 = vmatpush1.msra.mxu0 0.0
        %6351 = vmatprep.mubr.f32.mxu0 0.0
        %6352 = vmatmul.mubr.f32.gmra.mrb[0].mxu0 %v6192
        %v6353 = vpop.f32.mrb[0].mxu0
        %v6354 = vadd.f32 0.0, %v6353
        %v6355 = vpop.f32.mrb[0].mxu0
        %6356 = vmatprep.mubr.f32.mxu0 0.0
        %6357 = vmatmul.mubr.f32.gmra.mrb[0].mxu0 %v6195
        %v6358 = vpop.f32.mrb[0].mxu0
        %v6359 = vadd.f32 0.0, %v6358
        %v6360 = vpop.f32.mrb[0].mxu0
        %6361 = vmatprep.mubr.f32.mxu0 0.0
        %6362 = vmatmul.mubr.f32.gmra.mrb[0].mxu0 %v6198
        %v6363 = vpop.f32.mrb[0].mxu0
        %v6364 = vadd.f32 0.0, %v6363
        %v6365 = vpop.f32.mrb[0].mxu0
        %6366 = vmatprep.mubr.f32.mxu0 0.0
        %6367 = vmatmul.mubr.f32.gmra.mrb[0].mxu0 %v6201
        %v6368 = vpop.f32.mrb[0].mxu0
        %v6369 = vadd.f32 0.0, %v6368
        %v6370 = vpop.f32.mrb[0].mxu0
        %6371 = vmatprep.mubr.f32.mxu0 0.0
        %6372 = vmatmul.mubr.f32.gmra.mrb[0].mxu0 %v6204
        %v6373 = vpop.f32.mrb[0].mxu0
        %v6374 = vadd.f32 0.0, %v6373
        %v6375 = vpop.f32.mrb[0].mxu0
        %6376 = vmatprep.mubr.f32.mxu0 0.0
        %6377 = vmatmul.mubr.f32.gmra.mrb[0].mxu0 %v6207
        %v6378 = vpop.f32.mrb[0].mxu0
        %v6379 = vadd.f32 0.0, %v6378
        %v6380 = vpop.f32.mrb[0].mxu0
        %6381 = vmatprep.mubr.f32.mxu0 0.0
        %6382 = vmatmul.mubr.f32.gmra.mrb[0].mxu0 %v6210
        %v6383 = vpop.f32.mrb[0].mxu0
        %v6384 = vadd.f32 0.0, %v6383
        %v6385 = vpop.f32.mrb[0].mxu0
        %6386 = vmatprep.mubr.f32.mxu0 0.0
        %6387 = vmatmul.mubr.f32.gmra.mrb[0].mxu0 %v6213
        %v6388 = vpop.f32.mrb[0].mxu0
        %v6389 = vadd.f32 0.0, %v6388
        %v6390 = vpop.f32.mrb[0].mxu0
        %6391 = vmatprep.mubr.f32.mxu0 0.0
        %6392 = vmatmul.mubr.f32.gmra.mrb[0].mxu0 %v6216
        %v6393 = vpop.f32.mrb[0].mxu0
        %v6394 = vadd.f32 0.0, %v6393
        %v6395 = vpop.f32.mrb[0].mxu0
        %6396 = vmatprep.mubr.f32.mxu0 0.0
        %6397 = vmatmul.mubr.f32.gmra.mrb[0].mxu0 %v6219
        %v6398 = vpop.f32.mrb[0].mxu0
        %v6399 = vadd.f32 0.0, %v6398
        %v6400 = vpop.f32.mrb[0].mxu0
        %6401 = vmatprep.mubr.f32.mxu0 0.0
        %6402 = vmatmul.mubr.f32.gmra.mrb[0].mxu0 %v6222
        %v6403 = vpop.f32.mrb[0].mxu0
        %v6404 = vadd.f32 0.0, %v6403
        %v6405 = vpop.f32.mrb[0].mxu0
        %6406 = vmatprep.mubr.f32.mxu0 0.0
        %6407 = vmatmul.mubr.f32.gmra.mrb[0].mxu0 %v6225
        %v6408 = vpop.f32.mrb[0].mxu0
        %v6409 = vadd.f32 0.0, %v6408
        %v6410 = vpop.f32.mrb[0].mxu0
        %6411 = vmatprep.mubr.f32.mxu0 0.0
        %6412 = vmatmul.mubr.f32.gmra.mrb[0].mxu0 %v6228
        %v6413 = vpop.f32.mrb[0].mxu0
        %v6414 = vadd.f32 0.0, %v6413
        %v6415 = vpop.f32.mrb[0].mxu0
        %6416 = vmatprep.mubr.f32.mxu0 0.0
        %6417 = vmatmul.mubr.f32.gmra.mrb[0].mxu0 %v6231
        %v6418 = vpop.f32.mrb[0].mxu0
        %v6419 = vadd.f32 0.0, %v6418
        %v6420 = vpop.f32.mrb[0].mxu0
        %6421 = vmatprep.mubr.f32.mxu0 0.0
        %6422 = vmatmul.mubr.f32.gmra.mrb[0].mxu0 %v6234
        %v6423 = vpop.f32.mrb[0].mxu0
        %v6424 = vadd.f32 0.0, %v6423
        %v6425 = vpop.f32.mrb[0].mxu0
        %6426 = vmatprep.mubr.f32.mxu0 0.0
        %6427 = vmatmul.mubr.f32.gmra.mrb[0].mxu0 %v6237
        %v6428 = vpop.f32.mrb[0].mxu0
        %v6429 = vadd.f32 0.0, %v6428
        %v6430 = vpop.f32.mrb[0].mxu0
        %6431 = vmatprep.mubr.f32.mxu0 0.0
        %6432 = vmatmul.mubr.f32.gmra.mrb[0].mxu0 %v6240
        %v6433 = vpop.f32.mrb[0].mxu0
        %v6434 = vadd.f32 0.0, %v6433
        %v6435 = vpop.f32.mrb[0].mxu0
        %6436 = vmatprep.mubr.f32.mxu0 0.0
        %6437 = vmatmul.mubr.f32.gmra.mrb[0].mxu0 %v6243
        %v6438 = vpop.f32.mrb[0].mxu0
        %v6439 = vadd.f32 0.0, %v6438
        %v6440 = vpop.f32.mrb[0].mxu0
        %6441 = vmatprep.mubr.f32.mxu0 0.0
        %6442 = vmatmul.mubr.f32.gmra.mrb[0].mxu0 %v6246
        %v6443 = vpop.f32.mrb[0].mxu0
        %v6444 = vadd.f32 0.0, %v6443
        %v6445 = vpop.f32.mrb[0].mxu0
        %6446 = vmatprep.mubr.f32.mxu0 0.0
        %6447 = vmatmul.mubr.f32.gmra.mrb[0].mxu0 %v6249
        %v6448 = vpop.f32.mrb[0].mxu0
        %v6449 = vadd.f32 0.0, %v6448
        %v6450 = vpop.f32.mrb[0].mxu0
        %6451 = vmatprep.mubr.f32.mxu0 0.0
        %6452 = vmatmul.mubr.f32.gmra.mrb[0].mxu0 %v6252
        %v6453 = vpop.f32.mrb[0].mxu0
        %v6454 = vadd.f32 0.0, %v6453
        %v6455 = vpop.f32.mrb[0].mxu0
        %6456 = vmatprep.mubr.f32.mxu0 0.0
        %6457 = vmatmul.mubr.f32.gmra.mrb[0].mxu0 %v6255
        %v6458 = vpop.f32.mrb[0].mxu0
        %v6459 = vadd.f32 0.0, %v6458
        %v6460 = vpop.f32.mrb[0].mxu0
        %6461 = vmatprep.mubr.f32.mxu0 0.0
        %6462 = vmatmul.mubr.f32.gmra.mrb[0].mxu0 %v6258
        %v6463 = vpop.f32.mrb[0].mxu0
        %v6464 = vadd.f32 0.0, %v6463
        %v6465 = vpop.f32.mrb[0].mxu0
        %6466 = vmatprep.mubr.f32.mxu0 0.0
        %6467 = vmatmul.mubr.f32.gmra.mrb[0].mxu0 %v6261
        %v6468 = vpop.f32.mrb[0].mxu0
        %v6469 = vadd.f32 0.0, %v6468
        %v6470 = vpop.f32.mrb[0].mxu0
        %6471 = vmatprep.mubr.f32.mxu0 0.0
        %6472 = vmatmul.mubr.f32.gmra.mrb[0].mxu0 %v6264
        %v6473 = vpop.f32.mrb[0].mxu0
        %v6474 = vadd.f32 0.0, %v6473
        %v6475 = vpop.f32.mrb[0].mxu0
        %6476 = vmatprep.mubr.f32.mxu0 0.0
        %6477 = vmatmul.mubr.f32.gmra.mrb[0].mxu0 %v6267
        %v6478 = vpop.f32.mrb[0].mxu0
        %v6479 = vadd.f32 0.0, %v6478
        %v6480 = vpop.f32.mrb[0].mxu0
        %6481 = vmatprep.mubr.f32.mxu0 0.0
        %6482 = vmatmul.mubr.f32.gmra.mrb[0].mxu0 %v6270
        %v6483 = vpop.f32.mrb[0].mxu0
        %v6484 = vadd.f32 0.0, %v6483
        %v6485 = vpop.f32.mrb[0].mxu0
        %6486 = vmatprep.mubr.f32.mxu0 0.0
        %6487 = vmatmul.mubr.f32.gmra.mrb[0].mxu0 %v6273
        %v6488 = vpop.f32.mrb[0].mxu0
        %v6489 = vadd.f32 0.0, %v6488
        %v6490 = vpop.f32.mrb[0].mxu0
        %6491 = vmatprep.mubr.f32.mxu0 0.0
        %6492 = vmatmul.mubr.f32.gmra.mrb[0].mxu0 %v6276
        %v6493 = vpop.f32.mrb[0].mxu0
        %v6494 = vadd.f32 0.0, %v6493
        %v6495 = vpop.f32.mrb[0].mxu0
        %6496 = vmatprep.mubr.f32.mxu0 0.0
        %6497 = vmatmul.mubr.f32.gmra.mrb[0].mxu0 %v6279
        %v6498 = vpop.f32.mrb[0].mxu0
        %v6499 = vadd.f32 0.0, %v6498
        %v6500 = vpop.f32.mrb[0].mxu0
        %6501 = vmatprep.mubr.f32.mxu0 0.0
        %6502 = vmatmul.mubr.f32.gmra.mrb[0].mxu0 %v6282
        %v6503 = vpop.f32.mrb[0].mxu0
        %v6504 = vadd.f32 0.0, %v6503
        %v6505 = vpop.f32.mrb[0].mxu0
        %6506 = vmatprep.mubr.f32.mxu0 0.0
        %6507 = vmatmul.mubr.f32.gmra.mrb[0].mxu0 %v6285
        %v6508 = vpop.f32.mrb[0].mxu0
        %v6509 = vadd.f32 0.0, %v6508
        %v6510 = vpop.f32.mrb[0].mxu0
        %6511 = vdwg.mxu0
        %v6512 = vmul.f32 %v6354, %v4323
        %v6513 = vmul.f32 %v6359, %v4323
        %v6514 = vmul.f32 %v6364, %v4323
        %v6515 = vmul.f32 %v6369, %v4323
        %v6516 = vmul.f32 %v6374, %v4323
        %v6517 = vmul.f32 %v6379, %v4323
        %v6518 = vmul.f32 %v6384, %v4323
        %v6519 = vmul.f32 %v6389, %v4323
        %v6520 = vmul.f32 %v6394, %v4323
        %v6521 = vmul.f32 %v6399, %v4323
        %v6522 = vmul.f32 %v6404, %v4323
        %v6523 = vmul.f32 %v6409, %v4323
        %v6524 = vmul.f32 %v6414, %v4323
        %v6525 = vmul.f32 %v6419, %v4323
        %v6526 = vmul.f32 %v6424, %v4323
        %v6527 = vmul.f32 %v6429, %v4323
        %v6528 = vmul.f32 %v6434, %v4323
        %v6529 = vmul.f32 %v6439, %v4323
        %v6530 = vmul.f32 %v6444, %v4323
        %v6531 = vmul.f32 %v6449, %v4323
        %v6532 = vmul.f32 %v6454, %v4323
        %v6533 = vmul.f32 %v6459, %v4323
        %v6534 = vmul.f32 %v6464, %v4323
        %v6535 = vmul.f32 %v6469, %v4323
        %v6536 = vmul.f32 %v6474, %v4323
        %v6537 = vmul.f32 %v6479, %v4323
        %v6538 = vmul.f32 %v6484, %v4323
        %v6539 = vmul.f32 %v6489, %v4323
        %v6540 = vmul.f32 %v6494, %v4323
        %v6541 = vmul.f32 %v6499, %v4323
        %v6542 = vmul.f32 %v6504, %v4323
        %v6543 = vmul.f32 %v6509, %v4323
        %v6544 = vadd.f32 %v6512, %v4362
        %v6545 = vadd.f32 %v6513, %v4362
        %v6546 = vadd.f32 %v6514, %v4362
        %v6547 = vadd.f32 %v6515, %v4362
        %v6548 = vadd.f32 %v6516, %v4362
        %v6549 = vadd.f32 %v6517, %v4362
        %v6550 = vadd.f32 %v6518, %v4362
        %v6551 = vadd.f32 %v6519, %v4362
        %v6552 = vadd.f32 %v6520, %v4362
        %v6553 = vadd.f32 %v6521, %v4362
        %v6554 = vadd.f32 %v6522, %v4362
        %v6555 = vadd.f32 %v6523, %v4362
        %v6556 = vadd.f32 %v6524, %v4362
        %v6557 = vadd.f32 %v6525, %v4362
        %v6558 = vadd.f32 %v6526, %v4362
        %v6559 = vadd.f32 %v6527, %v4362
        %v6560 = vadd.f32 %v6528, %v4362
        %v6561 = vadd.f32 %v6529, %v4362
        %v6562 = vadd.f32 %v6530, %v4362
        %v6563 = vadd.f32 %v6531, %v4362
        %v6564 = vadd.f32 %v6532, %v4362
        %v6565 = vadd.f32 %v6533, %v4362
        %v6566 = vadd.f32 %v6534, %v4362
        %v6567 = vadd.f32 %v6535, %v4362
        %v6568 = vadd.f32 %v6536, %v4362
        %v6569 = vadd.f32 %v6537, %v4362
        %v6570 = vadd.f32 %v6538, %v4362
        %v6571 = vadd.f32 %v6539, %v4362
        %v6572 = vadd.f32 %v6540, %v4362
        %v6573 = vadd.f32 %v6541, %v4362
        %v6574 = vadd.f32 %v6542, %v4362
        %v6575 = vadd.f32 %v6543, %v4362
        %v6576 = vmax.f32 %v6544, 0.0
        %v6577 = vmax.f32 %v6545, 0.0
        %v6578 = vmax.f32 %v6546, 0.0
        %v6579 = vmax.f32 %v6547, 0.0
        %v6580 = vmax.f32 %v6548, 0.0
        %v6581 = vmax.f32 %v6549, 0.0
        %v6582 = vmax.f32 %v6550, 0.0
        %v6583 = vmax.f32 %v6551, 0.0
        %v6584 = vmax.f32 %v6552, 0.0
        %v6585 = vmax.f32 %v6553, 0.0
        %v6586 = vmax.f32 %v6554, 0.0
        %v6587 = vmax.f32 %v6555, 0.0
        %v6588 = vmax.f32 %v6556, 0.0
        %v6589 = vmax.f32 %v6557, 0.0
        %v6590 = vmax.f32 %v6558, 0.0
        %v6591 = vmax.f32 %v6559, 0.0
        %v6592 = vmax.f32 %v6560, 0.0
        %v6593 = vmax.f32 %v6561, 0.0
        %v6594 = vmax.f32 %v6562, 0.0
        %v6595 = vmax.f32 %v6563, 0.0
        %v6596 = vmax.f32 %v6564, 0.0
        %v6597 = vmax.f32 %v6565, 0.0
        %v6598 = vmax.f32 %v6566, 0.0
        %v6599 = vmax.f32 %v6567, 0.0
        %v6600 = vmax.f32 %v6568, 0.0
        %v6601 = vmax.f32 %v6569, 0.0
        %v6602 = vmax.f32 %v6570, 0.0
        %v6603 = vmax.f32 %v6571, 0.0
        %v6604 = vmax.f32 %v6572, 0.0
        %v6605 = vmax.f32 %v6573, 0.0
        %v6606 = vmax.f32 %v6574, 0.0
        %v6607 = vmax.f32 %v6575, 0.0
        %v6608 = vadd.s32 %v5101, 32
        %v6609 = vadd.s32 %v5102, 32
        %v6610 = vadd.s32 %v5101, 96
        %v6611 = vadd.s32 %v5102, 96
        %v6612 = vadd.s32 %v5101, 160
        %v6613 = vadd.s32 %v5102, 160
        %v6614 = vadd.s32 %v5101, 224
        %v6615 = vadd.s32 %v5102, 224
        %v6616 = vadd.s32 %v5101, 288
        %v6617 = vadd.s32 %v5102, 288
        %v6618 = vadd.s32 %v5101, 352
        %v6619 = vadd.s32 %v5102, 352
        %v6620 = vadd.s32 %v5101, 416
        %v6621 = vadd.s32 %v5102, 416
        %v6622 = vadd.s32 %v5101, 480
        %v6623 = vadd.s32 %v5102, 480
        %v6624 = vadd.s32 %v5101, 544
        %v6625 = vadd.s32 %v5102, 544
        %v6626 = vadd.s32 %v5101, 608
        %v6627 = vadd.s32 %v5102, 608
        %v6628 = vadd.s32 %v5101, 672
        %v6629 = vadd.s32 %v5102, 672
        %v6630 = vadd.s32 %v5101, 736
        %v6631 = vadd.s32 %v5102, 736
        %v6632 = vadd.s32 %v5101, 800
        %v6633 = vadd.s32 %v5102, 800
        %v6634 = vadd.s32 %v5101, 864
        %v6635 = vadd.s32 %v5102, 864
        %v6636 = vadd.s32 %v5101, 928
        %v6637 = vadd.s32 %v5102, 928
        %v6638 = vadd.s32 %v5101, 992
        %v6639 = vadd.s32 %v5102, 992
        %vm6640 = vcmp.eq.s32.totalorder %v3848, %v6608
        %vm6641 = vcmp.eq.s32.totalorder %v3849, %v6609
        %vm6642 = vcmp.eq.s32.totalorder %v3850, %v6610
        %vm6643 = vcmp.eq.s32.totalorder %v3851, %v6611
        %vm6644 = vcmp.eq.s32.totalorder %v3852, %v6612
        %vm6645 = vcmp.eq.s32.totalorder %v3853, %v6613
        %vm6646 = vcmp.eq.s32.totalorder %v3854, %v6614
        %vm6647 = vcmp.eq.s32.totalorder %v3855, %v6615
        %vm6648 = vcmp.eq.s32.totalorder %v3856, %v6616
        %vm6649 = vcmp.eq.s32.totalorder %v3857, %v6617
        %vm6650 = vcmp.eq.s32.totalorder %v3858, %v6618
        %vm6651 = vcmp.eq.s32.totalorder %v3859, %v6619
        %vm6652 = vcmp.eq.s32.totalorder %v3860, %v6620
        %vm6653 = vcmp.eq.s32.totalorder %v3861, %v6621
        %vm6654 = vcmp.eq.s32.totalorder %v3862, %v6622
        %vm6655 = vcmp.eq.s32.totalorder %v3863, %v6623
        %vm6656 = vcmp.eq.s32.totalorder %v3864, %v6624
        %vm6657 = vcmp.eq.s32.totalorder %v3865, %v6625
        %vm6658 = vcmp.eq.s32.totalorder %v3866, %v6626
        %vm6659 = vcmp.eq.s32.totalorder %v3867, %v6627
        %vm6660 = vcmp.eq.s32.totalorder %v3868, %v6628
        %vm6661 = vcmp.eq.s32.totalorder %v3869, %v6629
        %vm6662 = vcmp.eq.s32.totalorder %v3870, %v6630
        %vm6663 = vcmp.eq.s32.totalorder %v3871, %v6631
        %vm6664 = vcmp.eq.s32.totalorder %v3872, %v6632
        %vm6665 = vcmp.eq.s32.totalorder %v3873, %v6633
        %vm6666 = vcmp.eq.s32.totalorder %v3874, %v6634
        %vm6667 = vcmp.eq.s32.totalorder %v3875, %v6635
        %vm6668 = vcmp.eq.s32.totalorder %v3876, %v6636
        %vm6669 = vcmp.eq.s32.totalorder %v3877, %v6637
        %vm6670 = vcmp.eq.s32.totalorder %v3878, %v6638
        %vm6671 = vcmp.eq.s32.totalorder %v3879, %v6639
        %v6672 = vsel %vm6640, %v1084, 0.0
        %v6673 = vsel %vm6641, %v1085, 0.0
        %v6674 = vsel %vm6642, %v1086, 0.0
        %v6675 = vsel %vm6643, %v1087, 0.0
        %v6676 = vsel %vm6644, %v1088, 0.0
        %v6677 = vsel %vm6645, %v1089, 0.0
        %v6678 = vsel %vm6646, %v1090, 0.0
        %v6679 = vsel %vm6647, %v1091, 0.0
        %v6680 = vsel %vm6648, %v1092, 0.0
        %v6681 = vsel %vm6649, %v1093, 0.0
        %v6682 = vsel %vm6650, %v1094, 0.0
        %v6683 = vsel %vm6651, %v1095, 0.0
        %v6684 = vsel %vm6652, %v1096, 0.0
        %v6685 = vsel %vm6653, %v1097, 0.0
        %v6686 = vsel %vm6654, %v1098, 0.0
        %v6687 = vsel %vm6655, %v1099, 0.0
        %v6688 = vsel %vm6656, %v1100, 0.0
        %v6689 = vsel %vm6657, %v1101, 0.0
        %v6690 = vsel %vm6658, %v1102, 0.0
        %v6691 = vsel %vm6659, %v1103, 0.0
        %v6692 = vsel %vm6660, %v1104, 0.0
        %v6693 = vsel %vm6661, %v1105, 0.0
        %v6694 = vsel %vm6662, %v1106, 0.0
        %v6695 = vsel %vm6663, %v1107, 0.0
        %v6696 = vsel %vm6664, %v1108, 0.0
        %v6697 = vsel %vm6665, %v1109, 0.0
        %v6698 = vsel %vm6666, %v1110, 0.0
        %v6699 = vsel %vm6667, %v1111, 0.0
        %v6700 = vsel %vm6668, %v1112, 0.0
        %v6701 = vsel %vm6669, %v1113, 0.0
        %v6702 = vsel %vm6670, %v1114, 0.0
        %v6703 = vsel %vm6671, %v1115, 0.0
        %v6704 = vadd.f32 %v6672, %v6576
        %v6705 = vadd.f32 %v6673, %v6577
        %v6706 = vadd.f32 %v6674, %v6578
        %v6707 = vadd.f32 %v6675, %v6579
        %v6708 = vadd.f32 %v6676, %v6580
        %v6709 = vadd.f32 %v6677, %v6581
        %v6710 = vadd.f32 %v6678, %v6582
        %v6711 = vadd.f32 %v6679, %v6583
        %v6712 = vadd.f32 %v6680, %v6584
        %v6713 = vadd.f32 %v6681, %v6585
        %v6714 = vadd.f32 %v6682, %v6586
        %v6715 = vadd.f32 %v6683, %v6587
        %v6716 = vadd.f32 %v6684, %v6588
        %v6717 = vadd.f32 %v6685, %v6589
        %v6718 = vadd.f32 %v6686, %v6590
        %v6719 = vadd.f32 %v6687, %v6591
        %v6720 = vadd.f32 %v6688, %v6592
        %v6721 = vadd.f32 %v6689, %v6593
        %v6722 = vadd.f32 %v6690, %v6594
        %v6723 = vadd.f32 %v6691, %v6595
        %v6724 = vadd.f32 %v6692, %v6596
        %v6725 = vadd.f32 %v6693, %v6597
        %v6726 = vadd.f32 %v6694, %v6598
        %v6727 = vadd.f32 %v6695, %v6599
        %v6728 = vadd.f32 %v6696, %v6600
        %v6729 = vadd.f32 %v6697, %v6601
        %v6730 = vadd.f32 %v6698, %v6602
        %v6731 = vadd.f32 %v6699, %v6603
        %v6732 = vadd.f32 %v6700, %v6604
        %v6733 = vadd.f32 %v6701, %v6605
        %v6734 = vadd.f32 %v6702, %v6606
        %v6735 = vadd.f32 %v6703, %v6607
        %v6736 = vmax.f32 %v6704, 0.0
        %v6737 = vmax.f32 %v6705, 0.0
        %v6738 = vmax.f32 %v6706, 0.0
        %v6739 = vmax.f32 %v6707, 0.0
        %v6740 = vmax.f32 %v6708, 0.0
        %v6741 = vmax.f32 %v6709, 0.0
        %v6742 = vmax.f32 %v6710, 0.0
        %v6743 = vmax.f32 %v6711, 0.0
        %v6744 = vmax.f32 %v6712, 0.0
        %v6745 = vmax.f32 %v6713, 0.0
        %v6746 = vmax.f32 %v6714, 0.0
        %v6747 = vmax.f32 %v6715, 0.0
        %v6748 = vmax.f32 %v6716, 0.0
        %v6749 = vmax.f32 %v6717, 0.0
        %v6750 = vmax.f32 %v6718, 0.0
        %v6751 = vmax.f32 %v6719, 0.0
        %v6752 = vmax.f32 %v6720, 0.0
        %v6753 = vmax.f32 %v6721, 0.0
        %v6754 = vmax.f32 %v6722, 0.0
        %v6755 = vmax.f32 %v6723, 0.0
        %v6756 = vmax.f32 %v6724, 0.0
        %v6757 = vmax.f32 %v6725, 0.0
        %v6758 = vmax.f32 %v6726, 0.0
        %v6759 = vmax.f32 %v6727, 0.0
        %v6760 = vmax.f32 %v6728, 0.0
        %v6761 = vmax.f32 %v6729, 0.0
        %v6762 = vmax.f32 %v6730, 0.0
        %v6763 = vmax.f32 %v6731, 0.0
        %v6764 = vmax.f32 %v6732, 0.0
        %v6765 = vmax.f32 %v6733, 0.0
        %v6766 = vmax.f32 %v6734, 0.0
        %v6767 = vmax.f32 %v6735, 0.0
        %6800 = vrot.lane.b32.xlu0 %v6736, 8
        %v6801 = vpop.permute.xlu0 %6800
        %6802 = vrot.lane.b32.xlu0 %v6737, 8
        %v6803 = vpop.permute.xlu0 %6802
        %6804 = vrot.lane.b32.xlu0 %v6738, 8
        %v6805 = vpop.permute.xlu0 %6804
        %6806 = vrot.lane.b32.xlu0 %v6739, 8
        %v6807 = vpop.permute.xlu0 %6806
        %6808 = vrot.lane.b32.xlu0 %v6740, 8
        %v6809 = vpop.permute.xlu0 %6808
        %6810 = vrot.lane.b32.xlu0 %v6741, 8
        %v6811 = vpop.permute.xlu0 %6810
        %6812 = vrot.lane.b32.xlu0 %v6742, 8
        %v6813 = vpop.permute.xlu0 %6812
        %6814 = vrot.lane.b32.xlu0 %v6743, 8
        %v6815 = vpop.permute.xlu0 %6814
        %6816 = vrot.lane.b32.xlu0 %v6744, 8
        %v6817 = vpop.permute.xlu0 %6816
        %6818 = vrot.lane.b32.xlu0 %v6745, 8
        %v6819 = vpop.permute.xlu0 %6818
        %6820 = vrot.lane.b32.xlu0 %v6746, 8
        %v6821 = vpop.permute.xlu0 %6820
        %6822 = vrot.lane.b32.xlu0 %v6747, 8
        %v6823 = vpop.permute.xlu0 %6822
        %6824 = vrot.lane.b32.xlu0 %v6748, 8
        %v6825 = vpop.permute.xlu0 %6824
        %6826 = vrot.lane.b32.xlu0 %v6749, 8
        %v6827 = vpop.permute.xlu0 %6826
        %6828 = vrot.lane.b32.xlu0 %v6750, 8
        %v6829 = vpop.permute.xlu0 %6828
        %6830 = vrot.lane.b32.xlu0 %v6751, 8
        %v6831 = vpop.permute.xlu0 %6830
        %6832 = vrot.lane.b32.xlu0 %v6752, 8
        %v6833 = vpop.permute.xlu0 %6832
        %6834 = vrot.lane.b32.xlu0 %v6753, 8
        %v6835 = vpop.permute.xlu0 %6834
        %6836 = vrot.lane.b32.xlu0 %v6754, 8
        %v6837 = vpop.permute.xlu0 %6836
        %6838 = vrot.lane.b32.xlu0 %v6755, 8
        %v6839 = vpop.permute.xlu0 %6838
        %6840 = vrot.lane.b32.xlu0 %v6756, 8
        %v6841 = vpop.permute.xlu0 %6840
        %6842 = vrot.lane.b32.xlu0 %v6757, 8
        %v6843 = vpop.permute.xlu0 %6842
        %6844 = vrot.lane.b32.xlu0 %v6758, 8
        %v6845 = vpop.permute.xlu0 %6844
        %6846 = vrot.lane.b32.xlu0 %v6759, 8
        %v6847 = vpop.permute.xlu0 %6846
        %6848 = vrot.lane.b32.xlu0 %v6760, 8
        %v6849 = vpop.permute.xlu0 %6848
        %6850 = vrot.lane.b32.xlu0 %v6761, 8
        %v6851 = vpop.permute.xlu0 %6850
        %6852 = vrot.lane.b32.xlu0 %v6762, 8
        %v6853 = vpop.permute.xlu0 %6852
        %6854 = vrot.lane.b32.xlu0 %v6763, 8
        %v6855 = vpop.permute.xlu0 %6854
        %6856 = vrot.lane.b32.xlu0 %v6764, 8
        %v6857 = vpop.permute.xlu0 %6856
        %6858 = vrot.lane.b32.xlu0 %v6765, 8
        %v6859 = vpop.permute.xlu0 %6858
        %6860 = vrot.lane.b32.xlu0 %v6766, 8
        %v6861 = vpop.permute.xlu0 %6860
        %6862 = vrot.lane.b32.xlu0 %v6767, 8
        %v6863 = vpop.permute.xlu0 %6862
        %v6896 = vsel %vm5389, %v6063, %v6801
        %v6897 = vsel %vm5389, %v6064, %v6803
        %v6898 = vsel %vm5389, %v6065, %v6805
        %v6899 = vsel %vm5389, %v6066, %v6807
        %v6900 = vsel %vm5389, %v6067, %v6809
        %v6901 = vsel %vm5389, %v6068, %v6811
        %v6902 = vsel %vm5389, %v6069, %v6813
        %v6903 = vsel %vm5389, %v6070, %v6815
        %v6904 = vsel %vm5389, %v6071, %v6817
        %v6905 = vsel %vm5389, %v6072, %v6819
        %v6906 = vsel %vm5389, %v6073, %v6821
        %v6907 = vsel %vm5389, %v6074, %v6823
        %v6908 = vsel %vm5389, %v6075, %v6825
        %v6909 = vsel %vm5389, %v6076, %v6827
        %v6910 = vsel %vm5389, %v6077, %v6829
        %v6911 = vsel %vm5389, %v6078, %v6831
        %v6912 = vsel %vm5389, %v6079, %v6833
        %v6913 = vsel %vm5389, %v6080, %v6835
        %v6914 = vsel %vm5389, %v6081, %v6837
        %v6915 = vsel %vm5389, %v6082, %v6839
        %v6916 = vsel %vm5389, %v6083, %v6841
        %v6917 = vsel %vm5389, %v6084, %v6843
        %v6918 = vsel %vm5389, %v6085, %v6845
        %v6919 = vsel %vm5389, %v6086, %v6847
        %v6920 = vsel %vm5389, %v6087, %v6849
        %v6921 = vsel %vm5389, %v6088, %v6851
        %v6922 = vsel %vm5389, %v6089, %v6853
        %v6923 = vsel %vm5389, %v6090, %v6855
        %v6924 = vsel %vm5389, %v6091, %v6857
        %v6925 = vsel %vm5389, %v6092, %v6859
        %v6926 = vsel %vm5389, %v6093, %v6861
        %v6927 = vsel %vm5389, %v6094, %v6863
        %v6928 = vcombine.low %v5390, %v5394
        %v6929 = vcombine.high %v5390, %v5394
        %v6931 = vunpack.c.l.s4 1983009808
        %v6932 = vunpack.c.0.s8 %v6931
        %v6933 = vlaneseq
        %v6934 = vshrl.u32 %v6933, 7
        %v6935 = vsub.s32 %v6932, %v6934
        %v6936 = vrot.slane %v6928, %v6935
        %v6938 = vunpack.c.l.s4 1983009808
        %v6939 = vunpack.c.0.s8 %v6938
        %v6940 = vlaneseq
        %v6941 = vshrl.u32 %v6940, 7
        %v6942 = vsub.s32 %v6939, %v6941
        %v6943 = vrot.slane %v6929, %v6942
        %v6944 = vcombine.low %v5392, %v5396
        %v6945 = vcombine.high %v5392, %v5396
        %v6947 = vunpack.c.l.s4 1983009808
        %v6948 = vunpack.c.0.s8 %v6947
        %v6949 = vlaneseq
        %v6950 = vshrl.u32 %v6949, 7
        %v6951 = vsub.s32 %v6948, %v6950
        %v6952 = vrot.slane %v6944, %v6951
        %v6954 = vunpack.c.l.s4 1983009808
        %v6955 = vunpack.c.0.s8 %v6954
        %v6956 = vlaneseq
        %v6957 = vshrl.u32 %v6956, 7
        %v6958 = vsub.s32 %v6955, %v6957
        %v6959 = vrot.slane %v6945, %v6958
        %v6960 = vcombine.low %v5398, %v5402
        %v6961 = vcombine.high %v5398, %v5402
        %v6963 = vunpack.c.l.s4 1983009808
        %v6964 = vunpack.c.0.s8 %v6963
        %v6965 = vlaneseq
        %v6966 = vshrl.u32 %v6965, 7
        %v6967 = vsub.s32 %v6964, %v6966
        %v6968 = vrot.slane %v6960, %v6967
        %v6970 = vunpack.c.l.s4 1983009808
        %v6971 = vunpack.c.0.s8 %v6970
        %v6972 = vlaneseq
        %v6973 = vshrl.u32 %v6972, 7
        %v6974 = vsub.s32 %v6971, %v6973
        %v6975 = vrot.slane %v6961, %v6974
        %v6976 = vcombine.low %v5400, %v5404
        %v6977 = vcombine.high %v5400, %v5404
        %v6979 = vunpack.c.l.s4 1983009808
        %v6980 = vunpack.c.0.s8 %v6979
        %v6981 = vlaneseq
        %v6982 = vshrl.u32 %v6981, 7
        %v6983 = vsub.s32 %v6980, %v6982
        %v6984 = vrot.slane %v6976, %v6983
        %v6986 = vunpack.c.l.s4 1983009808
        %v6987 = vunpack.c.0.s8 %v6986
        %v6988 = vlaneseq
        %v6989 = vshrl.u32 %v6988, 7
        %v6990 = vsub.s32 %v6987, %v6989
        %v6991 = vrot.slane %v6977, %v6990
        %v6992 = vcombine.low %v6936, %v6952
        %v6993 = vcombine.high %v6936, %v6952
        %v6995 = vunpack.c.l.s4 1934713408
        %v6996 = vunpack.c.0.s8 %v6995
        %v6997 = vlaneseq
        %v6998 = vshrl.u32 %v6997, 7
        %v6999 = vsub.s32 %v6996, %v6998
        %v7000 = vrot.slane %v6992, %v6999
        %v7002 = vunpack.c.l.s4 1934713408
        %v7003 = vunpack.c.0.s8 %v7002
        %v7004 = vlaneseq
        %v7005 = vshrl.u32 %v7004, 7
        %v7006 = vsub.s32 %v7003, %v7005
        %v7007 = vrot.slane %v6993, %v7006
        %v7008 = vcombine.low %v6943, %v6959
        %v7009 = vcombine.high %v6943, %v6959
        %v7011 = vunpack.c.l.s4 1934713408
        %v7012 = vunpack.c.0.s8 %v7011
        %v7013 = vlaneseq
        %v7014 = vshrl.u32 %v7013, 7
        %v7015 = vsub.s32 %v7012, %v7014
        %v7016 = vrot.slane %v7008, %v7015
        %v7018 = vunpack.c.l.s4 1934713408
        %v7019 = vunpack.c.0.s8 %v7018
        %v7020 = vlaneseq
        %v7021 = vshrl.u32 %v7020, 7
        %v7022 = vsub.s32 %v7019, %v7021
        %v7023 = vrot.slane %v7009, %v7022
        %v7024 = vcombine.low %v6968, %v6984
        %v7025 = vcombine.high %v6968, %v6984
        %v7027 = vunpack.c.l.s4 1934713408
        %v7028 = vunpack.c.0.s8 %v7027
        %v7029 = vlaneseq
        %v7030 = vshrl.u32 %v7029, 7
        %v7031 = vsub.s32 %v7028, %v7030
        %v7032 = vrot.slane %v7024, %v7031
        %v7034 = vunpack.c.l.s4 1934713408
        %v7035 = vunpack.c.0.s8 %v7034
        %v7036 = vlaneseq
        %v7037 = vshrl.u32 %v7036, 7
        %v7038 = vsub.s32 %v7035, %v7037
        %v7039 = vrot.slane %v7025, %v7038
        %v7040 = vcombine.low %v6975, %v6991
        %v7041 = vcombine.high %v6975, %v6991
        %v7043 = vunpack.c.l.s4 1934713408
        %v7044 = vunpack.c.0.s8 %v7043
        %v7045 = vlaneseq
        %v7046 = vshrl.u32 %v7045, 7
        %v7047 = vsub.s32 %v7044, %v7046
        %v7048 = vrot.slane %v7040, %v7047
        %v7050 = vunpack.c.l.s4 1934713408
        %v7051 = vunpack.c.0.s8 %v7050
        %v7052 = vlaneseq
        %v7053 = vshrl.u32 %v7052, 7
        %v7054 = vsub.s32 %v7051, %v7053
        %v7055 = vrot.slane %v7041, %v7054
        %v7056 = vcombine.low %v7000, %v7032
        %v7057 = vcombine.high %v7000, %v7032
        %v7058 = vcombine.low %v7007, %v7039
        %v7059 = vcombine.high %v7007, %v7039
        %v7060 = vcombine.low %v7016, %v7048
        %v7061 = vcombine.high %v7016, %v7048
        %v7062 = vcombine.low %v7023, %v7055
        %v7063 = vcombine.high %v7023, %v7055
        %v7064 = vcombine.low %v5406, %v5410
        %v7065 = vcombine.high %v5406, %v5410
        %v7067 = vunpack.c.l.s4 1983009808
        %v7068 = vunpack.c.0.s8 %v7067
        %v7069 = vlaneseq
        %v7070 = vshrl.u32 %v7069, 7
        %v7071 = vsub.s32 %v7068, %v7070
        %v7072 = vrot.slane %v7064, %v7071
        %v7074 = vunpack.c.l.s4 1983009808
        %v7075 = vunpack.c.0.s8 %v7074
        %v7076 = vlaneseq
        %v7077 = vshrl.u32 %v7076, 7
        %v7078 = vsub.s32 %v7075, %v7077
        %v7079 = vrot.slane %v7065, %v7078
        %v7080 = vcombine.low %v5408, %v5412
        %v7081 = vcombine.high %v5408, %v5412
        %v7083 = vunpack.c.l.s4 1983009808
        %v7084 = vunpack.c.0.s8 %v7083
        %v7085 = vlaneseq
        %v7086 = vshrl.u32 %v7085, 7
        %v7087 = vsub.s32 %v7084, %v7086
        %v7088 = vrot.slane %v7080, %v7087
        %v7090 = vunpack.c.l.s4 1983009808
        %v7091 = vunpack.c.0.s8 %v7090
        %v7092 = vlaneseq
        %v7093 = vshrl.u32 %v7092, 7
        %v7094 = vsub.s32 %v7091, %v7093
        %v7095 = vrot.slane %v7081, %v7094
        %v7096 = vcombine.low %v5414, %v5418
        %v7097 = vcombine.high %v5414, %v5418
        %v7099 = vunpack.c.l.s4 1983009808
        %v7100 = vunpack.c.0.s8 %v7099
        %v7101 = vlaneseq
        %v7102 = vshrl.u32 %v7101, 7
        %v7103 = vsub.s32 %v7100, %v7102
        %v7104 = vrot.slane %v7096, %v7103
        %v7106 = vunpack.c.l.s4 1983009808
        %v7107 = vunpack.c.0.s8 %v7106
        %v7108 = vlaneseq
        %v7109 = vshrl.u32 %v7108, 7
        %v7110 = vsub.s32 %v7107, %v7109
        %v7111 = vrot.slane %v7097, %v7110
        %v7112 = vcombine.low %v5416, %v5420
        %v7113 = vcombine.high %v5416, %v5420
        %v7115 = vunpack.c.l.s4 1983009808
        %v7116 = vunpack.c.0.s8 %v7115
        %v7117 = vlaneseq
        %v7118 = vshrl.u32 %v7117, 7
        %v7119 = vsub.s32 %v7116, %v7118
        %v7120 = vrot.slane %v7112, %v7119
        %v7122 = vunpack.c.l.s4 1983009808
        %v7123 = vunpack.c.0.s8 %v7122
        %v7124 = vlaneseq
        %v7125 = vshrl.u32 %v7124, 7
        %v7126 = vsub.s32 %v7123, %v7125
        %v7127 = vrot.slane %v7113, %v7126
        %v7128 = vcombine.low %v7072, %v7088
        %v7129 = vcombine.high %v7072, %v7088
        %v7131 = vunpack.c.l.s4 1934713408
        %v7132 = vunpack.c.0.s8 %v7131
        %v7133 = vlaneseq
        %v7134 = vshrl.u32 %v7133, 7
        %v7135 = vsub.s32 %v7132, %v7134
        %v7136 = vrot.slane %v7128, %v7135
        %v7138 = vunpack.c.l.s4 1934713408
        %v7139 = vunpack.c.0.s8 %v7138
        %v7140 = vlaneseq
        %v7141 = vshrl.u32 %v7140, 7
        %v7142 = vsub.s32 %v7139, %v7141
        %v7143 = vrot.slane %v7129, %v7142
        %v7144 = vcombine.low %v7079, %v7095
        %v7145 = vcombine.high %v7079, %v7095
        %v7147 = vunpack.c.l.s4 1934713408
        %v7148 = vunpack.c.0.s8 %v7147
        %v7149 = vlaneseq
        %v7150 = vshrl.u32 %v7149, 7
        %v7151 = vsub.s32 %v7148, %v7150
        %v7152 = vrot.slane %v7144, %v7151
        %v7154 = vunpack.c.l.s4 1934713408
        %v7155 = vunpack.c.0.s8 %v7154
        %v7156 = vlaneseq
        %v7157 = vshrl.u32 %v7156, 7
        %v7158 = vsub.s32 %v7155, %v7157
        %v7159 = vrot.slane %v7145, %v7158
        %v7160 = vcombine.low %v7104, %v7120
        %v7161 = vcombine.high %v7104, %v7120
        %v7163 = vunpack.c.l.s4 1934713408
        %v7164 = vunpack.c.0.s8 %v7163
        %v7165 = vlaneseq
        %v7166 = vshrl.u32 %v7165, 7
        %v7167 = vsub.s32 %v7164, %v7166
        %v7168 = vrot.slane %v7160, %v7167
        %v7170 = vunpack.c.l.s4 1934713408
        %v7171 = vunpack.c.0.s8 %v7170
        %v7172 = vlaneseq
        %v7173 = vshrl.u32 %v7172, 7
        %v7174 = vsub.s32 %v7171, %v7173
        %v7175 = vrot.slane %v7161, %v7174
        %v7176 = vcombine.low %v7111, %v7127
        %v7177 = vcombine.high %v7111, %v7127
        %v7179 = vunpack.c.l.s4 1934713408
        %v7180 = vunpack.c.0.s8 %v7179
        %v7181 = vlaneseq
        %v7182 = vshrl.u32 %v7181, 7
        %v7183 = vsub.s32 %v7180, %v7182
        %v7184 = vrot.slane %v7176, %v7183
        %v7186 = vunpack.c.l.s4 1934713408
        %v7187 = vunpack.c.0.s8 %v7186
        %v7188 = vlaneseq
        %v7189 = vshrl.u32 %v7188, 7
        %v7190 = vsub.s32 %v7187, %v7189
        %v7191 = vrot.slane %v7177, %v7190
        %v7192 = vcombine.low %v7136, %v7168
        %v7193 = vcombine.high %v7136, %v7168
        %v7194 = vcombine.low %v7143, %v7175
        %v7195 = vcombine.high %v7143, %v7175
        %v7196 = vcombine.low %v7152, %v7184
        %v7197 = vcombine.high %v7152, %v7184
        %v7198 = vcombine.low %v7159, %v7191
        %v7199 = vcombine.high %v7159, %v7191
        %v7200 = vcombine.low %v5391, %v5395
        %v7201 = vcombine.high %v5391, %v5395
        %v7203 = vunpack.c.l.s4 1983009808
        %v7204 = vunpack.c.0.s8 %v7203
        %v7205 = vlaneseq
        %v7206 = vshrl.u32 %v7205, 7
        %v7207 = vsub.s32 %v7204, %v7206
        %v7208 = vrot.slane %v7200, %v7207
        %v7210 = vunpack.c.l.s4 1983009808
        %v7211 = vunpack.c.0.s8 %v7210
        %v7212 = vlaneseq
        %v7213 = vshrl.u32 %v7212, 7
        %v7214 = vsub.s32 %v7211, %v7213
        %v7215 = vrot.slane %v7201, %v7214
        %v7216 = vcombine.low %v5393, %v5397
        %v7217 = vcombine.high %v5393, %v5397
        %v7219 = vunpack.c.l.s4 1983009808
        %v7220 = vunpack.c.0.s8 %v7219
        %v7221 = vlaneseq
        %v7222 = vshrl.u32 %v7221, 7
        %v7223 = vsub.s32 %v7220, %v7222
        %v7224 = vrot.slane %v7216, %v7223
        %v7226 = vunpack.c.l.s4 1983009808
        %v7227 = vunpack.c.0.s8 %v7226
        %v7228 = vlaneseq
        %v7229 = vshrl.u32 %v7228, 7
        %v7230 = vsub.s32 %v7227, %v7229
        %v7231 = vrot.slane %v7217, %v7230
        %v7232 = vcombine.low %v5399, %v5403
        %v7233 = vcombine.high %v5399, %v5403
        %v7235 = vunpack.c.l.s4 1983009808
        %v7236 = vunpack.c.0.s8 %v7235
        %v7237 = vlaneseq
        %v7238 = vshrl.u32 %v7237, 7
        %v7239 = vsub.s32 %v7236, %v7238
        %v7240 = vrot.slane %v7232, %v7239
        %v7242 = vunpack.c.l.s4 1983009808
        %v7243 = vunpack.c.0.s8 %v7242
        %v7244 = vlaneseq
        %v7245 = vshrl.u32 %v7244, 7
        %v7246 = vsub.s32 %v7243, %v7245
        %v7247 = vrot.slane %v7233, %v7246
        %v7248 = vcombine.low %v5401, %v5405
        %v7249 = vcombine.high %v5401, %v5405
        %v7251 = vunpack.c.l.s4 1983009808
        %v7252 = vunpack.c.0.s8 %v7251
        %v7253 = vlaneseq
        %v7254 = vshrl.u32 %v7253, 7
        %v7255 = vsub.s32 %v7252, %v7254
        %v7256 = vrot.slane %v7248, %v7255
        %v7258 = vunpack.c.l.s4 1983009808
        %v7259 = vunpack.c.0.s8 %v7258
        %v7260 = vlaneseq
        %v7261 = vshrl.u32 %v7260, 7
        %v7262 = vsub.s32 %v7259, %v7261
        %v7263 = vrot.slane %v7249, %v7262
        %v7264 = vcombine.low %v7208, %v7224
        %v7265 = vcombine.high %v7208, %v7224
        %v7267 = vunpack.c.l.s4 1934713408
        %v7268 = vunpack.c.0.s8 %v7267
        %v7269 = vlaneseq
        %v7270 = vshrl.u32 %v7269, 7
        %v7271 = vsub.s32 %v7268, %v7270
        %v7272 = vrot.slane %v7264, %v7271
        %v7274 = vunpack.c.l.s4 1934713408
        %v7275 = vunpack.c.0.s8 %v7274
        %v7276 = vlaneseq
        %v7277 = vshrl.u32 %v7276, 7
        %v7278 = vsub.s32 %v7275, %v7277
        %v7279 = vrot.slane %v7265, %v7278
        %v7280 = vcombine.low %v7215, %v7231
        %v7281 = vcombine.high %v7215, %v7231
        %v7283 = vunpack.c.l.s4 1934713408
        %v7284 = vunpack.c.0.s8 %v7283
        %v7285 = vlaneseq
        %v7286 = vshrl.u32 %v7285, 7
        %v7287 = vsub.s32 %v7284, %v7286
        %v7288 = vrot.slane %v7280, %v7287
        %v7290 = vunpack.c.l.s4 1934713408
        %v7291 = vunpack.c.0.s8 %v7290
        %v7292 = vlaneseq
        %v7293 = vshrl.u32 %v7292, 7
        %v7294 = vsub.s32 %v7291, %v7293
        %v7295 = vrot.slane %v7281, %v7294
        %v7296 = vcombine.low %v7240, %v7256
        %v7297 = vcombine.high %v7240, %v7256
        %v7299 = vunpack.c.l.s4 1934713408
        %v7300 = vunpack.c.0.s8 %v7299
        %v7301 = vlaneseq
        %v7302 = vshrl.u32 %v7301, 7
        %v7303 = vsub.s32 %v7300, %v7302
        %v7304 = vrot.slane %v7296, %v7303
        %v7306 = vunpack.c.l.s4 1934713408
        %v7307 = vunpack.c.0.s8 %v7306
        %v7308 = vlaneseq
        %v7309 = vshrl.u32 %v7308, 7
        %v7310 = vsub.s32 %v7307, %v7309
        %v7311 = vrot.slane %v7297, %v7310
        %v7312 = vcombine.low %v7247, %v7263
        %v7313 = vcombine.high %v7247, %v7263
        %v7315 = vunpack.c.l.s4 1934713408
        %v7316 = vunpack.c.0.s8 %v7315
        %v7317 = vlaneseq
        %v7318 = vshrl.u32 %v7317, 7
        %v7319 = vsub.s32 %v7316, %v7318
        %v7320 = vrot.slane %v7312, %v7319
        %v7322 = vunpack.c.l.s4 1934713408
        %v7323 = vunpack.c.0.s8 %v7322
        %v7324 = vlaneseq
        %v7325 = vshrl.u32 %v7324, 7
        %v7326 = vsub.s32 %v7323, %v7325
        %v7327 = vrot.slane %v7313, %v7326
        %v7328 = vcombine.low %v7272, %v7304
        %v7329 = vcombine.high %v7272, %v7304
        %v7330 = vcombine.low %v7279, %v7311
        %v7331 = vcombine.high %v7279, %v7311
        %v7332 = vcombine.low %v7288, %v7320
        %v7333 = vcombine.high %v7288, %v7320
        %v7334 = vcombine.low %v7295, %v7327
        %v7335 = vcombine.high %v7295, %v7327
        %v7336 = vcombine.low %v5407, %v5411
        %v7337 = vcombine.high %v5407, %v5411
        %v7339 = vunpack.c.l.s4 1983009808
        %v7340 = vunpack.c.0.s8 %v7339
        %v7341 = vlaneseq
        %v7342 = vshrl.u32 %v7341, 7
        %v7343 = vsub.s32 %v7340, %v7342
        %v7344 = vrot.slane %v7336, %v7343
        %v7346 = vunpack.c.l.s4 1983009808
        %v7347 = vunpack.c.0.s8 %v7346
        %v7348 = vlaneseq
        %v7349 = vshrl.u32 %v7348, 7
        %v7350 = vsub.s32 %v7347, %v7349
        %v7351 = vrot.slane %v7337, %v7350
        %v7352 = vcombine.low %v5409, %v5413
        %v7353 = vcombine.high %v5409, %v5413
        %v7355 = vunpack.c.l.s4 1983009808
        %v7356 = vunpack.c.0.s8 %v7355
        %v7357 = vlaneseq
        %v7358 = vshrl.u32 %v7357, 7
        %v7359 = vsub.s32 %v7356, %v7358
        %v7360 = vrot.slane %v7352, %v7359
        %v7362 = vunpack.c.l.s4 1983009808
        %v7363 = vunpack.c.0.s8 %v7362
        %v7364 = vlaneseq
        %v7365 = vshrl.u32 %v7364, 7
        %v7366 = vsub.s32 %v7363, %v7365
        %v7367 = vrot.slane %v7353, %v7366
        %v7368 = vcombine.low %v5415, %v5419
        %v7369 = vcombine.high %v5415, %v5419
        %v7371 = vunpack.c.l.s4 1983009808
        %v7372 = vunpack.c.0.s8 %v7371
        %v7373 = vlaneseq
        %v7374 = vshrl.u32 %v7373, 7
        %v7375 = vsub.s32 %v7372, %v7374
        %v7376 = vrot.slane %v7368, %v7375
        %v7378 = vunpack.c.l.s4 1983009808
        %v7379 = vunpack.c.0.s8 %v7378
        %v7380 = vlaneseq
        %v7381 = vshrl.u32 %v7380, 7
        %v7382 = vsub.s32 %v7379, %v7381
        %v7383 = vrot.slane %v7369, %v7382
        %v7384 = vcombine.low %v5417, %v5421
        %v7385 = vcombine.high %v5417, %v5421
        %v7387 = vunpack.c.l.s4 1983009808
        %v7388 = vunpack.c.0.s8 %v7387
        %v7389 = vlaneseq
        %v7390 = vshrl.u32 %v7389, 7
        %v7391 = vsub.s32 %v7388, %v7390
        %v7392 = vrot.slane %v7384, %v7391
        %v7394 = vunpack.c.l.s4 1983009808
        %v7395 = vunpack.c.0.s8 %v7394
        %v7396 = vlaneseq
        %v7397 = vshrl.u32 %v7396, 7
        %v7398 = vsub.s32 %v7395, %v7397
        %v7399 = vrot.slane %v7385, %v7398
        %v7400 = vcombine.low %v7344, %v7360
        %v7401 = vcombine.high %v7344, %v7360
        %v7403 = vunpack.c.l.s4 1934713408
        %v7404 = vunpack.c.0.s8 %v7403
        %v7405 = vlaneseq
        %v7406 = vshrl.u32 %v7405, 7
        %v7407 = vsub.s32 %v7404, %v7406
        %v7408 = vrot.slane %v7400, %v7407
        %v7410 = vunpack.c.l.s4 1934713408
        %v7411 = vunpack.c.0.s8 %v7410
        %v7412 = vlaneseq
        %v7413 = vshrl.u32 %v7412, 7
        %v7414 = vsub.s32 %v7411, %v7413
        %v7415 = vrot.slane %v7401, %v7414
        %v7416 = vcombine.low %v7351, %v7367
        %v7417 = vcombine.high %v7351, %v7367
        %v7419 = vunpack.c.l.s4 1934713408
        %v7420 = vunpack.c.0.s8 %v7419
        %v7421 = vlaneseq
        %v7422 = vshrl.u32 %v7421, 7
        %v7423 = vsub.s32 %v7420, %v7422
        %v7424 = vrot.slane %v7416, %v7423
        %v7426 = vunpack.c.l.s4 1934713408
        %v7427 = vunpack.c.0.s8 %v7426
        %v7428 = vlaneseq
        %v7429 = vshrl.u32 %v7428, 7
        %v7430 = vsub.s32 %v7427, %v7429
        %v7431 = vrot.slane %v7417, %v7430
        %v7432 = vcombine.low %v7376, %v7392
        %v7433 = vcombine.high %v7376, %v7392
        %v7435 = vunpack.c.l.s4 1934713408
        %v7436 = vunpack.c.0.s8 %v7435
        %v7437 = vlaneseq
        %v7438 = vshrl.u32 %v7437, 7
        %v7439 = vsub.s32 %v7436, %v7438
        %v7440 = vrot.slane %v7432, %v7439
        %v7442 = vunpack.c.l.s4 1934713408
        %v7443 = vunpack.c.0.s8 %v7442
        %v7444 = vlaneseq
        %v7445 = vshrl.u32 %v7444, 7
        %v7446 = vsub.s32 %v7443, %v7445
        %v7447 = vrot.slane %v7433, %v7446
        %v7448 = vcombine.low %v7383, %v7399
        %v7449 = vcombine.high %v7383, %v7399
        %v7451 = vunpack.c.l.s4 1934713408
        %v7452 = vunpack.c.0.s8 %v7451
        %v7453 = vlaneseq
        %v7454 = vshrl.u32 %v7453, 7
        %v7455 = vsub.s32 %v7452, %v7454
        %v7456 = vrot.slane %v7448, %v7455
        %v7458 = vunpack.c.l.s4 1934713408
        %v7459 = vunpack.c.0.s8 %v7458
        %v7460 = vlaneseq
        %v7461 = vshrl.u32 %v7460, 7
        %v7462 = vsub.s32 %v7459, %v7461
        %v7463 = vrot.slane %v7449, %v7462
        %v7464 = vcombine.low %v7408, %v7440
        %v7465 = vcombine.high %v7408, %v7440
        %v7466 = vcombine.low %v7415, %v7447
        %v7467 = vcombine.high %v7415, %v7447
        %v7468 = vcombine.low %v7424, %v7456
        %v7469 = vcombine.high %v7424, %v7456
        %v7470 = vcombine.low %v7431, %v7463
        %v7471 = vcombine.high %v7431, %v7463
        %7474 = vrot.lane.b32.xlu0 %v7057, 16
        %v7475 = vpop.permute.xlu0 %7474
        %7476 = vrot.lane.b32.xlu0 %v7193, 16
        %v7477 = vpop.permute.xlu0 %7476
        %7482 = vrot.lane.b32.xlu0 %v7058, 32
        %v7483 = vpop.permute.xlu0 %7482
        %7484 = vrot.lane.b32.xlu0 %v7194, 32
        %v7485 = vpop.permute.xlu0 %7484
        %7490 = vrot.lane.b32.xlu0 %v7059, 48
        %v7491 = vpop.permute.xlu0 %7490
        %7492 = vrot.lane.b32.xlu0 %v7195, 48
        %v7493 = vpop.permute.xlu0 %7492
        %7498 = vrot.lane.b32.xlu0 %v7060, 64
        %v7499 = vpop.permute.xlu0 %7498
        %7500 = vrot.lane.b32.xlu0 %v7196, 64
        %v7501 = vpop.permute.xlu0 %7500
        %7506 = vrot.lane.b32.xlu0 %v7061, 80
        %v7507 = vpop.permute.xlu0 %7506
        %7508 = vrot.lane.b32.xlu0 %v7197, 80
        %v7509 = vpop.permute.xlu0 %7508
        %7514 = vrot.lane.b32.xlu0 %v7062, 96
        %v7515 = vpop.permute.xlu0 %7514
        %7516 = vrot.lane.b32.xlu0 %v7198, 96
        %v7517 = vpop.permute.xlu0 %7516
        %7522 = vrot.lane.b32.xlu0 %v7063, 112
        %v7523 = vpop.permute.xlu0 %7522
        %7524 = vrot.lane.b32.xlu0 %v7199, 112
        %v7525 = vpop.permute.xlu0 %7524
        %7530 = vrot.lane.b32.xlu0 %v7329, 16
        %v7531 = vpop.permute.xlu0 %7530
        %7532 = vrot.lane.b32.xlu0 %v7465, 16
        %v7533 = vpop.permute.xlu0 %7532
        %7538 = vrot.lane.b32.xlu0 %v7330, 32
        %v7539 = vpop.permute.xlu0 %7538
        %7540 = vrot.lane.b32.xlu0 %v7466, 32
        %v7541 = vpop.permute.xlu0 %7540
        %7546 = vrot.lane.b32.xlu0 %v7331, 48
        %v7547 = vpop.permute.xlu0 %7546
        %7548 = vrot.lane.b32.xlu0 %v7467, 48
        %v7549 = vpop.permute.xlu0 %7548
        %7554 = vrot.lane.b32.xlu0 %v7332, 64
        %v7555 = vpop.permute.xlu0 %7554
        %7556 = vrot.lane.b32.xlu0 %v7468, 64
        %v7557 = vpop.permute.xlu0 %7556
        %7562 = vrot.lane.b32.xlu0 %v7333, 80
        %v7563 = vpop.permute.xlu0 %7562
        %7564 = vrot.lane.b32.xlu0 %v7469, 80
        %v7565 = vpop.permute.xlu0 %7564
        %7570 = vrot.lane.b32.xlu0 %v7334, 96
        %v7571 = vpop.permute.xlu0 %7570
        %7572 = vrot.lane.b32.xlu0 %v7470, 96
        %v7573 = vpop.permute.xlu0 %7572
        %7578 = vrot.lane.b32.xlu0 %v7335, 112
        %v7579 = vpop.permute.xlu0 %7578
        %7580 = vrot.lane.b32.xlu0 %v7471, 112
        %v7581 = vpop.permute.xlu0 %7580
        %v7584 = vsel %vm716, %v7056, %v7475
        %v7585 = vsel %vm716, %v7192, %v7477
        %vm7586 = vcmask 261120
        %v7587 = vsel %vm7586, %v7584, %v7483
        %v7588 = vsel %vm7586, %v7585, %v7485
        %vm7589 = vcmask 392192
        %v7590 = vsel %vm7589, %v7587, %v7491
        %v7591 = vsel %vm7589, %v7588, %v7493
        %vm7592 = vcmask 523264
        %v7593 = vsel %vm7592, %v7590, %v7499
        %v7594 = vsel %vm7592, %v7591, %v7501
        %vm7595 = vcmask 654336
        %v7596 = vsel %vm7595, %v7593, %v7507
        %v7597 = vsel %vm7595, %v7594, %v7509
        %vm7598 = vcmask 785408
        %v7599 = vsel %vm7598, %v7596, %v7515
        %v7600 = vsel %vm7598, %v7597, %v7517
        %vm7601 = vcmask 916480
        %v7602 = vsel %vm7601, %v7599, %v7523
        %v7603 = vsel %vm7601, %v7600, %v7525
        %v7604 = vsel %vm716, %v7328, %v7531
        %v7605 = vsel %vm716, %v7464, %v7533
        %v7606 = vsel %vm7586, %v7604, %v7539
        %v7607 = vsel %vm7586, %v7605, %v7541
        %v7608 = vsel %vm7589, %v7606, %v7547
        %v7609 = vsel %vm7589, %v7607, %v7549
        %v7610 = vsel %vm7592, %v7608, %v7555
        %v7611 = vsel %vm7592, %v7609, %v7557
        %v7612 = vsel %vm7595, %v7610, %v7563
        %v7613 = vsel %vm7595, %v7611, %v7565
        %v7614 = vsel %vm7598, %v7612, %v7571
        %v7615 = vsel %vm7598, %v7613, %v7573
        %v7616 = vsel %vm7601, %v7614, %v7579
        %v7617 = vsel %vm7601, %v7615, %v7581
        %7618 = vst [vmem:[%s681] sm:$0xff] %v7602
        %7619 = vst [vmem:[%s681 + $0x8] sm:$0xff] %v7616
        %7620 = vst [vmem:[%s681 + $0x10] sm:$0xff] %v7603
        %7621 = vst [vmem:[%s681 + $0x18] sm:$0xff] %v7617
        %v7622 = vcombine.low %v6896, %v6900
        %v7623 = vcombine.high %v6896, %v6900
        %v7625 = vunpack.c.l.s4 1983009808
        %v7626 = vunpack.c.0.s8 %v7625
        %v7627 = vlaneseq
        %v7628 = vshrl.u32 %v7627, 7
        %v7629 = vsub.s32 %v7626, %v7628
        %v7630 = vrot.slane %v7622, %v7629
        %v7632 = vunpack.c.l.s4 1983009808
        %v7633 = vunpack.c.0.s8 %v7632
        %v7634 = vlaneseq
        %v7635 = vshrl.u32 %v7634, 7
        %v7636 = vsub.s32 %v7633, %v7635
        %v7637 = vrot.slane %v7623, %v7636
        %v7638 = vcombine.low %v6898, %v6902
        %v7639 = vcombine.high %v6898, %v6902
        %v7641 = vunpack.c.l.s4 1983009808
        %v7642 = vunpack.c.0.s8 %v7641
        %v7643 = vlaneseq
        %v7644 = vshrl.u32 %v7643, 7
        %v7645 = vsub.s32 %v7642, %v7644
        %v7646 = vrot.slane %v7638, %v7645
        %v7648 = vunpack.c.l.s4 1983009808
        %v7649 = vunpack.c.0.s8 %v7648
        %v7650 = vlaneseq
        %v7651 = vshrl.u32 %v7650, 7
        %v7652 = vsub.s32 %v7649, %v7651
        %v7653 = vrot.slane %v7639, %v7652
        %v7654 = vcombine.low %v6904, %v6908
        %v7655 = vcombine.high %v6904, %v6908
        %v7657 = vunpack.c.l.s4 1983009808
        %v7658 = vunpack.c.0.s8 %v7657
        %v7659 = vlaneseq
        %v7660 = vshrl.u32 %v7659, 7
        %v7661 = vsub.s32 %v7658, %v7660
        %v7662 = vrot.slane %v7654, %v7661
        %v7664 = vunpack.c.l.s4 1983009808
        %v7665 = vunpack.c.0.s8 %v7664
        %v7666 = vlaneseq
        %v7667 = vshrl.u32 %v7666, 7
        %v7668 = vsub.s32 %v7665, %v7667
        %v7669 = vrot.slane %v7655, %v7668
        %v7670 = vcombine.low %v6906, %v6910
        %v7671 = vcombine.high %v6906, %v6910
        %v7673 = vunpack.c.l.s4 1983009808
        %v7674 = vunpack.c.0.s8 %v7673
        %v7675 = vlaneseq
        %v7676 = vshrl.u32 %v7675, 7
        %v7677 = vsub.s32 %v7674, %v7676
        %v7678 = vrot.slane %v7670, %v7677
        %v7680 = vunpack.c.l.s4 1983009808
        %v7681 = vunpack.c.0.s8 %v7680
        %v7682 = vlaneseq
        %v7683 = vshrl.u32 %v7682, 7
        %v7684 = vsub.s32 %v7681, %v7683
        %v7685 = vrot.slane %v7671, %v7684
        %v7686 = vcombine.low %v7630, %v7646
        %v7687 = vcombine.high %v7630, %v7646
        %v7689 = vunpack.c.l.s4 1934713408
        %v7690 = vunpack.c.0.s8 %v7689
        %v7691 = vlaneseq
        %v7692 = vshrl.u32 %v7691, 7
        %v7693 = vsub.s32 %v7690, %v7692
        %v7694 = vrot.slane %v7686, %v7693
        %v7696 = vunpack.c.l.s4 1934713408
        %v7697 = vunpack.c.0.s8 %v7696
        %v7698 = vlaneseq
        %v7699 = vshrl.u32 %v7698, 7
        %v7700 = vsub.s32 %v7697, %v7699
        %v7701 = vrot.slane %v7687, %v7700
        %v7702 = vcombine.low %v7637, %v7653
        %v7703 = vcombine.high %v7637, %v7653
        %v7705 = vunpack.c.l.s4 1934713408
        %v7706 = vunpack.c.0.s8 %v7705
        %v7707 = vlaneseq
        %v7708 = vshrl.u32 %v7707, 7
        %v7709 = vsub.s32 %v7706, %v7708
        %v7710 = vrot.slane %v7702, %v7709
        %v7712 = vunpack.c.l.s4 1934713408
        %v7713 = vunpack.c.0.s8 %v7712
        %v7714 = vlaneseq
        %v7715 = vshrl.u32 %v7714, 7
        %v7716 = vsub.s32 %v7713, %v7715
        %v7717 = vrot.slane %v7703, %v7716
        %v7718 = vcombine.low %v7662, %v7678
        %v7719 = vcombine.high %v7662, %v7678
        %v7721 = vunpack.c.l.s4 1934713408
        %v7722 = vunpack.c.0.s8 %v7721
        %v7723 = vlaneseq
        %v7724 = vshrl.u32 %v7723, 7
        %v7725 = vsub.s32 %v7722, %v7724
        %v7726 = vrot.slane %v7718, %v7725
        %v7728 = vunpack.c.l.s4 1934713408
        %v7729 = vunpack.c.0.s8 %v7728
        %v7730 = vlaneseq
        %v7731 = vshrl.u32 %v7730, 7
        %v7732 = vsub.s32 %v7729, %v7731
        %v7733 = vrot.slane %v7719, %v7732
        %v7734 = vcombine.low %v7669, %v7685
        %v7735 = vcombine.high %v7669, %v7685
        %v7737 = vunpack.c.l.s4 1934713408
        %v7738 = vunpack.c.0.s8 %v7737
        %v7739 = vlaneseq
        %v7740 = vshrl.u32 %v7739, 7
        %v7741 = vsub.s32 %v7738, %v7740
        %v7742 = vrot.slane %v7734, %v7741
        %v7744 = vunpack.c.l.s4 1934713408
        %v7745 = vunpack.c.0.s8 %v7744
        %v7746 = vlaneseq
        %v7747 = vshrl.u32 %v7746, 7
        %v7748 = vsub.s32 %v7745, %v7747
        %v7749 = vrot.slane %v7735, %v7748
        %v7750 = vcombine.low %v7694, %v7726
        %v7751 = vcombine.high %v7694, %v7726
        %v7752 = vcombine.low %v7701, %v7733
        %v7753 = vcombine.high %v7701, %v7733
        %v7754 = vcombine.low %v7710, %v7742
        %v7755 = vcombine.high %v7710, %v7742
        %v7756 = vcombine.low %v7717, %v7749
        %v7757 = vcombine.high %v7717, %v7749
        %v7758 = vcombine.low %v6912, %v6916
        %v7759 = vcombine.high %v6912, %v6916
        %v7761 = vunpack.c.l.s4 1983009808
        %v7762 = vunpack.c.0.s8 %v7761
        %v7763 = vlaneseq
        %v7764 = vshrl.u32 %v7763, 7
        %v7765 = vsub.s32 %v7762, %v7764
        %v7766 = vrot.slane %v7758, %v7765
        %v7768 = vunpack.c.l.s4 1983009808
        %v7769 = vunpack.c.0.s8 %v7768
        %v7770 = vlaneseq
        %v7771 = vshrl.u32 %v7770, 7
        %v7772 = vsub.s32 %v7769, %v7771
        %v7773 = vrot.slane %v7759, %v7772
        %v7774 = vcombine.low %v6914, %v6918
        %v7775 = vcombine.high %v6914, %v6918
        %v7777 = vunpack.c.l.s4 1983009808
        %v7778 = vunpack.c.0.s8 %v7777
        %v7779 = vlaneseq
        %v7780 = vshrl.u32 %v7779, 7
        %v7781 = vsub.s32 %v7778, %v7780
        %v7782 = vrot.slane %v7774, %v7781
        %v7784 = vunpack.c.l.s4 1983009808
        %v7785 = vunpack.c.0.s8 %v7784
        %v7786 = vlaneseq
        %v7787 = vshrl.u32 %v7786, 7
        %v7788 = vsub.s32 %v7785, %v7787
        %v7789 = vrot.slane %v7775, %v7788
        %v7790 = vcombine.low %v6920, %v6924
        %v7791 = vcombine.high %v6920, %v6924
        %v7793 = vunpack.c.l.s4 1983009808
        %v7794 = vunpack.c.0.s8 %v7793
        %v7795 = vlaneseq
        %v7796 = vshrl.u32 %v7795, 7
        %v7797 = vsub.s32 %v7794, %v7796
        %v7798 = vrot.slane %v7790, %v7797
        %v7800 = vunpack.c.l.s4 1983009808
        %v7801 = vunpack.c.0.s8 %v7800
        %v7802 = vlaneseq
        %v7803 = vshrl.u32 %v7802, 7
        %v7804 = vsub.s32 %v7801, %v7803
        %v7805 = vrot.slane %v7791, %v7804
        %v7806 = vcombine.low %v6922, %v6926
        %v7807 = vcombine.high %v6922, %v6926
        %v7809 = vunpack.c.l.s4 1983009808
        %v7810 = vunpack.c.0.s8 %v7809
        %v7811 = vlaneseq
        %v7812 = vshrl.u32 %v7811, 7
        %v7813 = vsub.s32 %v7810, %v7812
        %v7814 = vrot.slane %v7806, %v7813
        %v7816 = vunpack.c.l.s4 1983009808
        %v7817 = vunpack.c.0.s8 %v7816
        %v7818 = vlaneseq
        %v7819 = vshrl.u32 %v7818, 7
        %v7820 = vsub.s32 %v7817, %v7819
        %v7821 = vrot.slane %v7807, %v7820
        %v7822 = vcombine.low %v7766, %v7782
        %v7823 = vcombine.high %v7766, %v7782
        %v7825 = vunpack.c.l.s4 1934713408
        %v7826 = vunpack.c.0.s8 %v7825
        %v7827 = vlaneseq
        %v7828 = vshrl.u32 %v7827, 7
        %v7829 = vsub.s32 %v7826, %v7828
        %v7830 = vrot.slane %v7822, %v7829
        %v7832 = vunpack.c.l.s4 1934713408
        %v7833 = vunpack.c.0.s8 %v7832
        %v7834 = vlaneseq
        %v7835 = vshrl.u32 %v7834, 7
        %v7836 = vsub.s32 %v7833, %v7835
        %v7837 = vrot.slane %v7823, %v7836
        %v7838 = vcombine.low %v7773, %v7789
        %v7839 = vcombine.high %v7773, %v7789
        %v7841 = vunpack.c.l.s4 1934713408
        %v7842 = vunpack.c.0.s8 %v7841
        %v7843 = vlaneseq
        %v7844 = vshrl.u32 %v7843, 7
        %v7845 = vsub.s32 %v7842, %v7844
        %v7846 = vrot.slane %v7838, %v7845
        %v7848 = vunpack.c.l.s4 1934713408
        %v7849 = vunpack.c.0.s8 %v7848
        %v7850 = vlaneseq
        %v7851 = vshrl.u32 %v7850, 7
        %v7852 = vsub.s32 %v7849, %v7851
        %v7853 = vrot.slane %v7839, %v7852
        %v7854 = vcombine.low %v7798, %v7814
        %v7855 = vcombine.high %v7798, %v7814
        %v7857 = vunpack.c.l.s4 1934713408
        %v7858 = vunpack.c.0.s8 %v7857
        %v7859 = vlaneseq
        %v7860 = vshrl.u32 %v7859, 7
        %v7861 = vsub.s32 %v7858, %v7860
        %v7862 = vrot.slane %v7854, %v7861
        %v7864 = vunpack.c.l.s4 1934713408
        %v7865 = vunpack.c.0.s8 %v7864
        %v7866 = vlaneseq
        %v7867 = vshrl.u32 %v7866, 7
        %v7868 = vsub.s32 %v7865, %v7867
        %v7869 = vrot.slane %v7855, %v7868
        %v7870 = vcombine.low %v7805, %v7821
        %v7871 = vcombine.high %v7805, %v7821
        %v7873 = vunpack.c.l.s4 1934713408
        %v7874 = vunpack.c.0.s8 %v7873
        %v7875 = vlaneseq
        %v7876 = vshrl.u32 %v7875, 7
        %v7877 = vsub.s32 %v7874, %v7876
        %v7878 = vrot.slane %v7870, %v7877
        %v7880 = vunpack.c.l.s4 1934713408
        %v7881 = vunpack.c.0.s8 %v7880
        %v7882 = vlaneseq
        %v7883 = vshrl.u32 %v7882, 7
        %v7884 = vsub.s32 %v7881, %v7883
        %v7885 = vrot.slane %v7871, %v7884
        %v7886 = vcombine.low %v7830, %v7862
        %v7887 = vcombine.high %v7830, %v7862
        %v7888 = vcombine.low %v7837, %v7869
        %v7889 = vcombine.high %v7837, %v7869
        %v7890 = vcombine.low %v7846, %v7878
        %v7891 = vcombine.high %v7846, %v7878
        %v7892 = vcombine.low %v7853, %v7885
        %v7893 = vcombine.high %v7853, %v7885
        %v7894 = vcombine.low %v6897, %v6901
        %v7895 = vcombine.high %v6897, %v6901
        %v7897 = vunpack.c.l.s4 1983009808
        %v7898 = vunpack.c.0.s8 %v7897
        %v7899 = vlaneseq
        %v7900 = vshrl.u32 %v7899, 7
        %v7901 = vsub.s32 %v7898, %v7900
        %v7902 = vrot.slane %v7894, %v7901
        %v7904 = vunpack.c.l.s4 1983009808
        %v7905 = vunpack.c.0.s8 %v7904
        %v7906 = vlaneseq
        %v7907 = vshrl.u32 %v7906, 7
        %v7908 = vsub.s32 %v7905, %v7907
        %v7909 = vrot.slane %v7895, %v7908
        %v7910 = vcombine.low %v6899, %v6903
        %v7911 = vcombine.high %v6899, %v6903
        %v7913 = vunpack.c.l.s4 1983009808
        %v7914 = vunpack.c.0.s8 %v7913
        %v7915 = vlaneseq
        %v7916 = vshrl.u32 %v7915, 7
        %v7917 = vsub.s32 %v7914, %v7916
        %v7918 = vrot.slane %v7910, %v7917
        %v7920 = vunpack.c.l.s4 1983009808
        %v7921 = vunpack.c.0.s8 %v7920
        %v7922 = vlaneseq
        %v7923 = vshrl.u32 %v7922, 7
        %v7924 = vsub.s32 %v7921, %v7923
        %v7925 = vrot.slane %v7911, %v7924
        %v7926 = vcombine.low %v6905, %v6909
        %v7927 = vcombine.high %v6905, %v6909
        %v7929 = vunpack.c.l.s4 1983009808
        %v7930 = vunpack.c.0.s8 %v7929
        %v7931 = vlaneseq
        %v7932 = vshrl.u32 %v7931, 7
        %v7933 = vsub.s32 %v7930, %v7932
        %v7934 = vrot.slane %v7926, %v7933
        %v7936 = vunpack.c.l.s4 1983009808
        %v7937 = vunpack.c.0.s8 %v7936
        %v7938 = vlaneseq
        %v7939 = vshrl.u32 %v7938, 7
        %v7940 = vsub.s32 %v7937, %v7939
        %v7941 = vrot.slane %v7927, %v7940
        %v7942 = vcombine.low %v6907, %v6911
        %v7943 = vcombine.high %v6907, %v6911
        %v7945 = vunpack.c.l.s4 1983009808
        %v7946 = vunpack.c.0.s8 %v7945
        %v7947 = vlaneseq
        %v7948 = vshrl.u32 %v7947, 7
        %v7949 = vsub.s32 %v7946, %v7948
        %v7950 = vrot.slane %v7942, %v7949
        %v7952 = vunpack.c.l.s4 1983009808
        %v7953 = vunpack.c.0.s8 %v7952
        %v7954 = vlaneseq
        %v7955 = vshrl.u32 %v7954, 7
        %v7956 = vsub.s32 %v7953, %v7955
        %v7957 = vrot.slane %v7943, %v7956
        %v7958 = vcombine.low %v7902, %v7918
        %v7959 = vcombine.high %v7902, %v7918
        %v7961 = vunpack.c.l.s4 1934713408
        %v7962 = vunpack.c.0.s8 %v7961
        %v7963 = vlaneseq
        %v7964 = vshrl.u32 %v7963, 7
        %v7965 = vsub.s32 %v7962, %v7964
        %v7966 = vrot.slane %v7958, %v7965
        %v7968 = vunpack.c.l.s4 1934713408
        %v7969 = vunpack.c.0.s8 %v7968
        %v7970 = vlaneseq
        %v7971 = vshrl.u32 %v7970, 7
        %v7972 = vsub.s32 %v7969, %v7971
        %v7973 = vrot.slane %v7959, %v7972
        %v7974 = vcombine.low %v7909, %v7925
        %v7975 = vcombine.high %v7909, %v7925
        %v7977 = vunpack.c.l.s4 1934713408
        %v7978 = vunpack.c.0.s8 %v7977
        %v7979 = vlaneseq
        %v7980 = vshrl.u32 %v7979, 7
        %v7981 = vsub.s32 %v7978, %v7980
        %v7982 = vrot.slane %v7974, %v7981
        %v7984 = vunpack.c.l.s4 1934713408
        %v7985 = vunpack.c.0.s8 %v7984
        %v7986 = vlaneseq
        %v7987 = vshrl.u32 %v7986, 7
        %v7988 = vsub.s32 %v7985, %v7987
        %v7989 = vrot.slane %v7975, %v7988
        %v7990 = vcombine.low %v7934, %v7950
        %v7991 = vcombine.high %v7934, %v7950
        %v7993 = vunpack.c.l.s4 1934713408
        %v7994 = vunpack.c.0.s8 %v7993
        %v7995 = vlaneseq
        %v7996 = vshrl.u32 %v7995, 7
        %v7997 = vsub.s32 %v7994, %v7996
        %v7998 = vrot.slane %v7990, %v7997
        %v8000 = vunpack.c.l.s4 1934713408
        %v8001 = vunpack.c.0.s8 %v8000
        %v8002 = vlaneseq
        %v8003 = vshrl.u32 %v8002, 7
        %v8004 = vsub.s32 %v8001, %v8003
        %v8005 = vrot.slane %v7991, %v8004
        %v8006 = vcombine.low %v7941, %v7957
        %v8007 = vcombine.high %v7941, %v7957
        %v8009 = vunpack.c.l.s4 1934713408
        %v8010 = vunpack.c.0.s8 %v8009
        %v8011 = vlaneseq
        %v8012 = vshrl.u32 %v8011, 7
        %v8013 = vsub.s32 %v8010, %v8012
        %v8014 = vrot.slane %v8006, %v8013
        %v8016 = vunpack.c.l.s4 1934713408
        %v8017 = vunpack.c.0.s8 %v8016
        %v8018 = vlaneseq
        %v8019 = vshrl.u32 %v8018, 7
        %v8020 = vsub.s32 %v8017, %v8019
        %v8021 = vrot.slane %v8007, %v8020
        %v8022 = vcombine.low %v7966, %v7998
        %v8023 = vcombine.high %v7966, %v7998
        %v8024 = vcombine.low %v7973, %v8005
        %v8025 = vcombine.high %v7973, %v8005
        %v8026 = vcombine.low %v7982, %v8014
        %v8027 = vcombine.high %v7982, %v8014
        %v8028 = vcombine.low %v7989, %v8021
        %v8029 = vcombine.high %v7989, %v8021
        %v8030 = vcombine.low %v6913, %v6917
        %v8031 = vcombine.high %v6913, %v6917
        %v8033 = vunpack.c.l.s4 1983009808
        %v8034 = vunpack.c.0.s8 %v8033
        %v8035 = vlaneseq
        %v8036 = vshrl.u32 %v8035, 7
        %v8037 = vsub.s32 %v8034, %v8036
        %v8038 = vrot.slane %v8030, %v8037
        %v8040 = vunpack.c.l.s4 1983009808
        %v8041 = vunpack.c.0.s8 %v8040
        %v8042 = vlaneseq
        %v8043 = vshrl.u32 %v8042, 7
        %v8044 = vsub.s32 %v8041, %v8043
        %v8045 = vrot.slane %v8031, %v8044
        %v8046 = vcombine.low %v6915, %v6919
        %v8047 = vcombine.high %v6915, %v6919
        %v8049 = vunpack.c.l.s4 1983009808
        %v8050 = vunpack.c.0.s8 %v8049
        %v8051 = vlaneseq
        %v8052 = vshrl.u32 %v8051, 7
        %v8053 = vsub.s32 %v8050, %v8052
        %v8054 = vrot.slane %v8046, %v8053
        %v8056 = vunpack.c.l.s4 1983009808
        %v8057 = vunpack.c.0.s8 %v8056
        %v8058 = vlaneseq
        %v8059 = vshrl.u32 %v8058, 7
        %v8060 = vsub.s32 %v8057, %v8059
        %v8061 = vrot.slane %v8047, %v8060
        %v8062 = vcombine.low %v6921, %v6925
        %v8063 = vcombine.high %v6921, %v6925
        %v8065 = vunpack.c.l.s4 1983009808
        %v8066 = vunpack.c.0.s8 %v8065
        %v8067 = vlaneseq
        %v8068 = vshrl.u32 %v8067, 7
        %v8069 = vsub.s32 %v8066, %v8068
        %v8070 = vrot.slane %v8062, %v8069
        %v8072 = vunpack.c.l.s4 1983009808
        %v8073 = vunpack.c.0.s8 %v8072
        %v8074 = vlaneseq
        %v8075 = vshrl.u32 %v8074, 7
        %v8076 = vsub.s32 %v8073, %v8075
        %v8077 = vrot.slane %v8063, %v8076
        %v8078 = vcombine.low %v6923, %v6927
        %v8079 = vcombine.high %v6923, %v6927
        %v8081 = vunpack.c.l.s4 1983009808
        %v8082 = vunpack.c.0.s8 %v8081
        %v8083 = vlaneseq
        %v8084 = vshrl.u32 %v8083, 7
        %v8085 = vsub.s32 %v8082, %v8084
        %v8086 = vrot.slane %v8078, %v8085
        %v8088 = vunpack.c.l.s4 1983009808
        %v8089 = vunpack.c.0.s8 %v8088
        %v8090 = vlaneseq
        %v8091 = vshrl.u32 %v8090, 7
        %v8092 = vsub.s32 %v8089, %v8091
        %v8093 = vrot.slane %v8079, %v8092
        %v8094 = vcombine.low %v8038, %v8054
        %v8095 = vcombine.high %v8038, %v8054
        %v8097 = vunpack.c.l.s4 1934713408
        %v8098 = vunpack.c.0.s8 %v8097
        %v8099 = vlaneseq
        %v8100 = vshrl.u32 %v8099, 7
        %v8101 = vsub.s32 %v8098, %v8100
        %v8102 = vrot.slane %v8094, %v8101
        %v8104 = vunpack.c.l.s4 1934713408
        %v8105 = vunpack.c.0.s8 %v8104
        %v8106 = vlaneseq
        %v8107 = vshrl.u32 %v8106, 7
        %v8108 = vsub.s32 %v8105, %v8107
        %v8109 = vrot.slane %v8095, %v8108
        %v8110 = vcombine.low %v8045, %v8061
        %v8111 = vcombine.high %v8045, %v8061
        %v8113 = vunpack.c.l.s4 1934713408
        %v8114 = vunpack.c.0.s8 %v8113
        %v8115 = vlaneseq
        %v8116 = vshrl.u32 %v8115, 7
        %v8117 = vsub.s32 %v8114, %v8116
        %v8118 = vrot.slane %v8110, %v8117
        %v8120 = vunpack.c.l.s4 1934713408
        %v8121 = vunpack.c.0.s8 %v8120
        %v8122 = vlaneseq
        %v8123 = vshrl.u32 %v8122, 7
        %v8124 = vsub.s32 %v8121, %v8123
        %v8125 = vrot.slane %v8111, %v8124
        %v8126 = vcombine.low %v8070, %v8086
        %v8127 = vcombine.high %v8070, %v8086
        %v8129 = vunpack.c.l.s4 1934713408
        %v8130 = vunpack.c.0.s8 %v8129
        %v8131 = vlaneseq
        %v8132 = vshrl.u32 %v8131, 7
        %v8133 = vsub.s32 %v8130, %v8132
        %v8134 = vrot.slane %v8126, %v8133
        %v8136 = vunpack.c.l.s4 1934713408
        %v8137 = vunpack.c.0.s8 %v8136
        %v8138 = vlaneseq
        %v8139 = vshrl.u32 %v8138, 7
        %v8140 = vsub.s32 %v8137, %v8139
        %v8141 = vrot.slane %v8127, %v8140
        %v8142 = vcombine.low %v8077, %v8093
        %v8143 = vcombine.high %v8077, %v8093
        %v8145 = vunpack.c.l.s4 1934713408
        %v8146 = vunpack.c.0.s8 %v8145
        %v8147 = vlaneseq
        %v8148 = vshrl.u32 %v8147, 7
        %v8149 = vsub.s32 %v8146, %v8148
        %v8150 = vrot.slane %v8142, %v8149
        %v8152 = vunpack.c.l.s4 1934713408
        %v8153 = vunpack.c.0.s8 %v8152
        %v8154 = vlaneseq
        %v8155 = vshrl.u32 %v8154, 7
        %v8156 = vsub.s32 %v8153, %v8155
        %v8157 = vrot.slane %v8143, %v8156
        %v8158 = vcombine.low %v8102, %v8134
        %v8159 = vcombine.high %v8102, %v8134
        %v8160 = vcombine.low %v8109, %v8141
        %v8161 = vcombine.high %v8109, %v8141
        %v8162 = vcombine.low %v8118, %v8150
        %v8163 = vcombine.high %v8118, %v8150
        %v8164 = vcombine.low %v8125, %v8157
        %v8165 = vcombine.high %v8125, %v8157
        %8168 = vrot.lane.b32.xlu0 %v7751, 16
        %v8169 = vpop.permute.xlu0 %8168
        %8170 = vrot.lane.b32.xlu0 %v7887, 16
        %v8171 = vpop.permute.xlu0 %8170
        %8176 = vrot.lane.b32.xlu0 %v7752, 32
        %v8177 = vpop.permute.xlu0 %8176
        %8178 = vrot.lane.b32.xlu0 %v7888, 32
        %v8179 = vpop.permute.xlu0 %8178
        %8184 = vrot.lane.b32.xlu0 %v7753, 48
        %v8185 = vpop.permute.xlu0 %8184
        %8186 = vrot.lane.b32.xlu0 %v7889, 48
        %v8187 = vpop.permute.xlu0 %8186
        %8192 = vrot.lane.b32.xlu0 %v7754, 64
        %v8193 = vpop.permute.xlu0 %8192
        %8194 = vrot.lane.b32.xlu0 %v7890, 64
        %v8195 = vpop.permute.xlu0 %8194
        %8200 = vrot.lane.b32.xlu0 %v7755, 80
        %v8201 = vpop.permute.xlu0 %8200
        %8202 = vrot.lane.b32.xlu0 %v7891, 80
        %v8203 = vpop.permute.xlu0 %8202
        %8208 = vrot.lane.b32.xlu0 %v7756, 96
        %v8209 = vpop.permute.xlu0 %8208
        %8210 = vrot.lane.b32.xlu0 %v7892, 96
        %v8211 = vpop.permute.xlu0 %8210
        %8216 = vrot.lane.b32.xlu0 %v7757, 112
        %v8217 = vpop.permute.xlu0 %8216
        %8218 = vrot.lane.b32.xlu0 %v7893, 112
        %v8219 = vpop.permute.xlu0 %8218
        %8224 = vrot.lane.b32.xlu0 %v8023, 16
        %v8225 = vpop.permute.xlu0 %8224
        %8226 = vrot.lane.b32.xlu0 %v8159, 16
        %v8227 = vpop.permute.xlu0 %8226
        %8232 = vrot.lane.b32.xlu0 %v8024, 32
        %v8233 = vpop.permute.xlu0 %8232
        %8234 = vrot.lane.b32.xlu0 %v8160, 32
        %v8235 = vpop.permute.xlu0 %8234
        %8240 = vrot.lane.b32.xlu0 %v8025, 48
        %v8241 = vpop.permute.xlu0 %8240
        %8242 = vrot.lane.b32.xlu0 %v8161, 48
        %v8243 = vpop.permute.xlu0 %8242
        %8248 = vrot.lane.b32.xlu0 %v8026, 64
        %v8249 = vpop.permute.xlu0 %8248
        %8250 = vrot.lane.b32.xlu0 %v8162, 64
        %v8251 = vpop.permute.xlu0 %8250
        %8256 = vrot.lane.b32.xlu0 %v8027, 80
        %v8257 = vpop.permute.xlu0 %8256
        %8258 = vrot.lane.b32.xlu0 %v8163, 80
        %v8259 = vpop.permute.xlu0 %8258
        %8264 = vrot.lane.b32.xlu0 %v8028, 96
        %v8265 = vpop.permute.xlu0 %8264
        %8266 = vrot.lane.b32.xlu0 %v8164, 96
        %v8267 = vpop.permute.xlu0 %8266
        %8272 = vrot.lane.b32.xlu0 %v8029, 112
        %v8273 = vpop.permute.xlu0 %8272
        %8274 = vrot.lane.b32.xlu0 %v8165, 112
        %v8275 = vpop.permute.xlu0 %8274
        %v8278 = vsel %vm716, %v7750, %v8169
        %v8279 = vsel %vm716, %v7886, %v8171
        %v8280 = vsel %vm7586, %v8278, %v8177
        %v8281 = vsel %vm7586, %v8279, %v8179
        %v8282 = vsel %vm7589, %v8280, %v8185
        %v8283 = vsel %vm7589, %v8281, %v8187
        %v8284 = vsel %vm7592, %v8282, %v8193
        %v8285 = vsel %vm7592, %v8283, %v8195
        %v8286 = vsel %vm7595, %v8284, %v8201
        %v8287 = vsel %vm7595, %v8285, %v8203
        %v8288 = vsel %vm7598, %v8286, %v8209
        %v8289 = vsel %vm7598, %v8287, %v8211
        %v8290 = vsel %vm7601, %v8288, %v8217
        %v8291 = vsel %vm7601, %v8289, %v8219
        %v8292 = vsel %vm716, %v8022, %v8225
        %v8293 = vsel %vm716, %v8158, %v8227
        %v8294 = vsel %vm7586, %v8292, %v8233
        %v8295 = vsel %vm7586, %v8293, %v8235
        %v8296 = vsel %vm7589, %v8294, %v8241
        %v8297 = vsel %vm7589, %v8295, %v8243
        %v8298 = vsel %vm7592, %v8296, %v8249
        %v8299 = vsel %vm7592, %v8297, %v8251
        %v8300 = vsel %vm7595, %v8298, %v8257
        %v8301 = vsel %vm7595, %v8299, %v8259
        %v8302 = vsel %vm7598, %v8300, %v8265
        %v8303 = vsel %vm7598, %v8301, %v8267
        %v8304 = vsel %vm7601, %v8302, %v8273
        %v8305 = vsel %vm7601, %v8303, %v8275
        %s8306 = scalar_lea.vmem %s681, 32 [#allocation25]
        %8307 = vst [vmem:[%s8306] sm:$0xff] %v8290
        %8308 = vst [vmem:[%s8306 + $0x8] sm:$0xff] %v8304
        %8309 = vst [vmem:[%s8306 + $0x10] sm:$0xff] %v8291
        %8310 = vst [vmem:[%s8306 + $0x18] sm:$0xff] %v8305
        %s8311 = sand.u32 %s352, 1
        %s8312 = scalar_lea.sflag [#allocation4], %s8311
        %s8313 = sand.u32 %s352, 1
        %s8314 = smul.addr %s8313, 64
        %s8315 = scalar_lea.vmem [#allocation25], %s8314
        // Predicated region
        $region133: #{upsampling_bottleneck_forward.1} parent=75 // pred_check
          %p8316 = pneg %p362
        $region134: #{upsampling_bottleneck_forward.1} parent=75 // pred_check_branch
          %8318 = sbr.rel (%p8316) target = $region136
        $region135: #{upsampling_bottleneck_forward.1} parent=75 // pred_region
          %s8320 = ssub.s32 1024, 1024
          %8321 = vsyncadd %s8312, %s8320
          %s8322 = smul.addr %s40, 8
          %s8323 = smul.addr %s8322, 128
          %s8324 = scalar_lea.hbm %s14, %s8323
          %s8325 = sshll.u32 %s8315, 4
          %s8326 = int_to_ptr.vmem [resolvable:$true] %s8325
          %8331 = dma.vmem_to_hbm [thread:$0]  %s8326, 1024, %s8324, %s8312, 256, 256, 16
        $region136: #{upsampling_bottleneck_forward.1} parent=75 // pred_fallthru
          _
      $region76: #{upsampling_bottleneck_forward.1} parent=5 // pred_fallthru
        _
      %p8332 = scmp.le.s32.totalorder 2, %s35
      // Predicated region
      $region137: #{upsampling_bottleneck_forward.1} parent=5 // pred_check
        %p8333 = pneg %p8332
      $region138: #{upsampling_bottleneck_forward.1} parent=5 // pred_check_branch
        %8335 = sbr.rel (%p8333) target = $region140
      $region139: #{upsampling_bottleneck_forward.1} parent=5 // pred_region
        %s8336 = ssub.s32 %s35, 2
        // Predicated region
        $region141: #{upsampling_bottleneck_forward.1} parent=139 // pred_check
          %p8337 = pneg %p368
        $region142: #{upsampling_bottleneck_forward.1} parent=139 // pred_check_branch
          %8339 = sbr.rel (%p8337) target = $region144
        $region143: #{upsampling_bottleneck_forward.1} parent=139 // pred_region
          %s8340 = sand.u32 %s353, 1
          %s8341 = scalar_lea.sflag [#allocation4], %s8340
          %s8342 = sand.u32 %s353, 1
          %s8343 = smul.addr %s8342, 64
          %s8344 = scalar_lea.vmem [#allocation25], %s8343
          %8345 = dma.done %s8341, 1024
        $region144: #{upsampling_bottleneck_forward.1} parent=139 // pred_fallthru
          _
      $region140: #{upsampling_bottleneck_forward.1} parent=5 // pred_fallthru
        _
    $region6: #{upsampling_bottleneck_forward.1} parent=1 // loop_footer
      %s39 = sadd.s32 1, %s35
    $region7: #{upsampling_bottleneck_forward.1} parent=1 // loop_footer_branch
      %34 = sbr.rel target = $region3
    $region8: #{upsampling_bottleneck_forward.1} parent=1 // loop_exit
      _
    %8346 = vsyncpa [#allocation3], 1
    %s8347 = scalar_lea.sflag [#allocation3], 1
    %8348 = vsyncpa %s8347, 1
    %8349 = vsyncpa [#allocation6], 1
    %s8350 = scalar_lea.sflag [#allocation6], 1
    %8351 = vsyncpa %s8350, 1
    %8352 = vsyncpa [#allocation9], 1
    %8353 = vsyncpa [#allocation12], 1
    %8354 = vsyncpa [#allocation15], 1
    %8355 = vsyncpa [#allocation18], 1
    %8356 = vsyncpa [#allocation21], 1
    %8357 = vsyncpa [#allocation24], 1
    %8358 = vsyncpa [#allocation4], 1
    %s8359 = scalar_lea.sflag [#allocation4], 1
    %8360 = vsyncpa %s8359, 1

</llo_original>
